<compile_context>
chip_gen: v7x
topology: tpu7x:2x2x1
jax: 0.10.0
libtpu: 0.0.40
codegen_flags: <defaults>
</compile_context>

<pallas_src>
import functools
import math

import jax
import jax.numpy as jnp
from jax import lax
from jax.experimental import pallas as pl
from jax.experimental.pallas import tpu as pltpu


def _round_up(x, m):
    return (x + m - 1) // m * m


def _full_spec(shape):
    nd = len(shape)
    return pl.BlockSpec(shape, lambda i, nd=nd: (0,) * nd)


# --------------------------------------------------------------------------
# Kernel 1: fused MFCC  (DFT -> |.|^2 -> mel -> log -> DCT), tiled over rows
# --------------------------------------------------------------------------

def _mfcc_kernel(frames_ref, cs_ref, mel_ref, dct_ref, o_ref):
    """frames: (TM, n_fft); cs: (n_fft, 2*Fpad) = [cos | -sin]; out: (TM, Cpad)."""
    fr = frames_ref[...].astype(cs_ref.dtype)          # optional bf16 DFT path
    spec = jnp.dot(fr, cs_ref[...], preferred_element_type=jnp.float32)
    fpad = cs_ref.shape[1] // 2                          # 128-aligned split point
    re = spec[:, :fpad]
    im = spec[:, fpad:]
    power = re * re + im * im                            # Spectrogram(power=2.0)
    mel = jnp.dot(power, mel_ref[...], preferred_element_type=jnp.float32)
    logmel = jnp.log(mel + 1e-6)                         # MFCC(log_mels=True)
    o_ref[...] = jnp.dot(logmel, dct_ref[...], preferred_element_type=jnp.float32)


def mfcc_pallas(frames, cos_sin, melW, dctW, *, tm):
    n_rows, n_fft = frames.shape
    c_pad = dctW.shape[1]
    assert n_rows % tm == 0
    return pl.pallas_call(
        _mfcc_kernel,
        grid=(n_rows // tm,),
        in_specs=[pl.BlockSpec((tm, n_fft), lambda i: (i, 0)),
                  pl.BlockSpec(cos_sin.shape, lambda i: (0, 0)),
                  pl.BlockSpec(melW.shape, lambda i: (0, 0)),
                  pl.BlockSpec(dctW.shape, lambda i: (0, 0))],
        out_specs=pl.BlockSpec((tm, c_pad), lambda i: (i, 0)),
        out_shape=jax.ShapeDtypeStruct((n_rows, c_pad), jnp.float32),
        compiler_params=pltpu.CompilerParams(
            dimension_semantics=("parallel",),
            vmem_limit_bytes=32 * 1024 * 1024),
    )(frames, cos_sin, melW, dctW)


# --------------------------------------------------------------------------
# Kernel 2: fused InstanceNorm1d(affine) + GRU + Linear  in (B, T, C) layout
# --------------------------------------------------------------------------

def _norm_gru_dense_kernel(x_ref, g_ref, b_ref, wih_ref, whh_ref, bih_ref,
                           bhh_ref, wd_ref, bd_ref, o_ref, gi_ref, h_ref):
    """x: (B, T, Cpad); wih: (Cpad, 3*Hpad); whh: (Hpad, 3*Hpad); wd: (Hpad, Zpad).

    Gate blocks are lane-aligned at multiples of Hpad (Hpad % 128 == 0),
    in PyTorch order [r | z | n].  Padded channels / hidden units stay 0.
    """
    B, T, C = x_ref.shape
    Hp = whh_ref.shape[0]

    # ---- InstanceNorm1d over the time axis (biased var, eps=1e-5, affine) ----
    x = x_ref[...]
    mean = jnp.mean(x, axis=1, keepdims=True)
    var = jnp.mean(jnp.square(x - mean), axis=1, keepdims=True)
    xn = (x - mean) * lax.rsqrt(var + 1e-5) * g_ref[...] + b_ref[...]

    # ---- hoisted GRU input projection: one big MXU op for all timesteps ----
    gi = jnp.dot(xn.reshape(B * T, C), wih_ref[...],
                 preferred_element_type=jnp.float32) + bih_ref[...]
    gi_ref[...] = gi.reshape(B, T, 3 * Hp)

    whh = whh_ref[...]
    bhh = bhh_ref[...]

    def step(t, h):
        gi_t = gi_ref[:, pl.ds(t, 1), :][:, 0, :]                    # (B, 3Hp)
        gh = jnp.dot(h, whh, preferred_element_type=jnp.float32) + bhh
        r = jax.nn.sigmoid(gi_t[:, 0 * Hp:1 * Hp] + gh[:, 0 * Hp:1 * Hp])
        z = jax.nn.sigmoid(gi_t[:, 1 * Hp:2 * Hp] + gh[:, 1 * Hp:2 * Hp])
        n = jnp.tanh(gi_t[:, 2 * Hp:3 * Hp] + r * gh[:, 2 * Hp:3 * Hp])
        h_new = (1.0 - z) * n + z * h
        h_ref[:, pl.ds(t, 1), :] = h_new[:, None, :]                 # lane-dense
        return h_new

    h0 = jnp.zeros((B, Hp), jnp.float32)
    if T <= 64:                      # small static T: fully unroll for LLO visibility
        h = h0
        for t in range(T):
            h = step(t, h)
    else:
        lax.fori_loop(0, T, step, h0)

    # ---- bulk Linear + single lane-dense store (off the serial chain) ----
    out = jnp.dot(h_ref[...].reshape(B * T, Hp), wd_ref[...],
                  preferred_element_type=jnp.float32) + bd_ref[...]
    o_ref[...] = out.reshape(B, T, wd_ref.shape[1])


def norm_gru_dense_pallas(x, gamma, beta, wih, whh, bih, bhh, wd, bd):
    B, T, _ = x.shape
    Hp = whh.shape[0]
    Zp = wd.shape[1]
    args = (x, gamma, beta, wih, whh, bih, bhh, wd, bd)
    return pl.pallas_call(
        _norm_gru_dense_kernel,
        grid=(1,),
        in_specs=[_full_spec(a.shape) for a in args],
        out_specs=_full_spec((B, T, Zp)),
        out_shape=jax.ShapeDtypeStruct((B, T, Zp), jnp.float32),
        scratch_shapes=[pltpu.VMEM((B, T, 3 * Hp), jnp.float32),
                        pltpu.VMEM((B, T, Hp), jnp.float32)],
    )(*args)


# --------------------------------------------------------------------------
# Constant matrices mirroring torchaudio.transforms.MFCC internals
# --------------------------------------------------------------------------

def build_mfcc_constants(n_fft, sample_rate, n_mels, n_mfcc,
                         f_min=20.0, f_max=8000.0, dft_dtype=jnp.float32):
    F = n_fft // 2 + 1
    Fpad = _round_up(F, 128)
    Cpad = _round_up(n_mfcc, 128)

    # One-sided real DFT as a single [cos | -sin] matrix (one MXU op in-kernel).
    n = jnp.arange(n_fft, dtype=jnp.float32)[:, None]
    k = jnp.arange(F, dtype=jnp.float32)[None, :]
    ang = 2.0 * math.pi * n * k / n_fft
    cosM = jnp.pad(jnp.cos(ang), ((0, 0), (0, Fpad - F)))
    sinM = jnp.pad(-jnp.sin(ang), ((0, 0), (0, Fpad - F)))
    cos_sin = jnp.concatenate([cosM, sinM], axis=1).astype(dft_dtype)  # (n_fft, 2*Fpad)

    # HTK mel filterbank (norm=None), as torchaudio.functional.melscale_fbanks.
    all_freqs = jnp.linspace(0.0, sample_rate / 2.0, F)
    m_min = 2595.0 * math.log10(1.0 + f_min / 700.0)
    m_max = 2595.0 * math.log10(1.0 + f_max / 700.0)
    m_pts = jnp.linspace(m_min, m_max, n_mels + 2)
    f_pts = 700.0 * (jnp.power(10.0, m_pts / 2595.0) - 1.0)
    f_diff = f_pts[1:] - f_pts[:-1]
    slopes = f_pts[None, :] - all_freqs[:, None]
    down = -slopes[:, :-2] / f_diff[:-1]
    up = slopes[:, 2:] / f_diff[1:]
    fb = jnp.maximum(0.0, jnp.minimum(down, up)).astype(jnp.float32)   # (F, n_mels)
    melW = jnp.pad(fb, ((0, Fpad - F), (0, 0)))                        # (Fpad, n_mels)

    # DCT-II, ortho norm, as torchaudio.functional.create_dct; lane-padded output.
    nm = jnp.arange(n_mels, dtype=jnp.float32)[None, :]
    km = jnp.arange(n_mfcc, dtype=jnp.float32)[:, None]
    dct = jnp.cos(math.pi / n_mels * (nm + 0.5) * km)                  # (n_mfcc, n_mels)
    dct = dct.at[0].multiply(1.0 / math.sqrt(2.0))
    dct = dct * math.sqrt(2.0 / n_mels)
    dctW = jnp.pad(dct.T.astype(jnp.float32), ((0, 0), (0, Cpad - n_mfcc)))

    return cos_sin, melW, dctW


# --------------------------------------------------------------------------
# Z_Encoder forward
# --------------------------------------------------------------------------

def z_encoder_forward(audio, params, *, n_fft, hop_length, z_units):
    B, L = audio.shape
    half = n_fft // 2

    # Spectrogram framing (center=True, reflect pad, periodic Hann) : plain-JAX glue.
    # TODO(synk): for long audio, do the framing in-kernel via hop-strided DMA to
    # avoid materializing the ~n_fft/hop-times duplicated (B, T, n_fft) array.
    padded = jnp.pad(audio, ((0, 0), (half, half)), mode="reflect")
    Tf = 1 + L // hop_length
    idx = jnp.arange(Tf)[:, None] * hop_length + jnp.arange(n_fft)[None, :]
    win = 0.5 * (1.0 - jnp.cos(2.0 * math.pi * jnp.arange(n_fft) / n_fft))
    frames = (padded[:, idx] * win[None, None, :]).reshape(B * Tf, n_fft)
    frames = frames.astype(jnp.float32)

    # Pad rows so the row tile divides evenly (and sublanes are aligned).
    N = B * Tf
    tm = 512 if N >= 512 else _round_up(N, 8)
    n_pad = _round_up(N, tm)
    if n_pad > N:
        frames = jnp.pad(frames, ((0, n_pad - N), (0, 0)))

    # Fused, row-tiled MFCC kernel -> (n_pad, Cpad), lane-dense.
    mfcc_pad = mfcc_pallas(frames, params["cos_sin"], params["melW"],
                           params["dctW"], tm=tm)
    c_pad = mfcc_pad.shape[1]

    # (B, T, Cpad); dropping the last frame == torch's x[:, :, :-1] in NCT layout.
    x = mfcc_pad[:N].reshape(B, Tf, c_pad)[:, :Tf - 1, :]

    # Fused InstanceNorm1d(affine) + GRU (batch_first) + Linear.
    out_pad = norm_gru_dense_pallas(x, params["in_gamma"], params["in_beta"],
                                    params["wih"], params["whh"],
                                    params["bih"], params["bhh"],
                                    params["wd"], params["bd"])
    return out_pad[:, :, :z_units]


# --------------------------------------------------------------------------
# Deterministic parameter construction (PyTorch layouts -> lane-aligned packs)
# --------------------------------------------------------------------------

def make_params(key, *, n_fft, sample_rate, n_mels, n_mfcc, gru_units, z_units,
                dft_dtype=jnp.float32):
    cos_sin, melW, dctW = build_mfcc_constants(
        n_fft, sample_rate, n_mels, n_mfcc, dft_dtype=dft_dtype)
    Cpad = dctW.shape[1]
    H = gru_units
    Hp = _round_up(H, 128)
    Zp = _round_up(z_units, 128)

    ks = jax.random.split(key, 8)
    kg = 1.0 / math.sqrt(H)

    # PyTorch GRU weights: W_ih (3H, D), W_hh (3H, H), gate order [r, z, n].
    w_ih = jax.random.uniform(ks[0], (3 * H, n_mfcc), jnp.float32, -kg, kg)
    w_hh = jax.random.uniform(ks[1], (3 * H, H), jnp.float32, -kg, kg)
    b_ih = jax.random.uniform(ks[2], (3 * H,), jnp.float32, -kg, kg)
    b_hh = jax.random.uniform(ks[3], (3 * H,), jnp.float32, -kg, kg)
    w_d = jax.random.uniform(ks[4], (z_units, H), jnp.float32, -kg, kg)
    b_d = jax.random.uniform(ks[5], (z_units,), jnp.float32, -kg, kg)
    gamma = 1.0 + 0.1 * jax.random.normal(ks[6], (n_mfcc,), jnp.float32)
    beta = 0.1 * jax.random.normal(ks[7], (n_mfcc,), jnp.float32)

    def pack_w(w, in_dim, in_pad):                     # -> (in_pad, 3*Hp)
        out = jnp.zeros((in_pad, 3 * Hp), jnp.float32)
        for g in range(3):
            out = out.at[:in_dim, g * Hp:g * Hp + H].set(w[g * H:(g + 1) * H, :].T)
        return out

    def pack_b(b):                                     # -> (1, 3*Hp)
        out = jnp.zeros((1, 3 * Hp), jnp.float32)
        for g in range(3):
            out = out.at[0, g * Hp:g * Hp + H].set(b[g * H:(g + 1) * H])
        return out

    wd = jnp.zeros((Hp, Zp), jnp.float32).at[:H, :z_units].set(w_d.T)
    bd = jnp.zeros((1, Zp), jnp.float32).at[0, :z_units].set(b_d)
    g_pad = jnp.ones((Cpad,), jnp.float32).at[:n_mfcc].set(gamma).reshape(1, 1, Cpad)
    b_pad = jnp.zeros((Cpad,), jnp.float32).at[:n_mfcc].set(beta).reshape(1, 1, Cpad)

    return dict(
        cos_sin=cos_sin, melW=melW, dctW=dctW,
        in_gamma=g_pad, in_beta=b_pad,
        wih=pack_w(w_ih, n_mfcc, Cpad),
        whh=pack_w(w_hh, H, Hp),
        bih=pack_b(b_ih),
        bhh=pack_b(b_hh),
        wd=wd, bd=bd,
    )


if __name__ == "__main__":
    # Small, consistent configuration.
    n_fft, hop_length = 256, 64
    sample_rate, n_mels, n_mfcc = 16000, 128, 30
    gru_units, z_units = 32, 16
    B, L = 2, 1024                     # -> 17 frames, 16 after x[:, :, :-1]

    key = jax.random.PRNGKey(0)
    k_audio, k_param = jax.random.split(key)
    audio = jax.random.normal(k_audio, (B, L), jnp.float32)

    params = make_params(k_param, n_fft=n_fft, sample_rate=sample_rate,
                         n_mels=n_mels, n_mfcc=n_mfcc,
                         gru_units=gru_units, z_units=z_units)

    fwd = jax.jit(functools.partial(z_encoder_forward, n_fft=n_fft,
                                    hop_length=hop_length, z_units=z_units))
    out = fwd(audio, params)
    out = jax.block_until_ready(out)
    assert out.shape == (B, L // hop_length, z_units), out.shape
    print("KERNEL_OK")
</pallas_src>

<mosaic_0001>
module attributes {stable_mosaic.version = 11 : i64} {
  func.func @_mfcc_kernel(%arg0: i32, %arg1: memref<40x256xf32, #tpu.memory_space<vmem>>, %arg2: memref<256x512xf32, #tpu.memory_space<vmem>>, %arg3: memref<256x128xf32, #tpu.memory_space<vmem>>, %arg4: memref<128x128xf32, #tpu.memory_space<vmem>>, %arg5: memref<40x128xf32, #tpu.memory_space<vmem>>) attributes {dimension_semantics = [#tpu.dimension_semantics<parallel>], iteration_bounds = array<i64: 1>, scalar_prefetch = 0 : i64, scratch_operands = 0 : i64, tpu.core_type = #tpu.core_type<tc>, window_params = [{transform_indices = @transform_0, window_bounds = array<i64: 40, 256>}, {pipeline_mode = #tpu.pipeline_mode<synchronous>, transform_indices = @transform_1, window_bounds = array<i64: 256, 512>}, {pipeline_mode = #tpu.pipeline_mode<synchronous>, transform_indices = @transform_2, window_bounds = array<i64: 256, 128>}, {pipeline_mode = #tpu.pipeline_mode<synchronous>, transform_indices = @transform_3, window_bounds = array<i64: 128, 128>}, {transform_indices = @transform_4, window_bounds = array<i64: 40, 128>}]} {
    %c0 = arith.constant 0 : index
    %c0_0 = arith.constant 0 : index
    %0 = vector.load %arg1[%c0, %c0_0] : memref<40x256xf32, #tpu.memory_space<vmem>>, vector<40x256xf32>
    %c0_1 = arith.constant 0 : index
    %c0_2 = arith.constant 0 : index
    %1 = vector.load %arg2[%c0_1, %c0_2] : memref<256x512xf32, #tpu.memory_space<vmem>>, vector<256x512xf32>
    %cst = arith.constant dense<0.000000e+00> : vector<40x512xf32>
    %2 = tpu.matmul %0, %1, %cst {dimension_numbers = #tpu.dot_dimension_numbers<[1], [0], [0], [1], [0, 0, 1, 1], [], []>} : vector<40x256xf32>, vector<256x512xf32>, vector<40x512xf32> -> vector<40x512xf32>
    %3 = vector.extract_strided_slice %2 {offsets = [0, 0], sizes = [40, 256], strides = [1, 1]} : vector<40x512xf32> to vector<40x256xf32>
    %4 = vector.extract_strided_slice %2 {offsets = [0, 256], sizes = [40, 256], strides = [1, 1]} : vector<40x512xf32> to vector<40x256xf32>
    %5 = arith.mulf %3, %3 : vector<40x256xf32>
    %6 = arith.mulf %4, %4 : vector<40x256xf32>
    %7 = arith.addf %5, %6 : vector<40x256xf32>
    %c0_3 = arith.constant 0 : index
    %c0_4 = arith.constant 0 : index
    %8 = vector.load %arg3[%c0_3, %c0_4] : memref<256x128xf32, #tpu.memory_space<vmem>>, vector<256x128xf32>
    %cst_5 = arith.constant dense<0.000000e+00> : vector<40x128xf32>
    %9 = tpu.matmul %7, %8, %cst_5 {dimension_numbers = #tpu.dot_dimension_numbers<[1], [0], [0], [1], [0, 0, 1, 1], [], []>} : vector<40x256xf32>, vector<256x128xf32>, vector<40x128xf32> -> vector<40x128xf32>
    %cst_6 = arith.constant 9.99999997E-7 : f32
    %10 = vector.broadcast %cst_6 : f32 to vector<40x128xf32>
    %11 = arith.addf %9, %10 : vector<40x128xf32>
    %12 = math.log %11 : vector<40x128xf32>
    %c0_7 = arith.constant 0 : index
    %c0_8 = arith.constant 0 : index
    %13 = vector.load %arg4[%c0_7, %c0_8] : memref<128x128xf32, #tpu.memory_space<vmem>>, vector<128x128xf32>
    %cst_9 = arith.constant dense<0.000000e+00> : vector<40x128xf32>
    %14 = tpu.matmul %12, %13, %cst_9 {dimension_numbers = #tpu.dot_dimension_numbers<[1], [0], [0], [1], [0, 0, 1, 1], [], []>} : vector<40x128xf32>, vector<128x128xf32>, vector<40x128xf32> -> vector<40x128xf32>
    %c0_10 = arith.constant 0 : index
    %c0_11 = arith.constant 0 : index
    %15 = vector.load %arg5[%c0_10, %c0_11] : memref<40x128xf32, #tpu.memory_space<vmem>>, vector<40x128xf32>
    tpu.vector_store %arg5[%c0_10, %c0_11], %14 {strides = array<i32>} : memref<40x128xf32, #tpu.memory_space<vmem>>, vector<40x128xf32>,
    return
  }
  func.func @transform_0(%arg0: i32) -> (i32, i32) {
    %c0_i32 = arith.constant 0 : i32
    %c0_i32_0 = arith.constant 0 : i32
    return %arg0, %c0_i32 : i32, i32
  }
  func.func @transform_1(%arg0: i32) -> (i32, i32) {
    %c0_i32 = arith.constant 0 : i32
    %c0_i32_0 = arith.constant 0 : i32
    %c0_i32_1 = arith.constant 0 : i32
    return %c0_i32, %c0_i32_0 : i32, i32
  }
  func.func @transform_2(%arg0: i32) -> (i32, i32) {
    %c0_i32 = arith.constant 0 : i32
    %c0_i32_0 = arith.constant 0 : i32
    %c0_i32_1 = arith.constant 0 : i32
    return %c0_i32, %c0_i32_0 : i32, i32
  }
  func.func @transform_3(%arg0: i32) -> (i32, i32) {
    %c0_i32 = arith.constant 0 : i32
    %c0_i32_0 = arith.constant 0 : i32
    %c0_i32_1 = arith.constant 0 : i32
    return %c0_i32, %c0_i32_0 : i32, i32
  }
  func.func @transform_4(%arg0: i32) -> (i32, i32) {
    %c0_i32 = arith.constant 0 : i32
    %c0_i32_0 = arith.constant 0 : i32
    return %arg0, %c0_i32 : i32, i32
  }
}

module attributes {stable_mosaic.version = 11 : i64} {
  func.func @_norm_gru_dense_kernel(%arg0: i32, %arg1: memref<2x16x128xf32, #tpu.memory_space<vmem>>, %arg2: memref<1x1x128xf32, #tpu.memory_space<vmem>>, %arg3: memref<1x1x128xf32, #tpu.memory_space<vmem>>, %arg4: memref<128x384xf32, #tpu.memory_space<vmem>>, %arg5: memref<128x384xf32, #tpu.memory_space<vmem>>, %arg6: memref<1x384xf32, #tpu.memory_space<vmem>>, %arg7: memref<1x384xf32, #tpu.memory_space<vmem>>, %arg8: memref<128x128xf32, #tpu.memory_space<vmem>>, %arg9: memref<1x128xf32, #tpu.memory_space<vmem>>, %arg10: memref<2x16x128xf32, #tpu.memory_space<vmem>>, %arg11: memref<2x16x384xf32, #tpu.memory_space<vmem>>, %arg12: memref<2x16x128xf32, #tpu.memory_space<vmem>>) attributes {dimension_semantics = [#tpu.dimension_semantics<arbitrary>], iteration_bounds = array<i64: 1>, scalar_prefetch = 0 : i64, scratch_operands = 2 : i64, tpu.core_type = #tpu.core_type<tc>, window_params = [{pipeline_mode = #tpu.pipeline_mode<synchronous>, transform_indices = @transform_0, window_bounds = array<i64: 2, 16, 128>}, {pipeline_mode = #tpu.pipeline_mode<synchronous>, transform_indices = @transform_1, window_bounds = array<i64: 1, 1, 128>}, {pipeline_mode = #tpu.pipeline_mode<synchronous>, transform_indices = @transform_2, window_bounds = array<i64: 1, 1, 128>}, {pipeline_mode = #tpu.pipeline_mode<synchronous>, transform_indices = @transform_3, window_bounds = array<i64: 128, 384>}, {pipeline_mode = #tpu.pipeline_mode<synchronous>, transform_indices = @transform_4, window_bounds = array<i64: 128, 384>}, {pipeline_mode = #tpu.pipeline_mode<synchronous>, transform_indices = @transform_5, window_bounds = array<i64: 1, 384>}, {pipeline_mode = #tpu.pipeline_mode<synchronous>, transform_indices = @transform_6, window_bounds = array<i64: 1, 384>}, {pipeline_mode = #tpu.pipeline_mode<synchronous>, transform_indices = @transform_7, window_bounds = array<i64: 128, 128>}, {pipeline_mode = #tpu.pipeline_mode<synchronous>, transform_indices = @transform_8, window_bounds = array<i64: 1, 128>}, {pipeline_mode = #tpu.pipeline_mode<synchronous>, transform_indices = @transform_9, window_bounds = array<i64: 2, 16, 128>}]} {
    %c0 = arith.constant 0 : index
    %c0_0 = arith.constant 0 : index
    %c0_1 = arith.constant 0 : index
    %0 = vector.load %arg1[%c0, %c0_0, %c0_1] : memref<2x16x128xf32, #tpu.memory_space<vmem>>, vector<2x16x128xf32>
    %cst = arith.constant dense<0.000000e+00> : vector<2x128xf32>
    %1 = vector.multi_reduction <add>, %0, %cst [1] : vector<2x16x128xf32> to vector<2x128xf32>
    %2 = vector.shape_cast %1 : vector<2x128xf32> to vector<2x1x128xf32>
    %cst_2 = arith.constant 1.600000e+01 : f32
    %3 = vector.broadcast %cst_2 : f32 to vector<2x1x128xf32>
    %4 = arith.divf %2, %3 : vector<2x1x128xf32>
    %5 = vector.broadcast %4 : vector<2x1x128xf32> to vector<2x16x128xf32>
    %6 = arith.subf %0, %5 : vector<2x16x128xf32>
    %7 = arith.mulf %6, %6 : vector<2x16x128xf32>
    %cst_3 = arith.constant dense<0.000000e+00> : vector<2x128xf32>
    %8 = vector.multi_reduction <add>, %7, %cst_3 [1] : vector<2x16x128xf32> to vector<2x128xf32>
    %9 = vector.shape_cast %8 : vector<2x128xf32> to vector<2x1x128xf32>
    %cst_4 = arith.constant 1.600000e+01 : f32
    %10 = vector.broadcast %cst_4 : f32 to vector<2x1x128xf32>
    %11 = arith.divf %9, %10 : vector<2x1x128xf32>
    %12 = vector.broadcast %4 : vector<2x1x128xf32> to vector<2x16x128xf32>
    %13 = arith.subf %0, %12 : vector<2x16x128xf32>
    %cst_5 = arith.constant 9.99999974E-6 : f32
    %14 = vector.broadcast %cst_5 : f32 to vector<2x1x128xf32>
    %15 = arith.addf %11, %14 : vector<2x1x128xf32>
    %16 = math.rsqrt %15 : vector<2x1x128xf32>
    %17 = vector.broadcast %16 : vector<2x1x128xf32> to vector<2x16x128xf32>
    %18 = arith.mulf %13, %17 : vector<2x16x128xf32>
    %c0_6 = arith.constant 0 : index
    %c0_7 = arith.constant 0 : index
    %c0_8 = arith.constant 0 : index
    %19 = vector.load %arg2[%c0_6, %c0_7, %c0_8] : memref<1x1x128xf32, #tpu.memory_space<vmem>>, vector<1x1x128xf32>
    %20 = vector.broadcast %19 : vector<1x1x128xf32> to vector<2x16x128xf32>
    %21 = arith.mulf %18, %20 : vector<2x16x128xf32>
    %c0_9 = arith.constant 0 : index
    %c0_10 = arith.constant 0 : index
    %c0_11 = arith.constant 0 : index
    %22 = vector.load %arg3[%c0_9, %c0_10, %c0_11] : memref<1x1x128xf32, #tpu.memory_space<vmem>>, vector<1x1x128xf32>
    %23 = vector.broadcast %22 : vector<1x1x128xf32> to vector<2x16x128xf32>
    %24 = arith.addf %21, %23 : vector<2x16x128xf32>
    %25 = vector.shape_cast %24 : vector<2x16x128xf32> to vector<32x128xf32>
    %c0_12 = arith.constant 0 : index
    %c0_13 = arith.constant 0 : index
    %26 = vector.load %arg4[%c0_12, %c0_13] : memref<128x384xf32, #tpu.memory_space<vmem>>, vector<128x384xf32>
    %cst_14 = arith.constant dense<0.000000e+00> : vector<32x384xf32>
    %27 = tpu.matmul %25, %26, %cst_14 {dimension_numbers = #tpu.dot_dimension_numbers<[1], [0], [0], [1], [0, 0, 1, 1], [], []>} : vector<32x128xf32>, vector<128x384xf32>, vector<32x384xf32> -> vector<32x384xf32>
    %c0_15 = arith.constant 0 : index
    %c0_16 = arith.constant 0 : index
    %28 = vector.load %arg6[%c0_15, %c0_16] : memref<1x384xf32, #tpu.memory_space<vmem>>, vector<1x384xf32>
    %29 = vector.broadcast %28 : vector<1x384xf32> to vector<32x384xf32>
    %30 = arith.addf %27, %29 : vector<32x384xf32>
    %31 = vector.shape_cast %30 : vector<32x384xf32> to vector<2x16x384xf32>
    %c0_17 = arith.constant 0 : index
    %c0_18 = arith.constant 0 : index
    %c0_19 = arith.constant 0 : index
    %32 = vector.load %arg11[%c0_17, %c0_18, %c0_19] : memref<2x16x384xf32, #tpu.memory_space<vmem>>, vector<2x16x384xf32>
    tpu.vector_store %arg11[%c0_17, %c0_18, %c0_19], %31 {strides = array<i32>} : memref<2x16x384xf32, #tpu.memory_space<vmem>>, vector<2x16x384xf32>,
    %c0_20 = arith.constant 0 : index
    %c0_21 = arith.constant 0 : index
    %33 = vector.load %arg5[%c0_20, %c0_21] : memref<128x384xf32, #tpu.memory_space<vmem>>, vector<128x384xf32>
    %c0_22 = arith.constant 0 : index
    %c0_23 = arith.constant 0 : index
    %34 = vector.load %arg7[%c0_22, %c0_23] : memref<1x384xf32, #tpu.memory_space<vmem>>, vector<1x384xf32>
    %cst_24 = arith.constant 0.000000e+00 : f32
    %35 = vector.broadcast %cst_24 : f32 to vector<2x128xf32>
    %c0_25 = arith.constant 0 : index
    %c0_26 = arith.constant 0 : index
    %c0_27 = arith.constant 0 : index
    %36 = vector.load %arg11[%c0_25, %c0_26, %c0_27] : memref<2x16x384xf32, #tpu.memory_space<vmem>>, vector<2x1x384xf32>
    %37 = vector.shape_cast %36 : vector<2x1x384xf32> to vector<2x384xf32>
    %cst_28 = arith.constant dense<0.000000e+00> : vector<2x384xf32>
    %38 = tpu.matmul %35, %33, %cst_28 {dimension_numbers = #tpu.dot_dimension_numbers<[1], [0], [0], [1], [0, 0, 1, 1], [], []>} : vector<2x128xf32>, vector<128x384xf32>, vector<2x384xf32> -> vector<2x384xf32>
    %39 = vector.broadcast %34 : vector<1x384xf32> to vector<2x384xf32>
    %40 = arith.addf %38, %39 : vector<2x384xf32>
    %41 = vector.extract_strided_slice %37 {offsets = [0, 0], sizes = [2, 128], strides = [1, 1]} : vector<2x384xf32> to vector<2x128xf32>
    %42 = vector.extract_strided_slice %40 {offsets = [0, 0], sizes = [2, 128], strides = [1, 1]} : vector<2x384xf32> to vector<2x128xf32>
    %43 = arith.addf %41, %42 : vector<2x128xf32>
    %44 = arith.negf %43 : vector<2x128xf32>
    %45 = math.exp %44 : vector<2x128xf32>
    %cst_29 = arith.constant 1.000000e+00 : f32
    %46 = vector.broadcast %cst_29 : f32 to vector<2x128xf32>
    %47 = arith.addf %46, %45 : vector<2x128xf32>
    %48 = arith.divf %46, %47 : vector<2x128xf32>
    %49 = vector.extract_strided_slice %37 {offsets = [0, 128], sizes = [2, 128], strides = [1, 1]} : vector<2x384xf32> to vector<2x128xf32>
    %50 = vector.extract_strided_slice %40 {offsets = [0, 128], sizes = [2, 128], strides = [1, 1]} : vector<2x384xf32> to vector<2x128xf32>
    %51 = arith.addf %49, %50 : vector<2x128xf32>
    %52 = arith.negf %51 : vector<2x128xf32>
    %53 = math.exp %52 : vector<2x128xf32>
    %cst_30 = arith.constant 1.000000e+00 : f32
    %54 = vector.broadcast %cst_30 : f32 to vector<2x128xf32>
    %55 = arith.addf %54, %53 : vector<2x128xf32>
    %56 = arith.divf %54, %55 : vector<2x128xf32>
    %57 = vector.extract_strided_slice %37 {offsets = [0, 256], sizes = [2, 128], strides = [1, 1]} : vector<2x384xf32> to vector<2x128xf32>
    %58 = vector.extract_strided_slice %40 {offsets = [0, 256], sizes = [2, 128], strides = [1, 1]} : vector<2x384xf32> to vector<2x128xf32>
    %59 = arith.mulf %48, %58 : vector<2x128xf32>
    %60 = arith.addf %57, %59 : vector<2x128xf32>
    %61 = math.tanh %60 : vector<2x128xf32>
    %cst_31 = arith.constant 1.000000e+00 : f32
    %62 = vector.broadcast %cst_31 : f32 to vector<2x128xf32>
    %63 = arith.subf %62, %56 : vector<2x128xf32>
    %64 = arith.mulf %63, %61 : vector<2x128xf32>
    %65 = arith.mulf %56, %35 : vector<2x128xf32>
    %66 = arith.addf %64, %65 : vector<2x128xf32>
    %67 = vector.shape_cast %66 : vector<2x128xf32> to vector<2x1x128xf32>
    %c0_32 = arith.constant 0 : index
    %c0_33 = arith.constant 0 : index
    %c0_34 = arith.constant 0 : index
    %68 = vector.load %arg12[%c0_32, %c0_33, %c0_34] : memref<2x16x128xf32, #tpu.memory_space<vmem>>, vector<2x1x128xf32>
    tpu.vector_store %arg12[%c0_32, %c0_33, %c0_34], %67 {strides = array<i32>} : memref<2x16x128xf32, #tpu.memory_space<vmem>>, vector<2x1x128xf32>,
    %c0_35 = arith.constant 0 : index
    %c1 = arith.constant 1 : index
    %c0_36 = arith.constant 0 : index
    %69 = vector.load %arg11[%c0_35, %c1, %c0_36] : memref<2x16x384xf32, #tpu.memory_space<vmem>>, vector<2x1x384xf32>
    %70 = vector.shape_cast %69 : vector<2x1x384xf32> to vector<2x384xf32>
    %cst_37 = arith.constant dense<0.000000e+00> : vector<2x384xf32>
    %71 = tpu.matmul %66, %33, %cst_37 {dimension_numbers = #tpu.dot_dimension_numbers<[1], [0], [0], [1], [0, 0, 1, 1], [], []>} : vector<2x128xf32>, vector<128x384xf32>, vector<2x384xf32> -> vector<2x384xf32>
    %72 = vector.broadcast %34 : vector<1x384xf32> to vector<2x384xf32>
    %73 = arith.addf %71, %72 : vector<2x384xf32>
    %74 = vector.extract_strided_slice %70 {offsets = [0, 0], sizes = [2, 128], strides = [1, 1]} : vector<2x384xf32> to vector<2x128xf32>
    %75 = vector.extract_strided_slice %73 {offsets = [0, 0], sizes = [2, 128], strides = [1, 1]} : vector<2x384xf32> to vector<2x128xf32>
    %76 = arith.addf %74, %75 : vector<2x128xf32>
    %77 = arith.negf %76 : vector<2x128xf32>
    %78 = math.exp %77 : vector<2x128xf32>
    %cst_38 = arith.constant 1.000000e+00 : f32
    %79 = vector.broadcast %cst_38 : f32 to vector<2x128xf32>
    %80 = arith.addf %79, %78 : vector<2x128xf32>
    %81 = arith.divf %79, %80 : vector<2x128xf32>
    %82 = vector.extract_strided_slice %70 {offsets = [0, 128], sizes = [2, 128], strides = [1, 1]} : vector<2x384xf32> to vector<2x128xf32>
    %83 = vector.extract_strided_slice %73 {offsets = [0, 128], sizes = [2, 128], strides = [1, 1]} : vector<2x384xf32> to vector<2x128xf32>
    %84 = arith.addf %82, %83 : vector<2x128xf32>
    %85 = arith.negf %84 : vector<2x128xf32>
    %86 = math.exp %85 : vector<2x128xf32>
    %cst_39 = arith.constant 1.000000e+00 : f32
    %87 = vector.broadcast %cst_39 : f32 to vector<2x128xf32>
    %88 = arith.addf %87, %86 : vector<2x128xf32>
    %89 = arith.divf %87, %88 : vector<2x128xf32>
    %90 = vector.extract_strided_slice %70 {offsets = [0, 256], sizes = [2, 128], strides = [1, 1]} : vector<2x384xf32> to vector<2x128xf32>
    %91 = vector.extract_strided_slice %73 {offsets = [0, 256], sizes = [2, 128], strides = [1, 1]} : vector<2x384xf32> to vector<2x128xf32>
    %92 = arith.mulf %81, %91 : vector<2x128xf32>
    %93 = arith.addf %90, %92 : vector<2x128xf32>
    %94 = math.tanh %93 : vector<2x128xf32>
    %cst_40 = arith.constant 1.000000e+00 : f32
    %95 = vector.broadcast %cst_40 : f32 to vector<2x128xf32>
    %96 = arith.subf %95, %89 : vector<2x128xf32>
    %97 = arith.mulf %96, %94 : vector<2x128xf32>
    %98 = arith.mulf %89, %66 : vector<2x128xf32>
    %99 = arith.addf %97, %98 : vector<2x128xf32>
    %100 = vector.shape_cast %99 : vector<2x128xf32> to vector<2x1x128xf32>
    %c0_41 = arith.constant 0 : index
    %c1_42 = arith.constant 1 : index
    %c0_43 = arith.constant 0 : index
    %101 = vector.load %arg12[%c0_41, %c1_42, %c0_43] : memref<2x16x128xf32, #tpu.memory_space<vmem>>, vector<2x1x128xf32>
    tpu.vector_store %arg12[%c0_41, %c1_42, %c0_43], %100 {strides = array<i32>} : memref<2x16x128xf32, #tpu.memory_space<vmem>>, vector<2x1x128xf32>,
    %c0_44 = arith.constant 0 : index
    %c2 = arith.constant 2 : index
    %c0_45 = arith.constant 0 : index
    %102 = vector.load %arg11[%c0_44, %c2, %c0_45] : memref<2x16x384xf32, #tpu.memory_space<vmem>>, vector<2x1x384xf32>
    %103 = vector.shape_cast %102 : vector<2x1x384xf32> to vector<2x384xf32>
    %cst_46 = arith.constant dense<0.000000e+00> : vector<2x384xf32>
    %104 = tpu.matmul %99, %33, %cst_46 {dimension_numbers = #tpu.dot_dimension_numbers<[1], [0], [0], [1], [0, 0, 1, 1], [], []>} : vector<2x128xf32>, vector<128x384xf32>, vector<2x384xf32> -> vector<2x384xf32>
    %105 = vector.broadcast %34 : vector<1x384xf32> to vector<2x384xf32>
    %106 = arith.addf %104, %105 : vector<2x384xf32>
    %107 = vector.extract_strided_slice %103 {offsets = [0, 0], sizes = [2, 128], strides = [1, 1]} : vector<2x384xf32> to vector<2x128xf32>
    %108 = vector.extract_strided_slice %106 {offsets = [0, 0], sizes = [2, 128], strides = [1, 1]} : vector<2x384xf32> to vector<2x128xf32>
    %109 = arith.addf %107, %108 : vector<2x128xf32>
    %110 = arith.negf %109 : vector<2x128xf32>
    %111 = math.exp %110 : vector<2x128xf32>
    %cst_47 = arith.constant 1.000000e+00 : f32
    %112 = vector.broadcast %cst_47 : f32 to vector<2x128xf32>
    %113 = arith.addf %112, %111 : vector<2x128xf32>
    %114 = arith.divf %112, %113 : vector<2x128xf32>
    %115 = vector.extract_strided_slice %103 {offsets = [0, 128], sizes = [2, 128], strides = [1, 1]} : vector<2x384xf32> to vector<2x128xf32>
    %116 = vector.extract_strided_slice %106 {offsets = [0, 128], sizes = [2, 128], strides = [1, 1]} : vector<2x384xf32> to vector<2x128xf32>
    %117 = arith.addf %115, %116 : vector<2x128xf32>
    %118 = arith.negf %117 : vector<2x128xf32>
    %119 = math.exp %118 : vector<2x128xf32>
    %cst_48 = arith.constant 1.000000e+00 : f32
    %120 = vector.broadcast %cst_48 : f32 to vector<2x128xf32>
    %121 = arith.addf %120, %119 : vector<2x128xf32>
    %122 = arith.divf %120, %121 : vector<2x128xf32>
    %123 = vector.extract_strided_slice %103 {offsets = [0, 256], sizes = [2, 128], strides = [1, 1]} : vector<2x384xf32> to vector<2x128xf32>
    %124 = vector.extract_strided_slice %106 {offsets = [0, 256], sizes = [2, 128], strides = [1, 1]} : vector<2x384xf32> to vector<2x128xf32>
    %125 = arith.mulf %114, %124 : vector<2x128xf32>
    %126 = arith.addf %123, %125 : vector<2x128xf32>
    %127 = math.tanh %126 : vector<2x128xf32>
    %cst_49 = arith.constant 1.000000e+00 : f32
    %128 = vector.broadcast %cst_49 : f32 to vector<2x128xf32>
    %129 = arith.subf %128, %122 : vector<2x128xf32>
    %130 = arith.mulf %129, %127 : vector<2x128xf32>
    %131 = arith.mulf %122, %99 : vector<2x128xf32>
    %132 = arith.addf %130, %131 : vector<2x128xf32>
    %133 = vector.shape_cast %132 : vector<2x128xf32> to vector<2x1x128xf32>
    %c0_50 = arith.constant 0 : index
    %c2_51 = arith.constant 2 : index
    %c0_52 = arith.constant 0 : index
    %134 = vector.load %arg12[%c0_50, %c2_51, %c0_52] : memref<2x16x128xf32, #tpu.memory_space<vmem>>, vector<2x1x128xf32>
    tpu.vector_store %arg12[%c0_50, %c2_51, %c0_52], %133 {strides = array<i32>} : memref<2x16x128xf32, #tpu.memory_space<vmem>>, vector<2x1x128xf32>,
    %c0_53 = arith.constant 0 : index
    %c3 = arith.constant 3 : index
    %c0_54 = arith.constant 0 : index
    %135 = vector.load %arg11[%c0_53, %c3, %c0_54] : memref<2x16x384xf32, #tpu.memory_space<vmem>>, vector<2x1x384xf32>
    %136 = vector.shape_cast %135 : vector<2x1x384xf32> to vector<2x384xf32>
    %cst_55 = arith.constant dense<0.000000e+00> : vector<2x384xf32>
    %137 = tpu.matmul %132, %33, %cst_55 {dimension_numbers = #tpu.dot_dimension_numbers<[1], [0], [0], [1], [0, 0, 1, 1], [], []>} : vector<2x128xf32>, vector<128x384xf32>, vector<2x384xf32> -> vector<2x384xf32>
    %138 = vector.broadcast %34 : vector<1x384xf32> to vector<2x384xf32>
    %139 = arith.addf %137, %138 : vector<2x384xf32>
    %140 = vector.extract_strided_slice %136 {offsets = [0, 0], sizes = [2, 128], strides = [1, 1]} : vector<2x384xf32> to vector<2x128xf32>
    %141 = vector.extract_strided_slice %139 {offsets = [0, 0], sizes = [2, 128], strides = [1, 1]} : vector<2x384xf32> to vector<2x128xf32>
    %142 = arith.addf %140, %141 : vector<2x128xf32>
    %143 = arith.negf %142 : vector<2x128xf32>
    %144 = math.exp %143 : vector<2x128xf32>
    %cst_56 = arith.constant 1.000000e+00 : f32
    %145 = vector.broadcast %cst_56 : f32 to vector<2x128xf32>
    %146 = arith.addf %145, %144 : vector<2x128xf32>
    %147 = arith.divf %145, %146 : vector<2x128xf32>
    %148 = vector.extract_strided_slice %136 {offsets = [0, 128], sizes = [2, 128], strides = [1, 1]} : vector<2x384xf32> to vector<2x128xf32>
    %149 = vector.extract_strided_slice %139 {offsets = [0, 128], sizes = [2, 128], strides = [1, 1]} : vector<2x384xf32> to vector<2x128xf32>
    %150 = arith.addf %148, %149 : vector<2x128xf32>
    %151 = arith.negf %150 : vector<2x128xf32>
    %152 = math.exp %151 : vector<2x128xf32>
    %cst_57 = arith.constant 1.000000e+00 : f32
    %153 = vector.broadcast %cst_57 : f32 to vector<2x128xf32>
    %154 = arith.addf %153, %152 : vector<2x128xf32>
    %155 = arith.divf %153, %154 : vector<2x128xf32>
    %156 = vector.extract_strided_slice %136 {offsets = [0, 256], sizes = [2, 128], strides = [1, 1]} : vector<2x384xf32> to vector<2x128xf32>
    %157 = vector.extract_strided_slice %139 {offsets = [0, 256], sizes = [2, 128], strides = [1, 1]} : vector<2x384xf32> to vector<2x128xf32>
    %158 = arith.mulf %147, %157 : vector<2x128xf32>
    %159 = arith.addf %156, %158 : vector<2x128xf32>
    %160 = math.tanh %159 : vector<2x128xf32>
    %cst_58 = arith.constant 1.000000e+00 : f32
    %161 = vector.broadcast %cst_58 : f32 to vector<2x128xf32>
    %162 = arith.subf %161, %155 : vector<2x128xf32>
    %163 = arith.mulf %162, %160 : vector<2x128xf32>
    %164 = arith.mulf %155, %132 : vector<2x128xf32>
    %165 = arith.addf %163, %164 : vector<2x128xf32>
    %166 = vector.shape_cast %165 : vector<2x128xf32> to vector<2x1x128xf32>
    %c0_59 = arith.constant 0 : index
    %c3_60 = arith.constant 3 : index
    %c0_61 = arith.constant 0 : index
    %167 = vector.load %arg12[%c0_59, %c3_60, %c0_61] : memref<2x16x128xf32, #tpu.memory_space<vmem>>, vector<2x1x128xf32>
    tpu.vector_store %arg12[%c0_59, %c3_60, %c0_61], %166 {strides = array<i32>} : memref<2x16x128xf32, #tpu.memory_space<vmem>>, vector<2x1x128xf32>,
    %c0_62 = arith.constant 0 : index
    %c4 = arith.constant 4 : index
    %c0_63 = arith.constant 0 : index
    %168 = vector.load %arg11[%c0_62, %c4, %c0_63] : memref<2x16x384xf32, #tpu.memory_space<vmem>>, vector<2x1x384xf32>
    %169 = vector.shape_cast %168 : vector<2x1x384xf32> to vector<2x384xf32>
    %cst_64 = arith.constant dense<0.000000e+00> : vector<2x384xf32>
    %170 = tpu.matmul %165, %33, %cst_64 {dimension_numbers = #tpu.dot_dimension_numbers<[1], [0], [0], [1], [0, 0, 1, 1], [], []>} : vector<2x128xf32>, vector<128x384xf32>, vector<2x384xf32> -> vector<2x384xf32>
    %171 = vector.broadcast %34 : vector<1x384xf32> to vector<2x384xf32>
    %172 = arith.addf %170, %171 : vector<2x384xf32>
    %173 = vector.extract_strided_slice %169 {offsets = [0, 0], sizes = [2, 128], strides = [1, 1]} : vector<2x384xf32> to vector<2x128xf32>
    %174 = vector.extract_strided_slice %172 {offsets = [0, 0], sizes = [2, 128], strides = [1, 1]} : vector<2x384xf32> to vector<2x128xf32>
    %175 = arith.addf %173, %174 : vector<2x128xf32>
    %176 = arith.negf %175 : vector<2x128xf32>
    %177 = math.exp %176 : vector<2x128xf32>
    %cst_65 = arith.constant 1.000000e+00 : f32
    %178 = vector.broadcast %cst_65 : f32 to vector<2x128xf32>
    %179 = arith.addf %178, %177 : vector<2x128xf32>
    %180 = arith.divf %178, %179 : vector<2x128xf32>
    %181 = vector.extract_strided_slice %169 {offsets = [0, 128], sizes = [2, 128], strides = [1, 1]} : vector<2x384xf32> to vector<2x128xf32>
    %182 = vector.extract_strided_slice %172 {offsets = [0, 128], sizes = [2, 128], strides = [1, 1]} : vector<2x384xf32> to vector<2x128xf32>
    %183 = arith.addf %181, %182 : vector<2x128xf32>
    %184 = arith.negf %183 : vector<2x128xf32>
    %185 = math.exp %184 : vector<2x128xf32>
    %cst_66 = arith.constant 1.000000e+00 : f32
    %186 = vector.broadcast %cst_66 : f32 to vector<2x128xf32>
    %187 = arith.addf %186, %185 : vector<2x128xf32>
    %188 = arith.divf %186, %187 : vector<2x128xf32>
    %189 = vector.extract_strided_slice %169 {offsets = [0, 256], sizes = [2, 128], strides = [1, 1]} : vector<2x384xf32> to vector<2x128xf32>
    %190 = vector.extract_strided_slice %172 {offsets = [0, 256], sizes = [2, 128], strides = [1, 1]} : vector<2x384xf32> to vector<2x128xf32>
    %191 = arith.mulf %180, %190 : vector<2x128xf32>
    %192 = arith.addf %189, %191 : vector<2x128xf32>
    %193 = math.tanh %192 : vector<2x128xf32>
    %cst_67 = arith.constant 1.000000e+00 : f32
    %194 = vector.broadcast %cst_67 : f32 to vector<2x128xf32>
    %195 = arith.subf %194, %188 : vector<2x128xf32>
    %196 = arith.mulf %195, %193 : vector<2x128xf32>
    %197 = arith.mulf %188, %165 : vector<2x128xf32>
    %198 = arith.addf %196, %197 : vector<2x128xf32>
    %199 = vector.shape_cast %198 : vector<2x128xf32> to vector<2x1x128xf32>
    %c0_68 = arith.constant 0 : index
    %c4_69 = arith.constant 4 : index
    %c0_70 = arith.constant 0 : index
    %200 = vector.load %arg12[%c0_68, %c4_69, %c0_70] : memref<2x16x128xf32, #tpu.memory_space<vmem>>, vector<2x1x128xf32>
    tpu.vector_store %arg12[%c0_68, %c4_69, %c0_70], %199 {strides = array<i32>} : memref<2x16x128xf32, #tpu.memory_space<vmem>>, vector<2x1x128xf32>,
    %c0_71 = arith.constant 0 : index
    %c5 = arith.constant 5 : index
    %c0_72 = arith.constant 0 : index
    %201 = vector.load %arg11[%c0_71, %c5, %c0_72] : memref<2x16x384xf32, #tpu.memory_space<vmem>>, vector<2x1x384xf32>
    %202 = vector.shape_cast %201 : vector<2x1x384xf32> to vector<2x384xf32>
    %cst_73 = arith.constant dense<0.000000e+00> : vector<2x384xf32>
    %203 = tpu.matmul %198, %33, %cst_73 {dimension_numbers = #tpu.dot_dimension_numbers<[1], [0], [0], [1], [0, 0, 1, 1], [], []>} : vector<2x128xf32>, vector<128x384xf32>, vector<2x384xf32> -> vector<2x384xf32>
    %204 = vector.broadcast %34 : vector<1x384xf32> to vector<2x384xf32>
    %205 = arith.addf %203, %204 : vector<2x384xf32>
    %206 = vector.extract_strided_slice %202 {offsets = [0, 0], sizes = [2, 128], strides = [1, 1]} : vector<2x384xf32> to vector<2x128xf32>
    %207 = vector.extract_strided_slice %205 {offsets = [0, 0], sizes = [2, 128], strides = [1, 1]} : vector<2x384xf32> to vector<2x128xf32>
    %208 = arith.addf %206, %207 : vector<2x128xf32>
    %209 = arith.negf %208 : vector<2x128xf32>
    %210 = math.exp %209 : vector<2x128xf32>
    %cst_74 = arith.constant 1.000000e+00 : f32
    %211 = vector.broadcast %cst_74 : f32 to vector<2x128xf32>
    %212 = arith.addf %211, %210 : vector<2x128xf32>
    %213 = arith.divf %211, %212 : vector<2x128xf32>
    %214 = vector.extract_strided_slice %202 {offsets = [0, 128], sizes = [2, 128], strides = [1, 1]} : vector<2x384xf32> to vector<2x128xf32>
    %215 = vector.extract_strided_slice %205 {offsets = [0, 128], sizes = [2, 128], strides = [1, 1]} : vector<2x384xf32> to vector<2x128xf32>
    %216 = arith.addf %214, %215 : vector<2x128xf32>
    %217 = arith.negf %216 : vector<2x128xf32>
    %218 = math.exp %217 : vector<2x128xf32>
    %cst_75 = arith.constant 1.000000e+00 : f32
    %219 = vector.broadcast %cst_75 : f32 to vector<2x128xf32>
    %220 = arith.addf %219, %218 : vector<2x128xf32>
    %221 = arith.divf %219, %220 : vector<2x128xf32>
    %222 = vector.extract_strided_slice %202 {offsets = [0, 256], sizes = [2, 128], strides = [1, 1]} : vector<2x384xf32> to vector<2x128xf32>
    %223 = vector.extract_strided_slice %205 {offsets = [0, 256], sizes = [2, 128], strides = [1, 1]} : vector<2x384xf32> to vector<2x128xf32>
    %224 = arith.mulf %213, %223 : vector<2x128xf32>
    %225 = arith.addf %222, %224 : vector<2x128xf32>
    %226 = math.tanh %225 : vector<2x128xf32>
    %cst_76 = arith.constant 1.000000e+00 : f32
    %227 = vector.broadcast %cst_76 : f32 to vector<2x128xf32>
    %228 = arith.subf %227, %221 : vector<2x128xf32>
    %229 = arith.mulf %228, %226 : vector<2x128xf32>
    %230 = arith.mulf %221, %198 : vector<2x128xf32>
    %231 = arith.addf %229, %230 : vector<2x128xf32>
    %232 = vector.shape_cast %231 : vector<2x128xf32> to vector<2x1x128xf32>
    %c0_77 = arith.constant 0 : index
    %c5_78 = arith.constant 5 : index
    %c0_79 = arith.constant 0 : index
    %233 = vector.load %arg12[%c0_77, %c5_78, %c0_79] : memref<2x16x128xf32, #tpu.memory_space<vmem>>, vector<2x1x128xf32>
    tpu.vector_store %arg12[%c0_77, %c5_78, %c0_79], %232 {strides = array<i32>} : memref<2x16x128xf32, #tpu.memory_space<vmem>>, vector<2x1x128xf32>,
    %c0_80 = arith.constant 0 : index
    %c6 = arith.constant 6 : index
    %c0_81 = arith.constant 0 : index
    %234 = vector.load %arg11[%c0_80, %c6, %c0_81] : memref<2x16x384xf32, #tpu.memory_space<vmem>>, vector<2x1x384xf32>
    %235 = vector.shape_cast %234 : vector<2x1x384xf32> to vector<2x384xf32>
    %cst_82 = arith.constant dense<0.000000e+00> : vector<2x384xf32>
    %236 = tpu.matmul %231, %33, %cst_82 {dimension_numbers = #tpu.dot_dimension_numbers<[1], [0], [0], [1], [0, 0, 1, 1], [], []>} : vector<2x128xf32>, vector<128x384xf32>, vector<2x384xf32> -> vector<2x384xf32>
    %237 = vector.broadcast %34 : vector<1x384xf32> to vector<2x384xf32>
    %238 = arith.addf %236, %237 : vector<2x384xf32>
    %239 = vector.extract_strided_slice %235 {offsets = [0, 0], sizes = [2, 128], strides = [1, 1]} : vector<2x384xf32> to vector<2x128xf32>
    %240 = vector.extract_strided_slice %238 {offsets = [0, 0], sizes = [2, 128], strides = [1, 1]} : vector<2x384xf32> to vector<2x128xf32>
    %241 = arith.addf %239, %240 : vector<2x128xf32>
    %242 = arith.negf %241 : vector<2x128xf32>
    %243 = math.exp %242 : vector<2x128xf32>
    %cst_83 = arith.constant 1.000000e+00 : f32
    %244 = vector.broadcast %cst_83 : f32 to vector<2x128xf32>
    %245 = arith.addf %244, %243 : vector<2x128xf32>
    %246 = arith.divf %244, %245 : vector<2x128xf32>
    %247 = vector.extract_strided_slice %235 {offsets = [0, 128], sizes = [2, 128], strides = [1, 1]} : vector<2x384xf32> to vector<2x128xf32>
    %248 = vector.extract_strided_slice %238 {offsets = [0, 128], sizes = [2, 128], strides = [1, 1]} : vector<2x384xf32> to vector<2x128xf32>
    %249 = arith.addf %247, %248 : vector<2x128xf32>
    %250 = arith.negf %249 : vector<2x128xf32>
    %251 = math.exp %250 : vector<2x128xf32>
    %cst_84 = arith.constant 1.000000e+00 : f32
    %252 = vector.broadcast %cst_84 : f32 to vector<2x128xf32>
    %253 = arith.addf %252, %251 : vector<2x128xf32>
    %254 = arith.divf %252, %253 : vector<2x128xf32>
    %255 = vector.extract_strided_slice %235 {offsets = [0, 256], sizes = [2, 128], strides = [1, 1]} : vector<2x384xf32> to vector<2x128xf32>
    %256 = vector.extract_strided_slice %238 {offsets = [0, 256], sizes = [2, 128], strides = [1, 1]} : vector<2x384xf32> to vector<2x128xf32>
    %257 = arith.mulf %246, %256 : vector<2x128xf32>
    %258 = arith.addf %255, %257 : vector<2x128xf32>
    %259 = math.tanh %258 : vector<2x128xf32>
    %cst_85 = arith.constant 1.000000e+00 : f32
    %260 = vector.broadcast %cst_85 : f32 to vector<2x128xf32>
    %261 = arith.subf %260, %254 : vector<2x128xf32>
    %262 = arith.mulf %261, %259 : vector<2x128xf32>
    %263 = arith.mulf %254, %231 : vector<2x128xf32>
    %264 = arith.addf %262, %263 : vector<2x128xf32>
    %265 = vector.shape_cast %264 : vector<2x128xf32> to vector<2x1x128xf32>
    %c0_86 = arith.constant 0 : index
    %c6_87 = arith.constant 6 : index
    %c0_88 = arith.constant 0 : index
    %266 = vector.load %arg12[%c0_86, %c6_87, %c0_88] : memref<2x16x128xf32, #tpu.memory_space<vmem>>, vector<2x1x128xf32>
    tpu.vector_store %arg12[%c0_86, %c6_87, %c0_88], %265 {strides = array<i32>} : memref<2x16x128xf32, #tpu.memory_space<vmem>>, vector<2x1x128xf32>,
    %c0_89 = arith.constant 0 : index
    %c7 = arith.constant 7 : index
    %c0_90 = arith.constant 0 : index
    %267 = vector.load %arg11[%c0_89, %c7, %c0_90] : memref<2x16x384xf32, #tpu.memory_space<vmem>>, vector<2x1x384xf32>
    %268 = vector.shape_cast %267 : vector<2x1x384xf32> to vector<2x384xf32>
    %cst_91 = arith.constant dense<0.000000e+00> : vector<2x384xf32>
    %269 = tpu.matmul %264, %33, %cst_91 {dimension_numbers = #tpu.dot_dimension_numbers<[1], [0], [0], [1], [0, 0, 1, 1], [], []>} : vector<2x128xf32>, vector<128x384xf32>, vector<2x384xf32> -> vector<2x384xf32>
    %270 = vector.broadcast %34 : vector<1x384xf32> to vector<2x384xf32>
    %271 = arith.addf %269, %270 : vector<2x384xf32>
    %272 = vector.extract_strided_slice %268 {offsets = [0, 0], sizes = [2, 128], strides = [1, 1]} : vector<2x384xf32> to vector<2x128xf32>
    %273 = vector.extract_strided_slice %271 {offsets = [0, 0], sizes = [2, 128], strides = [1, 1]} : vector<2x384xf32> to vector<2x128xf32>
    %274 = arith.addf %272, %273 : vector<2x128xf32>
    %275 = arith.negf %274 : vector<2x128xf32>
    %276 = math.exp %275 : vector<2x128xf32>
    %cst_92 = arith.constant 1.000000e+00 : f32
    %277 = vector.broadcast %cst_92 : f32 to vector<2x128xf32>
    %278 = arith.addf %277, %276 : vector<2x128xf32>
    %279 = arith.divf %277, %278 : vector<2x128xf32>
    %280 = vector.extract_strided_slice %268 {offsets = [0, 128], sizes = [2, 128], strides = [1, 1]} : vector<2x384xf32> to vector<2x128xf32>
    %281 = vector.extract_strided_slice %271 {offsets = [0, 128], sizes = [2, 128], strides = [1, 1]} : vector<2x384xf32> to vector<2x128xf32>
    %282 = arith.addf %280, %281 : vector<2x128xf32>
    %283 = arith.negf %282 : vector<2x128xf32>
    %284 = math.exp %283 : vector<2x128xf32>
    %cst_93 = arith.constant 1.000000e+00 : f32
    %285 = vector.broadcast %cst_93 : f32 to vector<2x128xf32>
    %286 = arith.addf %285, %284 : vector<2x128xf32>
    %287 = arith.divf %285, %286 : vector<2x128xf32>
    %288 = vector.extract_strided_slice %268 {offsets = [0, 256], sizes = [2, 128], strides = [1, 1]} : vector<2x384xf32> to vector<2x128xf32>
    %289 = vector.extract_strided_slice %271 {offsets = [0, 256], sizes = [2, 128], strides = [1, 1]} : vector<2x384xf32> to vector<2x128xf32>
    %290 = arith.mulf %279, %289 : vector<2x128xf32>
    %291 = arith.addf %288, %290 : vector<2x128xf32>
    %292 = math.tanh %291 : vector<2x128xf32>
    %cst_94 = arith.constant 1.000000e+00 : f32
    %293 = vector.broadcast %cst_94 : f32 to vector<2x128xf32>
    %294 = arith.subf %293, %287 : vector<2x128xf32>
    %295 = arith.mulf %294, %292 : vector<2x128xf32>
    %296 = arith.mulf %287, %264 : vector<2x128xf32>
    %297 = arith.addf %295, %296 : vector<2x128xf32>
    %298 = vector.shape_cast %297 : vector<2x128xf32> to vector<2x1x128xf32>
    %c0_95 = arith.constant 0 : index
    %c7_96 = arith.constant 7 : index
    %c0_97 = arith.constant 0 : index
    %299 = vector.load %arg12[%c0_95, %c7_96, %c0_97] : memref<2x16x128xf32, #tpu.memory_space<vmem>>, vector<2x1x128xf32>
    tpu.vector_store %arg12[%c0_95, %c7_96, %c0_97], %298 {strides = array<i32>} : memref<2x16x128xf32, #tpu.memory_space<vmem>>, vector<2x1x128xf32>,
    %c0_98 = arith.constant 0 : index
    %c8 = arith.constant 8 : index
    %c0_99 = arith.constant 0 : index
    %300 = vector.load %arg11[%c0_98, %c8, %c0_99] : memref<2x16x384xf32, #tpu.memory_space<vmem>>, vector<2x1x384xf32>
    %301 = vector.shape_cast %300 : vector<2x1x384xf32> to vector<2x384xf32>
    %cst_100 = arith.constant dense<0.000000e+00> : vector<2x384xf32>
    %302 = tpu.matmul %297, %33, %cst_100 {dimension_numbers = #tpu.dot_dimension_numbers<[1], [0], [0], [1], [0, 0, 1, 1], [], []>} : vector<2x128xf32>, vector<128x384xf32>, vector<2x384xf32> -> vector<2x384xf32>
    %303 = vector.broadcast %34 : vector<1x384xf32> to vector<2x384xf32>
    %304 = arith.addf %302, %303 : vector<2x384xf32>
    %305 = vector.extract_strided_slice %301 {offsets = [0, 0], sizes = [2, 128], strides = [1, 1]} : vector<2x384xf32> to vector<2x128xf32>
    %306 = vector.extract_strided_slice %304 {offsets = [0, 0], sizes = [2, 128], strides = [1, 1]} : vector<2x384xf32> to vector<2x128xf32>
    %307 = arith.addf %305, %306 : vector<2x128xf32>
    %308 = arith.negf %307 : vector<2x128xf32>
    %309 = math.exp %308 : vector<2x128xf32>
    %cst_101 = arith.constant 1.000000e+00 : f32
    %310 = vector.broadcast %cst_101 : f32 to vector<2x128xf32>
    %311 = arith.addf %310, %309 : vector<2x128xf32>
    %312 = arith.divf %310, %311 : vector<2x128xf32>
    %313 = vector.extract_strided_slice %301 {offsets = [0, 128], sizes = [2, 128], strides = [1, 1]} : vector<2x384xf32> to vector<2x128xf32>
    %314 = vector.extract_strided_slice %304 {offsets = [0, 128], sizes = [2, 128], strides = [1, 1]} : vector<2x384xf32> to vector<2x128xf32>
    %315 = arith.addf %313, %314 : vector<2x128xf32>
    %316 = arith.negf %315 : vector<2x128xf32>
    %317 = math.exp %316 : vector<2x128xf32>
    %cst_102 = arith.constant 1.000000e+00 : f32
    %318 = vector.broadcast %cst_102 : f32 to vector<2x128xf32>
    %319 = arith.addf %318, %317 : vector<2x128xf32>
    %320 = arith.divf %318, %319 : vector<2x128xf32>
    %321 = vector.extract_strided_slice %301 {offsets = [0, 256], sizes = [2, 128], strides = [1, 1]} : vector<2x384xf32> to vector<2x128xf32>
    %322 = vector.extract_strided_slice %304 {offsets = [0, 256], sizes = [2, 128], strides = [1, 1]} : vector<2x384xf32> to vector<2x128xf32>
    %323 = arith.mulf %312, %322 : vector<2x128xf32>
    %324 = arith.addf %321, %323 : vector<2x128xf32>
    %325 = math.tanh %324 : vector<2x128xf32>
    %cst_103 = arith.constant 1.000000e+00 : f32
    %326 = vector.broadcast %cst_103 : f32 to vector<2x128xf32>
    %327 = arith.subf %326, %320 : vector<2x128xf32>
    %328 = arith.mulf %327, %325 : vector<2x128xf32>
    %329 = arith.mulf %320, %297 : vector<2x128xf32>
    %330 = arith.addf %328, %329 : vector<2x128xf32>
    %331 = vector.shape_cast %330 : vector<2x128xf32> to vector<2x1x128xf32>
    %c0_104 = arith.constant 0 : index
    %c8_105 = arith.constant 8 : index
    %c0_106 = arith.constant 0 : index
    %332 = vector.load %arg12[%c0_104, %c8_105, %c0_106] : memref<2x16x128xf32, #tpu.memory_space<vmem>>, vector<2x1x128xf32>
    tpu.vector_store %arg12[%c0_104, %c8_105, %c0_106], %331 {strides = array<i32>} : memref<2x16x128xf32, #tpu.memory_space<vmem>>, vector<2x1x128xf32>,
    %c0_107 = arith.constant 0 : index
    %c9 = arith.constant 9 : index
    %c0_108 = arith.constant 0 : index
    %333 = vector.load %arg11[%c0_107, %c9, %c0_108] : memref<2x16x384xf32, #tpu.memory_space<vmem>>, vector<2x1x384xf32>
    %334 = vector.shape_cast %333 : vector<2x1x384xf32> to vector<2x384xf32>
    %cst_109 = arith.constant dense<0.000000e+00> : vector<2x384xf32>
    %335 = tpu.matmul %330, %33, %cst_109 {dimension_numbers = #tpu.dot_dimension_numbers<[1], [0], [0], [1], [0, 0, 1, 1], [], []>} : vector<2x128xf32>, vector<128x384xf32>, vector<2x384xf32> -> vector<2x384xf32>
    %336 = vector.broadcast %34 : vector<1x384xf32> to vector<2x384xf32>
    %337 = arith.addf %335, %336 : vector<2x384xf32>
    %338 = vector.extract_strided_slice %334 {offsets = [0, 0], sizes = [2, 128], strides = [1, 1]} : vector<2x384xf32> to vector<2x128xf32>
    %339 = vector.extract_strided_slice %337 {offsets = [0, 0], sizes = [2, 128], strides = [1, 1]} : vector<2x384xf32> to vector<2x128xf32>
    %340 = arith.addf %338, %339 : vector<2x128xf32>
    %341 = arith.negf %340 : vector<2x128xf32>
    %342 = math.exp %341 : vector<2x128xf32>
    %cst_110 = arith.constant 1.000000e+00 : f32
    %343 = vector.broadcast %cst_110 : f32 to vector<2x128xf32>
    %344 = arith.addf %343, %342 : vector<2x128xf32>
    %345 = arith.divf %343, %344 : vector<2x128xf32>
    %346 = vector.extract_strided_slice %334 {offsets = [0, 128], sizes = [2, 128], strides = [1, 1]} : vector<2x384xf32> to vector<2x128xf32>
    %347 = vector.extract_strided_slice %337 {offsets = [0, 128], sizes = [2, 128], strides = [1, 1]} : vector<2x384xf32> to vector<2x128xf32>
    %348 = arith.addf %346, %347 : vector<2x128xf32>
    %349 = arith.negf %348 : vector<2x128xf32>
    %350 = math.exp %349 : vector<2x128xf32>
    %cst_111 = arith.constant 1.000000e+00 : f32
    %351 = vector.broadcast %cst_111 : f32 to vector<2x128xf32>
    %352 = arith.addf %351, %350 : vector<2x128xf32>
    %353 = arith.divf %351, %352 : vector<2x128xf32>
    %354 = vector.extract_strided_slice %334 {offsets = [0, 256], sizes = [2, 128], strides = [1, 1]} : vector<2x384xf32> to vector<2x128xf32>
    %355 = vector.extract_strided_slice %337 {offsets = [0, 256], sizes = [2, 128], strides = [1, 1]} : vector<2x384xf32> to vector<2x128xf32>
    %356 = arith.mulf %345, %355 : vector<2x128xf32>
    %357 = arith.addf %354, %356 : vector<2x128xf32>
    %358 = math.tanh %357 : vector<2x128xf32>
    %cst_112 = arith.constant 1.000000e+00 : f32
    %359 = vector.broadcast %cst_112 : f32 to vector<2x128xf32>
    %360 = arith.subf %359, %353 : vector<2x128xf32>
    %361 = arith.mulf %360, %358 : vector<2x128xf32>
    %362 = arith.mulf %353, %330 : vector<2x128xf32>
    %363 = arith.addf %361, %362 : vector<2x128xf32>
    %364 = vector.shape_cast %363 : vector<2x128xf32> to vector<2x1x128xf32>
    %c0_113 = arith.constant 0 : index
    %c9_114 = arith.constant 9 : index
    %c0_115 = arith.constant 0 : index
    %365 = vector.load %arg12[%c0_113, %c9_114, %c0_115] : memref<2x16x128xf32, #tpu.memory_space<vmem>>, vector<2x1x128xf32>
    tpu.vector_store %arg12[%c0_113, %c9_114, %c0_115], %364 {strides = array<i32>} : memref<2x16x128xf32, #tpu.memory_space<vmem>>, vector<2x1x128xf32>,
    %c0_116 = arith.constant 0 : index
    %c10 = arith.constant 10 : index
    %c0_117 = arith.constant 0 : index
    %366 = vector.load %arg11[%c0_116, %c10, %c0_117] : memref<2x16x384xf32, #tpu.memory_space<vmem>>, vector<2x1x384xf32>
    %367 = vector.shape_cast %366 : vector<2x1x384xf32> to vector<2x384xf32>
    %cst_118 = arith.constant dense<0.000000e+00> : vector<2x384xf32>
    %368 = tpu.matmul %363, %33, %cst_118 {dimension_numbers = #tpu.dot_dimension_numbers<[1], [0], [0], [1], [0, 0, 1, 1], [], []>} : vector<2x128xf32>, vector<128x384xf32>, vector<2x384xf32> -> vector<2x384xf32>
    %369 = vector.broadcast %34 : vector<1x384xf32> to vector<2x384xf32>
    %370 = arith.addf %368, %369 : vector<2x384xf32>
    %371 = vector.extract_strided_slice %367 {offsets = [0, 0], sizes = [2, 128], strides = [1, 1]} : vector<2x384xf32> to vector<2x128xf32>
    %372 = vector.extract_strided_slice %370 {offsets = [0, 0], sizes = [2, 128], strides = [1, 1]} : vector<2x384xf32> to vector<2x128xf32>
    %373 = arith.addf %371, %372 : vector<2x128xf32>
    %374 = arith.negf %373 : vector<2x128xf32>
    %375 = math.exp %374 : vector<2x128xf32>
    %cst_119 = arith.constant 1.000000e+00 : f32
    %376 = vector.broadcast %cst_119 : f32 to vector<2x128xf32>
    %377 = arith.addf %376, %375 : vector<2x128xf32>
    %378 = arith.divf %376, %377 : vector<2x128xf32>
    %379 = vector.extract_strided_slice %367 {offsets = [0, 128], sizes = [2, 128], strides = [1, 1]} : vector<2x384xf32> to vector<2x128xf32>
    %380 = vector.extract_strided_slice %370 {offsets = [0, 128], sizes = [2, 128], strides = [1, 1]} : vector<2x384xf32> to vector<2x128xf32>
    %381 = arith.addf %379, %380 : vector<2x128xf32>
    %382 = arith.negf %381 : vector<2x128xf32>
    %383 = math.exp %382 : vector<2x128xf32>
    %cst_120 = arith.constant 1.000000e+00 : f32
    %384 = vector.broadcast %cst_120 : f32 to vector<2x128xf32>
    %385 = arith.addf %384, %383 : vector<2x128xf32>
    %386 = arith.divf %384, %385 : vector<2x128xf32>
    %387 = vector.extract_strided_slice %367 {offsets = [0, 256], sizes = [2, 128], strides = [1, 1]} : vector<2x384xf32> to vector<2x128xf32>
    %388 = vector.extract_strided_slice %370 {offsets = [0, 256], sizes = [2, 128], strides = [1, 1]} : vector<2x384xf32> to vector<2x128xf32>
    %389 = arith.mulf %378, %388 : vector<2x128xf32>
    %390 = arith.addf %387, %389 : vector<2x128xf32>
    %391 = math.tanh %390 : vector<2x128xf32>
    %cst_121 = arith.constant 1.000000e+00 : f32
    %392 = vector.broadcast %cst_121 : f32 to vector<2x128xf32>
    %393 = arith.subf %392, %386 : vector<2x128xf32>
    %394 = arith.mulf %393, %391 : vector<2x128xf32>
    %395 = arith.mulf %386, %363 : vector<2x128xf32>
    %396 = arith.addf %394, %395 : vector<2x128xf32>
    %397 = vector.shape_cast %396 : vector<2x128xf32> to vector<2x1x128xf32>
    %c0_122 = arith.constant 0 : index
    %c10_123 = arith.constant 10 : index
    %c0_124 = arith.constant 0 : index
    %398 = vector.load %arg12[%c0_122, %c10_123, %c0_124] : memref<2x16x128xf32, #tpu.memory_space<vmem>>, vector<2x1x128xf32>
    tpu.vector_store %arg12[%c0_122, %c10_123, %c0_124], %397 {strides = array<i32>} : memref<2x16x128xf32, #tpu.memory_space<vmem>>, vector<2x1x128xf32>,
    %c0_125 = arith.constant 0 : index
    %c11 = arith.constant 11 : index
    %c0_126 = arith.constant 0 : index
    %399 = vector.load %arg11[%c0_125, %c11, %c0_126] : memref<2x16x384xf32, #tpu.memory_space<vmem>>, vector<2x1x384xf32>
    %400 = vector.shape_cast %399 : vector<2x1x384xf32> to vector<2x384xf32>
    %cst_127 = arith.constant dense<0.000000e+00> : vector<2x384xf32>
    %401 = tpu.matmul %396, %33, %cst_127 {dimension_numbers = #tpu.dot_dimension_numbers<[1], [0], [0], [1], [0, 0, 1, 1], [], []>} : vector<2x128xf32>, vector<128x384xf32>, vector<2x384xf32> -> vector<2x384xf32>
    %402 = vector.broadcast %34 : vector<1x384xf32> to vector<2x384xf32>
    %403 = arith.addf %401, %402 : vector<2x384xf32>
    %404 = vector.extract_strided_slice %400 {offsets = [0, 0], sizes = [2, 128], strides = [1, 1]} : vector<2x384xf32> to vector<2x128xf32>
    %405 = vector.extract_strided_slice %403 {offsets = [0, 0], sizes = [2, 128], strides = [1, 1]} : vector<2x384xf32> to vector<2x128xf32>
    %406 = arith.addf %404, %405 : vector<2x128xf32>
    %407 = arith.negf %406 : vector<2x128xf32>
    %408 = math.exp %407 : vector<2x128xf32>
    %cst_128 = arith.constant 1.000000e+00 : f32
    %409 = vector.broadcast %cst_128 : f32 to vector<2x128xf32>
    %410 = arith.addf %409, %408 : vector<2x128xf32>
    %411 = arith.divf %409, %410 : vector<2x128xf32>
    %412 = vector.extract_strided_slice %400 {offsets = [0, 128], sizes = [2, 128], strides = [1, 1]} : vector<2x384xf32> to vector<2x128xf32>
    %413 = vector.extract_strided_slice %403 {offsets = [0, 128], sizes = [2, 128], strides = [1, 1]} : vector<2x384xf32> to vector<2x128xf32>
    %414 = arith.addf %412, %413 : vector<2x128xf32>
    %415 = arith.negf %414 : vector<2x128xf32>
    %416 = math.exp %415 : vector<2x128xf32>
    %cst_129 = arith.constant 1.000000e+00 : f32
    %417 = vector.broadcast %cst_129 : f32 to vector<2x128xf32>
    %418 = arith.addf %417, %416 : vector<2x128xf32>
    %419 = arith.divf %417, %418 : vector<2x128xf32>
    %420 = vector.extract_strided_slice %400 {offsets = [0, 256], sizes = [2, 128], strides = [1, 1]} : vector<2x384xf32> to vector<2x128xf32>
    %421 = vector.extract_strided_slice %403 {offsets = [0, 256], sizes = [2, 128], strides = [1, 1]} : vector<2x384xf32> to vector<2x128xf32>
    %422 = arith.mulf %411, %421 : vector<2x128xf32>
    %423 = arith.addf %420, %422 : vector<2x128xf32>
    %424 = math.tanh %423 : vector<2x128xf32>
    %cst_130 = arith.constant 1.000000e+00 : f32
    %425 = vector.broadcast %cst_130 : f32 to vector<2x128xf32>
    %426 = arith.subf %425, %419 : vector<2x128xf32>
    %427 = arith.mulf %426, %424 : vector<2x128xf32>
    %428 = arith.mulf %419, %396 : vector<2x128xf32>
    %429 = arith.addf %427, %428 : vector<2x128xf32>
    %430 = vector.shape_cast %429 : vector<2x128xf32> to vector<2x1x128xf32>
    %c0_131 = arith.constant 0 : index
    %c11_132 = arith.constant 11 : index
    %c0_133 = arith.constant 0 : index
    %431 = vector.load %arg12[%c0_131, %c11_132, %c0_133] : memref<2x16x128xf32, #tpu.memory_space<vmem>>, vector<2x1x128xf32>
    tpu.vector_store %arg12[%c0_131, %c11_132, %c0_133], %430 {strides = array<i32>} : memref<2x16x128xf32, #tpu.memory_space<vmem>>, vector<2x1x128xf32>,
    %c0_134 = arith.constant 0 : index
    %c12 = arith.constant 12 : index
    %c0_135 = arith.constant 0 : index
    %432 = vector.load %arg11[%c0_134, %c12, %c0_135] : memref<2x16x384xf32, #tpu.memory_space<vmem>>, vector<2x1x384xf32>
    %433 = vector.shape_cast %432 : vector<2x1x384xf32> to vector<2x384xf32>
    %cst_136 = arith.constant dense<0.000000e+00> : vector<2x384xf32>
    %434 = tpu.matmul %429, %33, %cst_136 {dimension_numbers = #tpu.dot_dimension_numbers<[1], [0], [0], [1], [0, 0, 1, 1], [], []>} : vector<2x128xf32>, vector<128x384xf32>, vector<2x384xf32> -> vector<2x384xf32>
    %435 = vector.broadcast %34 : vector<1x384xf32> to vector<2x384xf32>
    %436 = arith.addf %434, %435 : vector<2x384xf32>
    %437 = vector.extract_strided_slice %433 {offsets = [0, 0], sizes = [2, 128], strides = [1, 1]} : vector<2x384xf32> to vector<2x128xf32>
    %438 = vector.extract_strided_slice %436 {offsets = [0, 0], sizes = [2, 128], strides = [1, 1]} : vector<2x384xf32> to vector<2x128xf32>
    %439 = arith.addf %437, %438 : vector<2x128xf32>
    %440 = arith.negf %439 : vector<2x128xf32>
    %441 = math.exp %440 : vector<2x128xf32>
    %cst_137 = arith.constant 1.000000e+00 : f32
    %442 = vector.broadcast %cst_137 : f32 to vector<2x128xf32>
    %443 = arith.addf %442, %441 : vector<2x128xf32>
    %444 = arith.divf %442, %443 : vector<2x128xf32>
    %445 = vector.extract_strided_slice %433 {offsets = [0, 128], sizes = [2, 128], strides = [1, 1]} : vector<2x384xf32> to vector<2x128xf32>
    %446 = vector.extract_strided_slice %436 {offsets = [0, 128], sizes = [2, 128], strides = [1, 1]} : vector<2x384xf32> to vector<2x128xf32>
    %447 = arith.addf %445, %446 : vector<2x128xf32>
    %448 = arith.negf %447 : vector<2x128xf32>
    %449 = math.exp %448 : vector<2x128xf32>
    %cst_138 = arith.constant 1.000000e+00 : f32
    %450 = vector.broadcast %cst_138 : f32 to vector<2x128xf32>
    %451 = arith.addf %450, %449 : vector<2x128xf32>
    %452 = arith.divf %450, %451 : vector<2x128xf32>
    %453 = vector.extract_strided_slice %433 {offsets = [0, 256], sizes = [2, 128], strides = [1, 1]} : vector<2x384xf32> to vector<2x128xf32>
    %454 = vector.extract_strided_slice %436 {offsets = [0, 256], sizes = [2, 128], strides = [1, 1]} : vector<2x384xf32> to vector<2x128xf32>
    %455 = arith.mulf %444, %454 : vector<2x128xf32>
    %456 = arith.addf %453, %455 : vector<2x128xf32>
    %457 = math.tanh %456 : vector<2x128xf32>
    %cst_139 = arith.constant 1.000000e+00 : f32
    %458 = vector.broadcast %cst_139 : f32 to vector<2x128xf32>
    %459 = arith.subf %458, %452 : vector<2x128xf32>
    %460 = arith.mulf %459, %457 : vector<2x128xf32>
    %461 = arith.mulf %452, %429 : vector<2x128xf32>
    %462 = arith.addf %460, %461 : vector<2x128xf32>
    %463 = vector.shape_cast %462 : vector<2x128xf32> to vector<2x1x128xf32>
    %c0_140 = arith.constant 0 : index
    %c12_141 = arith.constant 12 : index
    %c0_142 = arith.constant 0 : index
    %464 = vector.load %arg12[%c0_140, %c12_141, %c0_142] : memref<2x16x128xf32, #tpu.memory_space<vmem>>, vector<2x1x128xf32>
    tpu.vector_store %arg12[%c0_140, %c12_141, %c0_142], %463 {strides = array<i32>} : memref<2x16x128xf32, #tpu.memory_space<vmem>>, vector<2x1x128xf32>,
    %c0_143 = arith.constant 0 : index
    %c13 = arith.constant 13 : index
    %c0_144 = arith.constant 0 : index
    %465 = vector.load %arg11[%c0_143, %c13, %c0_144] : memref<2x16x384xf32, #tpu.memory_space<vmem>>, vector<2x1x384xf32>
    %466 = vector.shape_cast %465 : vector<2x1x384xf32> to vector<2x384xf32>
    %cst_145 = arith.constant dense<0.000000e+00> : vector<2x384xf32>
    %467 = tpu.matmul %462, %33, %cst_145 {dimension_numbers = #tpu.dot_dimension_numbers<[1], [0], [0], [1], [0, 0, 1, 1], [], []>} : vector<2x128xf32>, vector<128x384xf32>, vector<2x384xf32> -> vector<2x384xf32>
    %468 = vector.broadcast %34 : vector<1x384xf32> to vector<2x384xf32>
    %469 = arith.addf %467, %468 : vector<2x384xf32>
    %470 = vector.extract_strided_slice %466 {offsets = [0, 0], sizes = [2, 128], strides = [1, 1]} : vector<2x384xf32> to vector<2x128xf32>
    %471 = vector.extract_strided_slice %469 {offsets = [0, 0], sizes = [2, 128], strides = [1, 1]} : vector<2x384xf32> to vector<2x128xf32>
    %472 = arith.addf %470, %471 : vector<2x128xf32>
    %473 = arith.negf %472 : vector<2x128xf32>
    %474 = math.exp %473 : vector<2x128xf32>
    %cst_146 = arith.constant 1.000000e+00 : f32
    %475 = vector.broadcast %cst_146 : f32 to vector<2x128xf32>
    %476 = arith.addf %475, %474 : vector<2x128xf32>
    %477 = arith.divf %475, %476 : vector<2x128xf32>
    %478 = vector.extract_strided_slice %466 {offsets = [0, 128], sizes = [2, 128], strides = [1, 1]} : vector<2x384xf32> to vector<2x128xf32>
    %479 = vector.extract_strided_slice %469 {offsets = [0, 128], sizes = [2, 128], strides = [1, 1]} : vector<2x384xf32> to vector<2x128xf32>
    %480 = arith.addf %478, %479 : vector<2x128xf32>
    %481 = arith.negf %480 : vector<2x128xf32>
    %482 = math.exp %481 : vector<2x128xf32>
    %cst_147 = arith.constant 1.000000e+00 : f32
    %483 = vector.broadcast %cst_147 : f32 to vector<2x128xf32>
    %484 = arith.addf %483, %482 : vector<2x128xf32>
    %485 = arith.divf %483, %484 : vector<2x128xf32>
    %486 = vector.extract_strided_slice %466 {offsets = [0, 256], sizes = [2, 128], strides = [1, 1]} : vector<2x384xf32> to vector<2x128xf32>
    %487 = vector.extract_strided_slice %469 {offsets = [0, 256], sizes = [2, 128], strides = [1, 1]} : vector<2x384xf32> to vector<2x128xf32>
    %488 = arith.mulf %477, %487 : vector<2x128xf32>
    %489 = arith.addf %486, %488 : vector<2x128xf32>
    %490 = math.tanh %489 : vector<2x128xf32>
    %cst_148 = arith.constant 1.000000e+00 : f32
    %491 = vector.broadcast %cst_148 : f32 to vector<2x128xf32>
    %492 = arith.subf %491, %485 : vector<2x128xf32>
    %493 = arith.mulf %492, %490 : vector<2x128xf32>
    %494 = arith.mulf %485, %462 : vector<2x128xf32>
    %495 = arith.addf %493, %494 : vector<2x128xf32>
    %496 = vector.shape_cast %495 : vector<2x128xf32> to vector<2x1x128xf32>
    %c0_149 = arith.constant 0 : index
    %c13_150 = arith.constant 13 : index
    %c0_151 = arith.constant 0 : index
    %497 = vector.load %arg12[%c0_149, %c13_150, %c0_151] : memref<2x16x128xf32, #tpu.memory_space<vmem>>, vector<2x1x128xf32>
    tpu.vector_store %arg12[%c0_149, %c13_150, %c0_151], %496 {strides = array<i32>} : memref<2x16x128xf32, #tpu.memory_space<vmem>>, vector<2x1x128xf32>,
    %c0_152 = arith.constant 0 : index
    %c14 = arith.constant 14 : index
    %c0_153 = arith.constant 0 : index
    %498 = vector.load %arg11[%c0_152, %c14, %c0_153] : memref<2x16x384xf32, #tpu.memory_space<vmem>>, vector<2x1x384xf32>
    %499 = vector.shape_cast %498 : vector<2x1x384xf32> to vector<2x384xf32>
    %cst_154 = arith.constant dense<0.000000e+00> : vector<2x384xf32>
    %500 = tpu.matmul %495, %33, %cst_154 {dimension_numbers = #tpu.dot_dimension_numbers<[1], [0], [0], [1], [0, 0, 1, 1], [], []>} : vector<2x128xf32>, vector<128x384xf32>, vector<2x384xf32> -> vector<2x384xf32>
    %501 = vector.broadcast %34 : vector<1x384xf32> to vector<2x384xf32>
    %502 = arith.addf %500, %501 : vector<2x384xf32>
    %503 = vector.extract_strided_slice %499 {offsets = [0, 0], sizes = [2, 128], strides = [1, 1]} : vector<2x384xf32> to vector<2x128xf32>
    %504 = vector.extract_strided_slice %502 {offsets = [0, 0], sizes = [2, 128], strides = [1, 1]} : vector<2x384xf32> to vector<2x128xf32>
    %505 = arith.addf %503, %504 : vector<2x128xf32>
    %506 = arith.negf %505 : vector<2x128xf32>
    %507 = math.exp %506 : vector<2x128xf32>
    %cst_155 = arith.constant 1.000000e+00 : f32
    %508 = vector.broadcast %cst_155 : f32 to vector<2x128xf32>
    %509 = arith.addf %508, %507 : vector<2x128xf32>
    %510 = arith.divf %508, %509 : vector<2x128xf32>
    %511 = vector.extract_strided_slice %499 {offsets = [0, 128], sizes = [2, 128], strides = [1, 1]} : vector<2x384xf32> to vector<2x128xf32>
    %512 = vector.extract_strided_slice %502 {offsets = [0, 128], sizes = [2, 128], strides = [1, 1]} : vector<2x384xf32> to vector<2x128xf32>
    %513 = arith.addf %511, %512 : vector<2x128xf32>
    %514 = arith.negf %513 : vector<2x128xf32>
    %515 = math.exp %514 : vector<2x128xf32>
    %cst_156 = arith.constant 1.000000e+00 : f32
    %516 = vector.broadcast %cst_156 : f32 to vector<2x128xf32>
    %517 = arith.addf %516, %515 : vector<2x128xf32>
    %518 = arith.divf %516, %517 : vector<2x128xf32>
    %519 = vector.extract_strided_slice %499 {offsets = [0, 256], sizes = [2, 128], strides = [1, 1]} : vector<2x384xf32> to vector<2x128xf32>
    %520 = vector.extract_strided_slice %502 {offsets = [0, 256], sizes = [2, 128], strides = [1, 1]} : vector<2x384xf32> to vector<2x128xf32>
    %521 = arith.mulf %510, %520 : vector<2x128xf32>
    %522 = arith.addf %519, %521 : vector<2x128xf32>
    %523 = math.tanh %522 : vector<2x128xf32>
    %cst_157 = arith.constant 1.000000e+00 : f32
    %524 = vector.broadcast %cst_157 : f32 to vector<2x128xf32>
    %525 = arith.subf %524, %518 : vector<2x128xf32>
    %526 = arith.mulf %525, %523 : vector<2x128xf32>
    %527 = arith.mulf %518, %495 : vector<2x128xf32>
    %528 = arith.addf %526, %527 : vector<2x128xf32>
    %529 = vector.shape_cast %528 : vector<2x128xf32> to vector<2x1x128xf32>
    %c0_158 = arith.constant 0 : index
    %c14_159 = arith.constant 14 : index
    %c0_160 = arith.constant 0 : index
    %530 = vector.load %arg12[%c0_158, %c14_159, %c0_160] : memref<2x16x128xf32, #tpu.memory_space<vmem>>, vector<2x1x128xf32>
    tpu.vector_store %arg12[%c0_158, %c14_159, %c0_160], %529 {strides = array<i32>} : memref<2x16x128xf32, #tpu.memory_space<vmem>>, vector<2x1x128xf32>,
    %c0_161 = arith.constant 0 : index
    %c15 = arith.constant 15 : index
    %c0_162 = arith.constant 0 : index
    %531 = vector.load %arg11[%c0_161, %c15, %c0_162] : memref<2x16x384xf32, #tpu.memory_space<vmem>>, vector<2x1x384xf32>
    %532 = vector.shape_cast %531 : vector<2x1x384xf32> to vector<2x384xf32>
    %cst_163 = arith.constant dense<0.000000e+00> : vector<2x384xf32>
    %533 = tpu.matmul %528, %33, %cst_163 {dimension_numbers = #tpu.dot_dimension_numbers<[1], [0], [0], [1], [0, 0, 1, 1], [], []>} : vector<2x128xf32>, vector<128x384xf32>, vector<2x384xf32> -> vector<2x384xf32>
    %534 = vector.broadcast %34 : vector<1x384xf32> to vector<2x384xf32>
    %535 = arith.addf %533, %534 : vector<2x384xf32>
    %536 = vector.extract_strided_slice %532 {offsets = [0, 0], sizes = [2, 128], strides = [1, 1]} : vector<2x384xf32> to vector<2x128xf32>
    %537 = vector.extract_strided_slice %535 {offsets = [0, 0], sizes = [2, 128], strides = [1, 1]} : vector<2x384xf32> to vector<2x128xf32>
    %538 = arith.addf %536, %537 : vector<2x128xf32>
    %539 = arith.negf %538 : vector<2x128xf32>
    %540 = math.exp %539 : vector<2x128xf32>
    %cst_164 = arith.constant 1.000000e+00 : f32
    %541 = vector.broadcast %cst_164 : f32 to vector<2x128xf32>
    %542 = arith.addf %541, %540 : vector<2x128xf32>
    %543 = arith.divf %541, %542 : vector<2x128xf32>
    %544 = vector.extract_strided_slice %532 {offsets = [0, 128], sizes = [2, 128], strides = [1, 1]} : vector<2x384xf32> to vector<2x128xf32>
    %545 = vector.extract_strided_slice %535 {offsets = [0, 128], sizes = [2, 128], strides = [1, 1]} : vector<2x384xf32> to vector<2x128xf32>
    %546 = arith.addf %544, %545 : vector<2x128xf32>
    %547 = arith.negf %546 : vector<2x128xf32>
    %548 = math.exp %547 : vector<2x128xf32>
    %cst_165 = arith.constant 1.000000e+00 : f32
    %549 = vector.broadcast %cst_165 : f32 to vector<2x128xf32>
    %550 = arith.addf %549, %548 : vector<2x128xf32>
    %551 = arith.divf %549, %550 : vector<2x128xf32>
    %552 = vector.extract_strided_slice %532 {offsets = [0, 256], sizes = [2, 128], strides = [1, 1]} : vector<2x384xf32> to vector<2x128xf32>
    %553 = vector.extract_strided_slice %535 {offsets = [0, 256], sizes = [2, 128], strides = [1, 1]} : vector<2x384xf32> to vector<2x128xf32>
    %554 = arith.mulf %543, %553 : vector<2x128xf32>
    %555 = arith.addf %552, %554 : vector<2x128xf32>
    %556 = math.tanh %555 : vector<2x128xf32>
    %cst_166 = arith.constant 1.000000e+00 : f32
    %557 = vector.broadcast %cst_166 : f32 to vector<2x128xf32>
    %558 = arith.subf %557, %551 : vector<2x128xf32>
    %559 = arith.mulf %558, %556 : vector<2x128xf32>
    %560 = arith.mulf %551, %528 : vector<2x128xf32>
    %561 = arith.addf %559, %560 : vector<2x128xf32>
    %562 = vector.shape_cast %561 : vector<2x128xf32> to vector<2x1x128xf32>
    %c0_167 = arith.constant 0 : index
    %c15_168 = arith.constant 15 : index
    %c0_169 = arith.constant 0 : index
    %563 = vector.load %arg12[%c0_167, %c15_168, %c0_169] : memref<2x16x128xf32, #tpu.memory_space<vmem>>, vector<2x1x128xf32>
    tpu.vector_store %arg12[%c0_167, %c15_168, %c0_169], %562 {strides = array<i32>} : memref<2x16x128xf32, #tpu.memory_space<vmem>>, vector<2x1x128xf32>,
    %c0_170 = arith.constant 0 : index
    %c0_171 = arith.constant 0 : index
    %c0_172 = arith.constant 0 : index
    %564 = vector.load %arg12[%c0_170, %c0_171, %c0_172] : memref<2x16x128xf32, #tpu.memory_space<vmem>>, vector<2x16x128xf32>
    %565 = vector.shape_cast %564 : vector<2x16x128xf32> to vector<32x128xf32>
    %c0_173 = arith.constant 0 : index
    %c0_174 = arith.constant 0 : index
    %566 = vector.load %arg8[%c0_173, %c0_174] : memref<128x128xf32, #tpu.memory_space<vmem>>, vector<128x128xf32>
    %cst_175 = arith.constant dense<0.000000e+00> : vector<32x128xf32>
    %567 = tpu.matmul %565, %566, %cst_175 {dimension_numbers = #tpu.dot_dimension_numbers<[1], [0], [0], [1], [0, 0, 1, 1], [], []>} : vector<32x128xf32>, vector<128x128xf32>, vector<32x128xf32> -> vector<32x128xf32>
    %c0_176 = arith.constant 0 : index
    %c0_177 = arith.constant 0 : index
    %568 = vector.load %arg9[%c0_176, %c0_177] : memref<1x128xf32, #tpu.memory_space<vmem>>, vector<1x128xf32>
    %569 = vector.broadcast %568 : vector<1x128xf32> to vector<32x128xf32>
    %570 = arith.addf %567, %569 : vector<32x128xf32>
    %571 = vector.shape_cast %570 : vector<32x128xf32> to vector<2x16x128xf32>
    %c0_178 = arith.constant 0 : index
    %c0_179 = arith.constant 0 : index
    %c0_180 = arith.constant 0 : index
    %572 = vector.load %arg10[%c0_178, %c0_179, %c0_180] : memref<2x16x128xf32, #tpu.memory_space<vmem>>, vector<2x16x128xf32>
    tpu.vector_store %arg10[%c0_178, %c0_179, %c0_180], %571 {strides = array<i32>} : memref<2x16x128xf32, #tpu.memory_space<vmem>>, vector<2x16x128xf32>,
    return
  }
  func.func @transform_0(%arg0: i32) -> (i32, i32, i32) {
    %c0_i32 = arith.constant 0 : i32
    %c0_i32_0 = arith.constant 0 : i32
    %c0_i32_1 = arith.constant 0 : i32
    %c0_i32_2 = arith.constant 0 : i32
    return %c0_i32, %c0_i32_0, %c0_i32_1 : i32, i32, i32
  }
  func.func @transform_1(%arg0: i32) -> (i32, i32, i32) {
    %c0_i32 = arith.constant 0 : i32
    %c0_i32_0 = arith.constant 0 : i32
    %c0_i32_1 = arith.constant 0 : i32
    %c0_i32_2 = arith.constant 0 : i32
    return %c0_i32, %c0_i32_0, %c0_i32_1 : i32, i32, i32
  }
  func.func @transform_2(%arg0: i32) -> (i32, i32, i32) {
    %c0_i32 = arith.constant 0 : i32
    %c0_i32_0 = arith.constant 0 : i32
    %c0_i32_1 = arith.constant 0 : i32
    %c0_i32_2 = arith.constant 0 : i32
    return %c0_i32, %c0_i32_0, %c0_i32_1 : i32, i32, i32
  }
  func.func @transform_3(%arg0: i32) -> (i32, i32) {
    %c0_i32 = arith.constant 0 : i32
    %c0_i32_0 = arith.constant 0 : i32
    %c0_i32_1 = arith.constant 0 : i32
    return %c0_i32, %c0_i32_0 : i32, i32
  }
  func.func @transform_4(%arg0: i32) -> (i32, i32) {
    %c0_i32 = arith.constant 0 : i32
    %c0_i32_0 = arith.constant 0 : i32
    %c0_i32_1 = arith.constant 0 : i32
    return %c0_i32, %c0_i32_0 : i32, i32
  }
  func.func @transform_5(%arg0: i32) -> (i32, i32) {
    %c0_i32 = arith.constant 0 : i32
    %c0_i32_0 = arith.constant 0 : i32
    %c0_i32_1 = arith.constant 0 : i32
    return %c0_i32, %c0_i32_0 : i32, i32
  }
  func.func @transform_6(%arg0: i32) -> (i32, i32) {
    %c0_i32 = arith.constant 0 : i32
    %c0_i32_0 = arith.constant 0 : i32
    %c0_i32_1 = arith.constant 0 : i32
    return %c0_i32, %c0_i32_0 : i32, i32
  }
  func.func @transform_7(%arg0: i32) -> (i32, i32) {
    %c0_i32 = arith.constant 0 : i32
    %c0_i32_0 = arith.constant 0 : i32
    %c0_i32_1 = arith.constant 0 : i32
    return %c0_i32, %c0_i32_0 : i32, i32
  }
  func.func @transform_8(%arg0: i32) -> (i32, i32) {
    %c0_i32 = arith.constant 0 : i32
    %c0_i32_0 = arith.constant 0 : i32
    %c0_i32_1 = arith.constant 0 : i32
    return %c0_i32, %c0_i32_0 : i32, i32
  }
  func.func @transform_9(%arg0: i32) -> (i32, i32, i32) {
    %c0_i32 = arith.constant 0 : i32
    %c0_i32_0 = arith.constant 0 : i32
    %c0_i32_1 = arith.constant 0 : i32
    %c0_i32_2 = arith.constant 0 : i32
    return %c0_i32, %c0_i32_0, %c0_i32_1 : i32, i32, i32
  }
}

</mosaic_0001>

<llo_original>
// kernel: z_encoder_forward.2
$region0: #{z_encoder_forward.2}
  #allocation0 [shape = 'u32[]', space=smem, size = 0x4, offset = 0x4, fixed_abs, tag = 'smem constant byte address 0x4 - core index']
  #allocation1 [shape = 'u32[144,128]{1,0:T(1,128)}', space=vmem, size = 0x12000, scoped, tag = 'internal scratch']
  %s0 = inlined_call_operand.vmem [shape: f32[40,256], index: 0, kind: input, shape index: {}]
  %s1 = inlined_call_operand.vmem [shape: f32[256,512], index: 1, kind: input, shape index: {}]
  %s2 = inlined_call_operand.vmem [shape: f32[256,128], index: 2, kind: input, shape index: {}]
  %s3 = inlined_call_operand.vmem [shape: f32[128,128], index: 3, kind: input, shape index: {}]
  %s4 = inlined_call_operand.vmem [shape: f32[40,128], index: 4, kind: output, shape index: {}]
  %s5 = sld [smem:[#allocation0]]
  $region26: #{z_encoder_forward.2} parent=0
    _
  %s7 = ssub.s32 1, %s5
  %s8 = scalar_select 0, %s7, %s5
  // Predicated region
  $region2: #{z_encoder_forward.2} parent=0 // pred_check
    _
  $region3: #{z_encoder_forward.2} parent=0 // pred_check_branch
    %10 = sbr.rel (0) target = $region5
  $region4: #{z_encoder_forward.2} parent=0 // pred_region
    _
  $region5: #{z_encoder_forward.2} parent=0 // pred_fallthru
    _
  // Predicated region
  $region6: #{z_encoder_forward.2} parent=0 // pred_check
    _
  $region7: #{z_encoder_forward.2} parent=0 // pred_check_branch
    %12 = sbr.rel (0) target = $region9
  $region8: #{z_encoder_forward.2} parent=0 // pred_region
    _
  $region9: #{z_encoder_forward.2} parent=0 // pred_fallthru
    _
  // Predicated region
  $region10: #{z_encoder_forward.2} parent=0 // pred_check
    _
  $region11: #{z_encoder_forward.2} parent=0 // pred_check_branch
    %14 = sbr.rel (0) target = $region13
  $region12: #{z_encoder_forward.2} parent=0 // pred_region
    _
  $region13: #{z_encoder_forward.2} parent=0 // pred_fallthru
    _
  // Predicated region
  $region14: #{z_encoder_forward.2} parent=0 // pred_check
    _
  $region15: #{z_encoder_forward.2} parent=0 // pred_check_branch
    %16 = sbr.rel (0) target = $region17
  $region16: #{z_encoder_forward.2} parent=0 // pred_region
    _
  $region17: #{z_encoder_forward.2} parent=0 // pred_fallthru
    _
  %v17 = vld [vmem:[%s0] sm:$0xff]
  %v18 = vld [vmem:[%s0 + $0x8] sm:$0xff]
  %v19 = vld [vmem:[%s0 + $0x10] sm:$0xff]
  %v20 = vld [vmem:[%s0 + $0x18] sm:$0xff]
  %v21 = vld [vmem:[%s0 + $0x20] sm:$0xff]
  %v22 = vld [vmem:[%s0 + $0x28] sm:$0xff]
  %v23 = vld [vmem:[%s0 + $0x30] sm:$0xff]
  %v24 = vld [vmem:[%s0 + $0x38] sm:$0xff]
  %v25 = vld [vmem:[%s0 + $0x40] sm:$0xff]
  %v26 = vld [vmem:[%s0 + $0x48] sm:$0xff]
  %v27 = vld [vmem:[%s1] sm:$0xff]
  %v28 = vld [vmem:[%s1 + $0x8] sm:$0xff]
  %v29 = vld [vmem:[%s1 + $0x10] sm:$0xff]
  %v30 = vld [vmem:[%s1 + $0x18] sm:$0xff]
  %v31 = vld [vmem:[%s1 + $0x20] sm:$0xff]
  %v32 = vld [vmem:[%s1 + $0x28] sm:$0xff]
  %v33 = vld [vmem:[%s1 + $0x30] sm:$0xff]
  %v34 = vld [vmem:[%s1 + $0x38] sm:$0xff]
  %v35 = vld [vmem:[%s1 + $0x40] sm:$0xff]
  %v36 = vld [vmem:[%s1 + $0x48] sm:$0xff]
  %v37 = vld [vmem:[%s1 + $0x50] sm:$0xff]
  %v38 = vld [vmem:[%s1 + $0x58] sm:$0xff]
  %v39 = vld [vmem:[%s1 + $0x60] sm:$0xff]
  %v40 = vld [vmem:[%s1 + $0x68] sm:$0xff]
  %v41 = vld [vmem:[%s1 + $0x70] sm:$0xff]
  %v42 = vld [vmem:[%s1 + $0x78] sm:$0xff]
  %v43 = vld [vmem:[%s1 + $0x80] sm:$0xff]
  %v44 = vld [vmem:[%s1 + $0x88] sm:$0xff]
  %v45 = vld [vmem:[%s1 + $0x90] sm:$0xff]
  %v46 = vld [vmem:[%s1 + $0x98] sm:$0xff]
  %v47 = vld [vmem:[%s1 + $0xa0] sm:$0xff]
  %v48 = vld [vmem:[%s1 + $0xa8] sm:$0xff]
  %v49 = vld [vmem:[%s1 + $0xb0] sm:$0xff]
  %v50 = vld [vmem:[%s1 + $0xb8] sm:$0xff]
  %v51 = vld [vmem:[%s1 + $0xc0] sm:$0xff]
  %v52 = vld [vmem:[%s1 + $0xc8] sm:$0xff]
  %v53 = vld [vmem:[%s1 + $0xd0] sm:$0xff]
  %v54 = vld [vmem:[%s1 + $0xd8] sm:$0xff]
  %v55 = vld [vmem:[%s1 + $0xe0] sm:$0xff]
  %v56 = vld [vmem:[%s1 + $0xe8] sm:$0xff]
  %v57 = vld [vmem:[%s1 + $0xf0] sm:$0xff]
  %v58 = vld [vmem:[%s1 + $0xf8] sm:$0xff]
  %v59 = vld [vmem:[%s1 + $0x100] sm:$0xff]
  %v60 = vld [vmem:[%s1 + $0x108] sm:$0xff]
  %v61 = vld [vmem:[%s1 + $0x110] sm:$0xff]
  %v62 = vld [vmem:[%s1 + $0x118] sm:$0xff]
  %v63 = vld [vmem:[%s1 + $0x120] sm:$0xff]
  %v64 = vld [vmem:[%s1 + $0x128] sm:$0xff]
  %v65 = vld [vmem:[%s1 + $0x130] sm:$0xff]
  %v66 = vld [vmem:[%s1 + $0x138] sm:$0xff]
  %v67 = vld [vmem:[%s1 + $0x140] sm:$0xff]
  %v68 = vld [vmem:[%s1 + $0x148] sm:$0xff]
  %v69 = vld [vmem:[%s1 + $0x150] sm:$0xff]
  %v70 = vld [vmem:[%s1 + $0x158] sm:$0xff]
  %v71 = vld [vmem:[%s1 + $0x160] sm:$0xff]
  %v72 = vld [vmem:[%s1 + $0x168] sm:$0xff]
  %v73 = vld [vmem:[%s1 + $0x170] sm:$0xff]
  %v74 = vld [vmem:[%s1 + $0x178] sm:$0xff]
  %v75 = vld [vmem:[%s1 + $0x180] sm:$0xff]
  %v76 = vld [vmem:[%s1 + $0x188] sm:$0xff]
  %v77 = vld [vmem:[%s1 + $0x190] sm:$0xff]
  %v78 = vld [vmem:[%s1 + $0x198] sm:$0xff]
  %v79 = vld [vmem:[%s1 + $0x1a0] sm:$0xff]
  %v80 = vld [vmem:[%s1 + $0x1a8] sm:$0xff]
  %v81 = vld [vmem:[%s1 + $0x1b0] sm:$0xff]
  %v82 = vld [vmem:[%s1 + $0x1b8] sm:$0xff]
  %v83 = vld [vmem:[%s1 + $0x1c0] sm:$0xff]
  %v84 = vld [vmem:[%s1 + $0x1c8] sm:$0xff]
  %v85 = vld [vmem:[%s1 + $0x1d0] sm:$0xff]
  %v86 = vld [vmem:[%s1 + $0x1d8] sm:$0xff]
  %v87 = vld [vmem:[%s1 + $0x1e0] sm:$0xff]
  %v88 = vld [vmem:[%s1 + $0x1e8] sm:$0xff]
  %v89 = vld [vmem:[%s1 + $0x1f0] sm:$0xff]
  %v90 = vld [vmem:[%s1 + $0x1f8] sm:$0xff]
  %v91 = vld [vmem:[%s1 + $0x200] sm:$0xff]
  %v92 = vld [vmem:[%s1 + $0x208] sm:$0xff]
  %v93 = vld [vmem:[%s1 + $0x210] sm:$0xff]
  %v94 = vld [vmem:[%s1 + $0x218] sm:$0xff]
  %v95 = vld [vmem:[%s1 + $0x220] sm:$0xff]
  %v96 = vld [vmem:[%s1 + $0x228] sm:$0xff]
  %v97 = vld [vmem:[%s1 + $0x230] sm:$0xff]
  %v98 = vld [vmem:[%s1 + $0x238] sm:$0xff]
  %v99 = vld [vmem:[%s1 + $0x240] sm:$0xff]
  %v100 = vld [vmem:[%s1 + $0x248] sm:$0xff]
  %v101 = vld [vmem:[%s1 + $0x250] sm:$0xff]
  %v102 = vld [vmem:[%s1 + $0x258] sm:$0xff]
  %v103 = vld [vmem:[%s1 + $0x260] sm:$0xff]
  %v104 = vld [vmem:[%s1 + $0x268] sm:$0xff]
  %v105 = vld [vmem:[%s1 + $0x270] sm:$0xff]
  %v106 = vld [vmem:[%s1 + $0x278] sm:$0xff]
  %v107 = vld [vmem:[%s1 + $0x280] sm:$0xff]
  %v108 = vld [vmem:[%s1 + $0x288] sm:$0xff]
  %v109 = vld [vmem:[%s1 + $0x290] sm:$0xff]
  %v110 = vld [vmem:[%s1 + $0x298] sm:$0xff]
  %v111 = vld [vmem:[%s1 + $0x2a0] sm:$0xff]
  %v112 = vld [vmem:[%s1 + $0x2a8] sm:$0xff]
  %v113 = vld [vmem:[%s1 + $0x2b0] sm:$0xff]
  %v114 = vld [vmem:[%s1 + $0x2b8] sm:$0xff]
  %v115 = vld [vmem:[%s1 + $0x2c0] sm:$0xff]
  %v116 = vld [vmem:[%s1 + $0x2c8] sm:$0xff]
  %v117 = vld [vmem:[%s1 + $0x2d0] sm:$0xff]
  %v118 = vld [vmem:[%s1 + $0x2d8] sm:$0xff]
  %v119 = vld [vmem:[%s1 + $0x2e0] sm:$0xff]
  %v120 = vld [vmem:[%s1 + $0x2e8] sm:$0xff]
  %v121 = vld [vmem:[%s1 + $0x2f0] sm:$0xff]
  %v122 = vld [vmem:[%s1 + $0x2f8] sm:$0xff]
  %v123 = vld [vmem:[%s1 + $0x300] sm:$0xff]
  %v124 = vld [vmem:[%s1 + $0x308] sm:$0xff]
  %v125 = vld [vmem:[%s1 + $0x310] sm:$0xff]
  %v126 = vld [vmem:[%s1 + $0x318] sm:$0xff]
  %v127 = vld [vmem:[%s1 + $0x320] sm:$0xff]
  %v128 = vld [vmem:[%s1 + $0x328] sm:$0xff]
  %v129 = vld [vmem:[%s1 + $0x330] sm:$0xff]
  %v130 = vld [vmem:[%s1 + $0x338] sm:$0xff]
  %v131 = vld [vmem:[%s1 + $0x340] sm:$0xff]
  %v132 = vld [vmem:[%s1 + $0x348] sm:$0xff]
  %v133 = vld [vmem:[%s1 + $0x350] sm:$0xff]
  %v134 = vld [vmem:[%s1 + $0x358] sm:$0xff]
  %v135 = vld [vmem:[%s1 + $0x360] sm:$0xff]
  %v136 = vld [vmem:[%s1 + $0x368] sm:$0xff]
  %v137 = vld [vmem:[%s1 + $0x370] sm:$0xff]
  %v138 = vld [vmem:[%s1 + $0x378] sm:$0xff]
  %v139 = vld [vmem:[%s1 + $0x380] sm:$0xff]
  %v140 = vld [vmem:[%s1 + $0x388] sm:$0xff]
  %v141 = vld [vmem:[%s1 + $0x390] sm:$0xff]
  %v142 = vld [vmem:[%s1 + $0x398] sm:$0xff]
  %v143 = vld [vmem:[%s1 + $0x3a0] sm:$0xff]
  %v144 = vld [vmem:[%s1 + $0x3a8] sm:$0xff]
  %v145 = vld [vmem:[%s1 + $0x3b0] sm:$0xff]
  %v146 = vld [vmem:[%s1 + $0x3b8] sm:$0xff]
  %v147 = vld [vmem:[%s1 + $0x3c0] sm:$0xff]
  %v148 = vld [vmem:[%s1 + $0x3c8] sm:$0xff]
  %v149 = vld [vmem:[%s1 + $0x3d0] sm:$0xff]
  %v150 = vld [vmem:[%s1 + $0x3d8] sm:$0xff]
  %v151 = vld [vmem:[%s1 + $0x3e0] sm:$0xff]
  %v152 = vld [vmem:[%s1 + $0x3e8] sm:$0xff]
  %v153 = vld [vmem:[%s1 + $0x3f0] sm:$0xff]
  %v154 = vld [vmem:[%s1 + $0x3f8] sm:$0xff]
  %155 = vmatprep.subr.mxu0 %v28
  %156 = vmatpush1.msra.mxu0 %v27
  %157 = vmatprep.subr.mxu0 %v32
  %158 = vmatpush1.msra.mxu0 %v31
  %159 = vmatprep.subr.mxu0 %v36
  %160 = vmatpush1.msra.mxu0 %v35
  %161 = vmatprep.subr.mxu0 %v40
  %162 = vmatpush1.msra.mxu0 %v39
  %163 = vmatprep.subr.mxu0 %v44
  %164 = vmatpush1.msra.mxu0 %v43
  %165 = vmatprep.subr.mxu0 %v48
  %166 = vmatpush1.msra.mxu0 %v47
  %167 = vmatprep.subr.mxu0 %v52
  %168 = vmatpush1.msra.mxu0 %v51
  %169 = vmatprep.subr.mxu0 %v56
  %170 = vmatpush1.msra.mxu0 %v55
  %171 = vmatprep.subr.mxu0 %v60
  %172 = vmatpush1.msra.mxu0 %v59
  %173 = vmatprep.subr.mxu0 %v64
  %174 = vmatpush1.msra.mxu0 %v63
  %175 = vmatprep.subr.mxu0 %v68
  %176 = vmatpush1.msra.mxu0 %v67
  %177 = vmatprep.subr.mxu0 %v72
  %178 = vmatpush1.msra.mxu0 %v71
  %179 = vmatprep.subr.mxu0 %v76
  %180 = vmatpush1.msra.mxu0 %v75
  %181 = vmatprep.subr.mxu0 %v80
  %182 = vmatpush1.msra.mxu0 %v79
  %183 = vmatprep.subr.mxu0 %v84
  %184 = vmatpush1.msra.mxu0 %v83
  %185 = vmatprep.subr.mxu0 %v88
  %186 = vmatpush1.msra.mxu0 %v87
  %187 = vmatprep.subr.mxu0 %v92
  %188 = vmatpush1.msra.mxu0 %v91
  %189 = vmatprep.subr.mxu0 %v96
  %190 = vmatpush1.msra.mxu0 %v95
  %191 = vmatprep.subr.mxu0 %v100
  %192 = vmatpush1.msra.mxu0 %v99
  %193 = vmatprep.subr.mxu0 %v104
  %194 = vmatpush1.msra.mxu0 %v103
  %195 = vmatprep.subr.mxu0 %v108
  %196 = vmatpush1.msra.mxu0 %v107
  %197 = vmatprep.subr.mxu0 %v112
  %198 = vmatpush1.msra.mxu0 %v111
  %199 = vmatprep.subr.mxu0 %v116
  %200 = vmatpush1.msra.mxu0 %v115
  %201 = vmatprep.subr.mxu0 %v120
  %202 = vmatpush1.msra.mxu0 %v119
  %203 = vmatprep.subr.mxu0 %v124
  %204 = vmatpush1.msra.mxu0 %v123
  %205 = vmatprep.subr.mxu0 %v128
  %206 = vmatpush1.msra.mxu0 %v127
  %207 = vmatprep.subr.mxu0 %v132
  %208 = vmatpush1.msra.mxu0 %v131
  %209 = vmatprep.subr.mxu0 %v136
  %210 = vmatpush1.msra.mxu0 %v135
  %211 = vmatprep.subr.mxu0 %v140
  %212 = vmatpush1.msra.mxu0 %v139
  %213 = vmatprep.subr.mxu0 %v144
  %214 = vmatpush1.msra.mxu0 %v143
  %215 = vmatprep.subr.mxu0 %v148
  %216 = vmatpush1.msra.mxu0 %v147
  %217 = vmatprep.subr.mxu0 %v152
  %218 = vmatpush1.msra.mxu0 %v151
  %219 = vmatprep.mubr.f32.mxu0 %v18
  %220 = vmatmul.mubr.f32.gmra.mrb[0].mxu0 %v17
  %v221 = vpop.f32.mrb[0].mxu0
  %v222 = vadd.f32 0.0, %v221
  %v223 = vpop.f32.mrb[0].mxu0
  %v224 = vadd.f32 0.0, %v223
  %225 = vmatprep.mubr.f32.mxu0 %v20
  %226 = vmatmul.mubr.f32.gmra.mrb[0].mxu0 %v19
  %v227 = vpop.f32.mrb[0].mxu0
  %v228 = vadd.f32 0.0, %v227
  %v229 = vpop.f32.mrb[0].mxu0
  %v230 = vadd.f32 0.0, %v229
  %231 = vmatprep.mubr.f32.mxu0 %v22
  %232 = vmatmul.mubr.f32.gmra.mrb[0].mxu0 %v21
  %v233 = vpop.f32.mrb[0].mxu0
  %v234 = vadd.f32 0.0, %v233
  %v235 = vpop.f32.mrb[0].mxu0
  %v236 = vadd.f32 0.0, %v235
  %237 = vmatprep.mubr.f32.mxu0 %v24
  %238 = vmatmul.mubr.f32.gmra.mrb[0].mxu0 %v23
  %v239 = vpop.f32.mrb[0].mxu0
  %v240 = vadd.f32 0.0, %v239
  %v241 = vpop.f32.mrb[0].mxu0
  %v242 = vadd.f32 0.0, %v241
  %243 = vmatprep.mubr.f32.mxu0 %v26
  %244 = vmatmul.mubr.f32.gmra.mrb[0].mxu0 %v25
  %v245 = vpop.f32.mrb[0].mxu0
  %v246 = vadd.f32 0.0, %v245
  %v247 = vpop.f32.mrb[0].mxu0
  %v248 = vadd.f32 0.0, %v247
  %249 = vdwg.mxu0
  %250 = vmatprep.subr.mxu0 %v30
  %251 = vmatpush1.msra.mxu0 %v29
  %252 = vmatprep.subr.mxu0 %v34
  %253 = vmatpush1.msra.mxu0 %v33
  %254 = vmatprep.subr.mxu0 %v38
  %255 = vmatpush1.msra.mxu0 %v37
  %256 = vmatprep.subr.mxu0 %v42
  %257 = vmatpush1.msra.mxu0 %v41
  %258 = vmatprep.subr.mxu0 %v46
  %259 = vmatpush1.msra.mxu0 %v45
  %260 = vmatprep.subr.mxu0 %v50
  %261 = vmatpush1.msra.mxu0 %v49
  %262 = vmatprep.subr.mxu0 %v54
  %263 = vmatpush1.msra.mxu0 %v53
  %264 = vmatprep.subr.mxu0 %v58
  %265 = vmatpush1.msra.mxu0 %v57
  %266 = vmatprep.subr.mxu0 %v62
  %267 = vmatpush1.msra.mxu0 %v61
  %268 = vmatprep.subr.mxu0 %v66
  %269 = vmatpush1.msra.mxu0 %v65
  %270 = vmatprep.subr.mxu0 %v70
  %271 = vmatpush1.msra.mxu0 %v69
  %272 = vmatprep.subr.mxu0 %v74
  %273 = vmatpush1.msra.mxu0 %v73
  %274 = vmatprep.subr.mxu0 %v78
  %275 = vmatpush1.msra.mxu0 %v77
  %276 = vmatprep.subr.mxu0 %v82
  %277 = vmatpush1.msra.mxu0 %v81
  %278 = vmatprep.subr.mxu0 %v86
  %279 = vmatpush1.msra.mxu0 %v85
  %280 = vmatprep.subr.mxu0 %v90
  %281 = vmatpush1.msra.mxu0 %v89
  %282 = vmatprep.subr.mxu0 %v94
  %283 = vmatpush1.msra.mxu0 %v93
  %284 = vmatprep.subr.mxu0 %v98
  %285 = vmatpush1.msra.mxu0 %v97
  %286 = vmatprep.subr.mxu0 %v102
  %287 = vmatpush1.msra.mxu0 %v101
  %288 = vmatprep.subr.mxu0 %v106
  %289 = vmatpush1.msra.mxu0 %v105
  %290 = vmatprep.subr.mxu0 %v110
  %291 = vmatpush1.msra.mxu0 %v109
  %292 = vmatprep.subr.mxu0 %v114
  %293 = vmatpush1.msra.mxu0 %v113
  %294 = vmatprep.subr.mxu0 %v118
  %295 = vmatpush1.msra.mxu0 %v117
  %296 = vmatprep.subr.mxu0 %v122
  %297 = vmatpush1.msra.mxu0 %v121
  %298 = vmatprep.subr.mxu0 %v126
  %299 = vmatpush1.msra.mxu0 %v125
  %300 = vmatprep.subr.mxu0 %v130
  %301 = vmatpush1.msra.mxu0 %v129
  %302 = vmatprep.subr.mxu0 %v134
  %303 = vmatpush1.msra.mxu0 %v133
  %304 = vmatprep.subr.mxu0 %v138
  %305 = vmatpush1.msra.mxu0 %v137
  %306 = vmatprep.subr.mxu0 %v142
  %307 = vmatpush1.msra.mxu0 %v141
  %308 = vmatprep.subr.mxu0 %v146
  %309 = vmatpush1.msra.mxu0 %v145
  %310 = vmatprep.subr.mxu0 %v150
  %311 = vmatpush1.msra.mxu0 %v149
  %312 = vmatprep.subr.mxu0 %v154
  %313 = vmatpush1.msra.mxu0 %v153
  %314 = vmatprep.mubr.f32.mxu0 %v18
  %315 = vmatmul.mubr.f32.gmra.mrb[0].mxu0 %v17
  %v316 = vpop.f32.mrb[0].mxu0
  %v317 = vadd.f32 0.0, %v316
  %v318 = vpop.f32.mrb[0].mxu0
  %v319 = vadd.f32 0.0, %v318
  %320 = vmatprep.mubr.f32.mxu0 %v20
  %321 = vmatmul.mubr.f32.gmra.mrb[0].mxu0 %v19
  %v322 = vpop.f32.mrb[0].mxu0
  %v323 = vadd.f32 0.0, %v322
  %v324 = vpop.f32.mrb[0].mxu0
  %v325 = vadd.f32 0.0, %v324
  %326 = vmatprep.mubr.f32.mxu0 %v22
  %327 = vmatmul.mubr.f32.gmra.mrb[0].mxu0 %v21
  %v328 = vpop.f32.mrb[0].mxu0
  %v329 = vadd.f32 0.0, %v328
  %v330 = vpop.f32.mrb[0].mxu0
  %v331 = vadd.f32 0.0, %v330
  %332 = vmatprep.mubr.f32.mxu0 %v24
  %333 = vmatmul.mubr.f32.gmra.mrb[0].mxu0 %v23
  %v334 = vpop.f32.mrb[0].mxu0
  %v335 = vadd.f32 0.0, %v334
  %v336 = vpop.f32.mrb[0].mxu0
  %v337 = vadd.f32 0.0, %v336
  %338 = vmatprep.mubr.f32.mxu0 %v26
  %339 = vmatmul.mubr.f32.gmra.mrb[0].mxu0 %v25
  %v340 = vpop.f32.mrb[0].mxu0
  %v341 = vadd.f32 0.0, %v340
  %v342 = vpop.f32.mrb[0].mxu0
  %v343 = vadd.f32 0.0, %v342
  %344 = vdwg.mxu0
  %v345 = vmul.f32 %v222, %v222
  %v346 = vmul.f32 %v224, %v224
  %v347 = vmul.f32 %v228, %v228
  %v348 = vmul.f32 %v230, %v230
  %v349 = vmul.f32 %v234, %v234
  %v350 = vmul.f32 %v236, %v236
  %v351 = vmul.f32 %v240, %v240
  %v352 = vmul.f32 %v242, %v242
  %v353 = vmul.f32 %v246, %v246
  %v354 = vmul.f32 %v248, %v248
  %v355 = vmul.f32 %v317, %v317
  %v356 = vmul.f32 %v319, %v319
  %v357 = vmul.f32 %v323, %v323
  %v358 = vmul.f32 %v325, %v325
  %v359 = vmul.f32 %v329, %v329
  %v360 = vmul.f32 %v331, %v331
  %v361 = vmul.f32 %v335, %v335
  %v362 = vmul.f32 %v337, %v337
  %v363 = vmul.f32 %v341, %v341
  %v364 = vmul.f32 %v343, %v343
  %v365 = vadd.f32 %v345, %v355
  %v366 = vadd.f32 %v346, %v356
  %v367 = vadd.f32 %v347, %v357
  %v368 = vadd.f32 %v348, %v358
  %v369 = vadd.f32 %v349, %v359
  %v370 = vadd.f32 %v350, %v360
  %v371 = vadd.f32 %v351, %v361
  %v372 = vadd.f32 %v352, %v362
  %v373 = vadd.f32 %v353, %v363
  %v374 = vadd.f32 %v354, %v364
  %v375 = vld [vmem:[%s2] sm:$0xff]
  %v376 = vld [vmem:[%s2 + $0x8] sm:$0xff]
  %v377 = vld [vmem:[%s2 + $0x10] sm:$0xff]
  %v378 = vld [vmem:[%s2 + $0x18] sm:$0xff]
  %v379 = vld [vmem:[%s2 + $0x20] sm:$0xff]
  %v380 = vld [vmem:[%s2 + $0x28] sm:$0xff]
  %v381 = vld [vmem:[%s2 + $0x30] sm:$0xff]
  %v382 = vld [vmem:[%s2 + $0x38] sm:$0xff]
  %v383 = vld [vmem:[%s2 + $0x40] sm:$0xff]
  %v384 = vld [vmem:[%s2 + $0x48] sm:$0xff]
  %v385 = vld [vmem:[%s2 + $0x50] sm:$0xff]
  %v386 = vld [vmem:[%s2 + $0x58] sm:$0xff]
  %v387 = vld [vmem:[%s2 + $0x60] sm:$0xff]
  %v388 = vld [vmem:[%s2 + $0x68] sm:$0xff]
  %v389 = vld [vmem:[%s2 + $0x70] sm:$0xff]
  %v390 = vld [vmem:[%s2 + $0x78] sm:$0xff]
  %v391 = vld [vmem:[%s2 + $0x80] sm:$0xff]
  %v392 = vld [vmem:[%s2 + $0x88] sm:$0xff]
  %v393 = vld [vmem:[%s2 + $0x90] sm:$0xff]
  %v394 = vld [vmem:[%s2 + $0x98] sm:$0xff]
  %v395 = vld [vmem:[%s2 + $0xa0] sm:$0xff]
  %v396 = vld [vmem:[%s2 + $0xa8] sm:$0xff]
  %v397 = vld [vmem:[%s2 + $0xb0] sm:$0xff]
  %v398 = vld [vmem:[%s2 + $0xb8] sm:$0xff]
  %v399 = vld [vmem:[%s2 + $0xc0] sm:$0xff]
  %v400 = vld [vmem:[%s2 + $0xc8] sm:$0xff]
  %v401 = vld [vmem:[%s2 + $0xd0] sm:$0xff]
  %v402 = vld [vmem:[%s2 + $0xd8] sm:$0xff]
  %v403 = vld [vmem:[%s2 + $0xe0] sm:$0xff]
  %v404 = vld [vmem:[%s2 + $0xe8] sm:$0xff]
  %v405 = vld [vmem:[%s2 + $0xf0] sm:$0xff]
  %v406 = vld [vmem:[%s2 + $0xf8] sm:$0xff]
  %407 = vmatprep.subr.mxu0 0.0
  %408 = vmatpush1.msra.mxu0 %v375
  %409 = vmatprep.subr.mxu0 0.0
  %410 = vmatpush1.msra.mxu0 %v376
  %411 = vmatprep.subr.mxu0 0.0
  %412 = vmatpush1.msra.mxu0 %v377
  %413 = vmatprep.subr.mxu0 0.0
  %414 = vmatpush1.msra.mxu0 %v378
  %415 = vmatprep.subr.mxu0 0.0
  %416 = vmatpush1.msra.mxu0 %v379
  %417 = vmatprep.subr.mxu0 0.0
  %418 = vmatpush1.msra.mxu0 %v380
  %419 = vmatprep.subr.mxu0 0.0
  %420 = vmatpush1.msra.mxu0 %v381
  %421 = vmatprep.subr.mxu0 0.0
  %422 = vmatpush1.msra.mxu0 %v382
  %423 = vmatprep.subr.mxu0 0.0
  %424 = vmatpush1.msra.mxu0 %v383
  %425 = vmatprep.subr.mxu0 0.0
  %426 = vmatpush1.msra.mxu0 %v384
  %427 = vmatprep.subr.mxu0 0.0
  %428 = vmatpush1.msra.mxu0 %v385
  %429 = vmatprep.subr.mxu0 0.0
  %430 = vmatpush1.msra.mxu0 %v386
  %431 = vmatprep.subr.mxu0 0.0
  %432 = vmatpush1.msra.mxu0 %v387
  %433 = vmatprep.subr.mxu0 0.0
  %434 = vmatpush1.msra.mxu0 %v388
  %435 = vmatprep.subr.mxu0 0.0
  %436 = vmatpush1.msra.mxu0 %v389
  %437 = vmatprep.subr.mxu0 0.0
  %438 = vmatpush1.msra.mxu0 %v390
  %439 = vmatprep.subr.mxu0 0.0
  %440 = vmatpush1.msra.mxu0 %v391
  %441 = vmatprep.subr.mxu0 0.0
  %442 = vmatpush1.msra.mxu0 %v392
  %443 = vmatprep.subr.mxu0 0.0
  %444 = vmatpush1.msra.mxu0 %v393
  %445 = vmatprep.subr.mxu0 0.0
  %446 = vmatpush1.msra.mxu0 %v394
  %447 = vmatprep.subr.mxu0 0.0
  %448 = vmatpush1.msra.mxu0 %v395
  %449 = vmatprep.subr.mxu0 0.0
  %450 = vmatpush1.msra.mxu0 %v396
  %451 = vmatprep.subr.mxu0 0.0
  %452 = vmatpush1.msra.mxu0 %v397
  %453 = vmatprep.subr.mxu0 0.0
  %454 = vmatpush1.msra.mxu0 %v398
  %455 = vmatprep.subr.mxu0 0.0
  %456 = vmatpush1.msra.mxu0 %v399
  %457 = vmatprep.subr.mxu0 0.0
  %458 = vmatpush1.msra.mxu0 %v400
  %459 = vmatprep.subr.mxu0 0.0
  %460 = vmatpush1.msra.mxu0 %v401
  %461 = vmatprep.subr.mxu0 0.0
  %462 = vmatpush1.msra.mxu0 %v402
  %463 = vmatprep.subr.mxu0 0.0
  %464 = vmatpush1.msra.mxu0 %v403
  %465 = vmatprep.subr.mxu0 0.0
  %466 = vmatpush1.msra.mxu0 %v404
  %467 = vmatprep.subr.mxu0 0.0
  %468 = vmatpush1.msra.mxu0 %v405
  %469 = vmatprep.subr.mxu0 0.0
  %470 = vmatpush1.msra.mxu0 %v406
  %471 = vmatprep.mubr.f32.mxu0 %v366
  %472 = vmatmul.mubr.f32.gmra.mrb[0].mxu0 %v365
  %v473 = vpop.f32.mrb[0].mxu0
  %v474 = vadd.f32 1e-06, %v473
  %v475 = vpop.f32.mrb[0].mxu0
  %476 = vmatprep.mubr.f32.mxu0 %v368
  %477 = vmatmul.mubr.f32.gmra.mrb[0].mxu0 %v367
  %v478 = vpop.f32.mrb[0].mxu0
  %v479 = vadd.f32 1e-06, %v478
  %v480 = vpop.f32.mrb[0].mxu0
  %481 = vmatprep.mubr.f32.mxu0 %v370
  %482 = vmatmul.mubr.f32.gmra.mrb[0].mxu0 %v369
  %v483 = vpop.f32.mrb[0].mxu0
  %v484 = vadd.f32 1e-06, %v483
  %v485 = vpop.f32.mrb[0].mxu0
  %486 = vmatprep.mubr.f32.mxu0 %v372
  %487 = vmatmul.mubr.f32.gmra.mrb[0].mxu0 %v371
  %v488 = vpop.f32.mrb[0].mxu0
  %v489 = vadd.f32 1e-06, %v488
  %v490 = vpop.f32.mrb[0].mxu0
  %491 = vmatprep.mubr.f32.mxu0 %v374
  %492 = vmatmul.mubr.f32.gmra.mrb[0].mxu0 %v373
  %v493 = vpop.f32.mrb[0].mxu0
  %v494 = vadd.f32 1e-06, %v493
  %v495 = vpop.f32.mrb[0].mxu0
  %496 = vdwg.mxu0
  %v497 = vlog2.pop %v474
  %v498 = vmul.f32 %v497, 0.6931472
  %v499 = vlog2.pop %v479
  %v500 = vmul.f32 %v499, 0.6931472
  %v501 = vlog2.pop %v484
  %v502 = vmul.f32 %v501, 0.6931472
  %v503 = vlog2.pop %v489
  %v504 = vmul.f32 %v503, 0.6931472
  %v505 = vlog2.pop %v494
  %v506 = vmul.f32 %v505, 0.6931472
  %v507 = vld [vmem:[%s3] sm:$0xff]
  %v508 = vld [vmem:[%s3 + $0x8] sm:$0xff]
  %v509 = vld [vmem:[%s3 + $0x10] sm:$0xff]
  %v510 = vld [vmem:[%s3 + $0x18] sm:$0xff]
  %v511 = vld [vmem:[%s3 + $0x20] sm:$0xff]
  %v512 = vld [vmem:[%s3 + $0x28] sm:$0xff]
  %v513 = vld [vmem:[%s3 + $0x30] sm:$0xff]
  %v514 = vld [vmem:[%s3 + $0x38] sm:$0xff]
  %v515 = vld [vmem:[%s3 + $0x40] sm:$0xff]
  %v516 = vld [vmem:[%s3 + $0x48] sm:$0xff]
  %v517 = vld [vmem:[%s3 + $0x50] sm:$0xff]
  %v518 = vld [vmem:[%s3 + $0x58] sm:$0xff]
  %v519 = vld [vmem:[%s3 + $0x60] sm:$0xff]
  %v520 = vld [vmem:[%s3 + $0x68] sm:$0xff]
  %v521 = vld [vmem:[%s3 + $0x70] sm:$0xff]
  %v522 = vld [vmem:[%s3 + $0x78] sm:$0xff]
  %523 = vmatprep.subr.mxu0 0.0
  %524 = vmatpush1.msra.mxu0 %v507
  %525 = vmatprep.subr.mxu0 0.0
  %526 = vmatpush1.msra.mxu0 %v508
  %527 = vmatprep.subr.mxu0 0.0
  %528 = vmatpush1.msra.mxu0 %v509
  %529 = vmatprep.subr.mxu0 0.0
  %530 = vmatpush1.msra.mxu0 %v510
  %531 = vmatprep.subr.mxu0 0.0
  %532 = vmatpush1.msra.mxu0 %v511
  %533 = vmatprep.subr.mxu0 0.0
  %534 = vmatpush1.msra.mxu0 %v512
  %535 = vmatprep.subr.mxu0 0.0
  %536 = vmatpush1.msra.mxu0 %v513
  %537 = vmatprep.subr.mxu0 0.0
  %538 = vmatpush1.msra.mxu0 %v514
  %539 = vmatprep.subr.mxu0 0.0
  %540 = vmatpush1.msra.mxu0 %v515
  %541 = vmatprep.subr.mxu0 0.0
  %542 = vmatpush1.msra.mxu0 %v516
  %543 = vmatprep.subr.mxu0 0.0
  %544 = vmatpush1.msra.mxu0 %v517
  %545 = vmatprep.subr.mxu0 0.0
  %546 = vmatpush1.msra.mxu0 %v518
  %547 = vmatprep.subr.mxu0 0.0
  %548 = vmatpush1.msra.mxu0 %v519
  %549 = vmatprep.subr.mxu0 0.0
  %550 = vmatpush1.msra.mxu0 %v520
  %551 = vmatprep.subr.mxu0 0.0
  %552 = vmatpush1.msra.mxu0 %v521
  %553 = vmatprep.subr.mxu0 0.0
  %554 = vmatpush1.msra.mxu0 %v522
  %555 = vmatprep.subr.mxu0 0.0
  %556 = vmatpush1.msra.mxu0 0.0
  %557 = vmatprep.subr.mxu0 0.0
  %558 = vmatpush1.msra.mxu0 0.0
  %559 = vmatprep.subr.mxu0 0.0
  %560 = vmatpush1.msra.mxu0 0.0
  %561 = vmatprep.subr.mxu0 0.0
  %562 = vmatpush1.msra.mxu0 0.0
  %563 = vmatprep.subr.mxu0 0.0
  %564 = vmatpush1.msra.mxu0 0.0
  %565 = vmatprep.subr.mxu0 0.0
  %566 = vmatpush1.msra.mxu0 0.0
  %567 = vmatprep.subr.mxu0 0.0
  %568 = vmatpush1.msra.mxu0 0.0
  %569 = vmatprep.subr.mxu0 0.0
  %570 = vmatpush1.msra.mxu0 0.0
  %571 = vmatprep.subr.mxu0 0.0
  %572 = vmatpush1.msra.mxu0 0.0
  %573 = vmatprep.subr.mxu0 0.0
  %574 = vmatpush1.msra.mxu0 0.0
  %575 = vmatprep.subr.mxu0 0.0
  %576 = vmatpush1.msra.mxu0 0.0
  %577 = vmatprep.subr.mxu0 0.0
  %578 = vmatpush1.msra.mxu0 0.0
  %579 = vmatprep.subr.mxu0 0.0
  %580 = vmatpush1.msra.mxu0 0.0
  %581 = vmatprep.subr.mxu0 0.0
  %582 = vmatpush1.msra.mxu0 0.0
  %583 = vmatprep.subr.mxu0 0.0
  %584 = vmatpush1.msra.mxu0 0.0
  %585 = vmatprep.subr.mxu0 0.0
  %586 = vmatpush1.msra.mxu0 0.0
  %587 = vmatprep.mubr.f32.mxu0 0.0
  %588 = vmatmul.mubr.f32.gmra.mrb[0].mxu0 %v498
  %v589 = vpop.f32.mrb[0].mxu0
  %v590 = vadd.f32 0.0, %v589
  %v591 = vpop.f32.mrb[0].mxu0
  %592 = vmatprep.mubr.f32.mxu0 0.0
  %593 = vmatmul.mubr.f32.gmra.mrb[0].mxu0 %v500
  %v594 = vpop.f32.mrb[0].mxu0
  %v595 = vadd.f32 0.0, %v594
  %v596 = vpop.f32.mrb[0].mxu0
  %597 = vmatprep.mubr.f32.mxu0 0.0
  %598 = vmatmul.mubr.f32.gmra.mrb[0].mxu0 %v502
  %v599 = vpop.f32.mrb[0].mxu0
  %v600 = vadd.f32 0.0, %v599
  %v601 = vpop.f32.mrb[0].mxu0
  %602 = vmatprep.mubr.f32.mxu0 0.0
  %603 = vmatmul.mubr.f32.gmra.mrb[0].mxu0 %v504
  %v604 = vpop.f32.mrb[0].mxu0
  %v605 = vadd.f32 0.0, %v604
  %v606 = vpop.f32.mrb[0].mxu0
  %607 = vmatprep.mubr.f32.mxu0 0.0
  %608 = vmatmul.mubr.f32.gmra.mrb[0].mxu0 %v506
  %v609 = vpop.f32.mrb[0].mxu0
  %v610 = vadd.f32 0.0, %v609
  %v611 = vpop.f32.mrb[0].mxu0
  %612 = vdwg.mxu0
  %613 = vst [vmem:[%s4] sm:$0xff] %v590
  %614 = vst [vmem:[%s4 + $0x8] sm:$0xff] %v595
  %615 = vst [vmem:[%s4 + $0x10] sm:$0xff] %v600
  %616 = vst [vmem:[%s4 + $0x18] sm:$0xff] %v605
  %617 = vst [vmem:[%s4 + $0x20] sm:$0xff] %v610
  // Predicated region
  $region18: #{z_encoder_forward.2} parent=0 // pred_check
    _
  $region19: #{z_encoder_forward.2} parent=0 // pred_check_branch
    %619 = sbr.rel (0) target = $region21
  $region20: #{z_encoder_forward.2} parent=0 // pred_region
    _
  $region21: #{z_encoder_forward.2} parent=0 // pred_fallthru
    _
  // Predicated region
  $region22: #{z_encoder_forward.2} parent=0 // pred_check
    _
  $region23: #{z_encoder_forward.2} parent=0 // pred_check_branch
    %621 = sbr.rel (0) target = $region25
  $region24: #{z_encoder_forward.2} parent=0 // pred_region
    _
  $region25: #{z_encoder_forward.2} parent=0 // pred_fallthru
    _

// kernel: z_encoder_forward.3
$region0: #{z_encoder_forward.3}
  #allocation0 [shape = 'u32[]', space=smem, size = 0x4, offset = 0x4, fixed_abs, tag = 'smem constant byte address 0x4 - core index']
  #allocation1 [shape = 'u32[144,128]{1,0:T(1,128)}', space=vmem, size = 0x12000, scoped, tag = 'internal scratch']
  #allocation2 [shape = 'f32[2,16,384]{2,1,0:T(8,128)}', space=vmem, size = 0xc000, scoped, tag = 'scratch operand']
  #allocation3 [shape = 'f32[2,16,128]{2,1,0:T(8,128)}', space=vmem, size = 0x4000, scoped, tag = 'scratch operand']
  %s0 = inlined_call_operand.vmem [shape: f32[2,16,128], index: 0, kind: input, shape index: {}]
  %s1 = inlined_call_operand.vmem [shape: f32[1,1,128], index: 1, kind: input, shape index: {}]
  %s2 = inlined_call_operand.vmem [shape: f32[1,1,128], index: 2, kind: input, shape index: {}]
  %s3 = inlined_call_operand.vmem [shape: f32[128,384], index: 3, kind: input, shape index: {}]
  %s4 = inlined_call_operand.vmem [shape: f32[128,384], index: 4, kind: input, shape index: {}]
  %s5 = inlined_call_operand.vmem [shape: f32[1,384], index: 5, kind: input, shape index: {}]
  %s6 = inlined_call_operand.vmem [shape: f32[1,384], index: 6, kind: input, shape index: {}]
  %s7 = inlined_call_operand.vmem [shape: f32[128,128], index: 7, kind: input, shape index: {}]
  %s8 = inlined_call_operand.vmem [shape: f32[1,128], index: 8, kind: input, shape index: {}]
  %s9 = inlined_call_operand.hbm [shape: f32[2,16,128], index: 9, kind: output, shape index: {}]
  %s10 = sld [smem:[#allocation0]]
  $region46: #{z_encoder_forward.3} parent=0
    _
  %s12 = ssub.s32 1, %s10
  %s13 = scalar_select 0, %s12, %s10
  $region1: #{z_encoder_forward.3} parent=0
    #allocation4 [shape = 'u8[16384]{0}', space=vmem, size = 0x4000, scoped, tag = 'output window, operand 0, single buffered']
    #allocation5 [shape = 's32[1]{0}', space=sflag, size = 0x4, scoped, tag = 'scoped memory for z_encoder_forward.3']
    %14 = vsyncpa [#allocation5], 0
    // Predicated region
    $region2: #{z_encoder_forward.3} parent=1 // pred_check
      _
    $region3: #{z_encoder_forward.3} parent=1 // pred_check_branch
      %16 = sbr.rel (0) target = $region5
    $region4: #{z_encoder_forward.3} parent=1 // pred_region
      _
    $region5: #{z_encoder_forward.3} parent=1 // pred_fallthru
      _
    // Predicated region
    $region6: #{z_encoder_forward.3} parent=1 // pred_check
      _
    $region7: #{z_encoder_forward.3} parent=1 // pred_check_branch
      %18 = sbr.rel (0) target = $region9
    $region8: #{z_encoder_forward.3} parent=1 // pred_region
      _
    $region9: #{z_encoder_forward.3} parent=1 // pred_fallthru
      _
    // Predicated region
    $region10: #{z_encoder_forward.3} parent=1 // pred_check
      _
    $region11: #{z_encoder_forward.3} parent=1 // pred_check_branch
      %20 = sbr.rel (0) target = $region13
    $region12: #{z_encoder_forward.3} parent=1 // pred_region
      _
    $region13: #{z_encoder_forward.3} parent=1 // pred_fallthru
      _
    // Predicated region
    $region14: #{z_encoder_forward.3} parent=1 // pred_check
      _
    $region15: #{z_encoder_forward.3} parent=1 // pred_check_branch
      %22 = sbr.rel (0) target = $region17
    $region16: #{z_encoder_forward.3} parent=1 // pred_region
      _
    $region17: #{z_encoder_forward.3} parent=1 // pred_fallthru
      _
    // Predicated region
    $region18: #{z_encoder_forward.3} parent=1 // pred_check
      _
    $region19: #{z_encoder_forward.3} parent=1 // pred_check_branch
      %24 = sbr.rel (0) target = $region21
    $region20: #{z_encoder_forward.3} parent=1 // pred_region
      _
    $region21: #{z_encoder_forward.3} parent=1 // pred_fallthru
      _
    // Predicated region
    $region22: #{z_encoder_forward.3} parent=1 // pred_check
      _
    $region23: #{z_encoder_forward.3} parent=1 // pred_check_branch
      %26 = sbr.rel (0) target = $region25
    $region24: #{z_encoder_forward.3} parent=1 // pred_region
      _
    $region25: #{z_encoder_forward.3} parent=1 // pred_fallthru
      _
    // Predicated region
    $region26: #{z_encoder_forward.3} parent=1 // pred_check
      _
    $region27: #{z_encoder_forward.3} parent=1 // pred_check_branch
      %28 = sbr.rel (0) target = $region29
    $region28: #{z_encoder_forward.3} parent=1 // pred_region
      _
    $region29: #{z_encoder_forward.3} parent=1 // pred_fallthru
      _
    // Predicated region
    $region30: #{z_encoder_forward.3} parent=1 // pred_check
      _
    $region31: #{z_encoder_forward.3} parent=1 // pred_check_branch
      %30 = sbr.rel (0) target = $region33
    $region32: #{z_encoder_forward.3} parent=1 // pred_region
      _
    $region33: #{z_encoder_forward.3} parent=1 // pred_fallthru
      _
    // Predicated region
    $region34: #{z_encoder_forward.3} parent=1 // pred_check
      _
    $region35: #{z_encoder_forward.3} parent=1 // pred_check_branch
      %32 = sbr.rel (0) target = $region37
    $region36: #{z_encoder_forward.3} parent=1 // pred_region
      _
    $region37: #{z_encoder_forward.3} parent=1 // pred_fallthru
      _
    %v33 = vld [vmem:[%s0] sm:$0xff]
    %v34 = vld [vmem:[%s0 + $0x8] sm:$0xff]
    %v35 = vld [vmem:[%s0 + $0x10] sm:$0xff]
    %v36 = vld [vmem:[%s0 + $0x18] sm:$0xff]
    %v37 = vadd.f32 %v33, %v34
    %v38 = vrot.slane %v37, 4
    %v39 = vadd.f32 %v37, %v38
    %v40 = vrot.slane %v39, 2
    %v41 = vadd.f32 %v39, %v40
    %v42 = vrot.slane %v41, 1
    %v43 = vadd.f32 %v41, %v42
    %v44 = vadd.f32 %v35, %v36
    %v45 = vrot.slane %v44, 4
    %v46 = vadd.f32 %v44, %v45
    %v47 = vrot.slane %v46, 2
    %v48 = vadd.f32 %v46, %v47
    %v49 = vrot.slane %v48, 1
    %v50 = vadd.f32 %v48, %v49
    %v51 = vrcp.pop 16.0
    %v52 = vmul.f32 %v43, %v51
    %v53 = vmul.f32 %v50, %v51
    %v54 = vsub.f32 %v33, %v52
    %v55 = vsub.f32 %v34, %v52
    %v56 = vsub.f32 %v35, %v53
    %v57 = vsub.f32 %v36, %v53
    %v58 = vmul.f32 %v54, %v54
    %v59 = vmul.f32 %v55, %v55
    %v60 = vmul.f32 %v56, %v56
    %v61 = vmul.f32 %v57, %v57
    %v62 = vadd.f32 %v58, %v59
    %v63 = vrot.slane %v62, 4
    %v64 = vadd.f32 %v62, %v63
    %v65 = vrot.slane %v64, 2
    %v66 = vadd.f32 %v64, %v65
    %v67 = vrot.slane %v66, 1
    %v68 = vadd.f32 %v66, %v67
    %v69 = vadd.f32 %v60, %v61
    %v70 = vrot.slane %v69, 4
    %v71 = vadd.f32 %v69, %v70
    %v72 = vrot.slane %v71, 2
    %v73 = vadd.f32 %v71, %v72
    %v74 = vrot.slane %v73, 1
    %v75 = vadd.f32 %v73, %v74
    %v76 = vmul.f32 %v68, %v51
    %v77 = vmul.f32 %v75, %v51
    %v78 = vadd.f32 %v76, 1e-05
    %v79 = vadd.f32 %v77, 1e-05
    %v80 = vrsqrt.pop %v78
    %v81 = vrsqrt.pop %v79
    %v82 = vmul.f32 %v54, %v80
    %v83 = vmul.f32 %v55, %v80
    %v84 = vmul.f32 %v56, %v81
    %v85 = vmul.f32 %v57, %v81
    %v86 = vld [vmem:[%s1] sm:$0x1]
    %v88 = vlaneseq
    %v89 = vshrl.u32 %v88, 7
    %v90 = vsub.s32 0, %v89
    %v91 = vrot.slane %v86, %v90
    %v93 = vmul.f32 %v82, %v91
    %v94 = vmul.f32 %v83, %v91
    %v95 = vmul.f32 %v84, %v91
    %v96 = vmul.f32 %v85, %v91
    %v97 = vld [vmem:[%s2] sm:$0x1]
    %v99 = vlaneseq
    %v100 = vshrl.u32 %v99, 7
    %v101 = vsub.s32 0, %v100
    %v102 = vrot.slane %v97, %v101
    %v104 = vadd.f32 %v93, %v102
    %v105 = vadd.f32 %v94, %v102
    %v106 = vadd.f32 %v95, %v102
    %v107 = vadd.f32 %v96, %v102
    %v108 = vld [vmem:[%s3] sm:$0xff]
    %v109 = vld [vmem:[%s3 + $0x8] sm:$0xff]
    %v110 = vld [vmem:[%s3 + $0x10] sm:$0xff]
    %v111 = vld [vmem:[%s3 + $0x18] sm:$0xff]
    %v112 = vld [vmem:[%s3 + $0x20] sm:$0xff]
    %v113 = vld [vmem:[%s3 + $0x28] sm:$0xff]
    %v114 = vld [vmem:[%s3 + $0x30] sm:$0xff]
    %v115 = vld [vmem:[%s3 + $0x38] sm:$0xff]
    %v116 = vld [vmem:[%s3 + $0x40] sm:$0xff]
    %v117 = vld [vmem:[%s3 + $0x48] sm:$0xff]
    %v118 = vld [vmem:[%s3 + $0x50] sm:$0xff]
    %v119 = vld [vmem:[%s3 + $0x58] sm:$0xff]
    %v120 = vld [vmem:[%s3 + $0x60] sm:$0xff]
    %v121 = vld [vmem:[%s3 + $0x68] sm:$0xff]
    %v122 = vld [vmem:[%s3 + $0x70] sm:$0xff]
    %v123 = vld [vmem:[%s3 + $0x78] sm:$0xff]
    %v124 = vld [vmem:[%s3 + $0x80] sm:$0xff]
    %v125 = vld [vmem:[%s3 + $0x88] sm:$0xff]
    %v126 = vld [vmem:[%s3 + $0x90] sm:$0xff]
    %v127 = vld [vmem:[%s3 + $0x98] sm:$0xff]
    %v128 = vld [vmem:[%s3 + $0xa0] sm:$0xff]
    %v129 = vld [vmem:[%s3 + $0xa8] sm:$0xff]
    %v130 = vld [vmem:[%s3 + $0xb0] sm:$0xff]
    %v131 = vld [vmem:[%s3 + $0xb8] sm:$0xff]
    %v132 = vld [vmem:[%s3 + $0xc0] sm:$0xff]
    %v133 = vld [vmem:[%s3 + $0xc8] sm:$0xff]
    %v134 = vld [vmem:[%s3 + $0xd0] sm:$0xff]
    %v135 = vld [vmem:[%s3 + $0xd8] sm:$0xff]
    %v136 = vld [vmem:[%s3 + $0xe0] sm:$0xff]
    %v137 = vld [vmem:[%s3 + $0xe8] sm:$0xff]
    %v138 = vld [vmem:[%s3 + $0xf0] sm:$0xff]
    %v139 = vld [vmem:[%s3 + $0xf8] sm:$0xff]
    %v140 = vld [vmem:[%s3 + $0x100] sm:$0xff]
    %v141 = vld [vmem:[%s3 + $0x108] sm:$0xff]
    %v142 = vld [vmem:[%s3 + $0x110] sm:$0xff]
    %v143 = vld [vmem:[%s3 + $0x118] sm:$0xff]
    %v144 = vld [vmem:[%s3 + $0x120] sm:$0xff]
    %v145 = vld [vmem:[%s3 + $0x128] sm:$0xff]
    %v146 = vld [vmem:[%s3 + $0x130] sm:$0xff]
    %v147 = vld [vmem:[%s3 + $0x138] sm:$0xff]
    %v148 = vld [vmem:[%s3 + $0x140] sm:$0xff]
    %v149 = vld [vmem:[%s3 + $0x148] sm:$0xff]
    %v150 = vld [vmem:[%s3 + $0x150] sm:$0xff]
    %v151 = vld [vmem:[%s3 + $0x158] sm:$0xff]
    %v152 = vld [vmem:[%s3 + $0x160] sm:$0xff]
    %v153 = vld [vmem:[%s3 + $0x168] sm:$0xff]
    %v154 = vld [vmem:[%s3 + $0x170] sm:$0xff]
    %v155 = vld [vmem:[%s3 + $0x178] sm:$0xff]
    %v156 = vld [vmem:[%s5] sm:$0x7]
    %v158 = vlaneseq
    %v159 = vshrl.u32 %v158, 7
    %v160 = vsub.s32 0, %v159
    %v161 = vrot.slane %v156, %v160
    %v162 = vlaneseq
    %v163 = vshrl.u32 %v162, 7
    %v164 = vsub.s32 1, %v163
    %v165 = vrot.slane %v156, %v164
    %v166 = vlaneseq
    %v167 = vshrl.u32 %v166, 7
    %v168 = vsub.s32 2, %v167
    %v169 = vrot.slane %v156, %v168
    %173 = vmatprep.subr.mxu0 %v109
    %174 = vmatpush1.msra.mxu0 %v108
    %175 = vmatprep.subr.mxu0 %v112
    %176 = vmatpush1.msra.mxu0 %v111
    %177 = vmatprep.subr.mxu0 %v115
    %178 = vmatpush1.msra.mxu0 %v114
    %179 = vmatprep.subr.mxu0 %v118
    %180 = vmatpush1.msra.mxu0 %v117
    %181 = vmatprep.subr.mxu0 %v121
    %182 = vmatpush1.msra.mxu0 %v120
    %183 = vmatprep.subr.mxu0 %v124
    %184 = vmatpush1.msra.mxu0 %v123
    %185 = vmatprep.subr.mxu0 %v127
    %186 = vmatpush1.msra.mxu0 %v126
    %187 = vmatprep.subr.mxu0 %v130
    %188 = vmatpush1.msra.mxu0 %v129
    %189 = vmatprep.subr.mxu0 %v133
    %190 = vmatpush1.msra.mxu0 %v132
    %191 = vmatprep.subr.mxu0 %v136
    %192 = vmatpush1.msra.mxu0 %v135
    %193 = vmatprep.subr.mxu0 %v139
    %194 = vmatpush1.msra.mxu0 %v138
    %195 = vmatprep.subr.mxu0 %v142
    %196 = vmatpush1.msra.mxu0 %v141
    %197 = vmatprep.subr.mxu0 %v145
    %198 = vmatpush1.msra.mxu0 %v144
    %199 = vmatprep.subr.mxu0 %v148
    %200 = vmatpush1.msra.mxu0 %v147
    %201 = vmatprep.subr.mxu0 %v151
    %202 = vmatpush1.msra.mxu0 %v150
    %203 = vmatprep.subr.mxu0 %v154
    %204 = vmatpush1.msra.mxu0 %v153
    %205 = vmatprep.subr.mxu0 0.0
    %206 = vmatpush1.msra.mxu0 0.0
    %207 = vmatprep.subr.mxu0 0.0
    %208 = vmatpush1.msra.mxu0 0.0
    %209 = vmatprep.subr.mxu0 0.0
    %210 = vmatpush1.msra.mxu0 0.0
    %211 = vmatprep.subr.mxu0 0.0
    %212 = vmatpush1.msra.mxu0 0.0
    %213 = vmatprep.subr.mxu0 0.0
    %214 = vmatpush1.msra.mxu0 0.0
    %215 = vmatprep.subr.mxu0 0.0
    %216 = vmatpush1.msra.mxu0 0.0
    %217 = vmatprep.subr.mxu0 0.0
    %218 = vmatpush1.msra.mxu0 0.0
    %219 = vmatprep.subr.mxu0 0.0
    %220 = vmatpush1.msra.mxu0 0.0
    %221 = vmatprep.subr.mxu0 0.0
    %222 = vmatpush1.msra.mxu0 0.0
    %223 = vmatprep.subr.mxu0 0.0
    %224 = vmatpush1.msra.mxu0 0.0
    %225 = vmatprep.subr.mxu0 0.0
    %226 = vmatpush1.msra.mxu0 0.0
    %227 = vmatprep.subr.mxu0 0.0
    %228 = vmatpush1.msra.mxu0 0.0
    %229 = vmatprep.subr.mxu0 0.0
    %230 = vmatpush1.msra.mxu0 0.0
    %231 = vmatprep.subr.mxu0 0.0
    %232 = vmatpush1.msra.mxu0 0.0
    %233 = vmatprep.subr.mxu0 0.0
    %234 = vmatpush1.msra.mxu0 0.0
    %235 = vmatprep.subr.mxu0 0.0
    %236 = vmatpush1.msra.mxu0 0.0
    %237 = vmatprep.mubr.f32.mxu0 0.0
    %238 = vmatmul.mubr.f32.gmra.mrb[0].mxu0 %v104
    %v239 = vpop.f32.mrb[0].mxu0
    %v240 = vadd.f32 %v161, %v239
    %v241 = vpop.f32.mrb[0].mxu0
    %v242 = vadd.f32 %v165, %v241
    %243 = vmatprep.mubr.f32.mxu0 0.0
    %244 = vmatmul.mubr.f32.gmra.mrb[0].mxu0 %v105
    %v245 = vpop.f32.mrb[0].mxu0
    %v246 = vadd.f32 %v161, %v245
    %v247 = vpop.f32.mrb[0].mxu0
    %v248 = vadd.f32 %v165, %v247
    %249 = vmatprep.mubr.f32.mxu0 0.0
    %250 = vmatmul.mubr.f32.gmra.mrb[0].mxu0 %v106
    %v251 = vpop.f32.mrb[0].mxu0
    %v252 = vadd.f32 %v161, %v251
    %v253 = vpop.f32.mrb[0].mxu0
    %v254 = vadd.f32 %v165, %v253
    %255 = vmatprep.mubr.f32.mxu0 0.0
    %256 = vmatmul.mubr.f32.gmra.mrb[0].mxu0 %v107
    %v257 = vpop.f32.mrb[0].mxu0
    %v258 = vadd.f32 %v161, %v257
    %v259 = vpop.f32.mrb[0].mxu0
    %v260 = vadd.f32 %v165, %v259
    %261 = vdwg.mxu0
    %262 = vmatprep.subr.mxu0 0.0
    %263 = vmatpush1.msra.mxu0 %v110
    %264 = vmatprep.subr.mxu0 0.0
    %265 = vmatpush1.msra.mxu0 %v113
    %266 = vmatprep.subr.mxu0 0.0
    %267 = vmatpush1.msra.mxu0 %v116
    %268 = vmatprep.subr.mxu0 0.0
    %269 = vmatpush1.msra.mxu0 %v119
    %270 = vmatprep.subr.mxu0 0.0
    %271 = vmatpush1.msra.mxu0 %v122
    %272 = vmatprep.subr.mxu0 0.0
    %273 = vmatpush1.msra.mxu0 %v125
    %274 = vmatprep.subr.mxu0 0.0
    %275 = vmatpush1.msra.mxu0 %v128
    %276 = vmatprep.subr.mxu0 0.0
    %277 = vmatpush1.msra.mxu0 %v131
    %278 = vmatprep.subr.mxu0 0.0
    %279 = vmatpush1.msra.mxu0 %v134
    %280 = vmatprep.subr.mxu0 0.0
    %281 = vmatpush1.msra.mxu0 %v137
    %282 = vmatprep.subr.mxu0 0.0
    %283 = vmatpush1.msra.mxu0 %v140
    %284 = vmatprep.subr.mxu0 0.0
    %285 = vmatpush1.msra.mxu0 %v143
    %286 = vmatprep.subr.mxu0 0.0
    %287 = vmatpush1.msra.mxu0 %v146
    %288 = vmatprep.subr.mxu0 0.0
    %289 = vmatpush1.msra.mxu0 %v149
    %290 = vmatprep.subr.mxu0 0.0
    %291 = vmatpush1.msra.mxu0 %v152
    %292 = vmatprep.subr.mxu0 0.0
    %293 = vmatpush1.msra.mxu0 %v155
    %294 = vmatprep.subr.mxu0 0.0
    %295 = vmatpush1.msra.mxu0 0.0
    %296 = vmatprep.subr.mxu0 0.0
    %297 = vmatpush1.msra.mxu0 0.0
    %298 = vmatprep.subr.mxu0 0.0
    %299 = vmatpush1.msra.mxu0 0.0
    %300 = vmatprep.subr.mxu0 0.0
    %301 = vmatpush1.msra.mxu0 0.0
    %302 = vmatprep.subr.mxu0 0.0
    %303 = vmatpush1.msra.mxu0 0.0
    %304 = vmatprep.subr.mxu0 0.0
    %305 = vmatpush1.msra.mxu0 0.0
    %306 = vmatprep.subr.mxu0 0.0
    %307 = vmatpush1.msra.mxu0 0.0
    %308 = vmatprep.subr.mxu0 0.0
    %309 = vmatpush1.msra.mxu0 0.0
    %310 = vmatprep.subr.mxu0 0.0
    %311 = vmatpush1.msra.mxu0 0.0
    %312 = vmatprep.subr.mxu0 0.0
    %313 = vmatpush1.msra.mxu0 0.0
    %314 = vmatprep.subr.mxu0 0.0
    %315 = vmatpush1.msra.mxu0 0.0
    %316 = vmatprep.subr.mxu0 0.0
    %317 = vmatpush1.msra.mxu0 0.0
    %318 = vmatprep.subr.mxu0 0.0
    %319 = vmatpush1.msra.mxu0 0.0
    %320 = vmatprep.subr.mxu0 0.0
    %321 = vmatpush1.msra.mxu0 0.0
    %322 = vmatprep.subr.mxu0 0.0
    %323 = vmatpush1.msra.mxu0 0.0
    %324 = vmatprep.subr.mxu0 0.0
    %325 = vmatpush1.msra.mxu0 0.0
    %326 = vmatprep.mubr.f32.mxu0 0.0
    %327 = vmatmul.mubr.f32.gmra.mrb[0].mxu0 %v104
    %v328 = vpop.f32.mrb[0].mxu0
    %v329 = vadd.f32 %v169, %v328
    %v330 = vpop.f32.mrb[0].mxu0
    %331 = vmatprep.mubr.f32.mxu0 0.0
    %332 = vmatmul.mubr.f32.gmra.mrb[0].mxu0 %v105
    %v333 = vpop.f32.mrb[0].mxu0
    %v334 = vadd.f32 %v169, %v333
    %v335 = vpop.f32.mrb[0].mxu0
    %336 = vmatprep.mubr.f32.mxu0 0.0
    %337 = vmatmul.mubr.f32.gmra.mrb[0].mxu0 %v106
    %v338 = vpop.f32.mrb[0].mxu0
    %v339 = vadd.f32 %v169, %v338
    %v340 = vpop.f32.mrb[0].mxu0
    %341 = vmatprep.mubr.f32.mxu0 0.0
    %342 = vmatmul.mubr.f32.gmra.mrb[0].mxu0 %v107
    %v343 = vpop.f32.mrb[0].mxu0
    %v344 = vadd.f32 %v169, %v343
    %v345 = vpop.f32.mrb[0].mxu0
    %346 = vdwg.mxu0
    %347 = vst [vmem:[#allocation2] sm:$0xff] %v240
    %348 = vst [vmem:[#allocation2 + $0x8] sm:$0xff] %v242
    %349 = vst [vmem:[#allocation2 + $0x10] sm:$0xff] %v329
    %350 = vst [vmem:[#allocation2 + $0x18] sm:$0xff] %v246
    %351 = vst [vmem:[#allocation2 + $0x20] sm:$0xff] %v248
    %352 = vst [vmem:[#allocation2 + $0x28] sm:$0xff] %v334
    %353 = vst [vmem:[#allocation2 + $0x30] sm:$0xff] %v252
    %354 = vst [vmem:[#allocation2 + $0x38] sm:$0xff] %v254
    %355 = vst [vmem:[#allocation2 + $0x40] sm:$0xff] %v339
    %356 = vst [vmem:[#allocation2 + $0x48] sm:$0xff] %v258
    %357 = vst [vmem:[#allocation2 + $0x50] sm:$0xff] %v260
    %358 = vst [vmem:[#allocation2 + $0x58] sm:$0xff] %v344
    %v359 = vld [vmem:[%s4] sm:$0xff]
    %v360 = vld [vmem:[%s4 + $0x8] sm:$0xff]
    %v361 = vld [vmem:[%s4 + $0x10] sm:$0xff]
    %v362 = vld [vmem:[%s4 + $0x18] sm:$0xff]
    %v363 = vld [vmem:[%s4 + $0x20] sm:$0xff]
    %v364 = vld [vmem:[%s4 + $0x28] sm:$0xff]
    %v365 = vld [vmem:[%s4 + $0x30] sm:$0xff]
    %v366 = vld [vmem:[%s4 + $0x38] sm:$0xff]
    %v367 = vld [vmem:[%s4 + $0x40] sm:$0xff]
    %v368 = vld [vmem:[%s4 + $0x48] sm:$0xff]
    %v369 = vld [vmem:[%s4 + $0x50] sm:$0xff]
    %v370 = vld [vmem:[%s4 + $0x58] sm:$0xff]
    %v371 = vld [vmem:[%s4 + $0x60] sm:$0xff]
    %v372 = vld [vmem:[%s4 + $0x68] sm:$0xff]
    %v373 = vld [vmem:[%s4 + $0x70] sm:$0xff]
    %v374 = vld [vmem:[%s4 + $0x78] sm:$0xff]
    %v375 = vld [vmem:[%s4 + $0x80] sm:$0xff]
    %v376 = vld [vmem:[%s4 + $0x88] sm:$0xff]
    %v377 = vld [vmem:[%s4 + $0x90] sm:$0xff]
    %v378 = vld [vmem:[%s4 + $0x98] sm:$0xff]
    %v379 = vld [vmem:[%s4 + $0xa0] sm:$0xff]
    %v380 = vld [vmem:[%s4 + $0xa8] sm:$0xff]
    %v381 = vld [vmem:[%s4 + $0xb0] sm:$0xff]
    %v382 = vld [vmem:[%s4 + $0xb8] sm:$0xff]
    %v383 = vld [vmem:[%s4 + $0xc0] sm:$0xff]
    %v384 = vld [vmem:[%s4 + $0xc8] sm:$0xff]
    %v385 = vld [vmem:[%s4 + $0xd0] sm:$0xff]
    %v386 = vld [vmem:[%s4 + $0xd8] sm:$0xff]
    %v387 = vld [vmem:[%s4 + $0xe0] sm:$0xff]
    %v388 = vld [vmem:[%s4 + $0xe8] sm:$0xff]
    %v389 = vld [vmem:[%s4 + $0xf0] sm:$0xff]
    %v390 = vld [vmem:[%s4 + $0xf8] sm:$0xff]
    %v391 = vld [vmem:[%s4 + $0x100] sm:$0xff]
    %v392 = vld [vmem:[%s4 + $0x108] sm:$0xff]
    %v393 = vld [vmem:[%s4 + $0x110] sm:$0xff]
    %v394 = vld [vmem:[%s4 + $0x118] sm:$0xff]
    %v395 = vld [vmem:[%s4 + $0x120] sm:$0xff]
    %v396 = vld [vmem:[%s4 + $0x128] sm:$0xff]
    %v397 = vld [vmem:[%s4 + $0x130] sm:$0xff]
    %v398 = vld [vmem:[%s4 + $0x138] sm:$0xff]
    %v399 = vld [vmem:[%s4 + $0x140] sm:$0xff]
    %v400 = vld [vmem:[%s4 + $0x148] sm:$0xff]
    %v401 = vld [vmem:[%s4 + $0x150] sm:$0xff]
    %v402 = vld [vmem:[%s4 + $0x158] sm:$0xff]
    %v403 = vld [vmem:[%s4 + $0x160] sm:$0xff]
    %v404 = vld [vmem:[%s4 + $0x168] sm:$0xff]
    %v405 = vld [vmem:[%s4 + $0x170] sm:$0xff]
    %v406 = vld [vmem:[%s4 + $0x178] sm:$0xff]
    %v407 = vld [vmem:[%s6] sm:$0x7]
    %v408 = vld [vmem:[#allocation2] ss:$8 sm:$0x7]
    %s409 = scalar_lea.vmem [#allocation2], 48
    %v410 = vld [vmem:[%s409] ss:$8 sm:$0x7]
    %v412 = vlaneseq
    %v413 = vshrl.u32 %v412, 7
    %v414 = vsub.s32 0, %v413
    %v415 = vrot.slane %v407, %v414
    %v416 = vlaneseq
    %v417 = vshrl.u32 %v416, 7
    %v418 = vsub.s32 1, %v417
    %v419 = vrot.slane %v407, %v418
    %v420 = vlaneseq
    %v421 = vshrl.u32 %v420, 7
    %v422 = vsub.s32 2, %v421
    %v423 = vrot.slane %v407, %v422
    %427 = vmatprep.subr.mxu0 %v360
    %428 = vmatpush1.msra.mxu0 %v359
    %429 = vmatprep.subr.mxu0 %v363
    %430 = vmatpush1.msra.mxu0 %v362
    %431 = vmatprep.subr.mxu0 %v366
    %432 = vmatpush1.msra.mxu0 %v365
    %433 = vmatprep.subr.mxu0 %v369
    %434 = vmatpush1.msra.mxu0 %v368
    %435 = vmatprep.subr.mxu0 %v372
    %436 = vmatpush1.msra.mxu0 %v371
    %437 = vmatprep.subr.mxu0 %v375
    %438 = vmatpush1.msra.mxu0 %v374
    %439 = vmatprep.subr.mxu0 %v378
    %440 = vmatpush1.msra.mxu0 %v377
    %441 = vmatprep.subr.mxu0 %v381
    %442 = vmatpush1.msra.mxu0 %v380
    %443 = vmatprep.subr.mxu0 %v384
    %444 = vmatpush1.msra.mxu0 %v383
    %445 = vmatprep.subr.mxu0 %v387
    %446 = vmatpush1.msra.mxu0 %v386
    %447 = vmatprep.subr.mxu0 %v390
    %448 = vmatpush1.msra.mxu0 %v389
    %449 = vmatprep.subr.mxu0 %v393
    %450 = vmatpush1.msra.mxu0 %v392
    %451 = vmatprep.subr.mxu0 %v396
    %452 = vmatpush1.msra.mxu0 %v395
    %453 = vmatprep.subr.mxu0 %v399
    %454 = vmatpush1.msra.mxu0 %v398
    %455 = vmatprep.subr.mxu0 %v402
    %456 = vmatpush1.msra.mxu0 %v401
    %457 = vmatprep.subr.mxu0 %v405
    %458 = vmatpush1.msra.mxu0 %v404
    %459 = vmatprep.subr.mxu0 0.0
    %460 = vmatpush1.msra.mxu0 0.0
    %461 = vmatprep.subr.mxu0 0.0
    %462 = vmatpush1.msra.mxu0 0.0
    %463 = vmatprep.subr.mxu0 0.0
    %464 = vmatpush1.msra.mxu0 0.0
    %465 = vmatprep.subr.mxu0 0.0
    %466 = vmatpush1.msra.mxu0 0.0
    %467 = vmatprep.subr.mxu0 0.0
    %468 = vmatpush1.msra.mxu0 0.0
    %469 = vmatprep.subr.mxu0 0.0
    %470 = vmatpush1.msra.mxu0 0.0
    %471 = vmatprep.subr.mxu0 0.0
    %472 = vmatpush1.msra.mxu0 0.0
    %473 = vmatprep.subr.mxu0 0.0
    %474 = vmatpush1.msra.mxu0 0.0
    %475 = vmatprep.subr.mxu0 0.0
    %476 = vmatpush1.msra.mxu0 0.0
    %477 = vmatprep.subr.mxu0 0.0
    %478 = vmatpush1.msra.mxu0 0.0
    %479 = vmatprep.subr.mxu0 0.0
    %480 = vmatpush1.msra.mxu0 0.0
    %481 = vmatprep.subr.mxu0 0.0
    %482 = vmatpush1.msra.mxu0 0.0
    %483 = vmatprep.subr.mxu0 0.0
    %484 = vmatpush1.msra.mxu0 0.0
    %485 = vmatprep.subr.mxu0 0.0
    %486 = vmatpush1.msra.mxu0 0.0
    %487 = vmatprep.subr.mxu0 0.0
    %488 = vmatpush1.msra.mxu0 0.0
    %489 = vmatprep.subr.mxu0 0.0
    %490 = vmatpush1.msra.mxu0 0.0
    %491 = vmatprep.mubr.f32.mxu0 0.0
    %492 = vmatmul.mubr.f32.gmra.mrb[0].mxu0 0.0
    %v493 = vpop.f32.mrb[0].mxu0
    %v494 = vadd.f32 %v415, %v493
    %v495 = vpop.f32.mrb[0].mxu0
    %v496 = vadd.f32 %v419, %v495
    %497 = vdwg.mxu0
    %498 = vmatprep.subr.mxu0 0.0
    %499 = vmatpush1.msra.mxu0 %v361
    %500 = vmatprep.subr.mxu0 0.0
    %501 = vmatpush1.msra.mxu0 %v364
    %502 = vmatprep.subr.mxu0 0.0
    %503 = vmatpush1.msra.mxu0 %v367
    %504 = vmatprep.subr.mxu0 0.0
    %505 = vmatpush1.msra.mxu0 %v370
    %506 = vmatprep.subr.mxu0 0.0
    %507 = vmatpush1.msra.mxu0 %v373
    %508 = vmatprep.subr.mxu0 0.0
    %509 = vmatpush1.msra.mxu0 %v376
    %510 = vmatprep.subr.mxu0 0.0
    %511 = vmatpush1.msra.mxu0 %v379
    %512 = vmatprep.subr.mxu0 0.0
    %513 = vmatpush1.msra.mxu0 %v382
    %514 = vmatprep.subr.mxu0 0.0
    %515 = vmatpush1.msra.mxu0 %v385
    %516 = vmatprep.subr.mxu0 0.0
    %517 = vmatpush1.msra.mxu0 %v388
    %518 = vmatprep.subr.mxu0 0.0
    %519 = vmatpush1.msra.mxu0 %v391
    %520 = vmatprep.subr.mxu0 0.0
    %521 = vmatpush1.msra.mxu0 %v394
    %522 = vmatprep.subr.mxu0 0.0
    %523 = vmatpush1.msra.mxu0 %v397
    %524 = vmatprep.subr.mxu0 0.0
    %525 = vmatpush1.msra.mxu0 %v400
    %526 = vmatprep.subr.mxu0 0.0
    %527 = vmatpush1.msra.mxu0 %v403
    %528 = vmatprep.subr.mxu0 0.0
    %529 = vmatpush1.msra.mxu0 %v406
    %530 = vmatprep.subr.mxu0 0.0
    %531 = vmatpush1.msra.mxu0 0.0
    %532 = vmatprep.subr.mxu0 0.0
    %533 = vmatpush1.msra.mxu0 0.0
    %534 = vmatprep.subr.mxu0 0.0
    %535 = vmatpush1.msra.mxu0 0.0
    %536 = vmatprep.subr.mxu0 0.0
    %537 = vmatpush1.msra.mxu0 0.0
    %538 = vmatprep.subr.mxu0 0.0
    %539 = vmatpush1.msra.mxu0 0.0
    %540 = vmatprep.subr.mxu0 0.0
    %541 = vmatpush1.msra.mxu0 0.0
    %542 = vmatprep.subr.mxu0 0.0
    %543 = vmatpush1.msra.mxu0 0.0
    %544 = vmatprep.subr.mxu0 0.0
    %545 = vmatpush1.msra.mxu0 0.0
    %546 = vmatprep.subr.mxu0 0.0
    %547 = vmatpush1.msra.mxu0 0.0
    %548 = vmatprep.subr.mxu0 0.0
    %549 = vmatpush1.msra.mxu0 0.0
    %550 = vmatprep.subr.mxu0 0.0
    %551 = vmatpush1.msra.mxu0 0.0
    %552 = vmatprep.subr.mxu0 0.0
    %553 = vmatpush1.msra.mxu0 0.0
    %554 = vmatprep.subr.mxu0 0.0
    %555 = vmatpush1.msra.mxu0 0.0
    %556 = vmatprep.subr.mxu0 0.0
    %557 = vmatpush1.msra.mxu0 0.0
    %558 = vmatprep.subr.mxu0 0.0
    %559 = vmatpush1.msra.mxu0 0.0
    %560 = vmatprep.subr.mxu0 0.0
    %561 = vmatpush1.msra.mxu0 0.0
    %562 = vmatprep.mubr.f32.mxu0 0.0
    %563 = vmatmul.mubr.f32.gmra.mrb[0].mxu0 0.0
    %v564 = vpop.f32.mrb[0].mxu0
    %v565 = vadd.f32 %v423, %v564
    %v566 = vpop.f32.mrb[0].mxu0
    %567 = vdwg.mxu0
    %v570 = vunpack.c.l.s4 1966171168
    %v571 = vunpack.c.0.s8 %v570
    %v572 = vlaneseq
    %v573 = vshrl.u32 %v572, 7
    %v574 = vsub.s32 %v571, %v573
    %v575 = vrot.slane %v494, %v574
    %v576 = vcombine.high %v575, %v575
    %v578 = vunpack.c.l.s4 1966171168
    %v579 = vunpack.c.0.s8 %v578
    %v580 = vlaneseq
    %v581 = vshrl.u32 %v580, 7
    %v582 = vsub.s32 %v579, %v581
    %v583 = vrot.slane %v575, %v582
    %v585 = vunpack.c.l.s4 1966171168
    %v586 = vunpack.c.0.s8 %v585
    %v587 = vlaneseq
    %v588 = vshrl.u32 %v587, 7
    %v589 = vsub.s32 %v586, %v588
    %v590 = vrot.slane %v576, %v589
    %v593 = vadd.f32 %v408, %v583
    %v594 = vadd.f32 %v410, %v590
    %v595 = vxor.u32 %v593, 2147483648
    %v596 = vxor.u32 %v594, 2147483648
    %v597 = vmul.f32 %v595, 1.442695
    %v598 = vpow.pop %v597
    %v599 = vmul.f32 %v596, 1.442695
    %v600 = vpow.pop %v599
    %v601 = vadd.f32 %v598, 1.0
    %v602 = vadd.f32 %v600, 1.0
    %v603 = vrcp.pop %v601
    %v604 = vmul.f32 1.0, %v603
    %v605 = vrcp.pop %v602
    %v606 = vmul.f32 1.0, %v605
    %v609 = vrot.slane %v408, 1
    %v610 = vrot.slane %v410, 1
    %v615 = vunpack.c.l.s4 1966171168
    %v616 = vunpack.c.0.s8 %v615
    %v617 = vlaneseq
    %v618 = vshrl.u32 %v617, 7
    %v619 = vsub.s32 %v616, %v618
    %v620 = vrot.slane %v496, %v619
    %v621 = vcombine.high %v620, %v620
    %v623 = vunpack.c.l.s4 1966171168
    %v624 = vunpack.c.0.s8 %v623
    %v625 = vlaneseq
    %v626 = vshrl.u32 %v625, 7
    %v627 = vsub.s32 %v624, %v626
    %v628 = vrot.slane %v620, %v627
    %v630 = vunpack.c.l.s4 1966171168
    %v631 = vunpack.c.0.s8 %v630
    %v632 = vlaneseq
    %v633 = vshrl.u32 %v632, 7
    %v634 = vsub.s32 %v631, %v633
    %v635 = vrot.slane %v621, %v634
    %v638 = vadd.f32 %v609, %v628
    %v639 = vadd.f32 %v610, %v635
    %v640 = vxor.u32 %v638, 2147483648
    %v641 = vxor.u32 %v639, 2147483648
    %v642 = vmul.f32 %v640, 1.442695
    %v643 = vpow.pop %v642
    %v644 = vmul.f32 %v641, 1.442695
    %v645 = vpow.pop %v644
    %v646 = vadd.f32 %v643, 1.0
    %v647 = vadd.f32 %v645, 1.0
    %v648 = vrcp.pop %v646
    %v649 = vmul.f32 1.0, %v648
    %v650 = vrcp.pop %v647
    %v651 = vmul.f32 1.0, %v650
    %v654 = vunpack.c.l.s4 1966171168
    %v655 = vunpack.c.0.s8 %v654
    %v656 = vlaneseq
    %v657 = vshrl.u32 %v656, 7
    %v658 = vsub.s32 %v655, %v657
    %v659 = vrot.slane %v565, %v658
    %v660 = vcombine.high %v659, %v659
    %v662 = vunpack.c.l.s4 1966171168
    %v663 = vunpack.c.0.s8 %v662
    %v664 = vlaneseq
    %v665 = vshrl.u32 %v664, 7
    %v666 = vsub.s32 %v663, %v665
    %v667 = vrot.slane %v659, %v666
    %v669 = vunpack.c.l.s4 1966171168
    %v670 = vunpack.c.0.s8 %v669
    %v671 = vlaneseq
    %v672 = vshrl.u32 %v671, 7
    %v673 = vsub.s32 %v670, %v672
    %v674 = vrot.slane %v660, %v673
    %v677 = vmul.f32 %v604, %v667
    %v678 = vmul.f32 %v606, %v674
    %v679 = vrot.slane %v408, 2
    %v680 = vrot.slane %v410, 2
    %v683 = vadd.f32 %v679, %v677
    %v684 = vadd.f32 %v680, %v678
    %v685 = vtanh.pop %v683
    %v686 = vtanh.pop %v684
    %v687 = vsub.f32 1.0, %v649
    %v688 = vsub.f32 1.0, %v651
    %v689 = vmul.f32 %v687, %v685
    %v690 = vmul.f32 %v688, %v686
    %v691 = vmul.f32 %v649, 0.0
    %v692 = vmul.f32 %v651, 0.0
    %v693 = vadd.f32 %v689, %v691
    %v694 = vadd.f32 %v690, %v692
    %695 = vst [vmem:[#allocation3] sm:$0x1] %v693
    %696 = vst [vmem:[#allocation3 + $0x10] sm:$0x1] %v694
    %s697 = scalar_lea.vmem [#allocation2], 1
    %v698 = vld [vmem:[%s697] ss:$8 sm:$0x7]
    %s699 = scalar_lea.vmem [#allocation2], 49
    %v700 = vld [vmem:[%s699] ss:$8 sm:$0x7]
    %v703 = vcombine.low %v693, %v694
    %v705 = vunpack.c.l.s4 1966171168
    %v706 = vunpack.c.0.s8 %v705
    %v707 = vlaneseq
    %v708 = vshrl.u32 %v707, 7
    %v709 = vsub.s32 %v706, %v708
    %v710 = vrot.slane %v703, %v709
    %v712 = vunpack.c.l.s4 1966171168
    %v713 = vunpack.c.0.s8 %v712
    %v714 = vlaneseq
    %v715 = vshrl.u32 %v714, 7
    %v716 = vsub.s32 %v713, %v715
    %v717 = vrot.slane %v710, %v716
    %719 = vmatprep.subr.mxu0 %v360
    %720 = vmatpush1.msra.mxu0 %v359
    %721 = vmatprep.subr.mxu0 %v363
    %722 = vmatpush1.msra.mxu0 %v362
    %723 = vmatprep.subr.mxu0 %v366
    %724 = vmatpush1.msra.mxu0 %v365
    %725 = vmatprep.subr.mxu0 %v369
    %726 = vmatpush1.msra.mxu0 %v368
    %727 = vmatprep.subr.mxu0 %v372
    %728 = vmatpush1.msra.mxu0 %v371
    %729 = vmatprep.subr.mxu0 %v375
    %730 = vmatpush1.msra.mxu0 %v374
    %731 = vmatprep.subr.mxu0 %v378
    %732 = vmatpush1.msra.mxu0 %v377
    %733 = vmatprep.subr.mxu0 %v381
    %734 = vmatpush1.msra.mxu0 %v380
    %735 = vmatprep.subr.mxu0 %v384
    %736 = vmatpush1.msra.mxu0 %v383
    %737 = vmatprep.subr.mxu0 %v387
    %738 = vmatpush1.msra.mxu0 %v386
    %739 = vmatprep.subr.mxu0 %v390
    %740 = vmatpush1.msra.mxu0 %v389
    %741 = vmatprep.subr.mxu0 %v393
    %742 = vmatpush1.msra.mxu0 %v392
    %743 = vmatprep.subr.mxu0 %v396
    %744 = vmatpush1.msra.mxu0 %v395
    %745 = vmatprep.subr.mxu0 %v399
    %746 = vmatpush1.msra.mxu0 %v398
    %747 = vmatprep.subr.mxu0 %v402
    %748 = vmatpush1.msra.mxu0 %v401
    %749 = vmatprep.subr.mxu0 %v405
    %750 = vmatpush1.msra.mxu0 %v404
    %751 = vmatprep.subr.mxu0 0.0
    %752 = vmatpush1.msra.mxu0 0.0
    %753 = vmatprep.subr.mxu0 0.0
    %754 = vmatpush1.msra.mxu0 0.0
    %755 = vmatprep.subr.mxu0 0.0
    %756 = vmatpush1.msra.mxu0 0.0
    %757 = vmatprep.subr.mxu0 0.0
    %758 = vmatpush1.msra.mxu0 0.0
    %759 = vmatprep.subr.mxu0 0.0
    %760 = vmatpush1.msra.mxu0 0.0
    %761 = vmatprep.subr.mxu0 0.0
    %762 = vmatpush1.msra.mxu0 0.0
    %763 = vmatprep.subr.mxu0 0.0
    %764 = vmatpush1.msra.mxu0 0.0
    %765 = vmatprep.subr.mxu0 0.0
    %766 = vmatpush1.msra.mxu0 0.0
    %767 = vmatprep.subr.mxu0 0.0
    %768 = vmatpush1.msra.mxu0 0.0
    %769 = vmatprep.subr.mxu0 0.0
    %770 = vmatpush1.msra.mxu0 0.0
    %771 = vmatprep.subr.mxu0 0.0
    %772 = vmatpush1.msra.mxu0 0.0
    %773 = vmatprep.subr.mxu0 0.0
    %774 = vmatpush1.msra.mxu0 0.0
    %775 = vmatprep.subr.mxu0 0.0
    %776 = vmatpush1.msra.mxu0 0.0
    %777 = vmatprep.subr.mxu0 0.0
    %778 = vmatpush1.msra.mxu0 0.0
    %779 = vmatprep.subr.mxu0 0.0
    %780 = vmatpush1.msra.mxu0 0.0
    %781 = vmatprep.subr.mxu0 0.0
    %782 = vmatpush1.msra.mxu0 0.0
    %783 = vmatprep.mubr.f32.mxu0 0.0
    %784 = vmatmul.mubr.f32.gmra.mrb[0].mxu0 %v717
    %v785 = vpop.f32.mrb[0].mxu0
    %v786 = vadd.f32 %v415, %v785
    %v787 = vpop.f32.mrb[0].mxu0
    %v788 = vadd.f32 %v419, %v787
    %789 = vdwg.mxu0
    %790 = vmatprep.subr.mxu0 0.0
    %791 = vmatpush1.msra.mxu0 %v361
    %792 = vmatprep.subr.mxu0 0.0
    %793 = vmatpush1.msra.mxu0 %v364
    %794 = vmatprep.subr.mxu0 0.0
    %795 = vmatpush1.msra.mxu0 %v367
    %796 = vmatprep.subr.mxu0 0.0
    %797 = vmatpush1.msra.mxu0 %v370
    %798 = vmatprep.subr.mxu0 0.0
    %799 = vmatpush1.msra.mxu0 %v373
    %800 = vmatprep.subr.mxu0 0.0
    %801 = vmatpush1.msra.mxu0 %v376
    %802 = vmatprep.subr.mxu0 0.0
    %803 = vmatpush1.msra.mxu0 %v379
    %804 = vmatprep.subr.mxu0 0.0
    %805 = vmatpush1.msra.mxu0 %v382
    %806 = vmatprep.subr.mxu0 0.0
    %807 = vmatpush1.msra.mxu0 %v385
    %808 = vmatprep.subr.mxu0 0.0
    %809 = vmatpush1.msra.mxu0 %v388
    %810 = vmatprep.subr.mxu0 0.0
    %811 = vmatpush1.msra.mxu0 %v391
    %812 = vmatprep.subr.mxu0 0.0
    %813 = vmatpush1.msra.mxu0 %v394
    %814 = vmatprep.subr.mxu0 0.0
    %815 = vmatpush1.msra.mxu0 %v397
    %816 = vmatprep.subr.mxu0 0.0
    %817 = vmatpush1.msra.mxu0 %v400
    %818 = vmatprep.subr.mxu0 0.0
    %819 = vmatpush1.msra.mxu0 %v403
    %820 = vmatprep.subr.mxu0 0.0
    %821 = vmatpush1.msra.mxu0 %v406
    %822 = vmatprep.subr.mxu0 0.0
    %823 = vmatpush1.msra.mxu0 0.0
    %824 = vmatprep.subr.mxu0 0.0
    %825 = vmatpush1.msra.mxu0 0.0
    %826 = vmatprep.subr.mxu0 0.0
    %827 = vmatpush1.msra.mxu0 0.0
    %828 = vmatprep.subr.mxu0 0.0
    %829 = vmatpush1.msra.mxu0 0.0
    %830 = vmatprep.subr.mxu0 0.0
    %831 = vmatpush1.msra.mxu0 0.0
    %832 = vmatprep.subr.mxu0 0.0
    %833 = vmatpush1.msra.mxu0 0.0
    %834 = vmatprep.subr.mxu0 0.0
    %835 = vmatpush1.msra.mxu0 0.0
    %836 = vmatprep.subr.mxu0 0.0
    %837 = vmatpush1.msra.mxu0 0.0
    %838 = vmatprep.subr.mxu0 0.0
    %839 = vmatpush1.msra.mxu0 0.0
    %840 = vmatprep.subr.mxu0 0.0
    %841 = vmatpush1.msra.mxu0 0.0
    %842 = vmatprep.subr.mxu0 0.0
    %843 = vmatpush1.msra.mxu0 0.0
    %844 = vmatprep.subr.mxu0 0.0
    %845 = vmatpush1.msra.mxu0 0.0
    %846 = vmatprep.subr.mxu0 0.0
    %847 = vmatpush1.msra.mxu0 0.0
    %848 = vmatprep.subr.mxu0 0.0
    %849 = vmatpush1.msra.mxu0 0.0
    %850 = vmatprep.subr.mxu0 0.0
    %851 = vmatpush1.msra.mxu0 0.0
    %852 = vmatprep.subr.mxu0 0.0
    %853 = vmatpush1.msra.mxu0 0.0
    %854 = vmatprep.mubr.f32.mxu0 0.0
    %855 = vmatmul.mubr.f32.gmra.mrb[0].mxu0 %v717
    %v856 = vpop.f32.mrb[0].mxu0
    %v857 = vadd.f32 %v423, %v856
    %v858 = vpop.f32.mrb[0].mxu0
    %859 = vdwg.mxu0
    %v862 = vunpack.c.l.s4 1966171168
    %v863 = vunpack.c.0.s8 %v862
    %v864 = vlaneseq
    %v865 = vshrl.u32 %v864, 7
    %v866 = vsub.s32 %v863, %v865
    %v867 = vrot.slane %v786, %v866
    %v868 = vcombine.high %v867, %v867
    %v870 = vunpack.c.l.s4 1966171168
    %v871 = vunpack.c.0.s8 %v870
    %v872 = vlaneseq
    %v873 = vshrl.u32 %v872, 7
    %v874 = vsub.s32 %v871, %v873
    %v875 = vrot.slane %v867, %v874
    %v877 = vunpack.c.l.s4 1966171168
    %v878 = vunpack.c.0.s8 %v877
    %v879 = vlaneseq
    %v880 = vshrl.u32 %v879, 7
    %v881 = vsub.s32 %v878, %v880
    %v882 = vrot.slane %v868, %v881
    %v885 = vadd.f32 %v698, %v875
    %v886 = vadd.f32 %v700, %v882
    %v887 = vxor.u32 %v885, 2147483648
    %v888 = vxor.u32 %v886, 2147483648
    %v889 = vmul.f32 %v887, 1.442695
    %v890 = vpow.pop %v889
    %v891 = vmul.f32 %v888, 1.442695
    %v892 = vpow.pop %v891
    %v893 = vadd.f32 %v890, 1.0
    %v894 = vadd.f32 %v892, 1.0
    %v895 = vrcp.pop %v893
    %v896 = vmul.f32 1.0, %v895
    %v897 = vrcp.pop %v894
    %v898 = vmul.f32 1.0, %v897
    %v901 = vrot.slane %v698, 1
    %v902 = vrot.slane %v700, 1
    %v907 = vunpack.c.l.s4 1966171168
    %v908 = vunpack.c.0.s8 %v907
    %v909 = vlaneseq
    %v910 = vshrl.u32 %v909, 7
    %v911 = vsub.s32 %v908, %v910
    %v912 = vrot.slane %v788, %v911
    %v913 = vcombine.high %v912, %v912
    %v915 = vunpack.c.l.s4 1966171168
    %v916 = vunpack.c.0.s8 %v915
    %v917 = vlaneseq
    %v918 = vshrl.u32 %v917, 7
    %v919 = vsub.s32 %v916, %v918
    %v920 = vrot.slane %v912, %v919
    %v922 = vunpack.c.l.s4 1966171168
    %v923 = vunpack.c.0.s8 %v922
    %v924 = vlaneseq
    %v925 = vshrl.u32 %v924, 7
    %v926 = vsub.s32 %v923, %v925
    %v927 = vrot.slane %v913, %v926
    %v930 = vadd.f32 %v901, %v920
    %v931 = vadd.f32 %v902, %v927
    %v932 = vxor.u32 %v930, 2147483648
    %v933 = vxor.u32 %v931, 2147483648
    %v934 = vmul.f32 %v932, 1.442695
    %v935 = vpow.pop %v934
    %v936 = vmul.f32 %v933, 1.442695
    %v937 = vpow.pop %v936
    %v938 = vadd.f32 %v935, 1.0
    %v939 = vadd.f32 %v937, 1.0
    %v940 = vrcp.pop %v938
    %v941 = vmul.f32 1.0, %v940
    %v942 = vrcp.pop %v939
    %v943 = vmul.f32 1.0, %v942
    %v946 = vunpack.c.l.s4 1966171168
    %v947 = vunpack.c.0.s8 %v946
    %v948 = vlaneseq
    %v949 = vshrl.u32 %v948, 7
    %v950 = vsub.s32 %v947, %v949
    %v951 = vrot.slane %v857, %v950
    %v952 = vcombine.high %v951, %v951
    %v954 = vunpack.c.l.s4 1966171168
    %v955 = vunpack.c.0.s8 %v954
    %v956 = vlaneseq
    %v957 = vshrl.u32 %v956, 7
    %v958 = vsub.s32 %v955, %v957
    %v959 = vrot.slane %v951, %v958
    %v961 = vunpack.c.l.s4 1966171168
    %v962 = vunpack.c.0.s8 %v961
    %v963 = vlaneseq
    %v964 = vshrl.u32 %v963, 7
    %v965 = vsub.s32 %v962, %v964
    %v966 = vrot.slane %v952, %v965
    %v969 = vmul.f32 %v896, %v959
    %v970 = vmul.f32 %v898, %v966
    %v971 = vrot.slane %v698, 2
    %v972 = vrot.slane %v700, 2
    %v975 = vadd.f32 %v971, %v969
    %v976 = vadd.f32 %v972, %v970
    %v977 = vtanh.pop %v975
    %v978 = vtanh.pop %v976
    %v979 = vsub.f32 1.0, %v941
    %v980 = vsub.f32 1.0, %v943
    %v981 = vmul.f32 %v979, %v977
    %v982 = vmul.f32 %v980, %v978
    %v983 = vmul.f32 %v941, %v693
    %v984 = vmul.f32 %v943, %v694
    %v985 = vadd.f32 %v981, %v983
    %v986 = vadd.f32 %v982, %v984
    %987 = vst [vmem:[#allocation3 + $0x1] sm:$0x1] %v985
    %988 = vst [vmem:[#allocation3 + $0x11] sm:$0x1] %v986
    %s989 = scalar_lea.vmem [#allocation2], 2
    %v990 = vld [vmem:[%s989] ss:$8 sm:$0x7]
    %s991 = scalar_lea.vmem [#allocation2], 50
    %v992 = vld [vmem:[%s991] ss:$8 sm:$0x7]
    %v995 = vcombine.low %v985, %v986
    %v997 = vunpack.c.l.s4 1966171168
    %v998 = vunpack.c.0.s8 %v997
    %v999 = vlaneseq
    %v1000 = vshrl.u32 %v999, 7
    %v1001 = vsub.s32 %v998, %v1000
    %v1002 = vrot.slane %v995, %v1001
    %v1004 = vunpack.c.l.s4 1966171168
    %v1005 = vunpack.c.0.s8 %v1004
    %v1006 = vlaneseq
    %v1007 = vshrl.u32 %v1006, 7
    %v1008 = vsub.s32 %v1005, %v1007
    %v1009 = vrot.slane %v1002, %v1008
    %1011 = vmatprep.subr.mxu0 %v360
    %1012 = vmatpush1.msra.mxu0 %v359
    %1013 = vmatprep.subr.mxu0 %v363
    %1014 = vmatpush1.msra.mxu0 %v362
    %1015 = vmatprep.subr.mxu0 %v366
    %1016 = vmatpush1.msra.mxu0 %v365
    %1017 = vmatprep.subr.mxu0 %v369
    %1018 = vmatpush1.msra.mxu0 %v368
    %1019 = vmatprep.subr.mxu0 %v372
    %1020 = vmatpush1.msra.mxu0 %v371
    %1021 = vmatprep.subr.mxu0 %v375
    %1022 = vmatpush1.msra.mxu0 %v374
    %1023 = vmatprep.subr.mxu0 %v378
    %1024 = vmatpush1.msra.mxu0 %v377
    %1025 = vmatprep.subr.mxu0 %v381
    %1026 = vmatpush1.msra.mxu0 %v380
    %1027 = vmatprep.subr.mxu0 %v384
    %1028 = vmatpush1.msra.mxu0 %v383
    %1029 = vmatprep.subr.mxu0 %v387
    %1030 = vmatpush1.msra.mxu0 %v386
    %1031 = vmatprep.subr.mxu0 %v390
    %1032 = vmatpush1.msra.mxu0 %v389
    %1033 = vmatprep.subr.mxu0 %v393
    %1034 = vmatpush1.msra.mxu0 %v392
    %1035 = vmatprep.subr.mxu0 %v396
    %1036 = vmatpush1.msra.mxu0 %v395
    %1037 = vmatprep.subr.mxu0 %v399
    %1038 = vmatpush1.msra.mxu0 %v398
    %1039 = vmatprep.subr.mxu0 %v402
    %1040 = vmatpush1.msra.mxu0 %v401
    %1041 = vmatprep.subr.mxu0 %v405
    %1042 = vmatpush1.msra.mxu0 %v404
    %1043 = vmatprep.subr.mxu0 0.0
    %1044 = vmatpush1.msra.mxu0 0.0
    %1045 = vmatprep.subr.mxu0 0.0
    %1046 = vmatpush1.msra.mxu0 0.0
    %1047 = vmatprep.subr.mxu0 0.0
    %1048 = vmatpush1.msra.mxu0 0.0
    %1049 = vmatprep.subr.mxu0 0.0
    %1050 = vmatpush1.msra.mxu0 0.0
    %1051 = vmatprep.subr.mxu0 0.0
    %1052 = vmatpush1.msra.mxu0 0.0
    %1053 = vmatprep.subr.mxu0 0.0
    %1054 = vmatpush1.msra.mxu0 0.0
    %1055 = vmatprep.subr.mxu0 0.0
    %1056 = vmatpush1.msra.mxu0 0.0
    %1057 = vmatprep.subr.mxu0 0.0
    %1058 = vmatpush1.msra.mxu0 0.0
    %1059 = vmatprep.subr.mxu0 0.0
    %1060 = vmatpush1.msra.mxu0 0.0
    %1061 = vmatprep.subr.mxu0 0.0
    %1062 = vmatpush1.msra.mxu0 0.0
    %1063 = vmatprep.subr.mxu0 0.0
    %1064 = vmatpush1.msra.mxu0 0.0
    %1065 = vmatprep.subr.mxu0 0.0
    %1066 = vmatpush1.msra.mxu0 0.0
    %1067 = vmatprep.subr.mxu0 0.0
    %1068 = vmatpush1.msra.mxu0 0.0
    %1069 = vmatprep.subr.mxu0 0.0
    %1070 = vmatpush1.msra.mxu0 0.0
    %1071 = vmatprep.subr.mxu0 0.0
    %1072 = vmatpush1.msra.mxu0 0.0
    %1073 = vmatprep.subr.mxu0 0.0
    %1074 = vmatpush1.msra.mxu0 0.0
    %1075 = vmatprep.mubr.f32.mxu0 0.0
    %1076 = vmatmul.mubr.f32.gmra.mrb[0].mxu0 %v1009
    %v1077 = vpop.f32.mrb[0].mxu0
    %v1078 = vadd.f32 %v415, %v1077
    %v1079 = vpop.f32.mrb[0].mxu0
    %v1080 = vadd.f32 %v419, %v1079
    %1081 = vdwg.mxu0
    %1082 = vmatprep.subr.mxu0 0.0
    %1083 = vmatpush1.msra.mxu0 %v361
    %1084 = vmatprep.subr.mxu0 0.0
    %1085 = vmatpush1.msra.mxu0 %v364
    %1086 = vmatprep.subr.mxu0 0.0
    %1087 = vmatpush1.msra.mxu0 %v367
    %1088 = vmatprep.subr.mxu0 0.0
    %1089 = vmatpush1.msra.mxu0 %v370
    %1090 = vmatprep.subr.mxu0 0.0
    %1091 = vmatpush1.msra.mxu0 %v373
    %1092 = vmatprep.subr.mxu0 0.0
    %1093 = vmatpush1.msra.mxu0 %v376
    %1094 = vmatprep.subr.mxu0 0.0
    %1095 = vmatpush1.msra.mxu0 %v379
    %1096 = vmatprep.subr.mxu0 0.0
    %1097 = vmatpush1.msra.mxu0 %v382
    %1098 = vmatprep.subr.mxu0 0.0
    %1099 = vmatpush1.msra.mxu0 %v385
    %1100 = vmatprep.subr.mxu0 0.0
    %1101 = vmatpush1.msra.mxu0 %v388
    %1102 = vmatprep.subr.mxu0 0.0
    %1103 = vmatpush1.msra.mxu0 %v391
    %1104 = vmatprep.subr.mxu0 0.0
    %1105 = vmatpush1.msra.mxu0 %v394
    %1106 = vmatprep.subr.mxu0 0.0
    %1107 = vmatpush1.msra.mxu0 %v397
    %1108 = vmatprep.subr.mxu0 0.0
    %1109 = vmatpush1.msra.mxu0 %v400
    %1110 = vmatprep.subr.mxu0 0.0
    %1111 = vmatpush1.msra.mxu0 %v403
    %1112 = vmatprep.subr.mxu0 0.0
    %1113 = vmatpush1.msra.mxu0 %v406
    %1114 = vmatprep.subr.mxu0 0.0
    %1115 = vmatpush1.msra.mxu0 0.0
    %1116 = vmatprep.subr.mxu0 0.0
    %1117 = vmatpush1.msra.mxu0 0.0
    %1118 = vmatprep.subr.mxu0 0.0
    %1119 = vmatpush1.msra.mxu0 0.0
    %1120 = vmatprep.subr.mxu0 0.0
    %1121 = vmatpush1.msra.mxu0 0.0
    %1122 = vmatprep.subr.mxu0 0.0
    %1123 = vmatpush1.msra.mxu0 0.0
    %1124 = vmatprep.subr.mxu0 0.0
    %1125 = vmatpush1.msra.mxu0 0.0
    %1126 = vmatprep.subr.mxu0 0.0
    %1127 = vmatpush1.msra.mxu0 0.0
    %1128 = vmatprep.subr.mxu0 0.0
    %1129 = vmatpush1.msra.mxu0 0.0
    %1130 = vmatprep.subr.mxu0 0.0
    %1131 = vmatpush1.msra.mxu0 0.0
    %1132 = vmatprep.subr.mxu0 0.0
    %1133 = vmatpush1.msra.mxu0 0.0
    %1134 = vmatprep.subr.mxu0 0.0
    %1135 = vmatpush1.msra.mxu0 0.0
    %1136 = vmatprep.subr.mxu0 0.0
    %1137 = vmatpush1.msra.mxu0 0.0
    %1138 = vmatprep.subr.mxu0 0.0
    %1139 = vmatpush1.msra.mxu0 0.0
    %1140 = vmatprep.subr.mxu0 0.0
    %1141 = vmatpush1.msra.mxu0 0.0
    %1142 = vmatprep.subr.mxu0 0.0
    %1143 = vmatpush1.msra.mxu0 0.0
    %1144 = vmatprep.subr.mxu0 0.0
    %1145 = vmatpush1.msra.mxu0 0.0
    %1146 = vmatprep.mubr.f32.mxu0 0.0
    %1147 = vmatmul.mubr.f32.gmra.mrb[0].mxu0 %v1009
    %v1148 = vpop.f32.mrb[0].mxu0
    %v1149 = vadd.f32 %v423, %v1148
    %v1150 = vpop.f32.mrb[0].mxu0
    %1151 = vdwg.mxu0
    %v1154 = vunpack.c.l.s4 1966171168
    %v1155 = vunpack.c.0.s8 %v1154
    %v1156 = vlaneseq
    %v1157 = vshrl.u32 %v1156, 7
    %v1158 = vsub.s32 %v1155, %v1157
    %v1159 = vrot.slane %v1078, %v1158
    %v1160 = vcombine.high %v1159, %v1159
    %v1162 = vunpack.c.l.s4 1966171168
    %v1163 = vunpack.c.0.s8 %v1162
    %v1164 = vlaneseq
    %v1165 = vshrl.u32 %v1164, 7
    %v1166 = vsub.s32 %v1163, %v1165
    %v1167 = vrot.slane %v1159, %v1166
    %v1169 = vunpack.c.l.s4 1966171168
    %v1170 = vunpack.c.0.s8 %v1169
    %v1171 = vlaneseq
    %v1172 = vshrl.u32 %v1171, 7
    %v1173 = vsub.s32 %v1170, %v1172
    %v1174 = vrot.slane %v1160, %v1173
    %v1177 = vadd.f32 %v990, %v1167
    %v1178 = vadd.f32 %v992, %v1174
    %v1179 = vxor.u32 %v1177, 2147483648
    %v1180 = vxor.u32 %v1178, 2147483648
    %v1181 = vmul.f32 %v1179, 1.442695
    %v1182 = vpow.pop %v1181
    %v1183 = vmul.f32 %v1180, 1.442695
    %v1184 = vpow.pop %v1183
    %v1185 = vadd.f32 %v1182, 1.0
    %v1186 = vadd.f32 %v1184, 1.0
    %v1187 = vrcp.pop %v1185
    %v1188 = vmul.f32 1.0, %v1187
    %v1189 = vrcp.pop %v1186
    %v1190 = vmul.f32 1.0, %v1189
    %v1193 = vrot.slane %v990, 1
    %v1194 = vrot.slane %v992, 1
    %v1199 = vunpack.c.l.s4 1966171168
    %v1200 = vunpack.c.0.s8 %v1199
    %v1201 = vlaneseq
    %v1202 = vshrl.u32 %v1201, 7
    %v1203 = vsub.s32 %v1200, %v1202
    %v1204 = vrot.slane %v1080, %v1203
    %v1205 = vcombine.high %v1204, %v1204
    %v1207 = vunpack.c.l.s4 1966171168
    %v1208 = vunpack.c.0.s8 %v1207
    %v1209 = vlaneseq
    %v1210 = vshrl.u32 %v1209, 7
    %v1211 = vsub.s32 %v1208, %v1210
    %v1212 = vrot.slane %v1204, %v1211
    %v1214 = vunpack.c.l.s4 1966171168
    %v1215 = vunpack.c.0.s8 %v1214
    %v1216 = vlaneseq
    %v1217 = vshrl.u32 %v1216, 7
    %v1218 = vsub.s32 %v1215, %v1217
    %v1219 = vrot.slane %v1205, %v1218
    %v1222 = vadd.f32 %v1193, %v1212
    %v1223 = vadd.f32 %v1194, %v1219
    %v1224 = vxor.u32 %v1222, 2147483648
    %v1225 = vxor.u32 %v1223, 2147483648
    %v1226 = vmul.f32 %v1224, 1.442695
    %v1227 = vpow.pop %v1226
    %v1228 = vmul.f32 %v1225, 1.442695
    %v1229 = vpow.pop %v1228
    %v1230 = vadd.f32 %v1227, 1.0
    %v1231 = vadd.f32 %v1229, 1.0
    %v1232 = vrcp.pop %v1230
    %v1233 = vmul.f32 1.0, %v1232
    %v1234 = vrcp.pop %v1231
    %v1235 = vmul.f32 1.0, %v1234
    %v1238 = vunpack.c.l.s4 1966171168
    %v1239 = vunpack.c.0.s8 %v1238
    %v1240 = vlaneseq
    %v1241 = vshrl.u32 %v1240, 7
    %v1242 = vsub.s32 %v1239, %v1241
    %v1243 = vrot.slane %v1149, %v1242
    %v1244 = vcombine.high %v1243, %v1243
    %v1246 = vunpack.c.l.s4 1966171168
    %v1247 = vunpack.c.0.s8 %v1246
    %v1248 = vlaneseq
    %v1249 = vshrl.u32 %v1248, 7
    %v1250 = vsub.s32 %v1247, %v1249
    %v1251 = vrot.slane %v1243, %v1250
    %v1253 = vunpack.c.l.s4 1966171168
    %v1254 = vunpack.c.0.s8 %v1253
    %v1255 = vlaneseq
    %v1256 = vshrl.u32 %v1255, 7
    %v1257 = vsub.s32 %v1254, %v1256
    %v1258 = vrot.slane %v1244, %v1257
    %v1261 = vmul.f32 %v1188, %v1251
    %v1262 = vmul.f32 %v1190, %v1258
    %v1263 = vrot.slane %v990, 2
    %v1264 = vrot.slane %v992, 2
    %v1267 = vadd.f32 %v1263, %v1261
    %v1268 = vadd.f32 %v1264, %v1262
    %v1269 = vtanh.pop %v1267
    %v1270 = vtanh.pop %v1268
    %v1271 = vsub.f32 1.0, %v1233
    %v1272 = vsub.f32 1.0, %v1235
    %v1273 = vmul.f32 %v1271, %v1269
    %v1274 = vmul.f32 %v1272, %v1270
    %v1275 = vmul.f32 %v1233, %v985
    %v1276 = vmul.f32 %v1235, %v986
    %v1277 = vadd.f32 %v1273, %v1275
    %v1278 = vadd.f32 %v1274, %v1276
    %1279 = vst [vmem:[#allocation3 + $0x2] sm:$0x1] %v1277
    %1280 = vst [vmem:[#allocation3 + $0x12] sm:$0x1] %v1278
    %s1281 = scalar_lea.vmem [#allocation2], 3
    %v1282 = vld [vmem:[%s1281] ss:$8 sm:$0x7]
    %s1283 = scalar_lea.vmem [#allocation2], 51
    %v1284 = vld [vmem:[%s1283] ss:$8 sm:$0x7]
    %v1287 = vcombine.low %v1277, %v1278
    %v1289 = vunpack.c.l.s4 1966171168
    %v1290 = vunpack.c.0.s8 %v1289
    %v1291 = vlaneseq
    %v1292 = vshrl.u32 %v1291, 7
    %v1293 = vsub.s32 %v1290, %v1292
    %v1294 = vrot.slane %v1287, %v1293
    %v1296 = vunpack.c.l.s4 1966171168
    %v1297 = vunpack.c.0.s8 %v1296
    %v1298 = vlaneseq
    %v1299 = vshrl.u32 %v1298, 7
    %v1300 = vsub.s32 %v1297, %v1299
    %v1301 = vrot.slane %v1294, %v1300
    %1303 = vmatprep.subr.mxu0 %v360
    %1304 = vmatpush1.msra.mxu0 %v359
    %1305 = vmatprep.subr.mxu0 %v363
    %1306 = vmatpush1.msra.mxu0 %v362
    %1307 = vmatprep.subr.mxu0 %v366
    %1308 = vmatpush1.msra.mxu0 %v365
    %1309 = vmatprep.subr.mxu0 %v369
    %1310 = vmatpush1.msra.mxu0 %v368
    %1311 = vmatprep.subr.mxu0 %v372
    %1312 = vmatpush1.msra.mxu0 %v371
    %1313 = vmatprep.subr.mxu0 %v375
    %1314 = vmatpush1.msra.mxu0 %v374
    %1315 = vmatprep.subr.mxu0 %v378
    %1316 = vmatpush1.msra.mxu0 %v377
    %1317 = vmatprep.subr.mxu0 %v381
    %1318 = vmatpush1.msra.mxu0 %v380
    %1319 = vmatprep.subr.mxu0 %v384
    %1320 = vmatpush1.msra.mxu0 %v383
    %1321 = vmatprep.subr.mxu0 %v387
    %1322 = vmatpush1.msra.mxu0 %v386
    %1323 = vmatprep.subr.mxu0 %v390
    %1324 = vmatpush1.msra.mxu0 %v389
    %1325 = vmatprep.subr.mxu0 %v393
    %1326 = vmatpush1.msra.mxu0 %v392
    %1327 = vmatprep.subr.mxu0 %v396
    %1328 = vmatpush1.msra.mxu0 %v395
    %1329 = vmatprep.subr.mxu0 %v399
    %1330 = vmatpush1.msra.mxu0 %v398
    %1331 = vmatprep.subr.mxu0 %v402
    %1332 = vmatpush1.msra.mxu0 %v401
    %1333 = vmatprep.subr.mxu0 %v405
    %1334 = vmatpush1.msra.mxu0 %v404
    %1335 = vmatprep.subr.mxu0 0.0
    %1336 = vmatpush1.msra.mxu0 0.0
    %1337 = vmatprep.subr.mxu0 0.0
    %1338 = vmatpush1.msra.mxu0 0.0
    %1339 = vmatprep.subr.mxu0 0.0
    %1340 = vmatpush1.msra.mxu0 0.0
    %1341 = vmatprep.subr.mxu0 0.0
    %1342 = vmatpush1.msra.mxu0 0.0
    %1343 = vmatprep.subr.mxu0 0.0
    %1344 = vmatpush1.msra.mxu0 0.0
    %1345 = vmatprep.subr.mxu0 0.0
    %1346 = vmatpush1.msra.mxu0 0.0
    %1347 = vmatprep.subr.mxu0 0.0
    %1348 = vmatpush1.msra.mxu0 0.0
    %1349 = vmatprep.subr.mxu0 0.0
    %1350 = vmatpush1.msra.mxu0 0.0
    %1351 = vmatprep.subr.mxu0 0.0
    %1352 = vmatpush1.msra.mxu0 0.0
    %1353 = vmatprep.subr.mxu0 0.0
    %1354 = vmatpush1.msra.mxu0 0.0
    %1355 = vmatprep.subr.mxu0 0.0
    %1356 = vmatpush1.msra.mxu0 0.0
    %1357 = vmatprep.subr.mxu0 0.0
    %1358 = vmatpush1.msra.mxu0 0.0
    %1359 = vmatprep.subr.mxu0 0.0
    %1360 = vmatpush1.msra.mxu0 0.0
    %1361 = vmatprep.subr.mxu0 0.0
    %1362 = vmatpush1.msra.mxu0 0.0
    %1363 = vmatprep.subr.mxu0 0.0
    %1364 = vmatpush1.msra.mxu0 0.0
    %1365 = vmatprep.subr.mxu0 0.0
    %1366 = vmatpush1.msra.mxu0 0.0
    %1367 = vmatprep.mubr.f32.mxu0 0.0
    %1368 = vmatmul.mubr.f32.gmra.mrb[0].mxu0 %v1301
    %v1369 = vpop.f32.mrb[0].mxu0
    %v1370 = vadd.f32 %v415, %v1369
    %v1371 = vpop.f32.mrb[0].mxu0
    %v1372 = vadd.f32 %v419, %v1371
    %1373 = vdwg.mxu0
    %1374 = vmatprep.subr.mxu0 0.0
    %1375 = vmatpush1.msra.mxu0 %v361
    %1376 = vmatprep.subr.mxu0 0.0
    %1377 = vmatpush1.msra.mxu0 %v364
    %1378 = vmatprep.subr.mxu0 0.0
    %1379 = vmatpush1.msra.mxu0 %v367
    %1380 = vmatprep.subr.mxu0 0.0
    %1381 = vmatpush1.msra.mxu0 %v370
    %1382 = vmatprep.subr.mxu0 0.0
    %1383 = vmatpush1.msra.mxu0 %v373
    %1384 = vmatprep.subr.mxu0 0.0
    %1385 = vmatpush1.msra.mxu0 %v376
    %1386 = vmatprep.subr.mxu0 0.0
    %1387 = vmatpush1.msra.mxu0 %v379
    %1388 = vmatprep.subr.mxu0 0.0
    %1389 = vmatpush1.msra.mxu0 %v382
    %1390 = vmatprep.subr.mxu0 0.0
    %1391 = vmatpush1.msra.mxu0 %v385
    %1392 = vmatprep.subr.mxu0 0.0
    %1393 = vmatpush1.msra.mxu0 %v388
    %1394 = vmatprep.subr.mxu0 0.0
    %1395 = vmatpush1.msra.mxu0 %v391
    %1396 = vmatprep.subr.mxu0 0.0
    %1397 = vmatpush1.msra.mxu0 %v394
    %1398 = vmatprep.subr.mxu0 0.0
    %1399 = vmatpush1.msra.mxu0 %v397
    %1400 = vmatprep.subr.mxu0 0.0
    %1401 = vmatpush1.msra.mxu0 %v400
    %1402 = vmatprep.subr.mxu0 0.0
    %1403 = vmatpush1.msra.mxu0 %v403
    %1404 = vmatprep.subr.mxu0 0.0
    %1405 = vmatpush1.msra.mxu0 %v406
    %1406 = vmatprep.subr.mxu0 0.0
    %1407 = vmatpush1.msra.mxu0 0.0
    %1408 = vmatprep.subr.mxu0 0.0
    %1409 = vmatpush1.msra.mxu0 0.0
    %1410 = vmatprep.subr.mxu0 0.0
    %1411 = vmatpush1.msra.mxu0 0.0
    %1412 = vmatprep.subr.mxu0 0.0
    %1413 = vmatpush1.msra.mxu0 0.0
    %1414 = vmatprep.subr.mxu0 0.0
    %1415 = vmatpush1.msra.mxu0 0.0
    %1416 = vmatprep.subr.mxu0 0.0
    %1417 = vmatpush1.msra.mxu0 0.0
    %1418 = vmatprep.subr.mxu0 0.0
    %1419 = vmatpush1.msra.mxu0 0.0
    %1420 = vmatprep.subr.mxu0 0.0
    %1421 = vmatpush1.msra.mxu0 0.0
    %1422 = vmatprep.subr.mxu0 0.0
    %1423 = vmatpush1.msra.mxu0 0.0
    %1424 = vmatprep.subr.mxu0 0.0
    %1425 = vmatpush1.msra.mxu0 0.0
    %1426 = vmatprep.subr.mxu0 0.0
    %1427 = vmatpush1.msra.mxu0 0.0
    %1428 = vmatprep.subr.mxu0 0.0
    %1429 = vmatpush1.msra.mxu0 0.0
    %1430 = vmatprep.subr.mxu0 0.0
    %1431 = vmatpush1.msra.mxu0 0.0
    %1432 = vmatprep.subr.mxu0 0.0
    %1433 = vmatpush1.msra.mxu0 0.0
    %1434 = vmatprep.subr.mxu0 0.0
    %1435 = vmatpush1.msra.mxu0 0.0
    %1436 = vmatprep.subr.mxu0 0.0
    %1437 = vmatpush1.msra.mxu0 0.0
    %1438 = vmatprep.mubr.f32.mxu0 0.0
    %1439 = vmatmul.mubr.f32.gmra.mrb[0].mxu0 %v1301
    %v1440 = vpop.f32.mrb[0].mxu0
    %v1441 = vadd.f32 %v423, %v1440
    %v1442 = vpop.f32.mrb[0].mxu0
    %1443 = vdwg.mxu0
    %v1446 = vunpack.c.l.s4 1966171168
    %v1447 = vunpack.c.0.s8 %v1446
    %v1448 = vlaneseq
    %v1449 = vshrl.u32 %v1448, 7
    %v1450 = vsub.s32 %v1447, %v1449
    %v1451 = vrot.slane %v1370, %v1450
    %v1452 = vcombine.high %v1451, %v1451
    %v1454 = vunpack.c.l.s4 1966171168
    %v1455 = vunpack.c.0.s8 %v1454
    %v1456 = vlaneseq
    %v1457 = vshrl.u32 %v1456, 7
    %v1458 = vsub.s32 %v1455, %v1457
    %v1459 = vrot.slane %v1451, %v1458
    %v1461 = vunpack.c.l.s4 1966171168
    %v1462 = vunpack.c.0.s8 %v1461
    %v1463 = vlaneseq
    %v1464 = vshrl.u32 %v1463, 7
    %v1465 = vsub.s32 %v1462, %v1464
    %v1466 = vrot.slane %v1452, %v1465
    %v1469 = vadd.f32 %v1282, %v1459
    %v1470 = vadd.f32 %v1284, %v1466
    %v1471 = vxor.u32 %v1469, 2147483648
    %v1472 = vxor.u32 %v1470, 2147483648
    %v1473 = vmul.f32 %v1471, 1.442695
    %v1474 = vpow.pop %v1473
    %v1475 = vmul.f32 %v1472, 1.442695
    %v1476 = vpow.pop %v1475
    %v1477 = vadd.f32 %v1474, 1.0
    %v1478 = vadd.f32 %v1476, 1.0
    %v1479 = vrcp.pop %v1477
    %v1480 = vmul.f32 1.0, %v1479
    %v1481 = vrcp.pop %v1478
    %v1482 = vmul.f32 1.0, %v1481
    %v1485 = vrot.slane %v1282, 1
    %v1486 = vrot.slane %v1284, 1
    %v1491 = vunpack.c.l.s4 1966171168
    %v1492 = vunpack.c.0.s8 %v1491
    %v1493 = vlaneseq
    %v1494 = vshrl.u32 %v1493, 7
    %v1495 = vsub.s32 %v1492, %v1494
    %v1496 = vrot.slane %v1372, %v1495
    %v1497 = vcombine.high %v1496, %v1496
    %v1499 = vunpack.c.l.s4 1966171168
    %v1500 = vunpack.c.0.s8 %v1499
    %v1501 = vlaneseq
    %v1502 = vshrl.u32 %v1501, 7
    %v1503 = vsub.s32 %v1500, %v1502
    %v1504 = vrot.slane %v1496, %v1503
    %v1506 = vunpack.c.l.s4 1966171168
    %v1507 = vunpack.c.0.s8 %v1506
    %v1508 = vlaneseq
    %v1509 = vshrl.u32 %v1508, 7
    %v1510 = vsub.s32 %v1507, %v1509
    %v1511 = vrot.slane %v1497, %v1510
    %v1514 = vadd.f32 %v1485, %v1504
    %v1515 = vadd.f32 %v1486, %v1511
    %v1516 = vxor.u32 %v1514, 2147483648
    %v1517 = vxor.u32 %v1515, 2147483648
    %v1518 = vmul.f32 %v1516, 1.442695
    %v1519 = vpow.pop %v1518
    %v1520 = vmul.f32 %v1517, 1.442695
    %v1521 = vpow.pop %v1520
    %v1522 = vadd.f32 %v1519, 1.0
    %v1523 = vadd.f32 %v1521, 1.0
    %v1524 = vrcp.pop %v1522
    %v1525 = vmul.f32 1.0, %v1524
    %v1526 = vrcp.pop %v1523
    %v1527 = vmul.f32 1.0, %v1526
    %v1530 = vunpack.c.l.s4 1966171168
    %v1531 = vunpack.c.0.s8 %v1530
    %v1532 = vlaneseq
    %v1533 = vshrl.u32 %v1532, 7
    %v1534 = vsub.s32 %v1531, %v1533
    %v1535 = vrot.slane %v1441, %v1534
    %v1536 = vcombine.high %v1535, %v1535
    %v1538 = vunpack.c.l.s4 1966171168
    %v1539 = vunpack.c.0.s8 %v1538
    %v1540 = vlaneseq
    %v1541 = vshrl.u32 %v1540, 7
    %v1542 = vsub.s32 %v1539, %v1541
    %v1543 = vrot.slane %v1535, %v1542
    %v1545 = vunpack.c.l.s4 1966171168
    %v1546 = vunpack.c.0.s8 %v1545
    %v1547 = vlaneseq
    %v1548 = vshrl.u32 %v1547, 7
    %v1549 = vsub.s32 %v1546, %v1548
    %v1550 = vrot.slane %v1536, %v1549
    %v1553 = vmul.f32 %v1480, %v1543
    %v1554 = vmul.f32 %v1482, %v1550
    %v1555 = vrot.slane %v1282, 2
    %v1556 = vrot.slane %v1284, 2
    %v1559 = vadd.f32 %v1555, %v1553
    %v1560 = vadd.f32 %v1556, %v1554
    %v1561 = vtanh.pop %v1559
    %v1562 = vtanh.pop %v1560
    %v1563 = vsub.f32 1.0, %v1525
    %v1564 = vsub.f32 1.0, %v1527
    %v1565 = vmul.f32 %v1563, %v1561
    %v1566 = vmul.f32 %v1564, %v1562
    %v1567 = vmul.f32 %v1525, %v1277
    %v1568 = vmul.f32 %v1527, %v1278
    %v1569 = vadd.f32 %v1565, %v1567
    %v1570 = vadd.f32 %v1566, %v1568
    %1571 = vst [vmem:[#allocation3 + $0x3] sm:$0x1] %v1569
    %1572 = vst [vmem:[#allocation3 + $0x13] sm:$0x1] %v1570
    %s1573 = scalar_lea.vmem [#allocation2], 4
    %v1574 = vld [vmem:[%s1573] ss:$8 sm:$0x7]
    %s1575 = scalar_lea.vmem [#allocation2], 52
    %v1576 = vld [vmem:[%s1575] ss:$8 sm:$0x7]
    %v1579 = vcombine.low %v1569, %v1570
    %v1581 = vunpack.c.l.s4 1966171168
    %v1582 = vunpack.c.0.s8 %v1581
    %v1583 = vlaneseq
    %v1584 = vshrl.u32 %v1583, 7
    %v1585 = vsub.s32 %v1582, %v1584
    %v1586 = vrot.slane %v1579, %v1585
    %v1588 = vunpack.c.l.s4 1966171168
    %v1589 = vunpack.c.0.s8 %v1588
    %v1590 = vlaneseq
    %v1591 = vshrl.u32 %v1590, 7
    %v1592 = vsub.s32 %v1589, %v1591
    %v1593 = vrot.slane %v1586, %v1592
    %1595 = vmatprep.subr.mxu0 %v360
    %1596 = vmatpush1.msra.mxu0 %v359
    %1597 = vmatprep.subr.mxu0 %v363
    %1598 = vmatpush1.msra.mxu0 %v362
    %1599 = vmatprep.subr.mxu0 %v366
    %1600 = vmatpush1.msra.mxu0 %v365
    %1601 = vmatprep.subr.mxu0 %v369
    %1602 = vmatpush1.msra.mxu0 %v368
    %1603 = vmatprep.subr.mxu0 %v372
    %1604 = vmatpush1.msra.mxu0 %v371
    %1605 = vmatprep.subr.mxu0 %v375
    %1606 = vmatpush1.msra.mxu0 %v374
    %1607 = vmatprep.subr.mxu0 %v378
    %1608 = vmatpush1.msra.mxu0 %v377
    %1609 = vmatprep.subr.mxu0 %v381
    %1610 = vmatpush1.msra.mxu0 %v380
    %1611 = vmatprep.subr.mxu0 %v384
    %1612 = vmatpush1.msra.mxu0 %v383
    %1613 = vmatprep.subr.mxu0 %v387
    %1614 = vmatpush1.msra.mxu0 %v386
    %1615 = vmatprep.subr.mxu0 %v390
    %1616 = vmatpush1.msra.mxu0 %v389
    %1617 = vmatprep.subr.mxu0 %v393
    %1618 = vmatpush1.msra.mxu0 %v392
    %1619 = vmatprep.subr.mxu0 %v396
    %1620 = vmatpush1.msra.mxu0 %v395
    %1621 = vmatprep.subr.mxu0 %v399
    %1622 = vmatpush1.msra.mxu0 %v398
    %1623 = vmatprep.subr.mxu0 %v402
    %1624 = vmatpush1.msra.mxu0 %v401
    %1625 = vmatprep.subr.mxu0 %v405
    %1626 = vmatpush1.msra.mxu0 %v404
    %1627 = vmatprep.subr.mxu0 0.0
    %1628 = vmatpush1.msra.mxu0 0.0
    %1629 = vmatprep.subr.mxu0 0.0
    %1630 = vmatpush1.msra.mxu0 0.0
    %1631 = vmatprep.subr.mxu0 0.0
    %1632 = vmatpush1.msra.mxu0 0.0
    %1633 = vmatprep.subr.mxu0 0.0
    %1634 = vmatpush1.msra.mxu0 0.0
    %1635 = vmatprep.subr.mxu0 0.0
    %1636 = vmatpush1.msra.mxu0 0.0
    %1637 = vmatprep.subr.mxu0 0.0
    %1638 = vmatpush1.msra.mxu0 0.0
    %1639 = vmatprep.subr.mxu0 0.0
    %1640 = vmatpush1.msra.mxu0 0.0
    %1641 = vmatprep.subr.mxu0 0.0
    %1642 = vmatpush1.msra.mxu0 0.0
    %1643 = vmatprep.subr.mxu0 0.0
    %1644 = vmatpush1.msra.mxu0 0.0
    %1645 = vmatprep.subr.mxu0 0.0
    %1646 = vmatpush1.msra.mxu0 0.0
    %1647 = vmatprep.subr.mxu0 0.0
    %1648 = vmatpush1.msra.mxu0 0.0
    %1649 = vmatprep.subr.mxu0 0.0
    %1650 = vmatpush1.msra.mxu0 0.0
    %1651 = vmatprep.subr.mxu0 0.0
    %1652 = vmatpush1.msra.mxu0 0.0
    %1653 = vmatprep.subr.mxu0 0.0
    %1654 = vmatpush1.msra.mxu0 0.0
    %1655 = vmatprep.subr.mxu0 0.0
    %1656 = vmatpush1.msra.mxu0 0.0
    %1657 = vmatprep.subr.mxu0 0.0
    %1658 = vmatpush1.msra.mxu0 0.0
    %1659 = vmatprep.mubr.f32.mxu0 0.0
    %1660 = vmatmul.mubr.f32.gmra.mrb[0].mxu0 %v1593
    %v1661 = vpop.f32.mrb[0].mxu0
    %v1662 = vadd.f32 %v415, %v1661
    %v1663 = vpop.f32.mrb[0].mxu0
    %v1664 = vadd.f32 %v419, %v1663
    %1665 = vdwg.mxu0
    %1666 = vmatprep.subr.mxu0 0.0
    %1667 = vmatpush1.msra.mxu0 %v361
    %1668 = vmatprep.subr.mxu0 0.0
    %1669 = vmatpush1.msra.mxu0 %v364
    %1670 = vmatprep.subr.mxu0 0.0
    %1671 = vmatpush1.msra.mxu0 %v367
    %1672 = vmatprep.subr.mxu0 0.0
    %1673 = vmatpush1.msra.mxu0 %v370
    %1674 = vmatprep.subr.mxu0 0.0
    %1675 = vmatpush1.msra.mxu0 %v373
    %1676 = vmatprep.subr.mxu0 0.0
    %1677 = vmatpush1.msra.mxu0 %v376
    %1678 = vmatprep.subr.mxu0 0.0
    %1679 = vmatpush1.msra.mxu0 %v379
    %1680 = vmatprep.subr.mxu0 0.0
    %1681 = vmatpush1.msra.mxu0 %v382
    %1682 = vmatprep.subr.mxu0 0.0
    %1683 = vmatpush1.msra.mxu0 %v385
    %1684 = vmatprep.subr.mxu0 0.0
    %1685 = vmatpush1.msra.mxu0 %v388
    %1686 = vmatprep.subr.mxu0 0.0
    %1687 = vmatpush1.msra.mxu0 %v391
    %1688 = vmatprep.subr.mxu0 0.0
    %1689 = vmatpush1.msra.mxu0 %v394
    %1690 = vmatprep.subr.mxu0 0.0
    %1691 = vmatpush1.msra.mxu0 %v397
    %1692 = vmatprep.subr.mxu0 0.0
    %1693 = vmatpush1.msra.mxu0 %v400
    %1694 = vmatprep.subr.mxu0 0.0
    %1695 = vmatpush1.msra.mxu0 %v403
    %1696 = vmatprep.subr.mxu0 0.0
    %1697 = vmatpush1.msra.mxu0 %v406
    %1698 = vmatprep.subr.mxu0 0.0
    %1699 = vmatpush1.msra.mxu0 0.0
    %1700 = vmatprep.subr.mxu0 0.0
    %1701 = vmatpush1.msra.mxu0 0.0
    %1702 = vmatprep.subr.mxu0 0.0
    %1703 = vmatpush1.msra.mxu0 0.0
    %1704 = vmatprep.subr.mxu0 0.0
    %1705 = vmatpush1.msra.mxu0 0.0
    %1706 = vmatprep.subr.mxu0 0.0
    %1707 = vmatpush1.msra.mxu0 0.0
    %1708 = vmatprep.subr.mxu0 0.0
    %1709 = vmatpush1.msra.mxu0 0.0
    %1710 = vmatprep.subr.mxu0 0.0
    %1711 = vmatpush1.msra.mxu0 0.0
    %1712 = vmatprep.subr.mxu0 0.0
    %1713 = vmatpush1.msra.mxu0 0.0
    %1714 = vmatprep.subr.mxu0 0.0
    %1715 = vmatpush1.msra.mxu0 0.0
    %1716 = vmatprep.subr.mxu0 0.0
    %1717 = vmatpush1.msra.mxu0 0.0
    %1718 = vmatprep.subr.mxu0 0.0
    %1719 = vmatpush1.msra.mxu0 0.0
    %1720 = vmatprep.subr.mxu0 0.0
    %1721 = vmatpush1.msra.mxu0 0.0
    %1722 = vmatprep.subr.mxu0 0.0
    %1723 = vmatpush1.msra.mxu0 0.0
    %1724 = vmatprep.subr.mxu0 0.0
    %1725 = vmatpush1.msra.mxu0 0.0
    %1726 = vmatprep.subr.mxu0 0.0
    %1727 = vmatpush1.msra.mxu0 0.0
    %1728 = vmatprep.subr.mxu0 0.0
    %1729 = vmatpush1.msra.mxu0 0.0
    %1730 = vmatprep.mubr.f32.mxu0 0.0
    %1731 = vmatmul.mubr.f32.gmra.mrb[0].mxu0 %v1593
    %v1732 = vpop.f32.mrb[0].mxu0
    %v1733 = vadd.f32 %v423, %v1732
    %v1734 = vpop.f32.mrb[0].mxu0
    %1735 = vdwg.mxu0
    %v1738 = vunpack.c.l.s4 1966171168
    %v1739 = vunpack.c.0.s8 %v1738
    %v1740 = vlaneseq
    %v1741 = vshrl.u32 %v1740, 7
    %v1742 = vsub.s32 %v1739, %v1741
    %v1743 = vrot.slane %v1662, %v1742
    %v1744 = vcombine.high %v1743, %v1743
    %v1746 = vunpack.c.l.s4 1966171168
    %v1747 = vunpack.c.0.s8 %v1746
    %v1748 = vlaneseq
    %v1749 = vshrl.u32 %v1748, 7
    %v1750 = vsub.s32 %v1747, %v1749
    %v1751 = vrot.slane %v1743, %v1750
    %v1753 = vunpack.c.l.s4 1966171168
    %v1754 = vunpack.c.0.s8 %v1753
    %v1755 = vlaneseq
    %v1756 = vshrl.u32 %v1755, 7
    %v1757 = vsub.s32 %v1754, %v1756
    %v1758 = vrot.slane %v1744, %v1757
    %v1761 = vadd.f32 %v1574, %v1751
    %v1762 = vadd.f32 %v1576, %v1758
    %v1763 = vxor.u32 %v1761, 2147483648
    %v1764 = vxor.u32 %v1762, 2147483648
    %v1765 = vmul.f32 %v1763, 1.442695
    %v1766 = vpow.pop %v1765
    %v1767 = vmul.f32 %v1764, 1.442695
    %v1768 = vpow.pop %v1767
    %v1769 = vadd.f32 %v1766, 1.0
    %v1770 = vadd.f32 %v1768, 1.0
    %v1771 = vrcp.pop %v1769
    %v1772 = vmul.f32 1.0, %v1771
    %v1773 = vrcp.pop %v1770
    %v1774 = vmul.f32 1.0, %v1773
    %v1777 = vrot.slane %v1574, 1
    %v1778 = vrot.slane %v1576, 1
    %v1783 = vunpack.c.l.s4 1966171168
    %v1784 = vunpack.c.0.s8 %v1783
    %v1785 = vlaneseq
    %v1786 = vshrl.u32 %v1785, 7
    %v1787 = vsub.s32 %v1784, %v1786
    %v1788 = vrot.slane %v1664, %v1787
    %v1789 = vcombine.high %v1788, %v1788
    %v1791 = vunpack.c.l.s4 1966171168
    %v1792 = vunpack.c.0.s8 %v1791
    %v1793 = vlaneseq
    %v1794 = vshrl.u32 %v1793, 7
    %v1795 = vsub.s32 %v1792, %v1794
    %v1796 = vrot.slane %v1788, %v1795
    %v1798 = vunpack.c.l.s4 1966171168
    %v1799 = vunpack.c.0.s8 %v1798
    %v1800 = vlaneseq
    %v1801 = vshrl.u32 %v1800, 7
    %v1802 = vsub.s32 %v1799, %v1801
    %v1803 = vrot.slane %v1789, %v1802
    %v1806 = vadd.f32 %v1777, %v1796
    %v1807 = vadd.f32 %v1778, %v1803
    %v1808 = vxor.u32 %v1806, 2147483648
    %v1809 = vxor.u32 %v1807, 2147483648
    %v1810 = vmul.f32 %v1808, 1.442695
    %v1811 = vpow.pop %v1810
    %v1812 = vmul.f32 %v1809, 1.442695
    %v1813 = vpow.pop %v1812
    %v1814 = vadd.f32 %v1811, 1.0
    %v1815 = vadd.f32 %v1813, 1.0
    %v1816 = vrcp.pop %v1814
    %v1817 = vmul.f32 1.0, %v1816
    %v1818 = vrcp.pop %v1815
    %v1819 = vmul.f32 1.0, %v1818
    %v1822 = vunpack.c.l.s4 1966171168
    %v1823 = vunpack.c.0.s8 %v1822
    %v1824 = vlaneseq
    %v1825 = vshrl.u32 %v1824, 7
    %v1826 = vsub.s32 %v1823, %v1825
    %v1827 = vrot.slane %v1733, %v1826
    %v1828 = vcombine.high %v1827, %v1827
    %v1830 = vunpack.c.l.s4 1966171168
    %v1831 = vunpack.c.0.s8 %v1830
    %v1832 = vlaneseq
    %v1833 = vshrl.u32 %v1832, 7
    %v1834 = vsub.s32 %v1831, %v1833
    %v1835 = vrot.slane %v1827, %v1834
    %v1837 = vunpack.c.l.s4 1966171168
    %v1838 = vunpack.c.0.s8 %v1837
    %v1839 = vlaneseq
    %v1840 = vshrl.u32 %v1839, 7
    %v1841 = vsub.s32 %v1838, %v1840
    %v1842 = vrot.slane %v1828, %v1841
    %v1845 = vmul.f32 %v1772, %v1835
    %v1846 = vmul.f32 %v1774, %v1842
    %v1847 = vrot.slane %v1574, 2
    %v1848 = vrot.slane %v1576, 2
    %v1851 = vadd.f32 %v1847, %v1845
    %v1852 = vadd.f32 %v1848, %v1846
    %v1853 = vtanh.pop %v1851
    %v1854 = vtanh.pop %v1852
    %v1855 = vsub.f32 1.0, %v1817
    %v1856 = vsub.f32 1.0, %v1819
    %v1857 = vmul.f32 %v1855, %v1853
    %v1858 = vmul.f32 %v1856, %v1854
    %v1859 = vmul.f32 %v1817, %v1569
    %v1860 = vmul.f32 %v1819, %v1570
    %v1861 = vadd.f32 %v1857, %v1859
    %v1862 = vadd.f32 %v1858, %v1860
    %1863 = vst [vmem:[#allocation3 + $0x4] sm:$0x1] %v1861
    %1864 = vst [vmem:[#allocation3 + $0x14] sm:$0x1] %v1862
    %s1865 = scalar_lea.vmem [#allocation2], 5
    %v1866 = vld [vmem:[%s1865] ss:$8 sm:$0x7]
    %s1867 = scalar_lea.vmem [#allocation2], 53
    %v1868 = vld [vmem:[%s1867] ss:$8 sm:$0x7]
    %v1871 = vcombine.low %v1861, %v1862
    %v1873 = vunpack.c.l.s4 1966171168
    %v1874 = vunpack.c.0.s8 %v1873
    %v1875 = vlaneseq
    %v1876 = vshrl.u32 %v1875, 7
    %v1877 = vsub.s32 %v1874, %v1876
    %v1878 = vrot.slane %v1871, %v1877
    %v1880 = vunpack.c.l.s4 1966171168
    %v1881 = vunpack.c.0.s8 %v1880
    %v1882 = vlaneseq
    %v1883 = vshrl.u32 %v1882, 7
    %v1884 = vsub.s32 %v1881, %v1883
    %v1885 = vrot.slane %v1878, %v1884
    %1887 = vmatprep.subr.mxu0 %v360
    %1888 = vmatpush1.msra.mxu0 %v359
    %1889 = vmatprep.subr.mxu0 %v363
    %1890 = vmatpush1.msra.mxu0 %v362
    %1891 = vmatprep.subr.mxu0 %v366
    %1892 = vmatpush1.msra.mxu0 %v365
    %1893 = vmatprep.subr.mxu0 %v369
    %1894 = vmatpush1.msra.mxu0 %v368
    %1895 = vmatprep.subr.mxu0 %v372
    %1896 = vmatpush1.msra.mxu0 %v371
    %1897 = vmatprep.subr.mxu0 %v375
    %1898 = vmatpush1.msra.mxu0 %v374
    %1899 = vmatprep.subr.mxu0 %v378
    %1900 = vmatpush1.msra.mxu0 %v377
    %1901 = vmatprep.subr.mxu0 %v381
    %1902 = vmatpush1.msra.mxu0 %v380
    %1903 = vmatprep.subr.mxu0 %v384
    %1904 = vmatpush1.msra.mxu0 %v383
    %1905 = vmatprep.subr.mxu0 %v387
    %1906 = vmatpush1.msra.mxu0 %v386
    %1907 = vmatprep.subr.mxu0 %v390
    %1908 = vmatpush1.msra.mxu0 %v389
    %1909 = vmatprep.subr.mxu0 %v393
    %1910 = vmatpush1.msra.mxu0 %v392
    %1911 = vmatprep.subr.mxu0 %v396
    %1912 = vmatpush1.msra.mxu0 %v395
    %1913 = vmatprep.subr.mxu0 %v399
    %1914 = vmatpush1.msra.mxu0 %v398
    %1915 = vmatprep.subr.mxu0 %v402
    %1916 = vmatpush1.msra.mxu0 %v401
    %1917 = vmatprep.subr.mxu0 %v405
    %1918 = vmatpush1.msra.mxu0 %v404
    %1919 = vmatprep.subr.mxu0 0.0
    %1920 = vmatpush1.msra.mxu0 0.0
    %1921 = vmatprep.subr.mxu0 0.0
    %1922 = vmatpush1.msra.mxu0 0.0
    %1923 = vmatprep.subr.mxu0 0.0
    %1924 = vmatpush1.msra.mxu0 0.0
    %1925 = vmatprep.subr.mxu0 0.0
    %1926 = vmatpush1.msra.mxu0 0.0
    %1927 = vmatprep.subr.mxu0 0.0
    %1928 = vmatpush1.msra.mxu0 0.0
    %1929 = vmatprep.subr.mxu0 0.0
    %1930 = vmatpush1.msra.mxu0 0.0
    %1931 = vmatprep.subr.mxu0 0.0
    %1932 = vmatpush1.msra.mxu0 0.0
    %1933 = vmatprep.subr.mxu0 0.0
    %1934 = vmatpush1.msra.mxu0 0.0
    %1935 = vmatprep.subr.mxu0 0.0
    %1936 = vmatpush1.msra.mxu0 0.0
    %1937 = vmatprep.subr.mxu0 0.0
    %1938 = vmatpush1.msra.mxu0 0.0
    %1939 = vmatprep.subr.mxu0 0.0
    %1940 = vmatpush1.msra.mxu0 0.0
    %1941 = vmatprep.subr.mxu0 0.0
    %1942 = vmatpush1.msra.mxu0 0.0
    %1943 = vmatprep.subr.mxu0 0.0
    %1944 = vmatpush1.msra.mxu0 0.0
    %1945 = vmatprep.subr.mxu0 0.0
    %1946 = vmatpush1.msra.mxu0 0.0
    %1947 = vmatprep.subr.mxu0 0.0
    %1948 = vmatpush1.msra.mxu0 0.0
    %1949 = vmatprep.subr.mxu0 0.0
    %1950 = vmatpush1.msra.mxu0 0.0
    %1951 = vmatprep.mubr.f32.mxu0 0.0
    %1952 = vmatmul.mubr.f32.gmra.mrb[0].mxu0 %v1885
    %v1953 = vpop.f32.mrb[0].mxu0
    %v1954 = vadd.f32 %v415, %v1953
    %v1955 = vpop.f32.mrb[0].mxu0
    %v1956 = vadd.f32 %v419, %v1955
    %1957 = vdwg.mxu0
    %1958 = vmatprep.subr.mxu0 0.0
    %1959 = vmatpush1.msra.mxu0 %v361
    %1960 = vmatprep.subr.mxu0 0.0
    %1961 = vmatpush1.msra.mxu0 %v364
    %1962 = vmatprep.subr.mxu0 0.0
    %1963 = vmatpush1.msra.mxu0 %v367
    %1964 = vmatprep.subr.mxu0 0.0
    %1965 = vmatpush1.msra.mxu0 %v370
    %1966 = vmatprep.subr.mxu0 0.0
    %1967 = vmatpush1.msra.mxu0 %v373
    %1968 = vmatprep.subr.mxu0 0.0
    %1969 = vmatpush1.msra.mxu0 %v376
    %1970 = vmatprep.subr.mxu0 0.0
    %1971 = vmatpush1.msra.mxu0 %v379
    %1972 = vmatprep.subr.mxu0 0.0
    %1973 = vmatpush1.msra.mxu0 %v382
    %1974 = vmatprep.subr.mxu0 0.0
    %1975 = vmatpush1.msra.mxu0 %v385
    %1976 = vmatprep.subr.mxu0 0.0
    %1977 = vmatpush1.msra.mxu0 %v388
    %1978 = vmatprep.subr.mxu0 0.0
    %1979 = vmatpush1.msra.mxu0 %v391
    %1980 = vmatprep.subr.mxu0 0.0
    %1981 = vmatpush1.msra.mxu0 %v394
    %1982 = vmatprep.subr.mxu0 0.0
    %1983 = vmatpush1.msra.mxu0 %v397
    %1984 = vmatprep.subr.mxu0 0.0
    %1985 = vmatpush1.msra.mxu0 %v400
    %1986 = vmatprep.subr.mxu0 0.0
    %1987 = vmatpush1.msra.mxu0 %v403
    %1988 = vmatprep.subr.mxu0 0.0
    %1989 = vmatpush1.msra.mxu0 %v406
    %1990 = vmatprep.subr.mxu0 0.0
    %1991 = vmatpush1.msra.mxu0 0.0
    %1992 = vmatprep.subr.mxu0 0.0
    %1993 = vmatpush1.msra.mxu0 0.0
    %1994 = vmatprep.subr.mxu0 0.0
    %1995 = vmatpush1.msra.mxu0 0.0
    %1996 = vmatprep.subr.mxu0 0.0
    %1997 = vmatpush1.msra.mxu0 0.0
    %1998 = vmatprep.subr.mxu0 0.0
    %1999 = vmatpush1.msra.mxu0 0.0
    %2000 = vmatprep.subr.mxu0 0.0
    %2001 = vmatpush1.msra.mxu0 0.0
    %2002 = vmatprep.subr.mxu0 0.0
    %2003 = vmatpush1.msra.mxu0 0.0
    %2004 = vmatprep.subr.mxu0 0.0
    %2005 = vmatpush1.msra.mxu0 0.0
    %2006 = vmatprep.subr.mxu0 0.0
    %2007 = vmatpush1.msra.mxu0 0.0
    %2008 = vmatprep.subr.mxu0 0.0
    %2009 = vmatpush1.msra.mxu0 0.0
    %2010 = vmatprep.subr.mxu0 0.0
    %2011 = vmatpush1.msra.mxu0 0.0
    %2012 = vmatprep.subr.mxu0 0.0
    %2013 = vmatpush1.msra.mxu0 0.0
    %2014 = vmatprep.subr.mxu0 0.0
    %2015 = vmatpush1.msra.mxu0 0.0
    %2016 = vmatprep.subr.mxu0 0.0
    %2017 = vmatpush1.msra.mxu0 0.0
    %2018 = vmatprep.subr.mxu0 0.0
    %2019 = vmatpush1.msra.mxu0 0.0
    %2020 = vmatprep.subr.mxu0 0.0
    %2021 = vmatpush1.msra.mxu0 0.0
    %2022 = vmatprep.mubr.f32.mxu0 0.0
    %2023 = vmatmul.mubr.f32.gmra.mrb[0].mxu0 %v1885
    %v2024 = vpop.f32.mrb[0].mxu0
    %v2025 = vadd.f32 %v423, %v2024
    %v2026 = vpop.f32.mrb[0].mxu0
    %2027 = vdwg.mxu0
    %v2030 = vunpack.c.l.s4 1966171168
    %v2031 = vunpack.c.0.s8 %v2030
    %v2032 = vlaneseq
    %v2033 = vshrl.u32 %v2032, 7
    %v2034 = vsub.s32 %v2031, %v2033
    %v2035 = vrot.slane %v1954, %v2034
    %v2036 = vcombine.high %v2035, %v2035
    %v2038 = vunpack.c.l.s4 1966171168
    %v2039 = vunpack.c.0.s8 %v2038
    %v2040 = vlaneseq
    %v2041 = vshrl.u32 %v2040, 7
    %v2042 = vsub.s32 %v2039, %v2041
    %v2043 = vrot.slane %v2035, %v2042
    %v2045 = vunpack.c.l.s4 1966171168
    %v2046 = vunpack.c.0.s8 %v2045
    %v2047 = vlaneseq
    %v2048 = vshrl.u32 %v2047, 7
    %v2049 = vsub.s32 %v2046, %v2048
    %v2050 = vrot.slane %v2036, %v2049
    %v2053 = vadd.f32 %v1866, %v2043
    %v2054 = vadd.f32 %v1868, %v2050
    %v2055 = vxor.u32 %v2053, 2147483648
    %v2056 = vxor.u32 %v2054, 2147483648
    %v2057 = vmul.f32 %v2055, 1.442695
    %v2058 = vpow.pop %v2057
    %v2059 = vmul.f32 %v2056, 1.442695
    %v2060 = vpow.pop %v2059
    %v2061 = vadd.f32 %v2058, 1.0
    %v2062 = vadd.f32 %v2060, 1.0
    %v2063 = vrcp.pop %v2061
    %v2064 = vmul.f32 1.0, %v2063
    %v2065 = vrcp.pop %v2062
    %v2066 = vmul.f32 1.0, %v2065
    %v2069 = vrot.slane %v1866, 1
    %v2070 = vrot.slane %v1868, 1
    %v2075 = vunpack.c.l.s4 1966171168
    %v2076 = vunpack.c.0.s8 %v2075
    %v2077 = vlaneseq
    %v2078 = vshrl.u32 %v2077, 7
    %v2079 = vsub.s32 %v2076, %v2078
    %v2080 = vrot.slane %v1956, %v2079
    %v2081 = vcombine.high %v2080, %v2080
    %v2083 = vunpack.c.l.s4 1966171168
    %v2084 = vunpack.c.0.s8 %v2083
    %v2085 = vlaneseq
    %v2086 = vshrl.u32 %v2085, 7
    %v2087 = vsub.s32 %v2084, %v2086
    %v2088 = vrot.slane %v2080, %v2087
    %v2090 = vunpack.c.l.s4 1966171168
    %v2091 = vunpack.c.0.s8 %v2090
    %v2092 = vlaneseq
    %v2093 = vshrl.u32 %v2092, 7
    %v2094 = vsub.s32 %v2091, %v2093
    %v2095 = vrot.slane %v2081, %v2094
    %v2098 = vadd.f32 %v2069, %v2088
    %v2099 = vadd.f32 %v2070, %v2095
    %v2100 = vxor.u32 %v2098, 2147483648
    %v2101 = vxor.u32 %v2099, 2147483648
    %v2102 = vmul.f32 %v2100, 1.442695
    %v2103 = vpow.pop %v2102
    %v2104 = vmul.f32 %v2101, 1.442695
    %v2105 = vpow.pop %v2104
    %v2106 = vadd.f32 %v2103, 1.0
    %v2107 = vadd.f32 %v2105, 1.0
    %v2108 = vrcp.pop %v2106
    %v2109 = vmul.f32 1.0, %v2108
    %v2110 = vrcp.pop %v2107
    %v2111 = vmul.f32 1.0, %v2110
    %v2114 = vunpack.c.l.s4 1966171168
    %v2115 = vunpack.c.0.s8 %v2114
    %v2116 = vlaneseq
    %v2117 = vshrl.u32 %v2116, 7
    %v2118 = vsub.s32 %v2115, %v2117
    %v2119 = vrot.slane %v2025, %v2118
    %v2120 = vcombine.high %v2119, %v2119
    %v2122 = vunpack.c.l.s4 1966171168
    %v2123 = vunpack.c.0.s8 %v2122
    %v2124 = vlaneseq
    %v2125 = vshrl.u32 %v2124, 7
    %v2126 = vsub.s32 %v2123, %v2125
    %v2127 = vrot.slane %v2119, %v2126
    %v2129 = vunpack.c.l.s4 1966171168
    %v2130 = vunpack.c.0.s8 %v2129
    %v2131 = vlaneseq
    %v2132 = vshrl.u32 %v2131, 7
    %v2133 = vsub.s32 %v2130, %v2132
    %v2134 = vrot.slane %v2120, %v2133
    %v2137 = vmul.f32 %v2064, %v2127
    %v2138 = vmul.f32 %v2066, %v2134
    %v2139 = vrot.slane %v1866, 2
    %v2140 = vrot.slane %v1868, 2
    %v2143 = vadd.f32 %v2139, %v2137
    %v2144 = vadd.f32 %v2140, %v2138
    %v2145 = vtanh.pop %v2143
    %v2146 = vtanh.pop %v2144
    %v2147 = vsub.f32 1.0, %v2109
    %v2148 = vsub.f32 1.0, %v2111
    %v2149 = vmul.f32 %v2147, %v2145
    %v2150 = vmul.f32 %v2148, %v2146
    %v2151 = vmul.f32 %v2109, %v1861
    %v2152 = vmul.f32 %v2111, %v1862
    %v2153 = vadd.f32 %v2149, %v2151
    %v2154 = vadd.f32 %v2150, %v2152
    %2155 = vst [vmem:[#allocation3 + $0x5] sm:$0x1] %v2153
    %2156 = vst [vmem:[#allocation3 + $0x15] sm:$0x1] %v2154
    %s2157 = scalar_lea.vmem [#allocation2], 6
    %v2158 = vld [vmem:[%s2157] ss:$8 sm:$0x7]
    %s2159 = scalar_lea.vmem [#allocation2], 54
    %v2160 = vld [vmem:[%s2159] ss:$8 sm:$0x7]
    %v2163 = vcombine.low %v2153, %v2154
    %v2165 = vunpack.c.l.s4 1966171168
    %v2166 = vunpack.c.0.s8 %v2165
    %v2167 = vlaneseq
    %v2168 = vshrl.u32 %v2167, 7
    %v2169 = vsub.s32 %v2166, %v2168
    %v2170 = vrot.slane %v2163, %v2169
    %v2172 = vunpack.c.l.s4 1966171168
    %v2173 = vunpack.c.0.s8 %v2172
    %v2174 = vlaneseq
    %v2175 = vshrl.u32 %v2174, 7
    %v2176 = vsub.s32 %v2173, %v2175
    %v2177 = vrot.slane %v2170, %v2176
    %2179 = vmatprep.subr.mxu0 %v360
    %2180 = vmatpush1.msra.mxu0 %v359
    %2181 = vmatprep.subr.mxu0 %v363
    %2182 = vmatpush1.msra.mxu0 %v362
    %2183 = vmatprep.subr.mxu0 %v366
    %2184 = vmatpush1.msra.mxu0 %v365
    %2185 = vmatprep.subr.mxu0 %v369
    %2186 = vmatpush1.msra.mxu0 %v368
    %2187 = vmatprep.subr.mxu0 %v372
    %2188 = vmatpush1.msra.mxu0 %v371
    %2189 = vmatprep.subr.mxu0 %v375
    %2190 = vmatpush1.msra.mxu0 %v374
    %2191 = vmatprep.subr.mxu0 %v378
    %2192 = vmatpush1.msra.mxu0 %v377
    %2193 = vmatprep.subr.mxu0 %v381
    %2194 = vmatpush1.msra.mxu0 %v380
    %2195 = vmatprep.subr.mxu0 %v384
    %2196 = vmatpush1.msra.mxu0 %v383
    %2197 = vmatprep.subr.mxu0 %v387
    %2198 = vmatpush1.msra.mxu0 %v386
    %2199 = vmatprep.subr.mxu0 %v390
    %2200 = vmatpush1.msra.mxu0 %v389
    %2201 = vmatprep.subr.mxu0 %v393
    %2202 = vmatpush1.msra.mxu0 %v392
    %2203 = vmatprep.subr.mxu0 %v396
    %2204 = vmatpush1.msra.mxu0 %v395
    %2205 = vmatprep.subr.mxu0 %v399
    %2206 = vmatpush1.msra.mxu0 %v398
    %2207 = vmatprep.subr.mxu0 %v402
    %2208 = vmatpush1.msra.mxu0 %v401
    %2209 = vmatprep.subr.mxu0 %v405
    %2210 = vmatpush1.msra.mxu0 %v404
    %2211 = vmatprep.subr.mxu0 0.0
    %2212 = vmatpush1.msra.mxu0 0.0
    %2213 = vmatprep.subr.mxu0 0.0
    %2214 = vmatpush1.msra.mxu0 0.0
    %2215 = vmatprep.subr.mxu0 0.0
    %2216 = vmatpush1.msra.mxu0 0.0
    %2217 = vmatprep.subr.mxu0 0.0
    %2218 = vmatpush1.msra.mxu0 0.0
    %2219 = vmatprep.subr.mxu0 0.0
    %2220 = vmatpush1.msra.mxu0 0.0
    %2221 = vmatprep.subr.mxu0 0.0
    %2222 = vmatpush1.msra.mxu0 0.0
    %2223 = vmatprep.subr.mxu0 0.0
    %2224 = vmatpush1.msra.mxu0 0.0
    %2225 = vmatprep.subr.mxu0 0.0
    %2226 = vmatpush1.msra.mxu0 0.0
    %2227 = vmatprep.subr.mxu0 0.0
    %2228 = vmatpush1.msra.mxu0 0.0
    %2229 = vmatprep.subr.mxu0 0.0
    %2230 = vmatpush1.msra.mxu0 0.0
    %2231 = vmatprep.subr.mxu0 0.0
    %2232 = vmatpush1.msra.mxu0 0.0
    %2233 = vmatprep.subr.mxu0 0.0
    %2234 = vmatpush1.msra.mxu0 0.0
    %2235 = vmatprep.subr.mxu0 0.0
    %2236 = vmatpush1.msra.mxu0 0.0
    %2237 = vmatprep.subr.mxu0 0.0
    %2238 = vmatpush1.msra.mxu0 0.0
    %2239 = vmatprep.subr.mxu0 0.0
    %2240 = vmatpush1.msra.mxu0 0.0
    %2241 = vmatprep.subr.mxu0 0.0
    %2242 = vmatpush1.msra.mxu0 0.0
    %2243 = vmatprep.mubr.f32.mxu0 0.0
    %2244 = vmatmul.mubr.f32.gmra.mrb[0].mxu0 %v2177
    %v2245 = vpop.f32.mrb[0].mxu0
    %v2246 = vadd.f32 %v415, %v2245
    %v2247 = vpop.f32.mrb[0].mxu0
    %v2248 = vadd.f32 %v419, %v2247
    %2249 = vdwg.mxu0
    %2250 = vmatprep.subr.mxu0 0.0
    %2251 = vmatpush1.msra.mxu0 %v361
    %2252 = vmatprep.subr.mxu0 0.0
    %2253 = vmatpush1.msra.mxu0 %v364
    %2254 = vmatprep.subr.mxu0 0.0
    %2255 = vmatpush1.msra.mxu0 %v367
    %2256 = vmatprep.subr.mxu0 0.0
    %2257 = vmatpush1.msra.mxu0 %v370
    %2258 = vmatprep.subr.mxu0 0.0
    %2259 = vmatpush1.msra.mxu0 %v373
    %2260 = vmatprep.subr.mxu0 0.0
    %2261 = vmatpush1.msra.mxu0 %v376
    %2262 = vmatprep.subr.mxu0 0.0
    %2263 = vmatpush1.msra.mxu0 %v379
    %2264 = vmatprep.subr.mxu0 0.0
    %2265 = vmatpush1.msra.mxu0 %v382
    %2266 = vmatprep.subr.mxu0 0.0
    %2267 = vmatpush1.msra.mxu0 %v385
    %2268 = vmatprep.subr.mxu0 0.0
    %2269 = vmatpush1.msra.mxu0 %v388
    %2270 = vmatprep.subr.mxu0 0.0
    %2271 = vmatpush1.msra.mxu0 %v391
    %2272 = vmatprep.subr.mxu0 0.0
    %2273 = vmatpush1.msra.mxu0 %v394
    %2274 = vmatprep.subr.mxu0 0.0
    %2275 = vmatpush1.msra.mxu0 %v397
    %2276 = vmatprep.subr.mxu0 0.0
    %2277 = vmatpush1.msra.mxu0 %v400
    %2278 = vmatprep.subr.mxu0 0.0
    %2279 = vmatpush1.msra.mxu0 %v403
    %2280 = vmatprep.subr.mxu0 0.0
    %2281 = vmatpush1.msra.mxu0 %v406
    %2282 = vmatprep.subr.mxu0 0.0
    %2283 = vmatpush1.msra.mxu0 0.0
    %2284 = vmatprep.subr.mxu0 0.0
    %2285 = vmatpush1.msra.mxu0 0.0
    %2286 = vmatprep.subr.mxu0 0.0
    %2287 = vmatpush1.msra.mxu0 0.0
    %2288 = vmatprep.subr.mxu0 0.0
    %2289 = vmatpush1.msra.mxu0 0.0
    %2290 = vmatprep.subr.mxu0 0.0
    %2291 = vmatpush1.msra.mxu0 0.0
    %2292 = vmatprep.subr.mxu0 0.0
    %2293 = vmatpush1.msra.mxu0 0.0
    %2294 = vmatprep.subr.mxu0 0.0
    %2295 = vmatpush1.msra.mxu0 0.0
    %2296 = vmatprep.subr.mxu0 0.0
    %2297 = vmatpush1.msra.mxu0 0.0
    %2298 = vmatprep.subr.mxu0 0.0
    %2299 = vmatpush1.msra.mxu0 0.0
    %2300 = vmatprep.subr.mxu0 0.0
    %2301 = vmatpush1.msra.mxu0 0.0
    %2302 = vmatprep.subr.mxu0 0.0
    %2303 = vmatpush1.msra.mxu0 0.0
    %2304 = vmatprep.subr.mxu0 0.0
    %2305 = vmatpush1.msra.mxu0 0.0
    %2306 = vmatprep.subr.mxu0 0.0
    %2307 = vmatpush1.msra.mxu0 0.0
    %2308 = vmatprep.subr.mxu0 0.0
    %2309 = vmatpush1.msra.mxu0 0.0
    %2310 = vmatprep.subr.mxu0 0.0
    %2311 = vmatpush1.msra.mxu0 0.0
    %2312 = vmatprep.subr.mxu0 0.0
    %2313 = vmatpush1.msra.mxu0 0.0
    %2314 = vmatprep.mubr.f32.mxu0 0.0
    %2315 = vmatmul.mubr.f32.gmra.mrb[0].mxu0 %v2177
    %v2316 = vpop.f32.mrb[0].mxu0
    %v2317 = vadd.f32 %v423, %v2316
    %v2318 = vpop.f32.mrb[0].mxu0
    %2319 = vdwg.mxu0
    %v2322 = vunpack.c.l.s4 1966171168
    %v2323 = vunpack.c.0.s8 %v2322
    %v2324 = vlaneseq
    %v2325 = vshrl.u32 %v2324, 7
    %v2326 = vsub.s32 %v2323, %v2325
    %v2327 = vrot.slane %v2246, %v2326
    %v2328 = vcombine.high %v2327, %v2327
    %v2330 = vunpack.c.l.s4 1966171168
    %v2331 = vunpack.c.0.s8 %v2330
    %v2332 = vlaneseq
    %v2333 = vshrl.u32 %v2332, 7
    %v2334 = vsub.s32 %v2331, %v2333
    %v2335 = vrot.slane %v2327, %v2334
    %v2337 = vunpack.c.l.s4 1966171168
    %v2338 = vunpack.c.0.s8 %v2337
    %v2339 = vlaneseq
    %v2340 = vshrl.u32 %v2339, 7
    %v2341 = vsub.s32 %v2338, %v2340
    %v2342 = vrot.slane %v2328, %v2341
    %v2345 = vadd.f32 %v2158, %v2335
    %v2346 = vadd.f32 %v2160, %v2342
    %v2347 = vxor.u32 %v2345, 2147483648
    %v2348 = vxor.u32 %v2346, 2147483648
    %v2349 = vmul.f32 %v2347, 1.442695
    %v2350 = vpow.pop %v2349
    %v2351 = vmul.f32 %v2348, 1.442695
    %v2352 = vpow.pop %v2351
    %v2353 = vadd.f32 %v2350, 1.0
    %v2354 = vadd.f32 %v2352, 1.0
    %v2355 = vrcp.pop %v2353
    %v2356 = vmul.f32 1.0, %v2355
    %v2357 = vrcp.pop %v2354
    %v2358 = vmul.f32 1.0, %v2357
    %v2361 = vrot.slane %v2158, 1
    %v2362 = vrot.slane %v2160, 1
    %v2367 = vunpack.c.l.s4 1966171168
    %v2368 = vunpack.c.0.s8 %v2367
    %v2369 = vlaneseq
    %v2370 = vshrl.u32 %v2369, 7
    %v2371 = vsub.s32 %v2368, %v2370
    %v2372 = vrot.slane %v2248, %v2371
    %v2373 = vcombine.high %v2372, %v2372
    %v2375 = vunpack.c.l.s4 1966171168
    %v2376 = vunpack.c.0.s8 %v2375
    %v2377 = vlaneseq
    %v2378 = vshrl.u32 %v2377, 7
    %v2379 = vsub.s32 %v2376, %v2378
    %v2380 = vrot.slane %v2372, %v2379
    %v2382 = vunpack.c.l.s4 1966171168
    %v2383 = vunpack.c.0.s8 %v2382
    %v2384 = vlaneseq
    %v2385 = vshrl.u32 %v2384, 7
    %v2386 = vsub.s32 %v2383, %v2385
    %v2387 = vrot.slane %v2373, %v2386
    %v2390 = vadd.f32 %v2361, %v2380
    %v2391 = vadd.f32 %v2362, %v2387
    %v2392 = vxor.u32 %v2390, 2147483648
    %v2393 = vxor.u32 %v2391, 2147483648
    %v2394 = vmul.f32 %v2392, 1.442695
    %v2395 = vpow.pop %v2394
    %v2396 = vmul.f32 %v2393, 1.442695
    %v2397 = vpow.pop %v2396
    %v2398 = vadd.f32 %v2395, 1.0
    %v2399 = vadd.f32 %v2397, 1.0
    %v2400 = vrcp.pop %v2398
    %v2401 = vmul.f32 1.0, %v2400
    %v2402 = vrcp.pop %v2399
    %v2403 = vmul.f32 1.0, %v2402
    %v2406 = vunpack.c.l.s4 1966171168
    %v2407 = vunpack.c.0.s8 %v2406
    %v2408 = vlaneseq
    %v2409 = vshrl.u32 %v2408, 7
    %v2410 = vsub.s32 %v2407, %v2409
    %v2411 = vrot.slane %v2317, %v2410
    %v2412 = vcombine.high %v2411, %v2411
    %v2414 = vunpack.c.l.s4 1966171168
    %v2415 = vunpack.c.0.s8 %v2414
    %v2416 = vlaneseq
    %v2417 = vshrl.u32 %v2416, 7
    %v2418 = vsub.s32 %v2415, %v2417
    %v2419 = vrot.slane %v2411, %v2418
    %v2421 = vunpack.c.l.s4 1966171168
    %v2422 = vunpack.c.0.s8 %v2421
    %v2423 = vlaneseq
    %v2424 = vshrl.u32 %v2423, 7
    %v2425 = vsub.s32 %v2422, %v2424
    %v2426 = vrot.slane %v2412, %v2425
    %v2429 = vmul.f32 %v2356, %v2419
    %v2430 = vmul.f32 %v2358, %v2426
    %v2431 = vrot.slane %v2158, 2
    %v2432 = vrot.slane %v2160, 2
    %v2435 = vadd.f32 %v2431, %v2429
    %v2436 = vadd.f32 %v2432, %v2430
    %v2437 = vtanh.pop %v2435
    %v2438 = vtanh.pop %v2436
    %v2439 = vsub.f32 1.0, %v2401
    %v2440 = vsub.f32 1.0, %v2403
    %v2441 = vmul.f32 %v2439, %v2437
    %v2442 = vmul.f32 %v2440, %v2438
    %v2443 = vmul.f32 %v2401, %v2153
    %v2444 = vmul.f32 %v2403, %v2154
    %v2445 = vadd.f32 %v2441, %v2443
    %v2446 = vadd.f32 %v2442, %v2444
    %2447 = vst [vmem:[#allocation3 + $0x6] sm:$0x1] %v2445
    %2448 = vst [vmem:[#allocation3 + $0x16] sm:$0x1] %v2446
    %s2449 = scalar_lea.vmem [#allocation2], 7
    %v2450 = vld [vmem:[%s2449] ss:$8 sm:$0x7]
    %s2451 = scalar_lea.vmem [#allocation2], 55
    %v2452 = vld [vmem:[%s2451] ss:$8 sm:$0x7]
    %v2455 = vcombine.low %v2445, %v2446
    %v2457 = vunpack.c.l.s4 1966171168
    %v2458 = vunpack.c.0.s8 %v2457
    %v2459 = vlaneseq
    %v2460 = vshrl.u32 %v2459, 7
    %v2461 = vsub.s32 %v2458, %v2460
    %v2462 = vrot.slane %v2455, %v2461
    %v2464 = vunpack.c.l.s4 1966171168
    %v2465 = vunpack.c.0.s8 %v2464
    %v2466 = vlaneseq
    %v2467 = vshrl.u32 %v2466, 7
    %v2468 = vsub.s32 %v2465, %v2467
    %v2469 = vrot.slane %v2462, %v2468
    %2471 = vmatprep.subr.mxu0 %v360
    %2472 = vmatpush1.msra.mxu0 %v359
    %2473 = vmatprep.subr.mxu0 %v363
    %2474 = vmatpush1.msra.mxu0 %v362
    %2475 = vmatprep.subr.mxu0 %v366
    %2476 = vmatpush1.msra.mxu0 %v365
    %2477 = vmatprep.subr.mxu0 %v369
    %2478 = vmatpush1.msra.mxu0 %v368
    %2479 = vmatprep.subr.mxu0 %v372
    %2480 = vmatpush1.msra.mxu0 %v371
    %2481 = vmatprep.subr.mxu0 %v375
    %2482 = vmatpush1.msra.mxu0 %v374
    %2483 = vmatprep.subr.mxu0 %v378
    %2484 = vmatpush1.msra.mxu0 %v377
    %2485 = vmatprep.subr.mxu0 %v381
    %2486 = vmatpush1.msra.mxu0 %v380
    %2487 = vmatprep.subr.mxu0 %v384
    %2488 = vmatpush1.msra.mxu0 %v383
    %2489 = vmatprep.subr.mxu0 %v387
    %2490 = vmatpush1.msra.mxu0 %v386
    %2491 = vmatprep.subr.mxu0 %v390
    %2492 = vmatpush1.msra.mxu0 %v389
    %2493 = vmatprep.subr.mxu0 %v393
    %2494 = vmatpush1.msra.mxu0 %v392
    %2495 = vmatprep.subr.mxu0 %v396
    %2496 = vmatpush1.msra.mxu0 %v395
    %2497 = vmatprep.subr.mxu0 %v399
    %2498 = vmatpush1.msra.mxu0 %v398
    %2499 = vmatprep.subr.mxu0 %v402
    %2500 = vmatpush1.msra.mxu0 %v401
    %2501 = vmatprep.subr.mxu0 %v405
    %2502 = vmatpush1.msra.mxu0 %v404
    %2503 = vmatprep.subr.mxu0 0.0
    %2504 = vmatpush1.msra.mxu0 0.0
    %2505 = vmatprep.subr.mxu0 0.0
    %2506 = vmatpush1.msra.mxu0 0.0
    %2507 = vmatprep.subr.mxu0 0.0
    %2508 = vmatpush1.msra.mxu0 0.0
    %2509 = vmatprep.subr.mxu0 0.0
    %2510 = vmatpush1.msra.mxu0 0.0
    %2511 = vmatprep.subr.mxu0 0.0
    %2512 = vmatpush1.msra.mxu0 0.0
    %2513 = vmatprep.subr.mxu0 0.0
    %2514 = vmatpush1.msra.mxu0 0.0
    %2515 = vmatprep.subr.mxu0 0.0
    %2516 = vmatpush1.msra.mxu0 0.0
    %2517 = vmatprep.subr.mxu0 0.0
    %2518 = vmatpush1.msra.mxu0 0.0
    %2519 = vmatprep.subr.mxu0 0.0
    %2520 = vmatpush1.msra.mxu0 0.0
    %2521 = vmatprep.subr.mxu0 0.0
    %2522 = vmatpush1.msra.mxu0 0.0
    %2523 = vmatprep.subr.mxu0 0.0
    %2524 = vmatpush1.msra.mxu0 0.0
    %2525 = vmatprep.subr.mxu0 0.0
    %2526 = vmatpush1.msra.mxu0 0.0
    %2527 = vmatprep.subr.mxu0 0.0
    %2528 = vmatpush1.msra.mxu0 0.0
    %2529 = vmatprep.subr.mxu0 0.0
    %2530 = vmatpush1.msra.mxu0 0.0
    %2531 = vmatprep.subr.mxu0 0.0
    %2532 = vmatpush1.msra.mxu0 0.0
    %2533 = vmatprep.subr.mxu0 0.0
    %2534 = vmatpush1.msra.mxu0 0.0
    %2535 = vmatprep.mubr.f32.mxu0 0.0
    %2536 = vmatmul.mubr.f32.gmra.mrb[0].mxu0 %v2469
    %v2537 = vpop.f32.mrb[0].mxu0
    %v2538 = vadd.f32 %v415, %v2537
    %v2539 = vpop.f32.mrb[0].mxu0
    %v2540 = vadd.f32 %v419, %v2539
    %2541 = vdwg.mxu0
    %2542 = vmatprep.subr.mxu0 0.0
    %2543 = vmatpush1.msra.mxu0 %v361
    %2544 = vmatprep.subr.mxu0 0.0
    %2545 = vmatpush1.msra.mxu0 %v364
    %2546 = vmatprep.subr.mxu0 0.0
    %2547 = vmatpush1.msra.mxu0 %v367
    %2548 = vmatprep.subr.mxu0 0.0
    %2549 = vmatpush1.msra.mxu0 %v370
    %2550 = vmatprep.subr.mxu0 0.0
    %2551 = vmatpush1.msra.mxu0 %v373
    %2552 = vmatprep.subr.mxu0 0.0
    %2553 = vmatpush1.msra.mxu0 %v376
    %2554 = vmatprep.subr.mxu0 0.0
    %2555 = vmatpush1.msra.mxu0 %v379
    %2556 = vmatprep.subr.mxu0 0.0
    %2557 = vmatpush1.msra.mxu0 %v382
    %2558 = vmatprep.subr.mxu0 0.0
    %2559 = vmatpush1.msra.mxu0 %v385
    %2560 = vmatprep.subr.mxu0 0.0
    %2561 = vmatpush1.msra.mxu0 %v388
    %2562 = vmatprep.subr.mxu0 0.0
    %2563 = vmatpush1.msra.mxu0 %v391
    %2564 = vmatprep.subr.mxu0 0.0
    %2565 = vmatpush1.msra.mxu0 %v394
    %2566 = vmatprep.subr.mxu0 0.0
    %2567 = vmatpush1.msra.mxu0 %v397
    %2568 = vmatprep.subr.mxu0 0.0
    %2569 = vmatpush1.msra.mxu0 %v400
    %2570 = vmatprep.subr.mxu0 0.0
    %2571 = vmatpush1.msra.mxu0 %v403
    %2572 = vmatprep.subr.mxu0 0.0
    %2573 = vmatpush1.msra.mxu0 %v406
    %2574 = vmatprep.subr.mxu0 0.0
    %2575 = vmatpush1.msra.mxu0 0.0
    %2576 = vmatprep.subr.mxu0 0.0
    %2577 = vmatpush1.msra.mxu0 0.0
    %2578 = vmatprep.subr.mxu0 0.0
    %2579 = vmatpush1.msra.mxu0 0.0
    %2580 = vmatprep.subr.mxu0 0.0
    %2581 = vmatpush1.msra.mxu0 0.0
    %2582 = vmatprep.subr.mxu0 0.0
    %2583 = vmatpush1.msra.mxu0 0.0
    %2584 = vmatprep.subr.mxu0 0.0
    %2585 = vmatpush1.msra.mxu0 0.0
    %2586 = vmatprep.subr.mxu0 0.0
    %2587 = vmatpush1.msra.mxu0 0.0
    %2588 = vmatprep.subr.mxu0 0.0
    %2589 = vmatpush1.msra.mxu0 0.0
    %2590 = vmatprep.subr.mxu0 0.0
    %2591 = vmatpush1.msra.mxu0 0.0
    %2592 = vmatprep.subr.mxu0 0.0
    %2593 = vmatpush1.msra.mxu0 0.0
    %2594 = vmatprep.subr.mxu0 0.0
    %2595 = vmatpush1.msra.mxu0 0.0
    %2596 = vmatprep.subr.mxu0 0.0
    %2597 = vmatpush1.msra.mxu0 0.0
    %2598 = vmatprep.subr.mxu0 0.0
    %2599 = vmatpush1.msra.mxu0 0.0
    %2600 = vmatprep.subr.mxu0 0.0
    %2601 = vmatpush1.msra.mxu0 0.0
    %2602 = vmatprep.subr.mxu0 0.0
    %2603 = vmatpush1.msra.mxu0 0.0
    %2604 = vmatprep.subr.mxu0 0.0
    %2605 = vmatpush1.msra.mxu0 0.0
    %2606 = vmatprep.mubr.f32.mxu0 0.0
    %2607 = vmatmul.mubr.f32.gmra.mrb[0].mxu0 %v2469
    %v2608 = vpop.f32.mrb[0].mxu0
    %v2609 = vadd.f32 %v423, %v2608
    %v2610 = vpop.f32.mrb[0].mxu0
    %2611 = vdwg.mxu0
    %v2614 = vunpack.c.l.s4 1966171168
    %v2615 = vunpack.c.0.s8 %v2614
    %v2616 = vlaneseq
    %v2617 = vshrl.u32 %v2616, 7
    %v2618 = vsub.s32 %v2615, %v2617
    %v2619 = vrot.slane %v2538, %v2618
    %v2620 = vcombine.high %v2619, %v2619
    %v2622 = vunpack.c.l.s4 1966171168
    %v2623 = vunpack.c.0.s8 %v2622
    %v2624 = vlaneseq
    %v2625 = vshrl.u32 %v2624, 7
    %v2626 = vsub.s32 %v2623, %v2625
    %v2627 = vrot.slane %v2619, %v2626
    %v2629 = vunpack.c.l.s4 1966171168
    %v2630 = vunpack.c.0.s8 %v2629
    %v2631 = vlaneseq
    %v2632 = vshrl.u32 %v2631, 7
    %v2633 = vsub.s32 %v2630, %v2632
    %v2634 = vrot.slane %v2620, %v2633
    %v2637 = vadd.f32 %v2450, %v2627
    %v2638 = vadd.f32 %v2452, %v2634
    %v2639 = vxor.u32 %v2637, 2147483648
    %v2640 = vxor.u32 %v2638, 2147483648
    %v2641 = vmul.f32 %v2639, 1.442695
    %v2642 = vpow.pop %v2641
    %v2643 = vmul.f32 %v2640, 1.442695
    %v2644 = vpow.pop %v2643
    %v2645 = vadd.f32 %v2642, 1.0
    %v2646 = vadd.f32 %v2644, 1.0
    %v2647 = vrcp.pop %v2645
    %v2648 = vmul.f32 1.0, %v2647
    %v2649 = vrcp.pop %v2646
    %v2650 = vmul.f32 1.0, %v2649
    %v2653 = vrot.slane %v2450, 1
    %v2654 = vrot.slane %v2452, 1
    %v2659 = vunpack.c.l.s4 1966171168
    %v2660 = vunpack.c.0.s8 %v2659
    %v2661 = vlaneseq
    %v2662 = vshrl.u32 %v2661, 7
    %v2663 = vsub.s32 %v2660, %v2662
    %v2664 = vrot.slane %v2540, %v2663
    %v2665 = vcombine.high %v2664, %v2664
    %v2667 = vunpack.c.l.s4 1966171168
    %v2668 = vunpack.c.0.s8 %v2667
    %v2669 = vlaneseq
    %v2670 = vshrl.u32 %v2669, 7
    %v2671 = vsub.s32 %v2668, %v2670
    %v2672 = vrot.slane %v2664, %v2671
    %v2674 = vunpack.c.l.s4 1966171168
    %v2675 = vunpack.c.0.s8 %v2674
    %v2676 = vlaneseq
    %v2677 = vshrl.u32 %v2676, 7
    %v2678 = vsub.s32 %v2675, %v2677
    %v2679 = vrot.slane %v2665, %v2678
    %v2682 = vadd.f32 %v2653, %v2672
    %v2683 = vadd.f32 %v2654, %v2679
    %v2684 = vxor.u32 %v2682, 2147483648
    %v2685 = vxor.u32 %v2683, 2147483648
    %v2686 = vmul.f32 %v2684, 1.442695
    %v2687 = vpow.pop %v2686
    %v2688 = vmul.f32 %v2685, 1.442695
    %v2689 = vpow.pop %v2688
    %v2690 = vadd.f32 %v2687, 1.0
    %v2691 = vadd.f32 %v2689, 1.0
    %v2692 = vrcp.pop %v2690
    %v2693 = vmul.f32 1.0, %v2692
    %v2694 = vrcp.pop %v2691
    %v2695 = vmul.f32 1.0, %v2694
    %v2698 = vunpack.c.l.s4 1966171168
    %v2699 = vunpack.c.0.s8 %v2698
    %v2700 = vlaneseq
    %v2701 = vshrl.u32 %v2700, 7
    %v2702 = vsub.s32 %v2699, %v2701
    %v2703 = vrot.slane %v2609, %v2702
    %v2704 = vcombine.high %v2703, %v2703
    %v2706 = vunpack.c.l.s4 1966171168
    %v2707 = vunpack.c.0.s8 %v2706
    %v2708 = vlaneseq
    %v2709 = vshrl.u32 %v2708, 7
    %v2710 = vsub.s32 %v2707, %v2709
    %v2711 = vrot.slane %v2703, %v2710
    %v2713 = vunpack.c.l.s4 1966171168
    %v2714 = vunpack.c.0.s8 %v2713
    %v2715 = vlaneseq
    %v2716 = vshrl.u32 %v2715, 7
    %v2717 = vsub.s32 %v2714, %v2716
    %v2718 = vrot.slane %v2704, %v2717
    %v2721 = vmul.f32 %v2648, %v2711
    %v2722 = vmul.f32 %v2650, %v2718
    %v2723 = vrot.slane %v2450, 2
    %v2724 = vrot.slane %v2452, 2
    %v2727 = vadd.f32 %v2723, %v2721
    %v2728 = vadd.f32 %v2724, %v2722
    %v2729 = vtanh.pop %v2727
    %v2730 = vtanh.pop %v2728
    %v2731 = vsub.f32 1.0, %v2693
    %v2732 = vsub.f32 1.0, %v2695
    %v2733 = vmul.f32 %v2731, %v2729
    %v2734 = vmul.f32 %v2732, %v2730
    %v2735 = vmul.f32 %v2693, %v2445
    %v2736 = vmul.f32 %v2695, %v2446
    %v2737 = vadd.f32 %v2733, %v2735
    %v2738 = vadd.f32 %v2734, %v2736
    %2739 = vst [vmem:[#allocation3 + $0x7] sm:$0x1] %v2737
    %2740 = vst [vmem:[#allocation3 + $0x17] sm:$0x1] %v2738
    %s2741 = scalar_lea.vmem [#allocation2], 24
    %v2742 = vld [vmem:[%s2741] ss:$8 sm:$0x7]
    %s2743 = scalar_lea.vmem [#allocation2], 72
    %v2744 = vld [vmem:[%s2743] ss:$8 sm:$0x7]
    %v2747 = vcombine.low %v2737, %v2738
    %v2749 = vunpack.c.l.s4 1966171168
    %v2750 = vunpack.c.0.s8 %v2749
    %v2751 = vlaneseq
    %v2752 = vshrl.u32 %v2751, 7
    %v2753 = vsub.s32 %v2750, %v2752
    %v2754 = vrot.slane %v2747, %v2753
    %v2756 = vunpack.c.l.s4 1966171168
    %v2757 = vunpack.c.0.s8 %v2756
    %v2758 = vlaneseq
    %v2759 = vshrl.u32 %v2758, 7
    %v2760 = vsub.s32 %v2757, %v2759
    %v2761 = vrot.slane %v2754, %v2760
    %2763 = vmatprep.subr.mxu0 %v360
    %2764 = vmatpush1.msra.mxu0 %v359
    %2765 = vmatprep.subr.mxu0 %v363
    %2766 = vmatpush1.msra.mxu0 %v362
    %2767 = vmatprep.subr.mxu0 %v366
    %2768 = vmatpush1.msra.mxu0 %v365
    %2769 = vmatprep.subr.mxu0 %v369
    %2770 = vmatpush1.msra.mxu0 %v368
    %2771 = vmatprep.subr.mxu0 %v372
    %2772 = vmatpush1.msra.mxu0 %v371
    %2773 = vmatprep.subr.mxu0 %v375
    %2774 = vmatpush1.msra.mxu0 %v374
    %2775 = vmatprep.subr.mxu0 %v378
    %2776 = vmatpush1.msra.mxu0 %v377
    %2777 = vmatprep.subr.mxu0 %v381
    %2778 = vmatpush1.msra.mxu0 %v380
    %2779 = vmatprep.subr.mxu0 %v384
    %2780 = vmatpush1.msra.mxu0 %v383
    %2781 = vmatprep.subr.mxu0 %v387
    %2782 = vmatpush1.msra.mxu0 %v386
    %2783 = vmatprep.subr.mxu0 %v390
    %2784 = vmatpush1.msra.mxu0 %v389
    %2785 = vmatprep.subr.mxu0 %v393
    %2786 = vmatpush1.msra.mxu0 %v392
    %2787 = vmatprep.subr.mxu0 %v396
    %2788 = vmatpush1.msra.mxu0 %v395
    %2789 = vmatprep.subr.mxu0 %v399
    %2790 = vmatpush1.msra.mxu0 %v398
    %2791 = vmatprep.subr.mxu0 %v402
    %2792 = vmatpush1.msra.mxu0 %v401
    %2793 = vmatprep.subr.mxu0 %v405
    %2794 = vmatpush1.msra.mxu0 %v404
    %2795 = vmatprep.subr.mxu0 0.0
    %2796 = vmatpush1.msra.mxu0 0.0
    %2797 = vmatprep.subr.mxu0 0.0
    %2798 = vmatpush1.msra.mxu0 0.0
    %2799 = vmatprep.subr.mxu0 0.0
    %2800 = vmatpush1.msra.mxu0 0.0
    %2801 = vmatprep.subr.mxu0 0.0
    %2802 = vmatpush1.msra.mxu0 0.0
    %2803 = vmatprep.subr.mxu0 0.0
    %2804 = vmatpush1.msra.mxu0 0.0
    %2805 = vmatprep.subr.mxu0 0.0
    %2806 = vmatpush1.msra.mxu0 0.0
    %2807 = vmatprep.subr.mxu0 0.0
    %2808 = vmatpush1.msra.mxu0 0.0
    %2809 = vmatprep.subr.mxu0 0.0
    %2810 = vmatpush1.msra.mxu0 0.0
    %2811 = vmatprep.subr.mxu0 0.0
    %2812 = vmatpush1.msra.mxu0 0.0
    %2813 = vmatprep.subr.mxu0 0.0
    %2814 = vmatpush1.msra.mxu0 0.0
    %2815 = vmatprep.subr.mxu0 0.0
    %2816 = vmatpush1.msra.mxu0 0.0
    %2817 = vmatprep.subr.mxu0 0.0
    %2818 = vmatpush1.msra.mxu0 0.0
    %2819 = vmatprep.subr.mxu0 0.0
    %2820 = vmatpush1.msra.mxu0 0.0
    %2821 = vmatprep.subr.mxu0 0.0
    %2822 = vmatpush1.msra.mxu0 0.0
    %2823 = vmatprep.subr.mxu0 0.0
    %2824 = vmatpush1.msra.mxu0 0.0
    %2825 = vmatprep.subr.mxu0 0.0
    %2826 = vmatpush1.msra.mxu0 0.0
    %2827 = vmatprep.mubr.f32.mxu0 0.0
    %2828 = vmatmul.mubr.f32.gmra.mrb[0].mxu0 %v2761
    %v2829 = vpop.f32.mrb[0].mxu0
    %v2830 = vadd.f32 %v415, %v2829
    %v2831 = vpop.f32.mrb[0].mxu0
    %v2832 = vadd.f32 %v419, %v2831
    %2833 = vdwg.mxu0
    %2834 = vmatprep.subr.mxu0 0.0
    %2835 = vmatpush1.msra.mxu0 %v361
    %2836 = vmatprep.subr.mxu0 0.0
    %2837 = vmatpush1.msra.mxu0 %v364
    %2838 = vmatprep.subr.mxu0 0.0
    %2839 = vmatpush1.msra.mxu0 %v367
    %2840 = vmatprep.subr.mxu0 0.0
    %2841 = vmatpush1.msra.mxu0 %v370
    %2842 = vmatprep.subr.mxu0 0.0
    %2843 = vmatpush1.msra.mxu0 %v373
    %2844 = vmatprep.subr.mxu0 0.0
    %2845 = vmatpush1.msra.mxu0 %v376
    %2846 = vmatprep.subr.mxu0 0.0
    %2847 = vmatpush1.msra.mxu0 %v379
    %2848 = vmatprep.subr.mxu0 0.0
    %2849 = vmatpush1.msra.mxu0 %v382
    %2850 = vmatprep.subr.mxu0 0.0
    %2851 = vmatpush1.msra.mxu0 %v385
    %2852 = vmatprep.subr.mxu0 0.0
    %2853 = vmatpush1.msra.mxu0 %v388
    %2854 = vmatprep.subr.mxu0 0.0
    %2855 = vmatpush1.msra.mxu0 %v391
    %2856 = vmatprep.subr.mxu0 0.0
    %2857 = vmatpush1.msra.mxu0 %v394
    %2858 = vmatprep.subr.mxu0 0.0
    %2859 = vmatpush1.msra.mxu0 %v397
    %2860 = vmatprep.subr.mxu0 0.0
    %2861 = vmatpush1.msra.mxu0 %v400
    %2862 = vmatprep.subr.mxu0 0.0
    %2863 = vmatpush1.msra.mxu0 %v403
    %2864 = vmatprep.subr.mxu0 0.0
    %2865 = vmatpush1.msra.mxu0 %v406
    %2866 = vmatprep.subr.mxu0 0.0
    %2867 = vmatpush1.msra.mxu0 0.0
    %2868 = vmatprep.subr.mxu0 0.0
    %2869 = vmatpush1.msra.mxu0 0.0
    %2870 = vmatprep.subr.mxu0 0.0
    %2871 = vmatpush1.msra.mxu0 0.0
    %2872 = vmatprep.subr.mxu0 0.0
    %2873 = vmatpush1.msra.mxu0 0.0
    %2874 = vmatprep.subr.mxu0 0.0
    %2875 = vmatpush1.msra.mxu0 0.0
    %2876 = vmatprep.subr.mxu0 0.0
    %2877 = vmatpush1.msra.mxu0 0.0
    %2878 = vmatprep.subr.mxu0 0.0
    %2879 = vmatpush1.msra.mxu0 0.0
    %2880 = vmatprep.subr.mxu0 0.0
    %2881 = vmatpush1.msra.mxu0 0.0
    %2882 = vmatprep.subr.mxu0 0.0
    %2883 = vmatpush1.msra.mxu0 0.0
    %2884 = vmatprep.subr.mxu0 0.0
    %2885 = vmatpush1.msra.mxu0 0.0
    %2886 = vmatprep.subr.mxu0 0.0
    %2887 = vmatpush1.msra.mxu0 0.0
    %2888 = vmatprep.subr.mxu0 0.0
    %2889 = vmatpush1.msra.mxu0 0.0
    %2890 = vmatprep.subr.mxu0 0.0
    %2891 = vmatpush1.msra.mxu0 0.0
    %2892 = vmatprep.subr.mxu0 0.0
    %2893 = vmatpush1.msra.mxu0 0.0
    %2894 = vmatprep.subr.mxu0 0.0
    %2895 = vmatpush1.msra.mxu0 0.0
    %2896 = vmatprep.subr.mxu0 0.0
    %2897 = vmatpush1.msra.mxu0 0.0
    %2898 = vmatprep.mubr.f32.mxu0 0.0
    %2899 = vmatmul.mubr.f32.gmra.mrb[0].mxu0 %v2761
    %v2900 = vpop.f32.mrb[0].mxu0
    %v2901 = vadd.f32 %v423, %v2900
    %v2902 = vpop.f32.mrb[0].mxu0
    %2903 = vdwg.mxu0
    %v2906 = vunpack.c.l.s4 1966171168
    %v2907 = vunpack.c.0.s8 %v2906
    %v2908 = vlaneseq
    %v2909 = vshrl.u32 %v2908, 7
    %v2910 = vsub.s32 %v2907, %v2909
    %v2911 = vrot.slane %v2830, %v2910
    %v2912 = vcombine.high %v2911, %v2911
    %v2914 = vunpack.c.l.s4 1966171168
    %v2915 = vunpack.c.0.s8 %v2914
    %v2916 = vlaneseq
    %v2917 = vshrl.u32 %v2916, 7
    %v2918 = vsub.s32 %v2915, %v2917
    %v2919 = vrot.slane %v2911, %v2918
    %v2921 = vunpack.c.l.s4 1966171168
    %v2922 = vunpack.c.0.s8 %v2921
    %v2923 = vlaneseq
    %v2924 = vshrl.u32 %v2923, 7
    %v2925 = vsub.s32 %v2922, %v2924
    %v2926 = vrot.slane %v2912, %v2925
    %v2929 = vadd.f32 %v2742, %v2919
    %v2930 = vadd.f32 %v2744, %v2926
    %v2931 = vxor.u32 %v2929, 2147483648
    %v2932 = vxor.u32 %v2930, 2147483648
    %v2933 = vmul.f32 %v2931, 1.442695
    %v2934 = vpow.pop %v2933
    %v2935 = vmul.f32 %v2932, 1.442695
    %v2936 = vpow.pop %v2935
    %v2937 = vadd.f32 %v2934, 1.0
    %v2938 = vadd.f32 %v2936, 1.0
    %v2939 = vrcp.pop %v2937
    %v2940 = vmul.f32 1.0, %v2939
    %v2941 = vrcp.pop %v2938
    %v2942 = vmul.f32 1.0, %v2941
    %v2945 = vrot.slane %v2742, 1
    %v2946 = vrot.slane %v2744, 1
    %v2951 = vunpack.c.l.s4 1966171168
    %v2952 = vunpack.c.0.s8 %v2951
    %v2953 = vlaneseq
    %v2954 = vshrl.u32 %v2953, 7
    %v2955 = vsub.s32 %v2952, %v2954
    %v2956 = vrot.slane %v2832, %v2955
    %v2957 = vcombine.high %v2956, %v2956
    %v2959 = vunpack.c.l.s4 1966171168
    %v2960 = vunpack.c.0.s8 %v2959
    %v2961 = vlaneseq
    %v2962 = vshrl.u32 %v2961, 7
    %v2963 = vsub.s32 %v2960, %v2962
    %v2964 = vrot.slane %v2956, %v2963
    %v2966 = vunpack.c.l.s4 1966171168
    %v2967 = vunpack.c.0.s8 %v2966
    %v2968 = vlaneseq
    %v2969 = vshrl.u32 %v2968, 7
    %v2970 = vsub.s32 %v2967, %v2969
    %v2971 = vrot.slane %v2957, %v2970
    %v2974 = vadd.f32 %v2945, %v2964
    %v2975 = vadd.f32 %v2946, %v2971
    %v2976 = vxor.u32 %v2974, 2147483648
    %v2977 = vxor.u32 %v2975, 2147483648
    %v2978 = vmul.f32 %v2976, 1.442695
    %v2979 = vpow.pop %v2978
    %v2980 = vmul.f32 %v2977, 1.442695
    %v2981 = vpow.pop %v2980
    %v2982 = vadd.f32 %v2979, 1.0
    %v2983 = vadd.f32 %v2981, 1.0
    %v2984 = vrcp.pop %v2982
    %v2985 = vmul.f32 1.0, %v2984
    %v2986 = vrcp.pop %v2983
    %v2987 = vmul.f32 1.0, %v2986
    %v2990 = vunpack.c.l.s4 1966171168
    %v2991 = vunpack.c.0.s8 %v2990
    %v2992 = vlaneseq
    %v2993 = vshrl.u32 %v2992, 7
    %v2994 = vsub.s32 %v2991, %v2993
    %v2995 = vrot.slane %v2901, %v2994
    %v2996 = vcombine.high %v2995, %v2995
    %v2998 = vunpack.c.l.s4 1966171168
    %v2999 = vunpack.c.0.s8 %v2998
    %v3000 = vlaneseq
    %v3001 = vshrl.u32 %v3000, 7
    %v3002 = vsub.s32 %v2999, %v3001
    %v3003 = vrot.slane %v2995, %v3002
    %v3005 = vunpack.c.l.s4 1966171168
    %v3006 = vunpack.c.0.s8 %v3005
    %v3007 = vlaneseq
    %v3008 = vshrl.u32 %v3007, 7
    %v3009 = vsub.s32 %v3006, %v3008
    %v3010 = vrot.slane %v2996, %v3009
    %v3013 = vmul.f32 %v2940, %v3003
    %v3014 = vmul.f32 %v2942, %v3010
    %v3015 = vrot.slane %v2742, 2
    %v3016 = vrot.slane %v2744, 2
    %v3019 = vadd.f32 %v3015, %v3013
    %v3020 = vadd.f32 %v3016, %v3014
    %v3021 = vtanh.pop %v3019
    %v3022 = vtanh.pop %v3020
    %v3023 = vsub.f32 1.0, %v2985
    %v3024 = vsub.f32 1.0, %v2987
    %v3025 = vmul.f32 %v3023, %v3021
    %v3026 = vmul.f32 %v3024, %v3022
    %v3027 = vmul.f32 %v2985, %v2737
    %v3028 = vmul.f32 %v2987, %v2738
    %v3029 = vadd.f32 %v3025, %v3027
    %v3030 = vadd.f32 %v3026, %v3028
    %3031 = vst [vmem:[#allocation3 + $0x8] sm:$0x1] %v3029
    %3032 = vst [vmem:[#allocation3 + $0x18] sm:$0x1] %v3030
    %s3033 = scalar_lea.vmem [#allocation2], 25
    %v3034 = vld [vmem:[%s3033] ss:$8 sm:$0x7]
    %s3035 = scalar_lea.vmem [#allocation2], 73
    %v3036 = vld [vmem:[%s3035] ss:$8 sm:$0x7]
    %v3039 = vcombine.low %v3029, %v3030
    %v3041 = vunpack.c.l.s4 1966171168
    %v3042 = vunpack.c.0.s8 %v3041
    %v3043 = vlaneseq
    %v3044 = vshrl.u32 %v3043, 7
    %v3045 = vsub.s32 %v3042, %v3044
    %v3046 = vrot.slane %v3039, %v3045
    %v3048 = vunpack.c.l.s4 1966171168
    %v3049 = vunpack.c.0.s8 %v3048
    %v3050 = vlaneseq
    %v3051 = vshrl.u32 %v3050, 7
    %v3052 = vsub.s32 %v3049, %v3051
    %v3053 = vrot.slane %v3046, %v3052
    %3055 = vmatprep.subr.mxu0 %v360
    %3056 = vmatpush1.msra.mxu0 %v359
    %3057 = vmatprep.subr.mxu0 %v363
    %3058 = vmatpush1.msra.mxu0 %v362
    %3059 = vmatprep.subr.mxu0 %v366
    %3060 = vmatpush1.msra.mxu0 %v365
    %3061 = vmatprep.subr.mxu0 %v369
    %3062 = vmatpush1.msra.mxu0 %v368
    %3063 = vmatprep.subr.mxu0 %v372
    %3064 = vmatpush1.msra.mxu0 %v371
    %3065 = vmatprep.subr.mxu0 %v375
    %3066 = vmatpush1.msra.mxu0 %v374
    %3067 = vmatprep.subr.mxu0 %v378
    %3068 = vmatpush1.msra.mxu0 %v377
    %3069 = vmatprep.subr.mxu0 %v381
    %3070 = vmatpush1.msra.mxu0 %v380
    %3071 = vmatprep.subr.mxu0 %v384
    %3072 = vmatpush1.msra.mxu0 %v383
    %3073 = vmatprep.subr.mxu0 %v387
    %3074 = vmatpush1.msra.mxu0 %v386
    %3075 = vmatprep.subr.mxu0 %v390
    %3076 = vmatpush1.msra.mxu0 %v389
    %3077 = vmatprep.subr.mxu0 %v393
    %3078 = vmatpush1.msra.mxu0 %v392
    %3079 = vmatprep.subr.mxu0 %v396
    %3080 = vmatpush1.msra.mxu0 %v395
    %3081 = vmatprep.subr.mxu0 %v399
    %3082 = vmatpush1.msra.mxu0 %v398
    %3083 = vmatprep.subr.mxu0 %v402
    %3084 = vmatpush1.msra.mxu0 %v401
    %3085 = vmatprep.subr.mxu0 %v405
    %3086 = vmatpush1.msra.mxu0 %v404
    %3087 = vmatprep.subr.mxu0 0.0
    %3088 = vmatpush1.msra.mxu0 0.0
    %3089 = vmatprep.subr.mxu0 0.0
    %3090 = vmatpush1.msra.mxu0 0.0
    %3091 = vmatprep.subr.mxu0 0.0
    %3092 = vmatpush1.msra.mxu0 0.0
    %3093 = vmatprep.subr.mxu0 0.0
    %3094 = vmatpush1.msra.mxu0 0.0
    %3095 = vmatprep.subr.mxu0 0.0
    %3096 = vmatpush1.msra.mxu0 0.0
    %3097 = vmatprep.subr.mxu0 0.0
    %3098 = vmatpush1.msra.mxu0 0.0
    %3099 = vmatprep.subr.mxu0 0.0
    %3100 = vmatpush1.msra.mxu0 0.0
    %3101 = vmatprep.subr.mxu0 0.0
    %3102 = vmatpush1.msra.mxu0 0.0
    %3103 = vmatprep.subr.mxu0 0.0
    %3104 = vmatpush1.msra.mxu0 0.0
    %3105 = vmatprep.subr.mxu0 0.0
    %3106 = vmatpush1.msra.mxu0 0.0
    %3107 = vmatprep.subr.mxu0 0.0
    %3108 = vmatpush1.msra.mxu0 0.0
    %3109 = vmatprep.subr.mxu0 0.0
    %3110 = vmatpush1.msra.mxu0 0.0
    %3111 = vmatprep.subr.mxu0 0.0
    %3112 = vmatpush1.msra.mxu0 0.0
    %3113 = vmatprep.subr.mxu0 0.0
    %3114 = vmatpush1.msra.mxu0 0.0
    %3115 = vmatprep.subr.mxu0 0.0
    %3116 = vmatpush1.msra.mxu0 0.0
    %3117 = vmatprep.subr.mxu0 0.0
    %3118 = vmatpush1.msra.mxu0 0.0
    %3119 = vmatprep.mubr.f32.mxu0 0.0
    %3120 = vmatmul.mubr.f32.gmra.mrb[0].mxu0 %v3053
    %v3121 = vpop.f32.mrb[0].mxu0
    %v3122 = vadd.f32 %v415, %v3121
    %v3123 = vpop.f32.mrb[0].mxu0
    %v3124 = vadd.f32 %v419, %v3123
    %3125 = vdwg.mxu0
    %3126 = vmatprep.subr.mxu0 0.0
    %3127 = vmatpush1.msra.mxu0 %v361
    %3128 = vmatprep.subr.mxu0 0.0
    %3129 = vmatpush1.msra.mxu0 %v364
    %3130 = vmatprep.subr.mxu0 0.0
    %3131 = vmatpush1.msra.mxu0 %v367
    %3132 = vmatprep.subr.mxu0 0.0
    %3133 = vmatpush1.msra.mxu0 %v370
    %3134 = vmatprep.subr.mxu0 0.0
    %3135 = vmatpush1.msra.mxu0 %v373
    %3136 = vmatprep.subr.mxu0 0.0
    %3137 = vmatpush1.msra.mxu0 %v376
    %3138 = vmatprep.subr.mxu0 0.0
    %3139 = vmatpush1.msra.mxu0 %v379
    %3140 = vmatprep.subr.mxu0 0.0
    %3141 = vmatpush1.msra.mxu0 %v382
    %3142 = vmatprep.subr.mxu0 0.0
    %3143 = vmatpush1.msra.mxu0 %v385
    %3144 = vmatprep.subr.mxu0 0.0
    %3145 = vmatpush1.msra.mxu0 %v388
    %3146 = vmatprep.subr.mxu0 0.0
    %3147 = vmatpush1.msra.mxu0 %v391
    %3148 = vmatprep.subr.mxu0 0.0
    %3149 = vmatpush1.msra.mxu0 %v394
    %3150 = vmatprep.subr.mxu0 0.0
    %3151 = vmatpush1.msra.mxu0 %v397
    %3152 = vmatprep.subr.mxu0 0.0
    %3153 = vmatpush1.msra.mxu0 %v400
    %3154 = vmatprep.subr.mxu0 0.0
    %3155 = vmatpush1.msra.mxu0 %v403
    %3156 = vmatprep.subr.mxu0 0.0
    %3157 = vmatpush1.msra.mxu0 %v406
    %3158 = vmatprep.subr.mxu0 0.0
    %3159 = vmatpush1.msra.mxu0 0.0
    %3160 = vmatprep.subr.mxu0 0.0
    %3161 = vmatpush1.msra.mxu0 0.0
    %3162 = vmatprep.subr.mxu0 0.0
    %3163 = vmatpush1.msra.mxu0 0.0
    %3164 = vmatprep.subr.mxu0 0.0
    %3165 = vmatpush1.msra.mxu0 0.0
    %3166 = vmatprep.subr.mxu0 0.0
    %3167 = vmatpush1.msra.mxu0 0.0
    %3168 = vmatprep.subr.mxu0 0.0
    %3169 = vmatpush1.msra.mxu0 0.0
    %3170 = vmatprep.subr.mxu0 0.0
    %3171 = vmatpush1.msra.mxu0 0.0
    %3172 = vmatprep.subr.mxu0 0.0
    %3173 = vmatpush1.msra.mxu0 0.0
    %3174 = vmatprep.subr.mxu0 0.0
    %3175 = vmatpush1.msra.mxu0 0.0
    %3176 = vmatprep.subr.mxu0 0.0
    %3177 = vmatpush1.msra.mxu0 0.0
    %3178 = vmatprep.subr.mxu0 0.0
    %3179 = vmatpush1.msra.mxu0 0.0
    %3180 = vmatprep.subr.mxu0 0.0
    %3181 = vmatpush1.msra.mxu0 0.0
    %3182 = vmatprep.subr.mxu0 0.0
    %3183 = vmatpush1.msra.mxu0 0.0
    %3184 = vmatprep.subr.mxu0 0.0
    %3185 = vmatpush1.msra.mxu0 0.0
    %3186 = vmatprep.subr.mxu0 0.0
    %3187 = vmatpush1.msra.mxu0 0.0
    %3188 = vmatprep.subr.mxu0 0.0
    %3189 = vmatpush1.msra.mxu0 0.0
    %3190 = vmatprep.mubr.f32.mxu0 0.0
    %3191 = vmatmul.mubr.f32.gmra.mrb[0].mxu0 %v3053
    %v3192 = vpop.f32.mrb[0].mxu0
    %v3193 = vadd.f32 %v423, %v3192
    %v3194 = vpop.f32.mrb[0].mxu0
    %3195 = vdwg.mxu0
    %v3198 = vunpack.c.l.s4 1966171168
    %v3199 = vunpack.c.0.s8 %v3198
    %v3200 = vlaneseq
    %v3201 = vshrl.u32 %v3200, 7
    %v3202 = vsub.s32 %v3199, %v3201
    %v3203 = vrot.slane %v3122, %v3202
    %v3204 = vcombine.high %v3203, %v3203
    %v3206 = vunpack.c.l.s4 1966171168
    %v3207 = vunpack.c.0.s8 %v3206
    %v3208 = vlaneseq
    %v3209 = vshrl.u32 %v3208, 7
    %v3210 = vsub.s32 %v3207, %v3209
    %v3211 = vrot.slane %v3203, %v3210
    %v3213 = vunpack.c.l.s4 1966171168
    %v3214 = vunpack.c.0.s8 %v3213
    %v3215 = vlaneseq
    %v3216 = vshrl.u32 %v3215, 7
    %v3217 = vsub.s32 %v3214, %v3216
    %v3218 = vrot.slane %v3204, %v3217
    %v3221 = vadd.f32 %v3034, %v3211
    %v3222 = vadd.f32 %v3036, %v3218
    %v3223 = vxor.u32 %v3221, 2147483648
    %v3224 = vxor.u32 %v3222, 2147483648
    %v3225 = vmul.f32 %v3223, 1.442695
    %v3226 = vpow.pop %v3225
    %v3227 = vmul.f32 %v3224, 1.442695
    %v3228 = vpow.pop %v3227
    %v3229 = vadd.f32 %v3226, 1.0
    %v3230 = vadd.f32 %v3228, 1.0
    %v3231 = vrcp.pop %v3229
    %v3232 = vmul.f32 1.0, %v3231
    %v3233 = vrcp.pop %v3230
    %v3234 = vmul.f32 1.0, %v3233
    %v3237 = vrot.slane %v3034, 1
    %v3238 = vrot.slane %v3036, 1
    %v3243 = vunpack.c.l.s4 1966171168
    %v3244 = vunpack.c.0.s8 %v3243
    %v3245 = vlaneseq
    %v3246 = vshrl.u32 %v3245, 7
    %v3247 = vsub.s32 %v3244, %v3246
    %v3248 = vrot.slane %v3124, %v3247
    %v3249 = vcombine.high %v3248, %v3248
    %v3251 = vunpack.c.l.s4 1966171168
    %v3252 = vunpack.c.0.s8 %v3251
    %v3253 = vlaneseq
    %v3254 = vshrl.u32 %v3253, 7
    %v3255 = vsub.s32 %v3252, %v3254
    %v3256 = vrot.slane %v3248, %v3255
    %v3258 = vunpack.c.l.s4 1966171168
    %v3259 = vunpack.c.0.s8 %v3258
    %v3260 = vlaneseq
    %v3261 = vshrl.u32 %v3260, 7
    %v3262 = vsub.s32 %v3259, %v3261
    %v3263 = vrot.slane %v3249, %v3262
    %v3266 = vadd.f32 %v3237, %v3256
    %v3267 = vadd.f32 %v3238, %v3263
    %v3268 = vxor.u32 %v3266, 2147483648
    %v3269 = vxor.u32 %v3267, 2147483648
    %v3270 = vmul.f32 %v3268, 1.442695
    %v3271 = vpow.pop %v3270
    %v3272 = vmul.f32 %v3269, 1.442695
    %v3273 = vpow.pop %v3272
    %v3274 = vadd.f32 %v3271, 1.0
    %v3275 = vadd.f32 %v3273, 1.0
    %v3276 = vrcp.pop %v3274
    %v3277 = vmul.f32 1.0, %v3276
    %v3278 = vrcp.pop %v3275
    %v3279 = vmul.f32 1.0, %v3278
    %v3282 = vunpack.c.l.s4 1966171168
    %v3283 = vunpack.c.0.s8 %v3282
    %v3284 = vlaneseq
    %v3285 = vshrl.u32 %v3284, 7
    %v3286 = vsub.s32 %v3283, %v3285
    %v3287 = vrot.slane %v3193, %v3286
    %v3288 = vcombine.high %v3287, %v3287
    %v3290 = vunpack.c.l.s4 1966171168
    %v3291 = vunpack.c.0.s8 %v3290
    %v3292 = vlaneseq
    %v3293 = vshrl.u32 %v3292, 7
    %v3294 = vsub.s32 %v3291, %v3293
    %v3295 = vrot.slane %v3287, %v3294
    %v3297 = vunpack.c.l.s4 1966171168
    %v3298 = vunpack.c.0.s8 %v3297
    %v3299 = vlaneseq
    %v3300 = vshrl.u32 %v3299, 7
    %v3301 = vsub.s32 %v3298, %v3300
    %v3302 = vrot.slane %v3288, %v3301
    %v3305 = vmul.f32 %v3232, %v3295
    %v3306 = vmul.f32 %v3234, %v3302
    %v3307 = vrot.slane %v3034, 2
    %v3308 = vrot.slane %v3036, 2
    %v3311 = vadd.f32 %v3307, %v3305
    %v3312 = vadd.f32 %v3308, %v3306
    %v3313 = vtanh.pop %v3311
    %v3314 = vtanh.pop %v3312
    %v3315 = vsub.f32 1.0, %v3277
    %v3316 = vsub.f32 1.0, %v3279
    %v3317 = vmul.f32 %v3315, %v3313
    %v3318 = vmul.f32 %v3316, %v3314
    %v3319 = vmul.f32 %v3277, %v3029
    %v3320 = vmul.f32 %v3279, %v3030
    %v3321 = vadd.f32 %v3317, %v3319
    %v3322 = vadd.f32 %v3318, %v3320
    %3323 = vst [vmem:[#allocation3 + $0x9] sm:$0x1] %v3321
    %3324 = vst [vmem:[#allocation3 + $0x19] sm:$0x1] %v3322
    %s3325 = scalar_lea.vmem [#allocation2], 26
    %v3326 = vld [vmem:[%s3325] ss:$8 sm:$0x7]
    %s3327 = scalar_lea.vmem [#allocation2], 74
    %v3328 = vld [vmem:[%s3327] ss:$8 sm:$0x7]
    %v3331 = vcombine.low %v3321, %v3322
    %v3333 = vunpack.c.l.s4 1966171168
    %v3334 = vunpack.c.0.s8 %v3333
    %v3335 = vlaneseq
    %v3336 = vshrl.u32 %v3335, 7
    %v3337 = vsub.s32 %v3334, %v3336
    %v3338 = vrot.slane %v3331, %v3337
    %v3340 = vunpack.c.l.s4 1966171168
    %v3341 = vunpack.c.0.s8 %v3340
    %v3342 = vlaneseq
    %v3343 = vshrl.u32 %v3342, 7
    %v3344 = vsub.s32 %v3341, %v3343
    %v3345 = vrot.slane %v3338, %v3344
    %3347 = vmatprep.subr.mxu0 %v360
    %3348 = vmatpush1.msra.mxu0 %v359
    %3349 = vmatprep.subr.mxu0 %v363
    %3350 = vmatpush1.msra.mxu0 %v362
    %3351 = vmatprep.subr.mxu0 %v366
    %3352 = vmatpush1.msra.mxu0 %v365
    %3353 = vmatprep.subr.mxu0 %v369
    %3354 = vmatpush1.msra.mxu0 %v368
    %3355 = vmatprep.subr.mxu0 %v372
    %3356 = vmatpush1.msra.mxu0 %v371
    %3357 = vmatprep.subr.mxu0 %v375
    %3358 = vmatpush1.msra.mxu0 %v374
    %3359 = vmatprep.subr.mxu0 %v378
    %3360 = vmatpush1.msra.mxu0 %v377
    %3361 = vmatprep.subr.mxu0 %v381
    %3362 = vmatpush1.msra.mxu0 %v380
    %3363 = vmatprep.subr.mxu0 %v384
    %3364 = vmatpush1.msra.mxu0 %v383
    %3365 = vmatprep.subr.mxu0 %v387
    %3366 = vmatpush1.msra.mxu0 %v386
    %3367 = vmatprep.subr.mxu0 %v390
    %3368 = vmatpush1.msra.mxu0 %v389
    %3369 = vmatprep.subr.mxu0 %v393
    %3370 = vmatpush1.msra.mxu0 %v392
    %3371 = vmatprep.subr.mxu0 %v396
    %3372 = vmatpush1.msra.mxu0 %v395
    %3373 = vmatprep.subr.mxu0 %v399
    %3374 = vmatpush1.msra.mxu0 %v398
    %3375 = vmatprep.subr.mxu0 %v402
    %3376 = vmatpush1.msra.mxu0 %v401
    %3377 = vmatprep.subr.mxu0 %v405
    %3378 = vmatpush1.msra.mxu0 %v404
    %3379 = vmatprep.subr.mxu0 0.0
    %3380 = vmatpush1.msra.mxu0 0.0
    %3381 = vmatprep.subr.mxu0 0.0
    %3382 = vmatpush1.msra.mxu0 0.0
    %3383 = vmatprep.subr.mxu0 0.0
    %3384 = vmatpush1.msra.mxu0 0.0
    %3385 = vmatprep.subr.mxu0 0.0
    %3386 = vmatpush1.msra.mxu0 0.0
    %3387 = vmatprep.subr.mxu0 0.0
    %3388 = vmatpush1.msra.mxu0 0.0
    %3389 = vmatprep.subr.mxu0 0.0
    %3390 = vmatpush1.msra.mxu0 0.0
    %3391 = vmatprep.subr.mxu0 0.0
    %3392 = vmatpush1.msra.mxu0 0.0
    %3393 = vmatprep.subr.mxu0 0.0
    %3394 = vmatpush1.msra.mxu0 0.0
    %3395 = vmatprep.subr.mxu0 0.0
    %3396 = vmatpush1.msra.mxu0 0.0
    %3397 = vmatprep.subr.mxu0 0.0
    %3398 = vmatpush1.msra.mxu0 0.0
    %3399 = vmatprep.subr.mxu0 0.0
    %3400 = vmatpush1.msra.mxu0 0.0
    %3401 = vmatprep.subr.mxu0 0.0
    %3402 = vmatpush1.msra.mxu0 0.0
    %3403 = vmatprep.subr.mxu0 0.0
    %3404 = vmatpush1.msra.mxu0 0.0
    %3405 = vmatprep.subr.mxu0 0.0
    %3406 = vmatpush1.msra.mxu0 0.0
    %3407 = vmatprep.subr.mxu0 0.0
    %3408 = vmatpush1.msra.mxu0 0.0
    %3409 = vmatprep.subr.mxu0 0.0
    %3410 = vmatpush1.msra.mxu0 0.0
    %3411 = vmatprep.mubr.f32.mxu0 0.0
    %3412 = vmatmul.mubr.f32.gmra.mrb[0].mxu0 %v3345
    %v3413 = vpop.f32.mrb[0].mxu0
    %v3414 = vadd.f32 %v415, %v3413
    %v3415 = vpop.f32.mrb[0].mxu0
    %v3416 = vadd.f32 %v419, %v3415
    %3417 = vdwg.mxu0
    %3418 = vmatprep.subr.mxu0 0.0
    %3419 = vmatpush1.msra.mxu0 %v361
    %3420 = vmatprep.subr.mxu0 0.0
    %3421 = vmatpush1.msra.mxu0 %v364
    %3422 = vmatprep.subr.mxu0 0.0
    %3423 = vmatpush1.msra.mxu0 %v367
    %3424 = vmatprep.subr.mxu0 0.0
    %3425 = vmatpush1.msra.mxu0 %v370
    %3426 = vmatprep.subr.mxu0 0.0
    %3427 = vmatpush1.msra.mxu0 %v373
    %3428 = vmatprep.subr.mxu0 0.0
    %3429 = vmatpush1.msra.mxu0 %v376
    %3430 = vmatprep.subr.mxu0 0.0
    %3431 = vmatpush1.msra.mxu0 %v379
    %3432 = vmatprep.subr.mxu0 0.0
    %3433 = vmatpush1.msra.mxu0 %v382
    %3434 = vmatprep.subr.mxu0 0.0
    %3435 = vmatpush1.msra.mxu0 %v385
    %3436 = vmatprep.subr.mxu0 0.0
    %3437 = vmatpush1.msra.mxu0 %v388
    %3438 = vmatprep.subr.mxu0 0.0
    %3439 = vmatpush1.msra.mxu0 %v391
    %3440 = vmatprep.subr.mxu0 0.0
    %3441 = vmatpush1.msra.mxu0 %v394
    %3442 = vmatprep.subr.mxu0 0.0
    %3443 = vmatpush1.msra.mxu0 %v397
    %3444 = vmatprep.subr.mxu0 0.0
    %3445 = vmatpush1.msra.mxu0 %v400
    %3446 = vmatprep.subr.mxu0 0.0
    %3447 = vmatpush1.msra.mxu0 %v403
    %3448 = vmatprep.subr.mxu0 0.0
    %3449 = vmatpush1.msra.mxu0 %v406
    %3450 = vmatprep.subr.mxu0 0.0
    %3451 = vmatpush1.msra.mxu0 0.0
    %3452 = vmatprep.subr.mxu0 0.0
    %3453 = vmatpush1.msra.mxu0 0.0
    %3454 = vmatprep.subr.mxu0 0.0
    %3455 = vmatpush1.msra.mxu0 0.0
    %3456 = vmatprep.subr.mxu0 0.0
    %3457 = vmatpush1.msra.mxu0 0.0
    %3458 = vmatprep.subr.mxu0 0.0
    %3459 = vmatpush1.msra.mxu0 0.0
    %3460 = vmatprep.subr.mxu0 0.0
    %3461 = vmatpush1.msra.mxu0 0.0
    %3462 = vmatprep.subr.mxu0 0.0
    %3463 = vmatpush1.msra.mxu0 0.0
    %3464 = vmatprep.subr.mxu0 0.0
    %3465 = vmatpush1.msra.mxu0 0.0
    %3466 = vmatprep.subr.mxu0 0.0
    %3467 = vmatpush1.msra.mxu0 0.0
    %3468 = vmatprep.subr.mxu0 0.0
    %3469 = vmatpush1.msra.mxu0 0.0
    %3470 = vmatprep.subr.mxu0 0.0
    %3471 = vmatpush1.msra.mxu0 0.0
    %3472 = vmatprep.subr.mxu0 0.0
    %3473 = vmatpush1.msra.mxu0 0.0
    %3474 = vmatprep.subr.mxu0 0.0
    %3475 = vmatpush1.msra.mxu0 0.0
    %3476 = vmatprep.subr.mxu0 0.0
    %3477 = vmatpush1.msra.mxu0 0.0
    %3478 = vmatprep.subr.mxu0 0.0
    %3479 = vmatpush1.msra.mxu0 0.0
    %3480 = vmatprep.subr.mxu0 0.0
    %3481 = vmatpush1.msra.mxu0 0.0
    %3482 = vmatprep.mubr.f32.mxu0 0.0
    %3483 = vmatmul.mubr.f32.gmra.mrb[0].mxu0 %v3345
    %v3484 = vpop.f32.mrb[0].mxu0
    %v3485 = vadd.f32 %v423, %v3484
    %v3486 = vpop.f32.mrb[0].mxu0
    %3487 = vdwg.mxu0
    %v3490 = vunpack.c.l.s4 1966171168
    %v3491 = vunpack.c.0.s8 %v3490
    %v3492 = vlaneseq
    %v3493 = vshrl.u32 %v3492, 7
    %v3494 = vsub.s32 %v3491, %v3493
    %v3495 = vrot.slane %v3414, %v3494
    %v3496 = vcombine.high %v3495, %v3495
    %v3498 = vunpack.c.l.s4 1966171168
    %v3499 = vunpack.c.0.s8 %v3498
    %v3500 = vlaneseq
    %v3501 = vshrl.u32 %v3500, 7
    %v3502 = vsub.s32 %v3499, %v3501
    %v3503 = vrot.slane %v3495, %v3502
    %v3505 = vunpack.c.l.s4 1966171168
    %v3506 = vunpack.c.0.s8 %v3505
    %v3507 = vlaneseq
    %v3508 = vshrl.u32 %v3507, 7
    %v3509 = vsub.s32 %v3506, %v3508
    %v3510 = vrot.slane %v3496, %v3509
    %v3513 = vadd.f32 %v3326, %v3503
    %v3514 = vadd.f32 %v3328, %v3510
    %v3515 = vxor.u32 %v3513, 2147483648
    %v3516 = vxor.u32 %v3514, 2147483648
    %v3517 = vmul.f32 %v3515, 1.442695
    %v3518 = vpow.pop %v3517
    %v3519 = vmul.f32 %v3516, 1.442695
    %v3520 = vpow.pop %v3519
    %v3521 = vadd.f32 %v3518, 1.0
    %v3522 = vadd.f32 %v3520, 1.0
    %v3523 = vrcp.pop %v3521
    %v3524 = vmul.f32 1.0, %v3523
    %v3525 = vrcp.pop %v3522
    %v3526 = vmul.f32 1.0, %v3525
    %v3529 = vrot.slane %v3326, 1
    %v3530 = vrot.slane %v3328, 1
    %v3535 = vunpack.c.l.s4 1966171168
    %v3536 = vunpack.c.0.s8 %v3535
    %v3537 = vlaneseq
    %v3538 = vshrl.u32 %v3537, 7
    %v3539 = vsub.s32 %v3536, %v3538
    %v3540 = vrot.slane %v3416, %v3539
    %v3541 = vcombine.high %v3540, %v3540
    %v3543 = vunpack.c.l.s4 1966171168
    %v3544 = vunpack.c.0.s8 %v3543
    %v3545 = vlaneseq
    %v3546 = vshrl.u32 %v3545, 7
    %v3547 = vsub.s32 %v3544, %v3546
    %v3548 = vrot.slane %v3540, %v3547
    %v3550 = vunpack.c.l.s4 1966171168
    %v3551 = vunpack.c.0.s8 %v3550
    %v3552 = vlaneseq
    %v3553 = vshrl.u32 %v3552, 7
    %v3554 = vsub.s32 %v3551, %v3553
    %v3555 = vrot.slane %v3541, %v3554
    %v3558 = vadd.f32 %v3529, %v3548
    %v3559 = vadd.f32 %v3530, %v3555
    %v3560 = vxor.u32 %v3558, 2147483648
    %v3561 = vxor.u32 %v3559, 2147483648
    %v3562 = vmul.f32 %v3560, 1.442695
    %v3563 = vpow.pop %v3562
    %v3564 = vmul.f32 %v3561, 1.442695
    %v3565 = vpow.pop %v3564
    %v3566 = vadd.f32 %v3563, 1.0
    %v3567 = vadd.f32 %v3565, 1.0
    %v3568 = vrcp.pop %v3566
    %v3569 = vmul.f32 1.0, %v3568
    %v3570 = vrcp.pop %v3567
    %v3571 = vmul.f32 1.0, %v3570
    %v3574 = vunpack.c.l.s4 1966171168
    %v3575 = vunpack.c.0.s8 %v3574
    %v3576 = vlaneseq
    %v3577 = vshrl.u32 %v3576, 7
    %v3578 = vsub.s32 %v3575, %v3577
    %v3579 = vrot.slane %v3485, %v3578
    %v3580 = vcombine.high %v3579, %v3579
    %v3582 = vunpack.c.l.s4 1966171168
    %v3583 = vunpack.c.0.s8 %v3582
    %v3584 = vlaneseq
    %v3585 = vshrl.u32 %v3584, 7
    %v3586 = vsub.s32 %v3583, %v3585
    %v3587 = vrot.slane %v3579, %v3586
    %v3589 = vunpack.c.l.s4 1966171168
    %v3590 = vunpack.c.0.s8 %v3589
    %v3591 = vlaneseq
    %v3592 = vshrl.u32 %v3591, 7
    %v3593 = vsub.s32 %v3590, %v3592
    %v3594 = vrot.slane %v3580, %v3593
    %v3597 = vmul.f32 %v3524, %v3587
    %v3598 = vmul.f32 %v3526, %v3594
    %v3599 = vrot.slane %v3326, 2
    %v3600 = vrot.slane %v3328, 2
    %v3603 = vadd.f32 %v3599, %v3597
    %v3604 = vadd.f32 %v3600, %v3598
    %v3605 = vtanh.pop %v3603
    %v3606 = vtanh.pop %v3604
    %v3607 = vsub.f32 1.0, %v3569
    %v3608 = vsub.f32 1.0, %v3571
    %v3609 = vmul.f32 %v3607, %v3605
    %v3610 = vmul.f32 %v3608, %v3606
    %v3611 = vmul.f32 %v3569, %v3321
    %v3612 = vmul.f32 %v3571, %v3322
    %v3613 = vadd.f32 %v3609, %v3611
    %v3614 = vadd.f32 %v3610, %v3612
    %3615 = vst [vmem:[#allocation3 + $0xa] sm:$0x1] %v3613
    %3616 = vst [vmem:[#allocation3 + $0x1a] sm:$0x1] %v3614
    %s3617 = scalar_lea.vmem [#allocation2], 27
    %v3618 = vld [vmem:[%s3617] ss:$8 sm:$0x7]
    %s3619 = scalar_lea.vmem [#allocation2], 75
    %v3620 = vld [vmem:[%s3619] ss:$8 sm:$0x7]
    %v3623 = vcombine.low %v3613, %v3614
    %v3625 = vunpack.c.l.s4 1966171168
    %v3626 = vunpack.c.0.s8 %v3625
    %v3627 = vlaneseq
    %v3628 = vshrl.u32 %v3627, 7
    %v3629 = vsub.s32 %v3626, %v3628
    %v3630 = vrot.slane %v3623, %v3629
    %v3632 = vunpack.c.l.s4 1966171168
    %v3633 = vunpack.c.0.s8 %v3632
    %v3634 = vlaneseq
    %v3635 = vshrl.u32 %v3634, 7
    %v3636 = vsub.s32 %v3633, %v3635
    %v3637 = vrot.slane %v3630, %v3636
    %3639 = vmatprep.subr.mxu0 %v360
    %3640 = vmatpush1.msra.mxu0 %v359
    %3641 = vmatprep.subr.mxu0 %v363
    %3642 = vmatpush1.msra.mxu0 %v362
    %3643 = vmatprep.subr.mxu0 %v366
    %3644 = vmatpush1.msra.mxu0 %v365
    %3645 = vmatprep.subr.mxu0 %v369
    %3646 = vmatpush1.msra.mxu0 %v368
    %3647 = vmatprep.subr.mxu0 %v372
    %3648 = vmatpush1.msra.mxu0 %v371
    %3649 = vmatprep.subr.mxu0 %v375
    %3650 = vmatpush1.msra.mxu0 %v374
    %3651 = vmatprep.subr.mxu0 %v378
    %3652 = vmatpush1.msra.mxu0 %v377
    %3653 = vmatprep.subr.mxu0 %v381
    %3654 = vmatpush1.msra.mxu0 %v380
    %3655 = vmatprep.subr.mxu0 %v384
    %3656 = vmatpush1.msra.mxu0 %v383
    %3657 = vmatprep.subr.mxu0 %v387
    %3658 = vmatpush1.msra.mxu0 %v386
    %3659 = vmatprep.subr.mxu0 %v390
    %3660 = vmatpush1.msra.mxu0 %v389
    %3661 = vmatprep.subr.mxu0 %v393
    %3662 = vmatpush1.msra.mxu0 %v392
    %3663 = vmatprep.subr.mxu0 %v396
    %3664 = vmatpush1.msra.mxu0 %v395
    %3665 = vmatprep.subr.mxu0 %v399
    %3666 = vmatpush1.msra.mxu0 %v398
    %3667 = vmatprep.subr.mxu0 %v402
    %3668 = vmatpush1.msra.mxu0 %v401
    %3669 = vmatprep.subr.mxu0 %v405
    %3670 = vmatpush1.msra.mxu0 %v404
    %3671 = vmatprep.subr.mxu0 0.0
    %3672 = vmatpush1.msra.mxu0 0.0
    %3673 = vmatprep.subr.mxu0 0.0
    %3674 = vmatpush1.msra.mxu0 0.0
    %3675 = vmatprep.subr.mxu0 0.0
    %3676 = vmatpush1.msra.mxu0 0.0
    %3677 = vmatprep.subr.mxu0 0.0
    %3678 = vmatpush1.msra.mxu0 0.0
    %3679 = vmatprep.subr.mxu0 0.0
    %3680 = vmatpush1.msra.mxu0 0.0
    %3681 = vmatprep.subr.mxu0 0.0
    %3682 = vmatpush1.msra.mxu0 0.0
    %3683 = vmatprep.subr.mxu0 0.0
    %3684 = vmatpush1.msra.mxu0 0.0
    %3685 = vmatprep.subr.mxu0 0.0
    %3686 = vmatpush1.msra.mxu0 0.0
    %3687 = vmatprep.subr.mxu0 0.0
    %3688 = vmatpush1.msra.mxu0 0.0
    %3689 = vmatprep.subr.mxu0 0.0
    %3690 = vmatpush1.msra.mxu0 0.0
    %3691 = vmatprep.subr.mxu0 0.0
    %3692 = vmatpush1.msra.mxu0 0.0
    %3693 = vmatprep.subr.mxu0 0.0
    %3694 = vmatpush1.msra.mxu0 0.0
    %3695 = vmatprep.subr.mxu0 0.0
    %3696 = vmatpush1.msra.mxu0 0.0
    %3697 = vmatprep.subr.mxu0 0.0
    %3698 = vmatpush1.msra.mxu0 0.0
    %3699 = vmatprep.subr.mxu0 0.0
    %3700 = vmatpush1.msra.mxu0 0.0
    %3701 = vmatprep.subr.mxu0 0.0
    %3702 = vmatpush1.msra.mxu0 0.0
    %3703 = vmatprep.mubr.f32.mxu0 0.0
    %3704 = vmatmul.mubr.f32.gmra.mrb[0].mxu0 %v3637
    %v3705 = vpop.f32.mrb[0].mxu0
    %v3706 = vadd.f32 %v415, %v3705
    %v3707 = vpop.f32.mrb[0].mxu0
    %v3708 = vadd.f32 %v419, %v3707
    %3709 = vdwg.mxu0
    %3710 = vmatprep.subr.mxu0 0.0
    %3711 = vmatpush1.msra.mxu0 %v361
    %3712 = vmatprep.subr.mxu0 0.0
    %3713 = vmatpush1.msra.mxu0 %v364
    %3714 = vmatprep.subr.mxu0 0.0
    %3715 = vmatpush1.msra.mxu0 %v367
    %3716 = vmatprep.subr.mxu0 0.0
    %3717 = vmatpush1.msra.mxu0 %v370
    %3718 = vmatprep.subr.mxu0 0.0
    %3719 = vmatpush1.msra.mxu0 %v373
    %3720 = vmatprep.subr.mxu0 0.0
    %3721 = vmatpush1.msra.mxu0 %v376
    %3722 = vmatprep.subr.mxu0 0.0
    %3723 = vmatpush1.msra.mxu0 %v379
    %3724 = vmatprep.subr.mxu0 0.0
    %3725 = vmatpush1.msra.mxu0 %v382
    %3726 = vmatprep.subr.mxu0 0.0
    %3727 = vmatpush1.msra.mxu0 %v385
    %3728 = vmatprep.subr.mxu0 0.0
    %3729 = vmatpush1.msra.mxu0 %v388
    %3730 = vmatprep.subr.mxu0 0.0
    %3731 = vmatpush1.msra.mxu0 %v391
    %3732 = vmatprep.subr.mxu0 0.0
    %3733 = vmatpush1.msra.mxu0 %v394
    %3734 = vmatprep.subr.mxu0 0.0
    %3735 = vmatpush1.msra.mxu0 %v397
    %3736 = vmatprep.subr.mxu0 0.0
    %3737 = vmatpush1.msra.mxu0 %v400
    %3738 = vmatprep.subr.mxu0 0.0
    %3739 = vmatpush1.msra.mxu0 %v403
    %3740 = vmatprep.subr.mxu0 0.0
    %3741 = vmatpush1.msra.mxu0 %v406
    %3742 = vmatprep.subr.mxu0 0.0
    %3743 = vmatpush1.msra.mxu0 0.0
    %3744 = vmatprep.subr.mxu0 0.0
    %3745 = vmatpush1.msra.mxu0 0.0
    %3746 = vmatprep.subr.mxu0 0.0
    %3747 = vmatpush1.msra.mxu0 0.0
    %3748 = vmatprep.subr.mxu0 0.0
    %3749 = vmatpush1.msra.mxu0 0.0
    %3750 = vmatprep.subr.mxu0 0.0
    %3751 = vmatpush1.msra.mxu0 0.0
    %3752 = vmatprep.subr.mxu0 0.0
    %3753 = vmatpush1.msra.mxu0 0.0
    %3754 = vmatprep.subr.mxu0 0.0
    %3755 = vmatpush1.msra.mxu0 0.0
    %3756 = vmatprep.subr.mxu0 0.0
    %3757 = vmatpush1.msra.mxu0 0.0
    %3758 = vmatprep.subr.mxu0 0.0
    %3759 = vmatpush1.msra.mxu0 0.0
    %3760 = vmatprep.subr.mxu0 0.0
    %3761 = vmatpush1.msra.mxu0 0.0
    %3762 = vmatprep.subr.mxu0 0.0
    %3763 = vmatpush1.msra.mxu0 0.0
    %3764 = vmatprep.subr.mxu0 0.0
    %3765 = vmatpush1.msra.mxu0 0.0
    %3766 = vmatprep.subr.mxu0 0.0
    %3767 = vmatpush1.msra.mxu0 0.0
    %3768 = vmatprep.subr.mxu0 0.0
    %3769 = vmatpush1.msra.mxu0 0.0
    %3770 = vmatprep.subr.mxu0 0.0
    %3771 = vmatpush1.msra.mxu0 0.0
    %3772 = vmatprep.subr.mxu0 0.0
    %3773 = vmatpush1.msra.mxu0 0.0
    %3774 = vmatprep.mubr.f32.mxu0 0.0
    %3775 = vmatmul.mubr.f32.gmra.mrb[0].mxu0 %v3637
    %v3776 = vpop.f32.mrb[0].mxu0
    %v3777 = vadd.f32 %v423, %v3776
    %v3778 = vpop.f32.mrb[0].mxu0
    %3779 = vdwg.mxu0
    %v3782 = vunpack.c.l.s4 1966171168
    %v3783 = vunpack.c.0.s8 %v3782
    %v3784 = vlaneseq
    %v3785 = vshrl.u32 %v3784, 7
    %v3786 = vsub.s32 %v3783, %v3785
    %v3787 = vrot.slane %v3706, %v3786
    %v3788 = vcombine.high %v3787, %v3787
    %v3790 = vunpack.c.l.s4 1966171168
    %v3791 = vunpack.c.0.s8 %v3790
    %v3792 = vlaneseq
    %v3793 = vshrl.u32 %v3792, 7
    %v3794 = vsub.s32 %v3791, %v3793
    %v3795 = vrot.slane %v3787, %v3794
    %v3797 = vunpack.c.l.s4 1966171168
    %v3798 = vunpack.c.0.s8 %v3797
    %v3799 = vlaneseq
    %v3800 = vshrl.u32 %v3799, 7
    %v3801 = vsub.s32 %v3798, %v3800
    %v3802 = vrot.slane %v3788, %v3801
    %v3805 = vadd.f32 %v3618, %v3795
    %v3806 = vadd.f32 %v3620, %v3802
    %v3807 = vxor.u32 %v3805, 2147483648
    %v3808 = vxor.u32 %v3806, 2147483648
    %v3809 = vmul.f32 %v3807, 1.442695
    %v3810 = vpow.pop %v3809
    %v3811 = vmul.f32 %v3808, 1.442695
    %v3812 = vpow.pop %v3811
    %v3813 = vadd.f32 %v3810, 1.0
    %v3814 = vadd.f32 %v3812, 1.0
    %v3815 = vrcp.pop %v3813
    %v3816 = vmul.f32 1.0, %v3815
    %v3817 = vrcp.pop %v3814
    %v3818 = vmul.f32 1.0, %v3817
    %v3821 = vrot.slane %v3618, 1
    %v3822 = vrot.slane %v3620, 1
    %v3827 = vunpack.c.l.s4 1966171168
    %v3828 = vunpack.c.0.s8 %v3827
    %v3829 = vlaneseq
    %v3830 = vshrl.u32 %v3829, 7
    %v3831 = vsub.s32 %v3828, %v3830
    %v3832 = vrot.slane %v3708, %v3831
    %v3833 = vcombine.high %v3832, %v3832
    %v3835 = vunpack.c.l.s4 1966171168
    %v3836 = vunpack.c.0.s8 %v3835
    %v3837 = vlaneseq
    %v3838 = vshrl.u32 %v3837, 7
    %v3839 = vsub.s32 %v3836, %v3838
    %v3840 = vrot.slane %v3832, %v3839
    %v3842 = vunpack.c.l.s4 1966171168
    %v3843 = vunpack.c.0.s8 %v3842
    %v3844 = vlaneseq
    %v3845 = vshrl.u32 %v3844, 7
    %v3846 = vsub.s32 %v3843, %v3845
    %v3847 = vrot.slane %v3833, %v3846
    %v3850 = vadd.f32 %v3821, %v3840
    %v3851 = vadd.f32 %v3822, %v3847
    %v3852 = vxor.u32 %v3850, 2147483648
    %v3853 = vxor.u32 %v3851, 2147483648
    %v3854 = vmul.f32 %v3852, 1.442695
    %v3855 = vpow.pop %v3854
    %v3856 = vmul.f32 %v3853, 1.442695
    %v3857 = vpow.pop %v3856
    %v3858 = vadd.f32 %v3855, 1.0
    %v3859 = vadd.f32 %v3857, 1.0
    %v3860 = vrcp.pop %v3858
    %v3861 = vmul.f32 1.0, %v3860
    %v3862 = vrcp.pop %v3859
    %v3863 = vmul.f32 1.0, %v3862
    %v3866 = vunpack.c.l.s4 1966171168
    %v3867 = vunpack.c.0.s8 %v3866
    %v3868 = vlaneseq
    %v3869 = vshrl.u32 %v3868, 7
    %v3870 = vsub.s32 %v3867, %v3869
    %v3871 = vrot.slane %v3777, %v3870
    %v3872 = vcombine.high %v3871, %v3871
    %v3874 = vunpack.c.l.s4 1966171168
    %v3875 = vunpack.c.0.s8 %v3874
    %v3876 = vlaneseq
    %v3877 = vshrl.u32 %v3876, 7
    %v3878 = vsub.s32 %v3875, %v3877
    %v3879 = vrot.slane %v3871, %v3878
    %v3881 = vunpack.c.l.s4 1966171168
    %v3882 = vunpack.c.0.s8 %v3881
    %v3883 = vlaneseq
    %v3884 = vshrl.u32 %v3883, 7
    %v3885 = vsub.s32 %v3882, %v3884
    %v3886 = vrot.slane %v3872, %v3885
    %v3889 = vmul.f32 %v3816, %v3879
    %v3890 = vmul.f32 %v3818, %v3886
    %v3891 = vrot.slane %v3618, 2
    %v3892 = vrot.slane %v3620, 2
    %v3895 = vadd.f32 %v3891, %v3889
    %v3896 = vadd.f32 %v3892, %v3890
    %v3897 = vtanh.pop %v3895
    %v3898 = vtanh.pop %v3896
    %v3899 = vsub.f32 1.0, %v3861
    %v3900 = vsub.f32 1.0, %v3863
    %v3901 = vmul.f32 %v3899, %v3897
    %v3902 = vmul.f32 %v3900, %v3898
    %v3903 = vmul.f32 %v3861, %v3613
    %v3904 = vmul.f32 %v3863, %v3614
    %v3905 = vadd.f32 %v3901, %v3903
    %v3906 = vadd.f32 %v3902, %v3904
    %3907 = vst [vmem:[#allocation3 + $0xb] sm:$0x1] %v3905
    %3908 = vst [vmem:[#allocation3 + $0x1b] sm:$0x1] %v3906
    %s3909 = scalar_lea.vmem [#allocation2], 28
    %v3910 = vld [vmem:[%s3909] ss:$8 sm:$0x7]
    %s3911 = scalar_lea.vmem [#allocation2], 76
    %v3912 = vld [vmem:[%s3911] ss:$8 sm:$0x7]
    %v3915 = vcombine.low %v3905, %v3906
    %v3917 = vunpack.c.l.s4 1966171168
    %v3918 = vunpack.c.0.s8 %v3917
    %v3919 = vlaneseq
    %v3920 = vshrl.u32 %v3919, 7
    %v3921 = vsub.s32 %v3918, %v3920
    %v3922 = vrot.slane %v3915, %v3921
    %v3924 = vunpack.c.l.s4 1966171168
    %v3925 = vunpack.c.0.s8 %v3924
    %v3926 = vlaneseq
    %v3927 = vshrl.u32 %v3926, 7
    %v3928 = vsub.s32 %v3925, %v3927
    %v3929 = vrot.slane %v3922, %v3928
    %3931 = vmatprep.subr.mxu0 %v360
    %3932 = vmatpush1.msra.mxu0 %v359
    %3933 = vmatprep.subr.mxu0 %v363
    %3934 = vmatpush1.msra.mxu0 %v362
    %3935 = vmatprep.subr.mxu0 %v366
    %3936 = vmatpush1.msra.mxu0 %v365
    %3937 = vmatprep.subr.mxu0 %v369
    %3938 = vmatpush1.msra.mxu0 %v368
    %3939 = vmatprep.subr.mxu0 %v372
    %3940 = vmatpush1.msra.mxu0 %v371
    %3941 = vmatprep.subr.mxu0 %v375
    %3942 = vmatpush1.msra.mxu0 %v374
    %3943 = vmatprep.subr.mxu0 %v378
    %3944 = vmatpush1.msra.mxu0 %v377
    %3945 = vmatprep.subr.mxu0 %v381
    %3946 = vmatpush1.msra.mxu0 %v380
    %3947 = vmatprep.subr.mxu0 %v384
    %3948 = vmatpush1.msra.mxu0 %v383
    %3949 = vmatprep.subr.mxu0 %v387
    %3950 = vmatpush1.msra.mxu0 %v386
    %3951 = vmatprep.subr.mxu0 %v390
    %3952 = vmatpush1.msra.mxu0 %v389
    %3953 = vmatprep.subr.mxu0 %v393
    %3954 = vmatpush1.msra.mxu0 %v392
    %3955 = vmatprep.subr.mxu0 %v396
    %3956 = vmatpush1.msra.mxu0 %v395
    %3957 = vmatprep.subr.mxu0 %v399
    %3958 = vmatpush1.msra.mxu0 %v398
    %3959 = vmatprep.subr.mxu0 %v402
    %3960 = vmatpush1.msra.mxu0 %v401
    %3961 = vmatprep.subr.mxu0 %v405
    %3962 = vmatpush1.msra.mxu0 %v404
    %3963 = vmatprep.subr.mxu0 0.0
    %3964 = vmatpush1.msra.mxu0 0.0
    %3965 = vmatprep.subr.mxu0 0.0
    %3966 = vmatpush1.msra.mxu0 0.0
    %3967 = vmatprep.subr.mxu0 0.0
    %3968 = vmatpush1.msra.mxu0 0.0
    %3969 = vmatprep.subr.mxu0 0.0
    %3970 = vmatpush1.msra.mxu0 0.0
    %3971 = vmatprep.subr.mxu0 0.0
    %3972 = vmatpush1.msra.mxu0 0.0
    %3973 = vmatprep.subr.mxu0 0.0
    %3974 = vmatpush1.msra.mxu0 0.0
    %3975 = vmatprep.subr.mxu0 0.0
    %3976 = vmatpush1.msra.mxu0 0.0
    %3977 = vmatprep.subr.mxu0 0.0
    %3978 = vmatpush1.msra.mxu0 0.0
    %3979 = vmatprep.subr.mxu0 0.0
    %3980 = vmatpush1.msra.mxu0 0.0
    %3981 = vmatprep.subr.mxu0 0.0
    %3982 = vmatpush1.msra.mxu0 0.0
    %3983 = vmatprep.subr.mxu0 0.0
    %3984 = vmatpush1.msra.mxu0 0.0
    %3985 = vmatprep.subr.mxu0 0.0
    %3986 = vmatpush1.msra.mxu0 0.0
    %3987 = vmatprep.subr.mxu0 0.0
    %3988 = vmatpush1.msra.mxu0 0.0
    %3989 = vmatprep.subr.mxu0 0.0
    %3990 = vmatpush1.msra.mxu0 0.0
    %3991 = vmatprep.subr.mxu0 0.0
    %3992 = vmatpush1.msra.mxu0 0.0
    %3993 = vmatprep.subr.mxu0 0.0
    %3994 = vmatpush1.msra.mxu0 0.0
    %3995 = vmatprep.mubr.f32.mxu0 0.0
    %3996 = vmatmul.mubr.f32.gmra.mrb[0].mxu0 %v3929
    %v3997 = vpop.f32.mrb[0].mxu0
    %v3998 = vadd.f32 %v415, %v3997
    %v3999 = vpop.f32.mrb[0].mxu0
    %v4000 = vadd.f32 %v419, %v3999
    %4001 = vdwg.mxu0
    %4002 = vmatprep.subr.mxu0 0.0
    %4003 = vmatpush1.msra.mxu0 %v361
    %4004 = vmatprep.subr.mxu0 0.0
    %4005 = vmatpush1.msra.mxu0 %v364
    %4006 = vmatprep.subr.mxu0 0.0
    %4007 = vmatpush1.msra.mxu0 %v367
    %4008 = vmatprep.subr.mxu0 0.0
    %4009 = vmatpush1.msra.mxu0 %v370
    %4010 = vmatprep.subr.mxu0 0.0
    %4011 = vmatpush1.msra.mxu0 %v373
    %4012 = vmatprep.subr.mxu0 0.0
    %4013 = vmatpush1.msra.mxu0 %v376
    %4014 = vmatprep.subr.mxu0 0.0
    %4015 = vmatpush1.msra.mxu0 %v379
    %4016 = vmatprep.subr.mxu0 0.0
    %4017 = vmatpush1.msra.mxu0 %v382
    %4018 = vmatprep.subr.mxu0 0.0
    %4019 = vmatpush1.msra.mxu0 %v385
    %4020 = vmatprep.subr.mxu0 0.0
    %4021 = vmatpush1.msra.mxu0 %v388
    %4022 = vmatprep.subr.mxu0 0.0
    %4023 = vmatpush1.msra.mxu0 %v391
    %4024 = vmatprep.subr.mxu0 0.0
    %4025 = vmatpush1.msra.mxu0 %v394
    %4026 = vmatprep.subr.mxu0 0.0
    %4027 = vmatpush1.msra.mxu0 %v397
    %4028 = vmatprep.subr.mxu0 0.0
    %4029 = vmatpush1.msra.mxu0 %v400
    %4030 = vmatprep.subr.mxu0 0.0
    %4031 = vmatpush1.msra.mxu0 %v403
    %4032 = vmatprep.subr.mxu0 0.0
    %4033 = vmatpush1.msra.mxu0 %v406
    %4034 = vmatprep.subr.mxu0 0.0
    %4035 = vmatpush1.msra.mxu0 0.0
    %4036 = vmatprep.subr.mxu0 0.0
    %4037 = vmatpush1.msra.mxu0 0.0
    %4038 = vmatprep.subr.mxu0 0.0
    %4039 = vmatpush1.msra.mxu0 0.0
    %4040 = vmatprep.subr.mxu0 0.0
    %4041 = vmatpush1.msra.mxu0 0.0
    %4042 = vmatprep.subr.mxu0 0.0
    %4043 = vmatpush1.msra.mxu0 0.0
    %4044 = vmatprep.subr.mxu0 0.0
    %4045 = vmatpush1.msra.mxu0 0.0
    %4046 = vmatprep.subr.mxu0 0.0
    %4047 = vmatpush1.msra.mxu0 0.0
    %4048 = vmatprep.subr.mxu0 0.0
    %4049 = vmatpush1.msra.mxu0 0.0
    %4050 = vmatprep.subr.mxu0 0.0
    %4051 = vmatpush1.msra.mxu0 0.0
    %4052 = vmatprep.subr.mxu0 0.0
    %4053 = vmatpush1.msra.mxu0 0.0
    %4054 = vmatprep.subr.mxu0 0.0
    %4055 = vmatpush1.msra.mxu0 0.0
    %4056 = vmatprep.subr.mxu0 0.0
    %4057 = vmatpush1.msra.mxu0 0.0
    %4058 = vmatprep.subr.mxu0 0.0
    %4059 = vmatpush1.msra.mxu0 0.0
    %4060 = vmatprep.subr.mxu0 0.0
    %4061 = vmatpush1.msra.mxu0 0.0
    %4062 = vmatprep.subr.mxu0 0.0
    %4063 = vmatpush1.msra.mxu0 0.0
    %4064 = vmatprep.subr.mxu0 0.0
    %4065 = vmatpush1.msra.mxu0 0.0
    %4066 = vmatprep.mubr.f32.mxu0 0.0
    %4067 = vmatmul.mubr.f32.gmra.mrb[0].mxu0 %v3929
    %v4068 = vpop.f32.mrb[0].mxu0
    %v4069 = vadd.f32 %v423, %v4068
    %v4070 = vpop.f32.mrb[0].mxu0
    %4071 = vdwg.mxu0
    %v4074 = vunpack.c.l.s4 1966171168
    %v4075 = vunpack.c.0.s8 %v4074
    %v4076 = vlaneseq
    %v4077 = vshrl.u32 %v4076, 7
    %v4078 = vsub.s32 %v4075, %v4077
    %v4079 = vrot.slane %v3998, %v4078
    %v4080 = vcombine.high %v4079, %v4079
    %v4082 = vunpack.c.l.s4 1966171168
    %v4083 = vunpack.c.0.s8 %v4082
    %v4084 = vlaneseq
    %v4085 = vshrl.u32 %v4084, 7
    %v4086 = vsub.s32 %v4083, %v4085
    %v4087 = vrot.slane %v4079, %v4086
    %v4089 = vunpack.c.l.s4 1966171168
    %v4090 = vunpack.c.0.s8 %v4089
    %v4091 = vlaneseq
    %v4092 = vshrl.u32 %v4091, 7
    %v4093 = vsub.s32 %v4090, %v4092
    %v4094 = vrot.slane %v4080, %v4093
    %v4097 = vadd.f32 %v3910, %v4087
    %v4098 = vadd.f32 %v3912, %v4094
    %v4099 = vxor.u32 %v4097, 2147483648
    %v4100 = vxor.u32 %v4098, 2147483648
    %v4101 = vmul.f32 %v4099, 1.442695
    %v4102 = vpow.pop %v4101
    %v4103 = vmul.f32 %v4100, 1.442695
    %v4104 = vpow.pop %v4103
    %v4105 = vadd.f32 %v4102, 1.0
    %v4106 = vadd.f32 %v4104, 1.0
    %v4107 = vrcp.pop %v4105
    %v4108 = vmul.f32 1.0, %v4107
    %v4109 = vrcp.pop %v4106
    %v4110 = vmul.f32 1.0, %v4109
    %v4113 = vrot.slane %v3910, 1
    %v4114 = vrot.slane %v3912, 1
    %v4119 = vunpack.c.l.s4 1966171168
    %v4120 = vunpack.c.0.s8 %v4119
    %v4121 = vlaneseq
    %v4122 = vshrl.u32 %v4121, 7
    %v4123 = vsub.s32 %v4120, %v4122
    %v4124 = vrot.slane %v4000, %v4123
    %v4125 = vcombine.high %v4124, %v4124
    %v4127 = vunpack.c.l.s4 1966171168
    %v4128 = vunpack.c.0.s8 %v4127
    %v4129 = vlaneseq
    %v4130 = vshrl.u32 %v4129, 7
    %v4131 = vsub.s32 %v4128, %v4130
    %v4132 = vrot.slane %v4124, %v4131
    %v4134 = vunpack.c.l.s4 1966171168
    %v4135 = vunpack.c.0.s8 %v4134
    %v4136 = vlaneseq
    %v4137 = vshrl.u32 %v4136, 7
    %v4138 = vsub.s32 %v4135, %v4137
    %v4139 = vrot.slane %v4125, %v4138
    %v4142 = vadd.f32 %v4113, %v4132
    %v4143 = vadd.f32 %v4114, %v4139
    %v4144 = vxor.u32 %v4142, 2147483648
    %v4145 = vxor.u32 %v4143, 2147483648
    %v4146 = vmul.f32 %v4144, 1.442695
    %v4147 = vpow.pop %v4146
    %v4148 = vmul.f32 %v4145, 1.442695
    %v4149 = vpow.pop %v4148
    %v4150 = vadd.f32 %v4147, 1.0
    %v4151 = vadd.f32 %v4149, 1.0
    %v4152 = vrcp.pop %v4150
    %v4153 = vmul.f32 1.0, %v4152
    %v4154 = vrcp.pop %v4151
    %v4155 = vmul.f32 1.0, %v4154
    %v4158 = vunpack.c.l.s4 1966171168
    %v4159 = vunpack.c.0.s8 %v4158
    %v4160 = vlaneseq
    %v4161 = vshrl.u32 %v4160, 7
    %v4162 = vsub.s32 %v4159, %v4161
    %v4163 = vrot.slane %v4069, %v4162
    %v4164 = vcombine.high %v4163, %v4163
    %v4166 = vunpack.c.l.s4 1966171168
    %v4167 = vunpack.c.0.s8 %v4166
    %v4168 = vlaneseq
    %v4169 = vshrl.u32 %v4168, 7
    %v4170 = vsub.s32 %v4167, %v4169
    %v4171 = vrot.slane %v4163, %v4170
    %v4173 = vunpack.c.l.s4 1966171168
    %v4174 = vunpack.c.0.s8 %v4173
    %v4175 = vlaneseq
    %v4176 = vshrl.u32 %v4175, 7
    %v4177 = vsub.s32 %v4174, %v4176
    %v4178 = vrot.slane %v4164, %v4177
    %v4181 = vmul.f32 %v4108, %v4171
    %v4182 = vmul.f32 %v4110, %v4178
    %v4183 = vrot.slane %v3910, 2
    %v4184 = vrot.slane %v3912, 2
    %v4187 = vadd.f32 %v4183, %v4181
    %v4188 = vadd.f32 %v4184, %v4182
    %v4189 = vtanh.pop %v4187
    %v4190 = vtanh.pop %v4188
    %v4191 = vsub.f32 1.0, %v4153
    %v4192 = vsub.f32 1.0, %v4155
    %v4193 = vmul.f32 %v4191, %v4189
    %v4194 = vmul.f32 %v4192, %v4190
    %v4195 = vmul.f32 %v4153, %v3905
    %v4196 = vmul.f32 %v4155, %v3906
    %v4197 = vadd.f32 %v4193, %v4195
    %v4198 = vadd.f32 %v4194, %v4196
    %4199 = vst [vmem:[#allocation3 + $0xc] sm:$0x1] %v4197
    %4200 = vst [vmem:[#allocation3 + $0x1c] sm:$0x1] %v4198
    %s4201 = scalar_lea.vmem [#allocation2], 29
    %v4202 = vld [vmem:[%s4201] ss:$8 sm:$0x7]
    %s4203 = scalar_lea.vmem [#allocation2], 77
    %v4204 = vld [vmem:[%s4203] ss:$8 sm:$0x7]
    %v4207 = vcombine.low %v4197, %v4198
    %v4209 = vunpack.c.l.s4 1966171168
    %v4210 = vunpack.c.0.s8 %v4209
    %v4211 = vlaneseq
    %v4212 = vshrl.u32 %v4211, 7
    %v4213 = vsub.s32 %v4210, %v4212
    %v4214 = vrot.slane %v4207, %v4213
    %v4216 = vunpack.c.l.s4 1966171168
    %v4217 = vunpack.c.0.s8 %v4216
    %v4218 = vlaneseq
    %v4219 = vshrl.u32 %v4218, 7
    %v4220 = vsub.s32 %v4217, %v4219
    %v4221 = vrot.slane %v4214, %v4220
    %4223 = vmatprep.subr.mxu0 %v360
    %4224 = vmatpush1.msra.mxu0 %v359
    %4225 = vmatprep.subr.mxu0 %v363
    %4226 = vmatpush1.msra.mxu0 %v362
    %4227 = vmatprep.subr.mxu0 %v366
    %4228 = vmatpush1.msra.mxu0 %v365
    %4229 = vmatprep.subr.mxu0 %v369
    %4230 = vmatpush1.msra.mxu0 %v368
    %4231 = vmatprep.subr.mxu0 %v372
    %4232 = vmatpush1.msra.mxu0 %v371
    %4233 = vmatprep.subr.mxu0 %v375
    %4234 = vmatpush1.msra.mxu0 %v374
    %4235 = vmatprep.subr.mxu0 %v378
    %4236 = vmatpush1.msra.mxu0 %v377
    %4237 = vmatprep.subr.mxu0 %v381
    %4238 = vmatpush1.msra.mxu0 %v380
    %4239 = vmatprep.subr.mxu0 %v384
    %4240 = vmatpush1.msra.mxu0 %v383
    %4241 = vmatprep.subr.mxu0 %v387
    %4242 = vmatpush1.msra.mxu0 %v386
    %4243 = vmatprep.subr.mxu0 %v390
    %4244 = vmatpush1.msra.mxu0 %v389
    %4245 = vmatprep.subr.mxu0 %v393
    %4246 = vmatpush1.msra.mxu0 %v392
    %4247 = vmatprep.subr.mxu0 %v396
    %4248 = vmatpush1.msra.mxu0 %v395
    %4249 = vmatprep.subr.mxu0 %v399
    %4250 = vmatpush1.msra.mxu0 %v398
    %4251 = vmatprep.subr.mxu0 %v402
    %4252 = vmatpush1.msra.mxu0 %v401
    %4253 = vmatprep.subr.mxu0 %v405
    %4254 = vmatpush1.msra.mxu0 %v404
    %4255 = vmatprep.subr.mxu0 0.0
    %4256 = vmatpush1.msra.mxu0 0.0
    %4257 = vmatprep.subr.mxu0 0.0
    %4258 = vmatpush1.msra.mxu0 0.0
    %4259 = vmatprep.subr.mxu0 0.0
    %4260 = vmatpush1.msra.mxu0 0.0
    %4261 = vmatprep.subr.mxu0 0.0
    %4262 = vmatpush1.msra.mxu0 0.0
    %4263 = vmatprep.subr.mxu0 0.0
    %4264 = vmatpush1.msra.mxu0 0.0
    %4265 = vmatprep.subr.mxu0 0.0
    %4266 = vmatpush1.msra.mxu0 0.0
    %4267 = vmatprep.subr.mxu0 0.0
    %4268 = vmatpush1.msra.mxu0 0.0
    %4269 = vmatprep.subr.mxu0 0.0
    %4270 = vmatpush1.msra.mxu0 0.0
    %4271 = vmatprep.subr.mxu0 0.0
    %4272 = vmatpush1.msra.mxu0 0.0
    %4273 = vmatprep.subr.mxu0 0.0
    %4274 = vmatpush1.msra.mxu0 0.0
    %4275 = vmatprep.subr.mxu0 0.0
    %4276 = vmatpush1.msra.mxu0 0.0
    %4277 = vmatprep.subr.mxu0 0.0
    %4278 = vmatpush1.msra.mxu0 0.0
    %4279 = vmatprep.subr.mxu0 0.0
    %4280 = vmatpush1.msra.mxu0 0.0
    %4281 = vmatprep.subr.mxu0 0.0
    %4282 = vmatpush1.msra.mxu0 0.0
    %4283 = vmatprep.subr.mxu0 0.0
    %4284 = vmatpush1.msra.mxu0 0.0
    %4285 = vmatprep.subr.mxu0 0.0
    %4286 = vmatpush1.msra.mxu0 0.0
    %4287 = vmatprep.mubr.f32.mxu0 0.0
    %4288 = vmatmul.mubr.f32.gmra.mrb[0].mxu0 %v4221
    %v4289 = vpop.f32.mrb[0].mxu0
    %v4290 = vadd.f32 %v415, %v4289
    %v4291 = vpop.f32.mrb[0].mxu0
    %v4292 = vadd.f32 %v419, %v4291
    %4293 = vdwg.mxu0
    %4294 = vmatprep.subr.mxu0 0.0
    %4295 = vmatpush1.msra.mxu0 %v361
    %4296 = vmatprep.subr.mxu0 0.0
    %4297 = vmatpush1.msra.mxu0 %v364
    %4298 = vmatprep.subr.mxu0 0.0
    %4299 = vmatpush1.msra.mxu0 %v367
    %4300 = vmatprep.subr.mxu0 0.0
    %4301 = vmatpush1.msra.mxu0 %v370
    %4302 = vmatprep.subr.mxu0 0.0
    %4303 = vmatpush1.msra.mxu0 %v373
    %4304 = vmatprep.subr.mxu0 0.0
    %4305 = vmatpush1.msra.mxu0 %v376
    %4306 = vmatprep.subr.mxu0 0.0
    %4307 = vmatpush1.msra.mxu0 %v379
    %4308 = vmatprep.subr.mxu0 0.0
    %4309 = vmatpush1.msra.mxu0 %v382
    %4310 = vmatprep.subr.mxu0 0.0
    %4311 = vmatpush1.msra.mxu0 %v385
    %4312 = vmatprep.subr.mxu0 0.0
    %4313 = vmatpush1.msra.mxu0 %v388
    %4314 = vmatprep.subr.mxu0 0.0
    %4315 = vmatpush1.msra.mxu0 %v391
    %4316 = vmatprep.subr.mxu0 0.0
    %4317 = vmatpush1.msra.mxu0 %v394
    %4318 = vmatprep.subr.mxu0 0.0
    %4319 = vmatpush1.msra.mxu0 %v397
    %4320 = vmatprep.subr.mxu0 0.0
    %4321 = vmatpush1.msra.mxu0 %v400
    %4322 = vmatprep.subr.mxu0 0.0
    %4323 = vmatpush1.msra.mxu0 %v403
    %4324 = vmatprep.subr.mxu0 0.0
    %4325 = vmatpush1.msra.mxu0 %v406
    %4326 = vmatprep.subr.mxu0 0.0
    %4327 = vmatpush1.msra.mxu0 0.0
    %4328 = vmatprep.subr.mxu0 0.0
    %4329 = vmatpush1.msra.mxu0 0.0
    %4330 = vmatprep.subr.mxu0 0.0
    %4331 = vmatpush1.msra.mxu0 0.0
    %4332 = vmatprep.subr.mxu0 0.0
    %4333 = vmatpush1.msra.mxu0 0.0
    %4334 = vmatprep.subr.mxu0 0.0
    %4335 = vmatpush1.msra.mxu0 0.0
    %4336 = vmatprep.subr.mxu0 0.0
    %4337 = vmatpush1.msra.mxu0 0.0
    %4338 = vmatprep.subr.mxu0 0.0
    %4339 = vmatpush1.msra.mxu0 0.0
    %4340 = vmatprep.subr.mxu0 0.0
    %4341 = vmatpush1.msra.mxu0 0.0
    %4342 = vmatprep.subr.mxu0 0.0
    %4343 = vmatpush1.msra.mxu0 0.0
    %4344 = vmatprep.subr.mxu0 0.0
    %4345 = vmatpush1.msra.mxu0 0.0
    %4346 = vmatprep.subr.mxu0 0.0
    %4347 = vmatpush1.msra.mxu0 0.0
    %4348 = vmatprep.subr.mxu0 0.0
    %4349 = vmatpush1.msra.mxu0 0.0
    %4350 = vmatprep.subr.mxu0 0.0
    %4351 = vmatpush1.msra.mxu0 0.0
    %4352 = vmatprep.subr.mxu0 0.0
    %4353 = vmatpush1.msra.mxu0 0.0
    %4354 = vmatprep.subr.mxu0 0.0
    %4355 = vmatpush1.msra.mxu0 0.0
    %4356 = vmatprep.subr.mxu0 0.0
    %4357 = vmatpush1.msra.mxu0 0.0
    %4358 = vmatprep.mubr.f32.mxu0 0.0
    %4359 = vmatmul.mubr.f32.gmra.mrb[0].mxu0 %v4221
    %v4360 = vpop.f32.mrb[0].mxu0
    %v4361 = vadd.f32 %v423, %v4360
    %v4362 = vpop.f32.mrb[0].mxu0
    %4363 = vdwg.mxu0
    %v4366 = vunpack.c.l.s4 1966171168
    %v4367 = vunpack.c.0.s8 %v4366
    %v4368 = vlaneseq
    %v4369 = vshrl.u32 %v4368, 7
    %v4370 = vsub.s32 %v4367, %v4369
    %v4371 = vrot.slane %v4290, %v4370
    %v4372 = vcombine.high %v4371, %v4371
    %v4374 = vunpack.c.l.s4 1966171168
    %v4375 = vunpack.c.0.s8 %v4374
    %v4376 = vlaneseq
    %v4377 = vshrl.u32 %v4376, 7
    %v4378 = vsub.s32 %v4375, %v4377
    %v4379 = vrot.slane %v4371, %v4378
    %v4381 = vunpack.c.l.s4 1966171168
    %v4382 = vunpack.c.0.s8 %v4381
    %v4383 = vlaneseq
    %v4384 = vshrl.u32 %v4383, 7
    %v4385 = vsub.s32 %v4382, %v4384
    %v4386 = vrot.slane %v4372, %v4385
    %v4389 = vadd.f32 %v4202, %v4379
    %v4390 = vadd.f32 %v4204, %v4386
    %v4391 = vxor.u32 %v4389, 2147483648
    %v4392 = vxor.u32 %v4390, 2147483648
    %v4393 = vmul.f32 %v4391, 1.442695
    %v4394 = vpow.pop %v4393
    %v4395 = vmul.f32 %v4392, 1.442695
    %v4396 = vpow.pop %v4395
    %v4397 = vadd.f32 %v4394, 1.0
    %v4398 = vadd.f32 %v4396, 1.0
    %v4399 = vrcp.pop %v4397
    %v4400 = vmul.f32 1.0, %v4399
    %v4401 = vrcp.pop %v4398
    %v4402 = vmul.f32 1.0, %v4401
    %v4405 = vrot.slane %v4202, 1
    %v4406 = vrot.slane %v4204, 1
    %v4411 = vunpack.c.l.s4 1966171168
    %v4412 = vunpack.c.0.s8 %v4411
    %v4413 = vlaneseq
    %v4414 = vshrl.u32 %v4413, 7
    %v4415 = vsub.s32 %v4412, %v4414
    %v4416 = vrot.slane %v4292, %v4415
    %v4417 = vcombine.high %v4416, %v4416
    %v4419 = vunpack.c.l.s4 1966171168
    %v4420 = vunpack.c.0.s8 %v4419
    %v4421 = vlaneseq
    %v4422 = vshrl.u32 %v4421, 7
    %v4423 = vsub.s32 %v4420, %v4422
    %v4424 = vrot.slane %v4416, %v4423
    %v4426 = vunpack.c.l.s4 1966171168
    %v4427 = vunpack.c.0.s8 %v4426
    %v4428 = vlaneseq
    %v4429 = vshrl.u32 %v4428, 7
    %v4430 = vsub.s32 %v4427, %v4429
    %v4431 = vrot.slane %v4417, %v4430
    %v4434 = vadd.f32 %v4405, %v4424
    %v4435 = vadd.f32 %v4406, %v4431
    %v4436 = vxor.u32 %v4434, 2147483648
    %v4437 = vxor.u32 %v4435, 2147483648
    %v4438 = vmul.f32 %v4436, 1.442695
    %v4439 = vpow.pop %v4438
    %v4440 = vmul.f32 %v4437, 1.442695
    %v4441 = vpow.pop %v4440
    %v4442 = vadd.f32 %v4439, 1.0
    %v4443 = vadd.f32 %v4441, 1.0
    %v4444 = vrcp.pop %v4442
    %v4445 = vmul.f32 1.0, %v4444
    %v4446 = vrcp.pop %v4443
    %v4447 = vmul.f32 1.0, %v4446
    %v4450 = vunpack.c.l.s4 1966171168
    %v4451 = vunpack.c.0.s8 %v4450
    %v4452 = vlaneseq
    %v4453 = vshrl.u32 %v4452, 7
    %v4454 = vsub.s32 %v4451, %v4453
    %v4455 = vrot.slane %v4361, %v4454
    %v4456 = vcombine.high %v4455, %v4455
    %v4458 = vunpack.c.l.s4 1966171168
    %v4459 = vunpack.c.0.s8 %v4458
    %v4460 = vlaneseq
    %v4461 = vshrl.u32 %v4460, 7
    %v4462 = vsub.s32 %v4459, %v4461
    %v4463 = vrot.slane %v4455, %v4462
    %v4465 = vunpack.c.l.s4 1966171168
    %v4466 = vunpack.c.0.s8 %v4465
    %v4467 = vlaneseq
    %v4468 = vshrl.u32 %v4467, 7
    %v4469 = vsub.s32 %v4466, %v4468
    %v4470 = vrot.slane %v4456, %v4469
    %v4473 = vmul.f32 %v4400, %v4463
    %v4474 = vmul.f32 %v4402, %v4470
    %v4475 = vrot.slane %v4202, 2
    %v4476 = vrot.slane %v4204, 2
    %v4479 = vadd.f32 %v4475, %v4473
    %v4480 = vadd.f32 %v4476, %v4474
    %v4481 = vtanh.pop %v4479
    %v4482 = vtanh.pop %v4480
    %v4483 = vsub.f32 1.0, %v4445
    %v4484 = vsub.f32 1.0, %v4447
    %v4485 = vmul.f32 %v4483, %v4481
    %v4486 = vmul.f32 %v4484, %v4482
    %v4487 = vmul.f32 %v4445, %v4197
    %v4488 = vmul.f32 %v4447, %v4198
    %v4489 = vadd.f32 %v4485, %v4487
    %v4490 = vadd.f32 %v4486, %v4488
    %4491 = vst [vmem:[#allocation3 + $0xd] sm:$0x1] %v4489
    %4492 = vst [vmem:[#allocation3 + $0x1d] sm:$0x1] %v4490
    %s4493 = scalar_lea.vmem [#allocation2], 30
    %v4494 = vld [vmem:[%s4493] ss:$8 sm:$0x7]
    %s4495 = scalar_lea.vmem [#allocation2], 78
    %v4496 = vld [vmem:[%s4495] ss:$8 sm:$0x7]
    %v4499 = vcombine.low %v4489, %v4490
    %v4501 = vunpack.c.l.s4 1966171168
    %v4502 = vunpack.c.0.s8 %v4501
    %v4503 = vlaneseq
    %v4504 = vshrl.u32 %v4503, 7
    %v4505 = vsub.s32 %v4502, %v4504
    %v4506 = vrot.slane %v4499, %v4505
    %v4508 = vunpack.c.l.s4 1966171168
    %v4509 = vunpack.c.0.s8 %v4508
    %v4510 = vlaneseq
    %v4511 = vshrl.u32 %v4510, 7
    %v4512 = vsub.s32 %v4509, %v4511
    %v4513 = vrot.slane %v4506, %v4512
    %4515 = vmatprep.subr.mxu0 %v360
    %4516 = vmatpush1.msra.mxu0 %v359
    %4517 = vmatprep.subr.mxu0 %v363
    %4518 = vmatpush1.msra.mxu0 %v362
    %4519 = vmatprep.subr.mxu0 %v366
    %4520 = vmatpush1.msra.mxu0 %v365
    %4521 = vmatprep.subr.mxu0 %v369
    %4522 = vmatpush1.msra.mxu0 %v368
    %4523 = vmatprep.subr.mxu0 %v372
    %4524 = vmatpush1.msra.mxu0 %v371
    %4525 = vmatprep.subr.mxu0 %v375
    %4526 = vmatpush1.msra.mxu0 %v374
    %4527 = vmatprep.subr.mxu0 %v378
    %4528 = vmatpush1.msra.mxu0 %v377
    %4529 = vmatprep.subr.mxu0 %v381
    %4530 = vmatpush1.msra.mxu0 %v380
    %4531 = vmatprep.subr.mxu0 %v384
    %4532 = vmatpush1.msra.mxu0 %v383
    %4533 = vmatprep.subr.mxu0 %v387
    %4534 = vmatpush1.msra.mxu0 %v386
    %4535 = vmatprep.subr.mxu0 %v390
    %4536 = vmatpush1.msra.mxu0 %v389
    %4537 = vmatprep.subr.mxu0 %v393
    %4538 = vmatpush1.msra.mxu0 %v392
    %4539 = vmatprep.subr.mxu0 %v396
    %4540 = vmatpush1.msra.mxu0 %v395
    %4541 = vmatprep.subr.mxu0 %v399
    %4542 = vmatpush1.msra.mxu0 %v398
    %4543 = vmatprep.subr.mxu0 %v402
    %4544 = vmatpush1.msra.mxu0 %v401
    %4545 = vmatprep.subr.mxu0 %v405
    %4546 = vmatpush1.msra.mxu0 %v404
    %4547 = vmatprep.subr.mxu0 0.0
    %4548 = vmatpush1.msra.mxu0 0.0
    %4549 = vmatprep.subr.mxu0 0.0
    %4550 = vmatpush1.msra.mxu0 0.0
    %4551 = vmatprep.subr.mxu0 0.0
    %4552 = vmatpush1.msra.mxu0 0.0
    %4553 = vmatprep.subr.mxu0 0.0
    %4554 = vmatpush1.msra.mxu0 0.0
    %4555 = vmatprep.subr.mxu0 0.0
    %4556 = vmatpush1.msra.mxu0 0.0
    %4557 = vmatprep.subr.mxu0 0.0
    %4558 = vmatpush1.msra.mxu0 0.0
    %4559 = vmatprep.subr.mxu0 0.0
    %4560 = vmatpush1.msra.mxu0 0.0
    %4561 = vmatprep.subr.mxu0 0.0
    %4562 = vmatpush1.msra.mxu0 0.0
    %4563 = vmatprep.subr.mxu0 0.0
    %4564 = vmatpush1.msra.mxu0 0.0
    %4565 = vmatprep.subr.mxu0 0.0
    %4566 = vmatpush1.msra.mxu0 0.0
    %4567 = vmatprep.subr.mxu0 0.0
    %4568 = vmatpush1.msra.mxu0 0.0
    %4569 = vmatprep.subr.mxu0 0.0
    %4570 = vmatpush1.msra.mxu0 0.0
    %4571 = vmatprep.subr.mxu0 0.0
    %4572 = vmatpush1.msra.mxu0 0.0
    %4573 = vmatprep.subr.mxu0 0.0
    %4574 = vmatpush1.msra.mxu0 0.0
    %4575 = vmatprep.subr.mxu0 0.0
    %4576 = vmatpush1.msra.mxu0 0.0
    %4577 = vmatprep.subr.mxu0 0.0
    %4578 = vmatpush1.msra.mxu0 0.0
    %4579 = vmatprep.mubr.f32.mxu0 0.0
    %4580 = vmatmul.mubr.f32.gmra.mrb[0].mxu0 %v4513
    %v4581 = vpop.f32.mrb[0].mxu0
    %v4582 = vadd.f32 %v415, %v4581
    %v4583 = vpop.f32.mrb[0].mxu0
    %v4584 = vadd.f32 %v419, %v4583
    %4585 = vdwg.mxu0
    %4586 = vmatprep.subr.mxu0 0.0
    %4587 = vmatpush1.msra.mxu0 %v361
    %4588 = vmatprep.subr.mxu0 0.0
    %4589 = vmatpush1.msra.mxu0 %v364
    %4590 = vmatprep.subr.mxu0 0.0
    %4591 = vmatpush1.msra.mxu0 %v367
    %4592 = vmatprep.subr.mxu0 0.0
    %4593 = vmatpush1.msra.mxu0 %v370
    %4594 = vmatprep.subr.mxu0 0.0
    %4595 = vmatpush1.msra.mxu0 %v373
    %4596 = vmatprep.subr.mxu0 0.0
    %4597 = vmatpush1.msra.mxu0 %v376
    %4598 = vmatprep.subr.mxu0 0.0
    %4599 = vmatpush1.msra.mxu0 %v379
    %4600 = vmatprep.subr.mxu0 0.0
    %4601 = vmatpush1.msra.mxu0 %v382
    %4602 = vmatprep.subr.mxu0 0.0
    %4603 = vmatpush1.msra.mxu0 %v385
    %4604 = vmatprep.subr.mxu0 0.0
    %4605 = vmatpush1.msra.mxu0 %v388
    %4606 = vmatprep.subr.mxu0 0.0
    %4607 = vmatpush1.msra.mxu0 %v391
    %4608 = vmatprep.subr.mxu0 0.0
    %4609 = vmatpush1.msra.mxu0 %v394
    %4610 = vmatprep.subr.mxu0 0.0
    %4611 = vmatpush1.msra.mxu0 %v397
    %4612 = vmatprep.subr.mxu0 0.0
    %4613 = vmatpush1.msra.mxu0 %v400
    %4614 = vmatprep.subr.mxu0 0.0
    %4615 = vmatpush1.msra.mxu0 %v403
    %4616 = vmatprep.subr.mxu0 0.0
    %4617 = vmatpush1.msra.mxu0 %v406
    %4618 = vmatprep.subr.mxu0 0.0
    %4619 = vmatpush1.msra.mxu0 0.0
    %4620 = vmatprep.subr.mxu0 0.0
    %4621 = vmatpush1.msra.mxu0 0.0
    %4622 = vmatprep.subr.mxu0 0.0
    %4623 = vmatpush1.msra.mxu0 0.0
    %4624 = vmatprep.subr.mxu0 0.0
    %4625 = vmatpush1.msra.mxu0 0.0
    %4626 = vmatprep.subr.mxu0 0.0
    %4627 = vmatpush1.msra.mxu0 0.0
    %4628 = vmatprep.subr.mxu0 0.0
    %4629 = vmatpush1.msra.mxu0 0.0
    %4630 = vmatprep.subr.mxu0 0.0
    %4631 = vmatpush1.msra.mxu0 0.0
    %4632 = vmatprep.subr.mxu0 0.0
    %4633 = vmatpush1.msra.mxu0 0.0
    %4634 = vmatprep.subr.mxu0 0.0
    %4635 = vmatpush1.msra.mxu0 0.0
    %4636 = vmatprep.subr.mxu0 0.0
    %4637 = vmatpush1.msra.mxu0 0.0
    %4638 = vmatprep.subr.mxu0 0.0
    %4639 = vmatpush1.msra.mxu0 0.0
    %4640 = vmatprep.subr.mxu0 0.0
    %4641 = vmatpush1.msra.mxu0 0.0
    %4642 = vmatprep.subr.mxu0 0.0
    %4643 = vmatpush1.msra.mxu0 0.0
    %4644 = vmatprep.subr.mxu0 0.0
    %4645 = vmatpush1.msra.mxu0 0.0
    %4646 = vmatprep.subr.mxu0 0.0
    %4647 = vmatpush1.msra.mxu0 0.0
    %4648 = vmatprep.subr.mxu0 0.0
    %4649 = vmatpush1.msra.mxu0 0.0
    %4650 = vmatprep.mubr.f32.mxu0 0.0
    %4651 = vmatmul.mubr.f32.gmra.mrb[0].mxu0 %v4513
    %v4652 = vpop.f32.mrb[0].mxu0
    %v4653 = vadd.f32 %v423, %v4652
    %v4654 = vpop.f32.mrb[0].mxu0
    %4655 = vdwg.mxu0
    %v4658 = vunpack.c.l.s4 1966171168
    %v4659 = vunpack.c.0.s8 %v4658
    %v4660 = vlaneseq
    %v4661 = vshrl.u32 %v4660, 7
    %v4662 = vsub.s32 %v4659, %v4661
    %v4663 = vrot.slane %v4582, %v4662
    %v4664 = vcombine.high %v4663, %v4663
    %v4666 = vunpack.c.l.s4 1966171168
    %v4667 = vunpack.c.0.s8 %v4666
    %v4668 = vlaneseq
    %v4669 = vshrl.u32 %v4668, 7
    %v4670 = vsub.s32 %v4667, %v4669
    %v4671 = vrot.slane %v4663, %v4670
    %v4673 = vunpack.c.l.s4 1966171168
    %v4674 = vunpack.c.0.s8 %v4673
    %v4675 = vlaneseq
    %v4676 = vshrl.u32 %v4675, 7
    %v4677 = vsub.s32 %v4674, %v4676
    %v4678 = vrot.slane %v4664, %v4677
    %v4681 = vadd.f32 %v4494, %v4671
    %v4682 = vadd.f32 %v4496, %v4678
    %v4683 = vxor.u32 %v4681, 2147483648
    %v4684 = vxor.u32 %v4682, 2147483648
    %v4685 = vmul.f32 %v4683, 1.442695
    %v4686 = vpow.pop %v4685
    %v4687 = vmul.f32 %v4684, 1.442695
    %v4688 = vpow.pop %v4687
    %v4689 = vadd.f32 %v4686, 1.0
    %v4690 = vadd.f32 %v4688, 1.0
    %v4691 = vrcp.pop %v4689
    %v4692 = vmul.f32 1.0, %v4691
    %v4693 = vrcp.pop %v4690
    %v4694 = vmul.f32 1.0, %v4693
    %v4697 = vrot.slane %v4494, 1
    %v4698 = vrot.slane %v4496, 1
    %v4703 = vunpack.c.l.s4 1966171168
    %v4704 = vunpack.c.0.s8 %v4703
    %v4705 = vlaneseq
    %v4706 = vshrl.u32 %v4705, 7
    %v4707 = vsub.s32 %v4704, %v4706
    %v4708 = vrot.slane %v4584, %v4707
    %v4709 = vcombine.high %v4708, %v4708
    %v4711 = vunpack.c.l.s4 1966171168
    %v4712 = vunpack.c.0.s8 %v4711
    %v4713 = vlaneseq
    %v4714 = vshrl.u32 %v4713, 7
    %v4715 = vsub.s32 %v4712, %v4714
    %v4716 = vrot.slane %v4708, %v4715
    %v4718 = vunpack.c.l.s4 1966171168
    %v4719 = vunpack.c.0.s8 %v4718
    %v4720 = vlaneseq
    %v4721 = vshrl.u32 %v4720, 7
    %v4722 = vsub.s32 %v4719, %v4721
    %v4723 = vrot.slane %v4709, %v4722
    %v4726 = vadd.f32 %v4697, %v4716
    %v4727 = vadd.f32 %v4698, %v4723
    %v4728 = vxor.u32 %v4726, 2147483648
    %v4729 = vxor.u32 %v4727, 2147483648
    %v4730 = vmul.f32 %v4728, 1.442695
    %v4731 = vpow.pop %v4730
    %v4732 = vmul.f32 %v4729, 1.442695
    %v4733 = vpow.pop %v4732
    %v4734 = vadd.f32 %v4731, 1.0
    %v4735 = vadd.f32 %v4733, 1.0
    %v4736 = vrcp.pop %v4734
    %v4737 = vmul.f32 1.0, %v4736
    %v4738 = vrcp.pop %v4735
    %v4739 = vmul.f32 1.0, %v4738
    %v4742 = vunpack.c.l.s4 1966171168
    %v4743 = vunpack.c.0.s8 %v4742
    %v4744 = vlaneseq
    %v4745 = vshrl.u32 %v4744, 7
    %v4746 = vsub.s32 %v4743, %v4745
    %v4747 = vrot.slane %v4653, %v4746
    %v4748 = vcombine.high %v4747, %v4747
    %v4750 = vunpack.c.l.s4 1966171168
    %v4751 = vunpack.c.0.s8 %v4750
    %v4752 = vlaneseq
    %v4753 = vshrl.u32 %v4752, 7
    %v4754 = vsub.s32 %v4751, %v4753
    %v4755 = vrot.slane %v4747, %v4754
    %v4757 = vunpack.c.l.s4 1966171168
    %v4758 = vunpack.c.0.s8 %v4757
    %v4759 = vlaneseq
    %v4760 = vshrl.u32 %v4759, 7
    %v4761 = vsub.s32 %v4758, %v4760
    %v4762 = vrot.slane %v4748, %v4761
    %v4765 = vmul.f32 %v4692, %v4755
    %v4766 = vmul.f32 %v4694, %v4762
    %v4767 = vrot.slane %v4494, 2
    %v4768 = vrot.slane %v4496, 2
    %v4771 = vadd.f32 %v4767, %v4765
    %v4772 = vadd.f32 %v4768, %v4766
    %v4773 = vtanh.pop %v4771
    %v4774 = vtanh.pop %v4772
    %v4775 = vsub.f32 1.0, %v4737
    %v4776 = vsub.f32 1.0, %v4739
    %v4777 = vmul.f32 %v4775, %v4773
    %v4778 = vmul.f32 %v4776, %v4774
    %v4779 = vmul.f32 %v4737, %v4489
    %v4780 = vmul.f32 %v4739, %v4490
    %v4781 = vadd.f32 %v4777, %v4779
    %v4782 = vadd.f32 %v4778, %v4780
    %4783 = vst [vmem:[#allocation3 + $0xe] sm:$0x1] %v4781
    %4784 = vst [vmem:[#allocation3 + $0x1e] sm:$0x1] %v4782
    %s4785 = scalar_lea.vmem [#allocation2], 31
    %v4786 = vld [vmem:[%s4785] ss:$8 sm:$0x7]
    %s4787 = scalar_lea.vmem [#allocation2], 79
    %v4788 = vld [vmem:[%s4787] ss:$8 sm:$0x7]
    %v4791 = vcombine.low %v4781, %v4782
    %v4793 = vunpack.c.l.s4 1966171168
    %v4794 = vunpack.c.0.s8 %v4793
    %v4795 = vlaneseq
    %v4796 = vshrl.u32 %v4795, 7
    %v4797 = vsub.s32 %v4794, %v4796
    %v4798 = vrot.slane %v4791, %v4797
    %v4800 = vunpack.c.l.s4 1966171168
    %v4801 = vunpack.c.0.s8 %v4800
    %v4802 = vlaneseq
    %v4803 = vshrl.u32 %v4802, 7
    %v4804 = vsub.s32 %v4801, %v4803
    %v4805 = vrot.slane %v4798, %v4804
    %4807 = vmatprep.subr.mxu0 %v360
    %4808 = vmatpush1.msra.mxu0 %v359
    %4809 = vmatprep.subr.mxu0 %v363
    %4810 = vmatpush1.msra.mxu0 %v362
    %4811 = vmatprep.subr.mxu0 %v366
    %4812 = vmatpush1.msra.mxu0 %v365
    %4813 = vmatprep.subr.mxu0 %v369
    %4814 = vmatpush1.msra.mxu0 %v368
    %4815 = vmatprep.subr.mxu0 %v372
    %4816 = vmatpush1.msra.mxu0 %v371
    %4817 = vmatprep.subr.mxu0 %v375
    %4818 = vmatpush1.msra.mxu0 %v374
    %4819 = vmatprep.subr.mxu0 %v378
    %4820 = vmatpush1.msra.mxu0 %v377
    %4821 = vmatprep.subr.mxu0 %v381
    %4822 = vmatpush1.msra.mxu0 %v380
    %4823 = vmatprep.subr.mxu0 %v384
    %4824 = vmatpush1.msra.mxu0 %v383
    %4825 = vmatprep.subr.mxu0 %v387
    %4826 = vmatpush1.msra.mxu0 %v386
    %4827 = vmatprep.subr.mxu0 %v390
    %4828 = vmatpush1.msra.mxu0 %v389
    %4829 = vmatprep.subr.mxu0 %v393
    %4830 = vmatpush1.msra.mxu0 %v392
    %4831 = vmatprep.subr.mxu0 %v396
    %4832 = vmatpush1.msra.mxu0 %v395
    %4833 = vmatprep.subr.mxu0 %v399
    %4834 = vmatpush1.msra.mxu0 %v398
    %4835 = vmatprep.subr.mxu0 %v402
    %4836 = vmatpush1.msra.mxu0 %v401
    %4837 = vmatprep.subr.mxu0 %v405
    %4838 = vmatpush1.msra.mxu0 %v404
    %4839 = vmatprep.subr.mxu0 0.0
    %4840 = vmatpush1.msra.mxu0 0.0
    %4841 = vmatprep.subr.mxu0 0.0
    %4842 = vmatpush1.msra.mxu0 0.0
    %4843 = vmatprep.subr.mxu0 0.0
    %4844 = vmatpush1.msra.mxu0 0.0
    %4845 = vmatprep.subr.mxu0 0.0
    %4846 = vmatpush1.msra.mxu0 0.0
    %4847 = vmatprep.subr.mxu0 0.0
    %4848 = vmatpush1.msra.mxu0 0.0
    %4849 = vmatprep.subr.mxu0 0.0
    %4850 = vmatpush1.msra.mxu0 0.0
    %4851 = vmatprep.subr.mxu0 0.0
    %4852 = vmatpush1.msra.mxu0 0.0
    %4853 = vmatprep.subr.mxu0 0.0
    %4854 = vmatpush1.msra.mxu0 0.0
    %4855 = vmatprep.subr.mxu0 0.0
    %4856 = vmatpush1.msra.mxu0 0.0
    %4857 = vmatprep.subr.mxu0 0.0
    %4858 = vmatpush1.msra.mxu0 0.0
    %4859 = vmatprep.subr.mxu0 0.0
    %4860 = vmatpush1.msra.mxu0 0.0
    %4861 = vmatprep.subr.mxu0 0.0
    %4862 = vmatpush1.msra.mxu0 0.0
    %4863 = vmatprep.subr.mxu0 0.0
    %4864 = vmatpush1.msra.mxu0 0.0
    %4865 = vmatprep.subr.mxu0 0.0
    %4866 = vmatpush1.msra.mxu0 0.0
    %4867 = vmatprep.subr.mxu0 0.0
    %4868 = vmatpush1.msra.mxu0 0.0
    %4869 = vmatprep.subr.mxu0 0.0
    %4870 = vmatpush1.msra.mxu0 0.0
    %4871 = vmatprep.mubr.f32.mxu0 0.0
    %4872 = vmatmul.mubr.f32.gmra.mrb[0].mxu0 %v4805
    %v4873 = vpop.f32.mrb[0].mxu0
    %v4874 = vadd.f32 %v415, %v4873
    %v4875 = vpop.f32.mrb[0].mxu0
    %v4876 = vadd.f32 %v419, %v4875
    %4877 = vdwg.mxu0
    %4878 = vmatprep.subr.mxu0 0.0
    %4879 = vmatpush1.msra.mxu0 %v361
    %4880 = vmatprep.subr.mxu0 0.0
    %4881 = vmatpush1.msra.mxu0 %v364
    %4882 = vmatprep.subr.mxu0 0.0
    %4883 = vmatpush1.msra.mxu0 %v367
    %4884 = vmatprep.subr.mxu0 0.0
    %4885 = vmatpush1.msra.mxu0 %v370
    %4886 = vmatprep.subr.mxu0 0.0
    %4887 = vmatpush1.msra.mxu0 %v373
    %4888 = vmatprep.subr.mxu0 0.0
    %4889 = vmatpush1.msra.mxu0 %v376
    %4890 = vmatprep.subr.mxu0 0.0
    %4891 = vmatpush1.msra.mxu0 %v379
    %4892 = vmatprep.subr.mxu0 0.0
    %4893 = vmatpush1.msra.mxu0 %v382
    %4894 = vmatprep.subr.mxu0 0.0
    %4895 = vmatpush1.msra.mxu0 %v385
    %4896 = vmatprep.subr.mxu0 0.0
    %4897 = vmatpush1.msra.mxu0 %v388
    %4898 = vmatprep.subr.mxu0 0.0
    %4899 = vmatpush1.msra.mxu0 %v391
    %4900 = vmatprep.subr.mxu0 0.0
    %4901 = vmatpush1.msra.mxu0 %v394
    %4902 = vmatprep.subr.mxu0 0.0
    %4903 = vmatpush1.msra.mxu0 %v397
    %4904 = vmatprep.subr.mxu0 0.0
    %4905 = vmatpush1.msra.mxu0 %v400
    %4906 = vmatprep.subr.mxu0 0.0
    %4907 = vmatpush1.msra.mxu0 %v403
    %4908 = vmatprep.subr.mxu0 0.0
    %4909 = vmatpush1.msra.mxu0 %v406
    %4910 = vmatprep.subr.mxu0 0.0
    %4911 = vmatpush1.msra.mxu0 0.0
    %4912 = vmatprep.subr.mxu0 0.0
    %4913 = vmatpush1.msra.mxu0 0.0
    %4914 = vmatprep.subr.mxu0 0.0
    %4915 = vmatpush1.msra.mxu0 0.0
    %4916 = vmatprep.subr.mxu0 0.0
    %4917 = vmatpush1.msra.mxu0 0.0
    %4918 = vmatprep.subr.mxu0 0.0
    %4919 = vmatpush1.msra.mxu0 0.0
    %4920 = vmatprep.subr.mxu0 0.0
    %4921 = vmatpush1.msra.mxu0 0.0
    %4922 = vmatprep.subr.mxu0 0.0
    %4923 = vmatpush1.msra.mxu0 0.0
    %4924 = vmatprep.subr.mxu0 0.0
    %4925 = vmatpush1.msra.mxu0 0.0
    %4926 = vmatprep.subr.mxu0 0.0
    %4927 = vmatpush1.msra.mxu0 0.0
    %4928 = vmatprep.subr.mxu0 0.0
    %4929 = vmatpush1.msra.mxu0 0.0
    %4930 = vmatprep.subr.mxu0 0.0
    %4931 = vmatpush1.msra.mxu0 0.0
    %4932 = vmatprep.subr.mxu0 0.0
    %4933 = vmatpush1.msra.mxu0 0.0
    %4934 = vmatprep.subr.mxu0 0.0
    %4935 = vmatpush1.msra.mxu0 0.0
    %4936 = vmatprep.subr.mxu0 0.0
    %4937 = vmatpush1.msra.mxu0 0.0
    %4938 = vmatprep.subr.mxu0 0.0
    %4939 = vmatpush1.msra.mxu0 0.0
    %4940 = vmatprep.subr.mxu0 0.0
    %4941 = vmatpush1.msra.mxu0 0.0
    %4942 = vmatprep.mubr.f32.mxu0 0.0
    %4943 = vmatmul.mubr.f32.gmra.mrb[0].mxu0 %v4805
    %v4944 = vpop.f32.mrb[0].mxu0
    %v4945 = vadd.f32 %v423, %v4944
    %v4946 = vpop.f32.mrb[0].mxu0
    %4947 = vdwg.mxu0
    %v4950 = vunpack.c.l.s4 1966171168
    %v4951 = vunpack.c.0.s8 %v4950
    %v4952 = vlaneseq
    %v4953 = vshrl.u32 %v4952, 7
    %v4954 = vsub.s32 %v4951, %v4953
    %v4955 = vrot.slane %v4874, %v4954
    %v4956 = vcombine.high %v4955, %v4955
    %v4958 = vunpack.c.l.s4 1966171168
    %v4959 = vunpack.c.0.s8 %v4958
    %v4960 = vlaneseq
    %v4961 = vshrl.u32 %v4960, 7
    %v4962 = vsub.s32 %v4959, %v4961
    %v4963 = vrot.slane %v4955, %v4962
    %v4965 = vunpack.c.l.s4 1966171168
    %v4966 = vunpack.c.0.s8 %v4965
    %v4967 = vlaneseq
    %v4968 = vshrl.u32 %v4967, 7
    %v4969 = vsub.s32 %v4966, %v4968
    %v4970 = vrot.slane %v4956, %v4969
    %v4973 = vadd.f32 %v4786, %v4963
    %v4974 = vadd.f32 %v4788, %v4970
    %v4975 = vxor.u32 %v4973, 2147483648
    %v4976 = vxor.u32 %v4974, 2147483648
    %v4977 = vmul.f32 %v4975, 1.442695
    %v4978 = vpow.pop %v4977
    %v4979 = vmul.f32 %v4976, 1.442695
    %v4980 = vpow.pop %v4979
    %v4981 = vadd.f32 %v4978, 1.0
    %v4982 = vadd.f32 %v4980, 1.0
    %v4983 = vrcp.pop %v4981
    %v4984 = vmul.f32 1.0, %v4983
    %v4985 = vrcp.pop %v4982
    %v4986 = vmul.f32 1.0, %v4985
    %v4989 = vrot.slane %v4786, 1
    %v4990 = vrot.slane %v4788, 1
    %v4995 = vunpack.c.l.s4 1966171168
    %v4996 = vunpack.c.0.s8 %v4995
    %v4997 = vlaneseq
    %v4998 = vshrl.u32 %v4997, 7
    %v4999 = vsub.s32 %v4996, %v4998
    %v5000 = vrot.slane %v4876, %v4999
    %v5001 = vcombine.high %v5000, %v5000
    %v5003 = vunpack.c.l.s4 1966171168
    %v5004 = vunpack.c.0.s8 %v5003
    %v5005 = vlaneseq
    %v5006 = vshrl.u32 %v5005, 7
    %v5007 = vsub.s32 %v5004, %v5006
    %v5008 = vrot.slane %v5000, %v5007
    %v5010 = vunpack.c.l.s4 1966171168
    %v5011 = vunpack.c.0.s8 %v5010
    %v5012 = vlaneseq
    %v5013 = vshrl.u32 %v5012, 7
    %v5014 = vsub.s32 %v5011, %v5013
    %v5015 = vrot.slane %v5001, %v5014
    %v5018 = vadd.f32 %v4989, %v5008
    %v5019 = vadd.f32 %v4990, %v5015
    %v5020 = vxor.u32 %v5018, 2147483648
    %v5021 = vxor.u32 %v5019, 2147483648
    %v5022 = vmul.f32 %v5020, 1.442695
    %v5023 = vpow.pop %v5022
    %v5024 = vmul.f32 %v5021, 1.442695
    %v5025 = vpow.pop %v5024
    %v5026 = vadd.f32 %v5023, 1.0
    %v5027 = vadd.f32 %v5025, 1.0
    %v5028 = vrcp.pop %v5026
    %v5029 = vmul.f32 1.0, %v5028
    %v5030 = vrcp.pop %v5027
    %v5031 = vmul.f32 1.0, %v5030
    %v5034 = vunpack.c.l.s4 1966171168
    %v5035 = vunpack.c.0.s8 %v5034
    %v5036 = vlaneseq
    %v5037 = vshrl.u32 %v5036, 7
    %v5038 = vsub.s32 %v5035, %v5037
    %v5039 = vrot.slane %v4945, %v5038
    %v5040 = vcombine.high %v5039, %v5039
    %v5042 = vunpack.c.l.s4 1966171168
    %v5043 = vunpack.c.0.s8 %v5042
    %v5044 = vlaneseq
    %v5045 = vshrl.u32 %v5044, 7
    %v5046 = vsub.s32 %v5043, %v5045
    %v5047 = vrot.slane %v5039, %v5046
    %v5049 = vunpack.c.l.s4 1966171168
    %v5050 = vunpack.c.0.s8 %v5049
    %v5051 = vlaneseq
    %v5052 = vshrl.u32 %v5051, 7
    %v5053 = vsub.s32 %v5050, %v5052
    %v5054 = vrot.slane %v5040, %v5053
    %v5057 = vmul.f32 %v4984, %v5047
    %v5058 = vmul.f32 %v4986, %v5054
    %v5059 = vrot.slane %v4786, 2
    %v5060 = vrot.slane %v4788, 2
    %v5063 = vadd.f32 %v5059, %v5057
    %v5064 = vadd.f32 %v5060, %v5058
    %v5065 = vtanh.pop %v5063
    %v5066 = vtanh.pop %v5064
    %v5067 = vsub.f32 1.0, %v5029
    %v5068 = vsub.f32 1.0, %v5031
    %v5069 = vmul.f32 %v5067, %v5065
    %v5070 = vmul.f32 %v5068, %v5066
    %v5071 = vmul.f32 %v5029, %v4781
    %v5072 = vmul.f32 %v5031, %v4782
    %v5073 = vadd.f32 %v5069, %v5071
    %v5074 = vadd.f32 %v5070, %v5072
    %5075 = vst [vmem:[#allocation3 + $0xf] sm:$0x1] %v5073
    %5076 = vst [vmem:[#allocation3 + $0x1f] sm:$0x1] %v5074
    %v5077 = vld [vmem:[#allocation3] sm:$0xff]
    %v5078 = vld [vmem:[#allocation3 + $0x8] sm:$0xff]
    %v5079 = vld [vmem:[#allocation3 + $0x10] sm:$0xff]
    %v5080 = vld [vmem:[#allocation3 + $0x18] sm:$0xff]
    %v5081 = vld [vmem:[%s7] sm:$0xff]
    %v5082 = vld [vmem:[%s7 + $0x8] sm:$0xff]
    %v5083 = vld [vmem:[%s7 + $0x10] sm:$0xff]
    %v5084 = vld [vmem:[%s7 + $0x18] sm:$0xff]
    %v5085 = vld [vmem:[%s7 + $0x20] sm:$0xff]
    %v5086 = vld [vmem:[%s7 + $0x28] sm:$0xff]
    %v5087 = vld [vmem:[%s7 + $0x30] sm:$0xff]
    %v5088 = vld [vmem:[%s7 + $0x38] sm:$0xff]
    %v5089 = vld [vmem:[%s7 + $0x40] sm:$0xff]
    %v5090 = vld [vmem:[%s7 + $0x48] sm:$0xff]
    %v5091 = vld [vmem:[%s7 + $0x50] sm:$0xff]
    %v5092 = vld [vmem:[%s7 + $0x58] sm:$0xff]
    %v5093 = vld [vmem:[%s7 + $0x60] sm:$0xff]
    %v5094 = vld [vmem:[%s7 + $0x68] sm:$0xff]
    %v5095 = vld [vmem:[%s7 + $0x70] sm:$0xff]
    %v5096 = vld [vmem:[%s7 + $0x78] sm:$0xff]
    %v5097 = vld [vmem:[%s8] sm:$0x1]
    %v5099 = vlaneseq
    %v5100 = vshrl.u32 %v5099, 7
    %v5101 = vsub.s32 0, %v5100
    %v5102 = vrot.slane %v5097, %v5101
    %5104 = vmatprep.subr.mxu0 0.0
    %5105 = vmatpush1.msra.mxu0 %v5081
    %5106 = vmatprep.subr.mxu0 0.0
    %5107 = vmatpush1.msra.mxu0 %v5082
    %5108 = vmatprep.subr.mxu0 0.0
    %5109 = vmatpush1.msra.mxu0 %v5083
    %5110 = vmatprep.subr.mxu0 0.0
    %5111 = vmatpush1.msra.mxu0 %v5084
    %5112 = vmatprep.subr.mxu0 0.0
    %5113 = vmatpush1.msra.mxu0 %v5085
    %5114 = vmatprep.subr.mxu0 0.0
    %5115 = vmatpush1.msra.mxu0 %v5086
    %5116 = vmatprep.subr.mxu0 0.0
    %5117 = vmatpush1.msra.mxu0 %v5087
    %5118 = vmatprep.subr.mxu0 0.0
    %5119 = vmatpush1.msra.mxu0 %v5088
    %5120 = vmatprep.subr.mxu0 0.0
    %5121 = vmatpush1.msra.mxu0 %v5089
    %5122 = vmatprep.subr.mxu0 0.0
    %5123 = vmatpush1.msra.mxu0 %v5090
    %5124 = vmatprep.subr.mxu0 0.0
    %5125 = vmatpush1.msra.mxu0 %v5091
    %5126 = vmatprep.subr.mxu0 0.0
    %5127 = vmatpush1.msra.mxu0 %v5092
    %5128 = vmatprep.subr.mxu0 0.0
    %5129 = vmatpush1.msra.mxu0 %v5093
    %5130 = vmatprep.subr.mxu0 0.0
    %5131 = vmatpush1.msra.mxu0 %v5094
    %5132 = vmatprep.subr.mxu0 0.0
    %5133 = vmatpush1.msra.mxu0 %v5095
    %5134 = vmatprep.subr.mxu0 0.0
    %5135 = vmatpush1.msra.mxu0 %v5096
    %5136 = vmatprep.subr.mxu0 0.0
    %5137 = vmatpush1.msra.mxu0 0.0
    %5138 = vmatprep.subr.mxu0 0.0
    %5139 = vmatpush1.msra.mxu0 0.0
    %5140 = vmatprep.subr.mxu0 0.0
    %5141 = vmatpush1.msra.mxu0 0.0
    %5142 = vmatprep.subr.mxu0 0.0
    %5143 = vmatpush1.msra.mxu0 0.0
    %5144 = vmatprep.subr.mxu0 0.0
    %5145 = vmatpush1.msra.mxu0 0.0
    %5146 = vmatprep.subr.mxu0 0.0
    %5147 = vmatpush1.msra.mxu0 0.0
    %5148 = vmatprep.subr.mxu0 0.0
    %5149 = vmatpush1.msra.mxu0 0.0
    %5150 = vmatprep.subr.mxu0 0.0
    %5151 = vmatpush1.msra.mxu0 0.0
    %5152 = vmatprep.subr.mxu0 0.0
    %5153 = vmatpush1.msra.mxu0 0.0
    %5154 = vmatprep.subr.mxu0 0.0
    %5155 = vmatpush1.msra.mxu0 0.0
    %5156 = vmatprep.subr.mxu0 0.0
    %5157 = vmatpush1.msra.mxu0 0.0
    %5158 = vmatprep.subr.mxu0 0.0
    %5159 = vmatpush1.msra.mxu0 0.0
    %5160 = vmatprep.subr.mxu0 0.0
    %5161 = vmatpush1.msra.mxu0 0.0
    %5162 = vmatprep.subr.mxu0 0.0
    %5163 = vmatpush1.msra.mxu0 0.0
    %5164 = vmatprep.subr.mxu0 0.0
    %5165 = vmatpush1.msra.mxu0 0.0
    %5166 = vmatprep.subr.mxu0 0.0
    %5167 = vmatpush1.msra.mxu0 0.0
    %5168 = vmatprep.mubr.f32.mxu0 0.0
    %5169 = vmatmul.mubr.f32.gmra.mrb[0].mxu0 %v5077
    %v5170 = vpop.f32.mrb[0].mxu0
    %v5171 = vadd.f32 %v5102, %v5170
    %v5172 = vpop.f32.mrb[0].mxu0
    %5173 = vmatprep.mubr.f32.mxu0 0.0
    %5174 = vmatmul.mubr.f32.gmra.mrb[0].mxu0 %v5078
    %v5175 = vpop.f32.mrb[0].mxu0
    %v5176 = vadd.f32 %v5102, %v5175
    %v5177 = vpop.f32.mrb[0].mxu0
    %5178 = vmatprep.mubr.f32.mxu0 0.0
    %5179 = vmatmul.mubr.f32.gmra.mrb[0].mxu0 %v5079
    %v5180 = vpop.f32.mrb[0].mxu0
    %v5181 = vadd.f32 %v5102, %v5180
    %v5182 = vpop.f32.mrb[0].mxu0
    %5183 = vmatprep.mubr.f32.mxu0 0.0
    %5184 = vmatmul.mubr.f32.gmra.mrb[0].mxu0 %v5080
    %v5185 = vpop.f32.mrb[0].mxu0
    %v5186 = vadd.f32 %v5102, %v5185
    %v5187 = vpop.f32.mrb[0].mxu0
    %5188 = vdwg.mxu0
    %5189 = vst [vmem:[#allocation4] sm:$0xff] %v5171
    %5190 = vst [vmem:[#allocation4 + $0x8] sm:$0xff] %v5176
    %5191 = vst [vmem:[#allocation4 + $0x10] sm:$0xff] %v5181
    %5192 = vst [vmem:[#allocation4 + $0x18] sm:$0xff] %v5186
    // Predicated region
    $region38: #{z_encoder_forward.3} parent=1 // pred_check
      _
    $region39: #{z_encoder_forward.3} parent=1 // pred_check_branch
      %5194 = sbr.rel (0) target = $region41
    $region40: #{z_encoder_forward.3} parent=1 // pred_region
      %s5196 = ssub.s32 512, 512
      %5197 = vsyncadd [#allocation5], %s5196
      %s5198 = sshll.u32 [#allocation4], 4
      %s5199 = int_to_ptr.vmem [resolvable:$true] %s5198
      %5204 = dma.vmem_to_hbm [thread:$0]  %s5199, 512, %s9, [#allocation5], 128, 128, 8
    $region41: #{z_encoder_forward.3} parent=1 // pred_fallthru
      _
    // Predicated region
    $region42: #{z_encoder_forward.3} parent=1 // pred_check
      _
    $region43: #{z_encoder_forward.3} parent=1 // pred_check_branch
      %5206 = sbr.rel (0) target = $region45
    $region44: #{z_encoder_forward.3} parent=1 // pred_region
      %5207 = dma.done [#allocation5], 512
    $region45: #{z_encoder_forward.3} parent=1 // pred_fallthru
      _
    %5208 = vsyncpa [#allocation5], 1

</llo_original>
